<compile_context>
chip_gen: v5e
topology: v5e:2x2
jax: 0.10.0
libtpu: 0.0.40
codegen_flags: <defaults>
</compile_context>

<pallas_src>
import jax
import jax.numpy as jnp
from jax.experimental import pallas as pl
from jax.experimental.pallas import tpu as pltpu


# ---------------------------------------------------------------------------
# Fused forward kernel: the whole network in a single pallas_call.
# ---------------------------------------------------------------------------

def _autoencoder_kernel(x_ref,
                        w1_ref, b1_ref, w2_ref, b2_ref, w3_ref, b3_ref,
                        w4_ref, b4_ref, wd1_ref, bd1_ref, wd5_ref, bd5_ref,
                        code_ref, img_ref,
                        a1_ref, a2_ref, a3_ref):
    """Entire autoencoder forward for the whole batch, VMEM-resident."""

    def conv3x3(x_f32, w_ref, b_ref, stride):
        """3x3 conv, pad=1, as ONE MXU matmul with K = 9*Cin.

        In-kernel im2col: zero-pad once (bf16 cast once), take 9 shifted
        static slices, concatenate them on the lane (channel) axis and do a
        single jnp.dot against the pre-packed (9*Cin, Cout) weight.
        For stride 2, taps are decimated to even output rows (outer-dim
        reshape, free) and even output columns are extracted after the
        matmul with one reshape-based deinterleave.
        """
        n, h, w, cin = x_f32.shape
        k9cin, cout = w_ref.shape
        h_out = h // stride
        # full-res output width, padded up to a sublane multiple of 8 so all
        # flatten/unflatten reshapes are layout-trivial
        wp = ((w + 7) // 8) * 8

        # zero padding: H by 1/1, W by 1 left and (wp+1-w) right; cast bf16 ONCE
        xb = x_f32.astype(jnp.bfloat16)
        zh = jnp.zeros((n, 1, w, cin), jnp.bfloat16)
        xp = jnp.concatenate([zh, xb, zh], axis=1)                # (n, h+2, w,    cin)
        zl = jnp.zeros((n, h + 2, 1, cin), jnp.bfloat16)
        zr = jnp.zeros((n, h + 2, wp + 1 - w, cin), jnp.bfloat16)
        xp = jnp.concatenate([zl, xp, zr], axis=2)                # (n, h+2, wp+2, cin)

        taps = []
        for kh in range(3):
            for kw in range(3):
                t = xp[:, kh:kh + h, kw:kw + wp, :]               # (n, h, wp, cin)
                if stride == 2:
                    # even output rows only; H is an outer dim -> free split
                    t = t.reshape(n, h_out, 2, wp, cin)[:, :, 0]  # (n, h_out, wp, cin)
                taps.append(t)
        col = jnp.concatenate(taps, axis=-1)                      # (n, h_out, wp, 9*cin)

        m = n * h_out * wp
        acc = jnp.dot(col.reshape(m, k9cin), w_ref[...],
                      preferred_element_type=jnp.float32)         # (m, cout) f32
        acc = acc + b_ref[...]                                    # (1, cout) f32
        out = acc.reshape(n, h_out, wp, cout)

        if stride == 2:
            # even output columns: sublane regroup (C stays on the lane axis)
            out = out.reshape(n, h_out, wp // 2, 2, cout)[:, :, :, 0, :]
            wp_eff, w_out = wp // 2, w // 2
        else:
            wp_eff, w_out = wp, w
        if wp_eff != w_out:
            out = out[:, :, :w_out, :]                            # drop pad columns
        return out                                                # (n, h_out, w_out, cout) f32

    def upsample_linear_w(y):
        """1D linear upsample along W (scale 2, align_corners=False).

        out[..., 2w]   = 0.75*y[..., w] + 0.25*y[..., max(w-1, 0)]
        out[..., 2w+1] = 0.75*y[..., w] + 0.25*y[..., min(w+1, W-1)]
        Even/odd interleave via stack on a new axis before C + reshape.
        """
        n, h, w, c = y.shape
        left = jnp.concatenate([y[:, :, :1], y[:, :, :w - 1]], axis=2)
        right = jnp.concatenate([y[:, :, 1:], y[:, :, w - 1:]], axis=2)
        even = 0.75 * y + 0.25 * left
        odd = 0.75 * y + 0.25 * right
        out = jnp.stack([even, odd], axis=3)                      # (n, h, w, 2, c)
        return out.reshape(n, h, 2 * w, c)                        # (n, h, 2w, c)

    x = x_ref[...]                                                # (N, 16, 16, 3) f32

    # ---------------- encode ----------------
    a1_ref[...] = conv3x3(x, w1_ref, b1_ref, stride=1)            # (N,16,16, 32)
    a2_ref[...] = conv3x3(a1_ref[...], w2_ref, b2_ref, stride=2)  # (N, 8, 8, 64)
    a3_ref[...] = conv3x3(a2_ref[...], w3_ref, b3_ref, stride=2)  # (N, 4, 4,128)
    h4 = conv3x3(a3_ref[...], w4_ref, b4_ref, stride=2)           # (N, 2, 2,256)
    # sigmoid = 1 / (1 + exp(-x)); exp + approx reciprocal both hit the EUP
    code = pl.reciprocal(1.0 + jnp.exp(-h4), approx=True)
    code_ref[...] = code.astype(code_ref.dtype)

    # ---------------- decode ----------------
    d = upsample_linear_w(code)                                   # (N, 2, 4,256)
    d = conv3x3(d, wd1_ref, bd1_ref, stride=1)                    # (N, 2, 4,128)
    d = upsample_linear_w(d)                                      # (N, 2, 8,128)
    d = upsample_linear_w(d)                                      # (N, 2,16,128)
    img = conv3x3(d, wd5_ref, bd5_ref, stride=1)                  # (N, 2,16,  3)
    # Single tiny (lane-sparse, 3-channel) store for the whole forward.
    img_ref[...] = img.astype(img_ref.dtype)


# ---------------------------------------------------------------------------
# Host-side weight packing (done ONCE, outside the forward) + wrapper
# ---------------------------------------------------------------------------

def _pack_conv(w, b):
    """Conv2d weight (Cout, Cin, 3, 3) -> im2col matrix (9*Cin, Cout) bf16."""
    cout, cin = w.shape[0], w.shape[1]
    wm = jnp.transpose(w, (2, 3, 1, 0)).reshape(9 * cin, cout)
    return wm.astype(jnp.bfloat16), b.reshape(1, -1).astype(jnp.float32)


def _pack_deconv(w, b):
    """ConvTranspose2d (Cin, Cout, 3, 3) -> (9*Cin, Cout) bf16.

    ConvTranspose2d(k=3, s=1, p=1) == Conv2d(pad=1) with spatially flipped
    kernel and swapped in/out channel axes.
    """
    cin, cout = w.shape[0], w.shape[1]
    wm = jnp.transpose(jnp.flip(w, axis=(2, 3)), (2, 3, 0, 1)).reshape(9 * cin, cout)
    return wm.astype(jnp.bfloat16), b.reshape(1, -1).astype(jnp.float32)


def pack_params(params):
    """Pre-pack all weights once (transpose/flip/bf16/(9*Cin,Cout) reshape)."""
    return (
        *_pack_conv(*params["conv1"]),
        *_pack_conv(*params["conv2"]),
        *_pack_conv(*params["conv3"]),
        *_pack_conv(*params["conv4"]),
        *_pack_deconv(*params["deconv1"]),
        *_pack_deconv(*params["deconv5"]),
    )


def autoencoder_forward(packed, x_nchw):
    n, _, h, w = x_nchw.shape
    x = jnp.transpose(x_nchw, (0, 2, 3, 1)).astype(jnp.float32)   # NCHW -> NHWC
    args = (x, *packed)

    code_nhwc, img_nhwc = pl.pallas_call(
        _autoencoder_kernel,
        out_shape=(
            jax.ShapeDtypeStruct((n, h // 8, w // 8, 256), jnp.float32),  # code
            jax.ShapeDtypeStruct((n, h // 8, w, 3), jnp.float32),         # img
        ),
        in_specs=[pl.BlockSpec(memory_space=pltpu.MemorySpace.VMEM)
                  for _ in args],
        out_specs=(pl.BlockSpec(memory_space=pltpu.MemorySpace.VMEM),
                   pl.BlockSpec(memory_space=pltpu.MemorySpace.VMEM)),
        scratch_shapes=[                       # per-layer activation staging
            pltpu.VMEM((n, h, w, 32), jnp.float32),            # conv1 out
            pltpu.VMEM((n, h // 2, w // 2, 64), jnp.float32),  # conv2 out
            pltpu.VMEM((n, h // 4, w // 4, 128), jnp.float32), # conv3 out
        ],
    )(*args)

    # Tiny boundary transposes back to PyTorch's NCHW layout.
    img_nchw = jnp.transpose(img_nhwc, (0, 3, 1, 2))     # (N,   3, H/8, W)
    code_nchw = jnp.transpose(code_nhwc, (0, 3, 1, 2))   # (N, 256, H/8, W/8)
    return img_nchw, code_nchw


# ---------------------------------------------------------------------------
# Parameter init (deterministic, PyTorch-shaped)
# ---------------------------------------------------------------------------

def _init_conv(key, cout, cin):
    kw, kb = jax.random.split(key)
    bound = 1.0 / jnp.sqrt(cin * 9.0)
    w = jax.random.uniform(kw, (cout, cin, 3, 3), jnp.float32, -bound, bound)
    b = jax.random.uniform(kb, (cout,), jnp.float32, -bound, bound)
    return w, b


def _init_deconv(key, cin, cout):
    kw, kb = jax.random.split(key)
    bound = 1.0 / jnp.sqrt(cout * 9.0)
    w = jax.random.uniform(kw, (cin, cout, 3, 3), jnp.float32, -bound, bound)
    b = jax.random.uniform(kb, (cout,), jnp.float32, -bound, bound)
    return w, b


def init_params(key):
    keys = jax.random.split(key, 6)
    return {
        "conv1": _init_conv(keys[0], 32, 3),
        "conv2": _init_conv(keys[1], 64, 32),
        "conv3": _init_conv(keys[2], 128, 64),
        "conv4": _init_conv(keys[3], 256, 128),
        "deconv1": _init_deconv(keys[4], 256, 128),
        "deconv5": _init_deconv(keys[5], 128, 3),
    }


if __name__ == "__main__":
    key = jax.random.PRNGKey(0)
    k_param, k_x = jax.random.split(key)
    params = init_params(k_param)
    packed = pack_params(params)          # pre-packed ONCE, outside the forward

    N, C, H, W = 2, 3, 16, 16
    x = jax.random.normal(k_x, (N, C, H, W), jnp.float32)

    fwd = jax.jit(autoencoder_forward)
    img, code = fwd(packed, x)
    jax.block_until_ready((img, code))

    assert code.shape == (N, 256, H // 8, W // 8), code.shape
    assert img.shape == (N, 3, H // 8, W), img.shape
    assert bool(jnp.all(jnp.isfinite(img))) and bool(jnp.all(jnp.isfinite(code)))
    print("KERNEL_OK")
</pallas_src>

<mosaic_0001>
module attributes {stable_mosaic.version = 11 : i64} {
  func.func @_autoencoder_kernel(%arg0: memref<2x16x16x3xf32, #tpu.memory_space<vmem>>, %arg1: memref<27x32xbf16, #tpu.memory_space<vmem>>, %arg2: memref<1x32xf32, #tpu.memory_space<vmem>>, %arg3: memref<288x64xbf16, #tpu.memory_space<vmem>>, %arg4: memref<1x64xf32, #tpu.memory_space<vmem>>, %arg5: memref<576x128xbf16, #tpu.memory_space<vmem>>, %arg6: memref<1x128xf32, #tpu.memory_space<vmem>>, %arg7: memref<1152x256xbf16, #tpu.memory_space<vmem>>, %arg8: memref<1x256xf32, #tpu.memory_space<vmem>>, %arg9: memref<2304x128xbf16, #tpu.memory_space<vmem>>, %arg10: memref<1x128xf32, #tpu.memory_space<vmem>>, %arg11: memref<1152x3xbf16, #tpu.memory_space<vmem>>, %arg12: memref<1x3xf32, #tpu.memory_space<vmem>>, %arg13: memref<2x2x2x256xf32, #tpu.memory_space<vmem>>, %arg14: memref<2x2x16x3xf32, #tpu.memory_space<vmem>>, %arg15: memref<2x16x16x32xf32, #tpu.memory_space<vmem>>, %arg16: memref<2x8x8x64xf32, #tpu.memory_space<vmem>>, %arg17: memref<2x4x4x128xf32, #tpu.memory_space<vmem>>) attributes {dimension_semantics = [], scalar_prefetch = 0 : i64, scratch_operands = 3 : i64, tpu.core_type = #tpu.core_type<tc>} {
    %c0 = arith.constant 0 : index
    %c0_0 = arith.constant 0 : index
    %c0_1 = arith.constant 0 : index
    %c0_2 = arith.constant 0 : index
    %0 = vector.load %arg0[%c0, %c0_0, %c0_1, %c0_2] : memref<2x16x16x3xf32, #tpu.memory_space<vmem>>, vector<2x16x16x3xf32>
    %1 = arith.truncf %0 : vector<2x16x16x3xf32> to vector<2x16x16x3xbf16>
    %cst = arith.constant 0.000000e+00 : bf16
    %2 = vector.broadcast %cst : bf16 to vector<2x1x16x3xbf16>
    %3 = tpu.concatenate %2, %1, %2 in 1 : vector<2x1x16x3xbf16>, vector<2x16x16x3xbf16>, vector<2x1x16x3xbf16> -> vector<2x18x16x3xbf16>
    %cst_3 = arith.constant 0.000000e+00 : bf16
    %4 = vector.broadcast %cst_3 : bf16 to vector<2x18x1x3xbf16>
    %cst_4 = arith.constant 0.000000e+00 : bf16
    %5 = vector.broadcast %cst_4 : bf16 to vector<2x18x1x3xbf16>
    %6 = tpu.concatenate %4, %3, %5 in 2 : vector<2x18x1x3xbf16>, vector<2x18x16x3xbf16>, vector<2x18x1x3xbf16> -> vector<2x18x18x3xbf16>
    %7 = vector.extract_strided_slice %6 {offsets = [0, 0, 0, 0], sizes = [2, 16, 16, 3], strides = [1, 1, 1, 1]} : vector<2x18x18x3xbf16> to vector<2x16x16x3xbf16>
    %8 = vector.extract_strided_slice %6 {offsets = [0, 0, 1, 0], sizes = [2, 16, 16, 3], strides = [1, 1, 1, 1]} : vector<2x18x18x3xbf16> to vector<2x16x16x3xbf16>
    %9 = vector.extract_strided_slice %6 {offsets = [0, 0, 2, 0], sizes = [2, 16, 16, 3], strides = [1, 1, 1, 1]} : vector<2x18x18x3xbf16> to vector<2x16x16x3xbf16>
    %10 = vector.extract_strided_slice %6 {offsets = [0, 1, 0, 0], sizes = [2, 16, 16, 3], strides = [1, 1, 1, 1]} : vector<2x18x18x3xbf16> to vector<2x16x16x3xbf16>
    %11 = vector.extract_strided_slice %6 {offsets = [0, 1, 1, 0], sizes = [2, 16, 16, 3], strides = [1, 1, 1, 1]} : vector<2x18x18x3xbf16> to vector<2x16x16x3xbf16>
    %12 = vector.extract_strided_slice %6 {offsets = [0, 1, 2, 0], sizes = [2, 16, 16, 3], strides = [1, 1, 1, 1]} : vector<2x18x18x3xbf16> to vector<2x16x16x3xbf16>
    %13 = vector.extract_strided_slice %6 {offsets = [0, 2, 0, 0], sizes = [2, 16, 16, 3], strides = [1, 1, 1, 1]} : vector<2x18x18x3xbf16> to vector<2x16x16x3xbf16>
    %14 = vector.extract_strided_slice %6 {offsets = [0, 2, 1, 0], sizes = [2, 16, 16, 3], strides = [1, 1, 1, 1]} : vector<2x18x18x3xbf16> to vector<2x16x16x3xbf16>
    %15 = vector.extract_strided_slice %6 {offsets = [0, 2, 2, 0], sizes = [2, 16, 16, 3], strides = [1, 1, 1, 1]} : vector<2x18x18x3xbf16> to vector<2x16x16x3xbf16>
    %16 = tpu.concatenate %7, %8, %9, %10, %11, %12, %13, %14, %15 in 3 : vector<2x16x16x3xbf16>, vector<2x16x16x3xbf16>, vector<2x16x16x3xbf16>, vector<2x16x16x3xbf16>, vector<2x16x16x3xbf16>, vector<2x16x16x3xbf16>, vector<2x16x16x3xbf16>, vector<2x16x16x3xbf16>, vector<2x16x16x3xbf16> -> vector<2x16x16x27xbf16>
    %17 = vector.shape_cast %16 : vector<2x16x16x27xbf16> to vector<512x27xbf16>
    %c0_5 = arith.constant 0 : index
    %c0_6 = arith.constant 0 : index
    %18 = vector.load %arg1[%c0_5, %c0_6] : memref<27x32xbf16, #tpu.memory_space<vmem>>, vector<27x32xbf16>
    %cst_7 = arith.constant dense<0.000000e+00> : vector<512x32xf32>
    %19 = tpu.matmul %17, %18, %cst_7 {dimension_numbers = #tpu.dot_dimension_numbers<[1], [0], [0], [1], [0, 0, 1, 1], [], []>} : vector<512x27xbf16>, vector<27x32xbf16>, vector<512x32xf32> -> vector<512x32xf32>
    %c0_8 = arith.constant 0 : index
    %c0_9 = arith.constant 0 : index
    %20 = vector.load %arg2[%c0_8, %c0_9] : memref<1x32xf32, #tpu.memory_space<vmem>>, vector<1x32xf32>
    %21 = vector.broadcast %20 : vector<1x32xf32> to vector<512x32xf32>
    %22 = arith.addf %19, %21 : vector<512x32xf32>
    %23 = vector.shape_cast %22 : vector<512x32xf32> to vector<2x16x16x32xf32>
    %c0_10 = arith.constant 0 : index
    %c0_11 = arith.constant 0 : index
    %c0_12 = arith.constant 0 : index
    %c0_13 = arith.constant 0 : index
    %24 = vector.load %arg15[%c0_10, %c0_11, %c0_12, %c0_13] : memref<2x16x16x32xf32, #tpu.memory_space<vmem>>, vector<2x16x16x32xf32>
    tpu.vector_store %arg15[%c0_10, %c0_11, %c0_12, %c0_13], %23 {strides = array<i32>} : memref<2x16x16x32xf32, #tpu.memory_space<vmem>>, vector<2x16x16x32xf32>,
    %c0_14 = arith.constant 0 : index
    %c0_15 = arith.constant 0 : index
    %c0_16 = arith.constant 0 : index
    %c0_17 = arith.constant 0 : index
    %25 = vector.load %arg15[%c0_14, %c0_15, %c0_16, %c0_17] : memref<2x16x16x32xf32, #tpu.memory_space<vmem>>, vector<2x16x16x32xf32>
    %26 = arith.truncf %25 : vector<2x16x16x32xf32> to vector<2x16x16x32xbf16>
    %cst_18 = arith.constant 0.000000e+00 : bf16
    %27 = vector.broadcast %cst_18 : bf16 to vector<2x1x16x32xbf16>
    %28 = tpu.concatenate %27, %26, %27 in 1 : vector<2x1x16x32xbf16>, vector<2x16x16x32xbf16>, vector<2x1x16x32xbf16> -> vector<2x18x16x32xbf16>
    %cst_19 = arith.constant 0.000000e+00 : bf16
    %29 = vector.broadcast %cst_19 : bf16 to vector<2x18x1x32xbf16>
    %cst_20 = arith.constant 0.000000e+00 : bf16
    %30 = vector.broadcast %cst_20 : bf16 to vector<2x18x1x32xbf16>
    %31 = tpu.concatenate %29, %28, %30 in 2 : vector<2x18x1x32xbf16>, vector<2x18x16x32xbf16>, vector<2x18x1x32xbf16> -> vector<2x18x18x32xbf16>
    %32 = vector.extract_strided_slice %31 {offsets = [0, 0, 0, 0], sizes = [2, 16, 16, 32], strides = [1, 1, 1, 1]} : vector<2x18x18x32xbf16> to vector<2x16x16x32xbf16>
    %33 = vector.shape_cast %32 : vector<2x16x16x32xbf16> to vector<2x8x2x16x32xbf16>
    %34 = vector.extract_strided_slice %33 {offsets = [0, 0, 0, 0, 0], sizes = [2, 8, 1, 16, 32], strides = [1, 1, 1, 1, 1]} : vector<2x8x2x16x32xbf16> to vector<2x8x1x16x32xbf16>
    %35 = vector.shape_cast %34 : vector<2x8x1x16x32xbf16> to vector<2x8x16x32xbf16>
    %36 = vector.extract_strided_slice %31 {offsets = [0, 0, 1, 0], sizes = [2, 16, 16, 32], strides = [1, 1, 1, 1]} : vector<2x18x18x32xbf16> to vector<2x16x16x32xbf16>
    %37 = vector.shape_cast %36 : vector<2x16x16x32xbf16> to vector<2x8x2x16x32xbf16>
    %38 = vector.extract_strided_slice %37 {offsets = [0, 0, 0, 0, 0], sizes = [2, 8, 1, 16, 32], strides = [1, 1, 1, 1, 1]} : vector<2x8x2x16x32xbf16> to vector<2x8x1x16x32xbf16>
    %39 = vector.shape_cast %38 : vector<2x8x1x16x32xbf16> to vector<2x8x16x32xbf16>
    %40 = vector.extract_strided_slice %31 {offsets = [0, 0, 2, 0], sizes = [2, 16, 16, 32], strides = [1, 1, 1, 1]} : vector<2x18x18x32xbf16> to vector<2x16x16x32xbf16>
    %41 = vector.shape_cast %40 : vector<2x16x16x32xbf16> to vector<2x8x2x16x32xbf16>
    %42 = vector.extract_strided_slice %41 {offsets = [0, 0, 0, 0, 0], sizes = [2, 8, 1, 16, 32], strides = [1, 1, 1, 1, 1]} : vector<2x8x2x16x32xbf16> to vector<2x8x1x16x32xbf16>
    %43 = vector.shape_cast %42 : vector<2x8x1x16x32xbf16> to vector<2x8x16x32xbf16>
    %44 = vector.extract_strided_slice %31 {offsets = [0, 1, 0, 0], sizes = [2, 16, 16, 32], strides = [1, 1, 1, 1]} : vector<2x18x18x32xbf16> to vector<2x16x16x32xbf16>
    %45 = vector.shape_cast %44 : vector<2x16x16x32xbf16> to vector<2x8x2x16x32xbf16>
    %46 = vector.extract_strided_slice %45 {offsets = [0, 0, 0, 0, 0], sizes = [2, 8, 1, 16, 32], strides = [1, 1, 1, 1, 1]} : vector<2x8x2x16x32xbf16> to vector<2x8x1x16x32xbf16>
    %47 = vector.shape_cast %46 : vector<2x8x1x16x32xbf16> to vector<2x8x16x32xbf16>
    %48 = vector.extract_strided_slice %31 {offsets = [0, 1, 1, 0], sizes = [2, 16, 16, 32], strides = [1, 1, 1, 1]} : vector<2x18x18x32xbf16> to vector<2x16x16x32xbf16>
    %49 = vector.shape_cast %48 : vector<2x16x16x32xbf16> to vector<2x8x2x16x32xbf16>
    %50 = vector.extract_strided_slice %49 {offsets = [0, 0, 0, 0, 0], sizes = [2, 8, 1, 16, 32], strides = [1, 1, 1, 1, 1]} : vector<2x8x2x16x32xbf16> to vector<2x8x1x16x32xbf16>
    %51 = vector.shape_cast %50 : vector<2x8x1x16x32xbf16> to vector<2x8x16x32xbf16>
    %52 = vector.extract_strided_slice %31 {offsets = [0, 1, 2, 0], sizes = [2, 16, 16, 32], strides = [1, 1, 1, 1]} : vector<2x18x18x32xbf16> to vector<2x16x16x32xbf16>
    %53 = vector.shape_cast %52 : vector<2x16x16x32xbf16> to vector<2x8x2x16x32xbf16>
    %54 = vector.extract_strided_slice %53 {offsets = [0, 0, 0, 0, 0], sizes = [2, 8, 1, 16, 32], strides = [1, 1, 1, 1, 1]} : vector<2x8x2x16x32xbf16> to vector<2x8x1x16x32xbf16>
    %55 = vector.shape_cast %54 : vector<2x8x1x16x32xbf16> to vector<2x8x16x32xbf16>
    %56 = vector.extract_strided_slice %31 {offsets = [0, 2, 0, 0], sizes = [2, 16, 16, 32], strides = [1, 1, 1, 1]} : vector<2x18x18x32xbf16> to vector<2x16x16x32xbf16>
    %57 = vector.shape_cast %56 : vector<2x16x16x32xbf16> to vector<2x8x2x16x32xbf16>
    %58 = vector.extract_strided_slice %57 {offsets = [0, 0, 0, 0, 0], sizes = [2, 8, 1, 16, 32], strides = [1, 1, 1, 1, 1]} : vector<2x8x2x16x32xbf16> to vector<2x8x1x16x32xbf16>
    %59 = vector.shape_cast %58 : vector<2x8x1x16x32xbf16> to vector<2x8x16x32xbf16>
    %60 = vector.extract_strided_slice %31 {offsets = [0, 2, 1, 0], sizes = [2, 16, 16, 32], strides = [1, 1, 1, 1]} : vector<2x18x18x32xbf16> to vector<2x16x16x32xbf16>
    %61 = vector.shape_cast %60 : vector<2x16x16x32xbf16> to vector<2x8x2x16x32xbf16>
    %62 = vector.extract_strided_slice %61 {offsets = [0, 0, 0, 0, 0], sizes = [2, 8, 1, 16, 32], strides = [1, 1, 1, 1, 1]} : vector<2x8x2x16x32xbf16> to vector<2x8x1x16x32xbf16>
    %63 = vector.shape_cast %62 : vector<2x8x1x16x32xbf16> to vector<2x8x16x32xbf16>
    %64 = vector.extract_strided_slice %31 {offsets = [0, 2, 2, 0], sizes = [2, 16, 16, 32], strides = [1, 1, 1, 1]} : vector<2x18x18x32xbf16> to vector<2x16x16x32xbf16>
    %65 = vector.shape_cast %64 : vector<2x16x16x32xbf16> to vector<2x8x2x16x32xbf16>
    %66 = vector.extract_strided_slice %65 {offsets = [0, 0, 0, 0, 0], sizes = [2, 8, 1, 16, 32], strides = [1, 1, 1, 1, 1]} : vector<2x8x2x16x32xbf16> to vector<2x8x1x16x32xbf16>
    %67 = vector.shape_cast %66 : vector<2x8x1x16x32xbf16> to vector<2x8x16x32xbf16>
    %68 = tpu.concatenate %35, %39, %43, %47, %51, %55, %59, %63, %67 in 3 : vector<2x8x16x32xbf16>, vector<2x8x16x32xbf16>, vector<2x8x16x32xbf16>, vector<2x8x16x32xbf16>, vector<2x8x16x32xbf16>, vector<2x8x16x32xbf16>, vector<2x8x16x32xbf16>, vector<2x8x16x32xbf16>, vector<2x8x16x32xbf16> -> vector<2x8x16x288xbf16>
    %69 = vector.shape_cast %68 : vector<2x8x16x288xbf16> to vector<256x288xbf16>
    %c0_21 = arith.constant 0 : index
    %c0_22 = arith.constant 0 : index
    %70 = vector.load %arg3[%c0_21, %c0_22] : memref<288x64xbf16, #tpu.memory_space<vmem>>, vector<288x64xbf16>
    %cst_23 = arith.constant dense<0.000000e+00> : vector<256x64xf32>
    %71 = tpu.matmul %69, %70, %cst_23 {dimension_numbers = #tpu.dot_dimension_numbers<[1], [0], [0], [1], [0, 0, 1, 1], [], []>} : vector<256x288xbf16>, vector<288x64xbf16>, vector<256x64xf32> -> vector<256x64xf32>
    %c0_24 = arith.constant 0 : index
    %c0_25 = arith.constant 0 : index
    %72 = vector.load %arg4[%c0_24, %c0_25] : memref<1x64xf32, #tpu.memory_space<vmem>>, vector<1x64xf32>
    %73 = vector.broadcast %72 : vector<1x64xf32> to vector<256x64xf32>
    %74 = arith.addf %71, %73 : vector<256x64xf32>
    %75 = vector.shape_cast %74 : vector<256x64xf32> to vector<2x8x16x64xf32>
    %76 = vector.shape_cast %75 : vector<2x8x16x64xf32> to vector<2x8x8x2x64xf32>
    %77 = vector.extract_strided_slice %76 {offsets = [0, 0, 0, 0, 0], sizes = [2, 8, 8, 1, 64], strides = [1, 1, 1, 1, 1]} : vector<2x8x8x2x64xf32> to vector<2x8x8x1x64xf32>
    %78 = vector.shape_cast %77 : vector<2x8x8x1x64xf32> to vector<2x8x8x64xf32>
    %c0_26 = arith.constant 0 : index
    %c0_27 = arith.constant 0 : index
    %c0_28 = arith.constant 0 : index
    %c0_29 = arith.constant 0 : index
    %79 = vector.load %arg16[%c0_26, %c0_27, %c0_28, %c0_29] : memref<2x8x8x64xf32, #tpu.memory_space<vmem>>, vector<2x8x8x64xf32>
    tpu.vector_store %arg16[%c0_26, %c0_27, %c0_28, %c0_29], %78 {strides = array<i32>} : memref<2x8x8x64xf32, #tpu.memory_space<vmem>>, vector<2x8x8x64xf32>,
    %c0_30 = arith.constant 0 : index
    %c0_31 = arith.constant 0 : index
    %c0_32 = arith.constant 0 : index
    %c0_33 = arith.constant 0 : index
    %80 = vector.load %arg16[%c0_30, %c0_31, %c0_32, %c0_33] : memref<2x8x8x64xf32, #tpu.memory_space<vmem>>, vector<2x8x8x64xf32>
    %81 = arith.truncf %80 : vector<2x8x8x64xf32> to vector<2x8x8x64xbf16>
    %cst_34 = arith.constant 0.000000e+00 : bf16
    %82 = vector.broadcast %cst_34 : bf16 to vector<2x1x8x64xbf16>
    %83 = tpu.concatenate %82, %81, %82 in 1 : vector<2x1x8x64xbf16>, vector<2x8x8x64xbf16>, vector<2x1x8x64xbf16> -> vector<2x10x8x64xbf16>
    %cst_35 = arith.constant 0.000000e+00 : bf16
    %84 = vector.broadcast %cst_35 : bf16 to vector<2x10x1x64xbf16>
    %cst_36 = arith.constant 0.000000e+00 : bf16
    %85 = vector.broadcast %cst_36 : bf16 to vector<2x10x1x64xbf16>
    %86 = tpu.concatenate %84, %83, %85 in 2 : vector<2x10x1x64xbf16>, vector<2x10x8x64xbf16>, vector<2x10x1x64xbf16> -> vector<2x10x10x64xbf16>
    %87 = vector.extract_strided_slice %86 {offsets = [0, 0, 0, 0], sizes = [2, 8, 8, 64], strides = [1, 1, 1, 1]} : vector<2x10x10x64xbf16> to vector<2x8x8x64xbf16>
    %88 = vector.shape_cast %87 : vector<2x8x8x64xbf16> to vector<2x4x2x8x64xbf16>
    %89 = vector.extract_strided_slice %88 {offsets = [0, 0, 0, 0, 0], sizes = [2, 4, 1, 8, 64], strides = [1, 1, 1, 1, 1]} : vector<2x4x2x8x64xbf16> to vector<2x4x1x8x64xbf16>
    %90 = vector.shape_cast %89 : vector<2x4x1x8x64xbf16> to vector<2x4x8x64xbf16>
    %91 = vector.extract_strided_slice %86 {offsets = [0, 0, 1, 0], sizes = [2, 8, 8, 64], strides = [1, 1, 1, 1]} : vector<2x10x10x64xbf16> to vector<2x8x8x64xbf16>
    %92 = vector.shape_cast %91 : vector<2x8x8x64xbf16> to vector<2x4x2x8x64xbf16>
    %93 = vector.extract_strided_slice %92 {offsets = [0, 0, 0, 0, 0], sizes = [2, 4, 1, 8, 64], strides = [1, 1, 1, 1, 1]} : vector<2x4x2x8x64xbf16> to vector<2x4x1x8x64xbf16>
    %94 = vector.shape_cast %93 : vector<2x4x1x8x64xbf16> to vector<2x4x8x64xbf16>
    %95 = vector.extract_strided_slice %86 {offsets = [0, 0, 2, 0], sizes = [2, 8, 8, 64], strides = [1, 1, 1, 1]} : vector<2x10x10x64xbf16> to vector<2x8x8x64xbf16>
    %96 = vector.shape_cast %95 : vector<2x8x8x64xbf16> to vector<2x4x2x8x64xbf16>
    %97 = vector.extract_strided_slice %96 {offsets = [0, 0, 0, 0, 0], sizes = [2, 4, 1, 8, 64], strides = [1, 1, 1, 1, 1]} : vector<2x4x2x8x64xbf16> to vector<2x4x1x8x64xbf16>
    %98 = vector.shape_cast %97 : vector<2x4x1x8x64xbf16> to vector<2x4x8x64xbf16>
    %99 = vector.extract_strided_slice %86 {offsets = [0, 1, 0, 0], sizes = [2, 8, 8, 64], strides = [1, 1, 1, 1]} : vector<2x10x10x64xbf16> to vector<2x8x8x64xbf16>
    %100 = vector.shape_cast %99 : vector<2x8x8x64xbf16> to vector<2x4x2x8x64xbf16>
    %101 = vector.extract_strided_slice %100 {offsets = [0, 0, 0, 0, 0], sizes = [2, 4, 1, 8, 64], strides = [1, 1, 1, 1, 1]} : vector<2x4x2x8x64xbf16> to vector<2x4x1x8x64xbf16>
    %102 = vector.shape_cast %101 : vector<2x4x1x8x64xbf16> to vector<2x4x8x64xbf16>
    %103 = vector.extract_strided_slice %86 {offsets = [0, 1, 1, 0], sizes = [2, 8, 8, 64], strides = [1, 1, 1, 1]} : vector<2x10x10x64xbf16> to vector<2x8x8x64xbf16>
    %104 = vector.shape_cast %103 : vector<2x8x8x64xbf16> to vector<2x4x2x8x64xbf16>
    %105 = vector.extract_strided_slice %104 {offsets = [0, 0, 0, 0, 0], sizes = [2, 4, 1, 8, 64], strides = [1, 1, 1, 1, 1]} : vector<2x4x2x8x64xbf16> to vector<2x4x1x8x64xbf16>
    %106 = vector.shape_cast %105 : vector<2x4x1x8x64xbf16> to vector<2x4x8x64xbf16>
    %107 = vector.extract_strided_slice %86 {offsets = [0, 1, 2, 0], sizes = [2, 8, 8, 64], strides = [1, 1, 1, 1]} : vector<2x10x10x64xbf16> to vector<2x8x8x64xbf16>
    %108 = vector.shape_cast %107 : vector<2x8x8x64xbf16> to vector<2x4x2x8x64xbf16>
    %109 = vector.extract_strided_slice %108 {offsets = [0, 0, 0, 0, 0], sizes = [2, 4, 1, 8, 64], strides = [1, 1, 1, 1, 1]} : vector<2x4x2x8x64xbf16> to vector<2x4x1x8x64xbf16>
    %110 = vector.shape_cast %109 : vector<2x4x1x8x64xbf16> to vector<2x4x8x64xbf16>
    %111 = vector.extract_strided_slice %86 {offsets = [0, 2, 0, 0], sizes = [2, 8, 8, 64], strides = [1, 1, 1, 1]} : vector<2x10x10x64xbf16> to vector<2x8x8x64xbf16>
    %112 = vector.shape_cast %111 : vector<2x8x8x64xbf16> to vector<2x4x2x8x64xbf16>
    %113 = vector.extract_strided_slice %112 {offsets = [0, 0, 0, 0, 0], sizes = [2, 4, 1, 8, 64], strides = [1, 1, 1, 1, 1]} : vector<2x4x2x8x64xbf16> to vector<2x4x1x8x64xbf16>
    %114 = vector.shape_cast %113 : vector<2x4x1x8x64xbf16> to vector<2x4x8x64xbf16>
    %115 = vector.extract_strided_slice %86 {offsets = [0, 2, 1, 0], sizes = [2, 8, 8, 64], strides = [1, 1, 1, 1]} : vector<2x10x10x64xbf16> to vector<2x8x8x64xbf16>
    %116 = vector.shape_cast %115 : vector<2x8x8x64xbf16> to vector<2x4x2x8x64xbf16>
    %117 = vector.extract_strided_slice %116 {offsets = [0, 0, 0, 0, 0], sizes = [2, 4, 1, 8, 64], strides = [1, 1, 1, 1, 1]} : vector<2x4x2x8x64xbf16> to vector<2x4x1x8x64xbf16>
    %118 = vector.shape_cast %117 : vector<2x4x1x8x64xbf16> to vector<2x4x8x64xbf16>
    %119 = vector.extract_strided_slice %86 {offsets = [0, 2, 2, 0], sizes = [2, 8, 8, 64], strides = [1, 1, 1, 1]} : vector<2x10x10x64xbf16> to vector<2x8x8x64xbf16>
    %120 = vector.shape_cast %119 : vector<2x8x8x64xbf16> to vector<2x4x2x8x64xbf16>
    %121 = vector.extract_strided_slice %120 {offsets = [0, 0, 0, 0, 0], sizes = [2, 4, 1, 8, 64], strides = [1, 1, 1, 1, 1]} : vector<2x4x2x8x64xbf16> to vector<2x4x1x8x64xbf16>
    %122 = vector.shape_cast %121 : vector<2x4x1x8x64xbf16> to vector<2x4x8x64xbf16>
    %123 = tpu.concatenate %90, %94, %98, %102, %106, %110, %114, %118, %122 in 3 : vector<2x4x8x64xbf16>, vector<2x4x8x64xbf16>, vector<2x4x8x64xbf16>, vector<2x4x8x64xbf16>, vector<2x4x8x64xbf16>, vector<2x4x8x64xbf16>, vector<2x4x8x64xbf16>, vector<2x4x8x64xbf16>, vector<2x4x8x64xbf16> -> vector<2x4x8x576xbf16>
    %124 = vector.shape_cast %123 : vector<2x4x8x576xbf16> to vector<64x576xbf16>
    %c0_37 = arith.constant 0 : index
    %c0_38 = arith.constant 0 : index
    %125 = vector.load %arg5[%c0_37, %c0_38] : memref<576x128xbf16, #tpu.memory_space<vmem>>, vector<576x128xbf16>
    %cst_39 = arith.constant dense<0.000000e+00> : vector<64x128xf32>
    %126 = tpu.matmul %124, %125, %cst_39 {dimension_numbers = #tpu.dot_dimension_numbers<[1], [0], [0], [1], [0, 0, 1, 1], [], []>} : vector<64x576xbf16>, vector<576x128xbf16>, vector<64x128xf32> -> vector<64x128xf32>
    %c0_40 = arith.constant 0 : index
    %c0_41 = arith.constant 0 : index
    %127 = vector.load %arg6[%c0_40, %c0_41] : memref<1x128xf32, #tpu.memory_space<vmem>>, vector<1x128xf32>
    %128 = vector.broadcast %127 : vector<1x128xf32> to vector<64x128xf32>
    %129 = arith.addf %126, %128 : vector<64x128xf32>
    %130 = vector.shape_cast %129 : vector<64x128xf32> to vector<2x4x8x128xf32>
    %131 = vector.shape_cast %130 : vector<2x4x8x128xf32> to vector<2x4x4x2x128xf32>
    %132 = vector.extract_strided_slice %131 {offsets = [0, 0, 0, 0, 0], sizes = [2, 4, 4, 1, 128], strides = [1, 1, 1, 1, 1]} : vector<2x4x4x2x128xf32> to vector<2x4x4x1x128xf32>
    %133 = vector.shape_cast %132 : vector<2x4x4x1x128xf32> to vector<2x4x4x128xf32>
    %c0_42 = arith.constant 0 : index
    %c0_43 = arith.constant 0 : index
    %c0_44 = arith.constant 0 : index
    %c0_45 = arith.constant 0 : index
    %134 = vector.load %arg17[%c0_42, %c0_43, %c0_44, %c0_45] : memref<2x4x4x128xf32, #tpu.memory_space<vmem>>, vector<2x4x4x128xf32>
    tpu.vector_store %arg17[%c0_42, %c0_43, %c0_44, %c0_45], %133 {strides = array<i32>} : memref<2x4x4x128xf32, #tpu.memory_space<vmem>>, vector<2x4x4x128xf32>,
    %c0_46 = arith.constant 0 : index
    %c0_47 = arith.constant 0 : index
    %c0_48 = arith.constant 0 : index
    %c0_49 = arith.constant 0 : index
    %135 = vector.load %arg17[%c0_46, %c0_47, %c0_48, %c0_49] : memref<2x4x4x128xf32, #tpu.memory_space<vmem>>, vector<2x4x4x128xf32>
    %136 = arith.truncf %135 : vector<2x4x4x128xf32> to vector<2x4x4x128xbf16>
    %cst_50 = arith.constant 0.000000e+00 : bf16
    %137 = vector.broadcast %cst_50 : bf16 to vector<2x1x4x128xbf16>
    %138 = tpu.concatenate %137, %136, %137 in 1 : vector<2x1x4x128xbf16>, vector<2x4x4x128xbf16>, vector<2x1x4x128xbf16> -> vector<2x6x4x128xbf16>
    %cst_51 = arith.constant 0.000000e+00 : bf16
    %139 = vector.broadcast %cst_51 : bf16 to vector<2x6x1x128xbf16>
    %cst_52 = arith.constant 0.000000e+00 : bf16
    %140 = vector.broadcast %cst_52 : bf16 to vector<2x6x5x128xbf16>
    %141 = tpu.concatenate %139, %138, %140 in 2 : vector<2x6x1x128xbf16>, vector<2x6x4x128xbf16>, vector<2x6x5x128xbf16> -> vector<2x6x10x128xbf16>
    %142 = vector.extract_strided_slice %141 {offsets = [0, 0, 0, 0], sizes = [2, 4, 8, 128], strides = [1, 1, 1, 1]} : vector<2x6x10x128xbf16> to vector<2x4x8x128xbf16>
    %143 = vector.shape_cast %142 : vector<2x4x8x128xbf16> to vector<2x2x2x8x128xbf16>
    %144 = vector.extract_strided_slice %143 {offsets = [0, 0, 0, 0, 0], sizes = [2, 2, 1, 8, 128], strides = [1, 1, 1, 1, 1]} : vector<2x2x2x8x128xbf16> to vector<2x2x1x8x128xbf16>
    %145 = vector.shape_cast %144 : vector<2x2x1x8x128xbf16> to vector<2x2x8x128xbf16>
    %146 = vector.extract_strided_slice %141 {offsets = [0, 0, 1, 0], sizes = [2, 4, 8, 128], strides = [1, 1, 1, 1]} : vector<2x6x10x128xbf16> to vector<2x4x8x128xbf16>
    %147 = vector.shape_cast %146 : vector<2x4x8x128xbf16> to vector<2x2x2x8x128xbf16>
    %148 = vector.extract_strided_slice %147 {offsets = [0, 0, 0, 0, 0], sizes = [2, 2, 1, 8, 128], strides = [1, 1, 1, 1, 1]} : vector<2x2x2x8x128xbf16> to vector<2x2x1x8x128xbf16>
    %149 = vector.shape_cast %148 : vector<2x2x1x8x128xbf16> to vector<2x2x8x128xbf16>
    %150 = vector.extract_strided_slice %141 {offsets = [0, 0, 2, 0], sizes = [2, 4, 8, 128], strides = [1, 1, 1, 1]} : vector<2x6x10x128xbf16> to vector<2x4x8x128xbf16>
    %151 = vector.shape_cast %150 : vector<2x4x8x128xbf16> to vector<2x2x2x8x128xbf16>
    %152 = vector.extract_strided_slice %151 {offsets = [0, 0, 0, 0, 0], sizes = [2, 2, 1, 8, 128], strides = [1, 1, 1, 1, 1]} : vector<2x2x2x8x128xbf16> to vector<2x2x1x8x128xbf16>
    %153 = vector.shape_cast %152 : vector<2x2x1x8x128xbf16> to vector<2x2x8x128xbf16>
    %154 = vector.extract_strided_slice %141 {offsets = [0, 1, 0, 0], sizes = [2, 4, 8, 128], strides = [1, 1, 1, 1]} : vector<2x6x10x128xbf16> to vector<2x4x8x128xbf16>
    %155 = vector.shape_cast %154 : vector<2x4x8x128xbf16> to vector<2x2x2x8x128xbf16>
    %156 = vector.extract_strided_slice %155 {offsets = [0, 0, 0, 0, 0], sizes = [2, 2, 1, 8, 128], strides = [1, 1, 1, 1, 1]} : vector<2x2x2x8x128xbf16> to vector<2x2x1x8x128xbf16>
    %157 = vector.shape_cast %156 : vector<2x2x1x8x128xbf16> to vector<2x2x8x128xbf16>
    %158 = vector.extract_strided_slice %141 {offsets = [0, 1, 1, 0], sizes = [2, 4, 8, 128], strides = [1, 1, 1, 1]} : vector<2x6x10x128xbf16> to vector<2x4x8x128xbf16>
    %159 = vector.shape_cast %158 : vector<2x4x8x128xbf16> to vector<2x2x2x8x128xbf16>
    %160 = vector.extract_strided_slice %159 {offsets = [0, 0, 0, 0, 0], sizes = [2, 2, 1, 8, 128], strides = [1, 1, 1, 1, 1]} : vector<2x2x2x8x128xbf16> to vector<2x2x1x8x128xbf16>
    %161 = vector.shape_cast %160 : vector<2x2x1x8x128xbf16> to vector<2x2x8x128xbf16>
    %162 = vector.extract_strided_slice %141 {offsets = [0, 1, 2, 0], sizes = [2, 4, 8, 128], strides = [1, 1, 1, 1]} : vector<2x6x10x128xbf16> to vector<2x4x8x128xbf16>
    %163 = vector.shape_cast %162 : vector<2x4x8x128xbf16> to vector<2x2x2x8x128xbf16>
    %164 = vector.extract_strided_slice %163 {offsets = [0, 0, 0, 0, 0], sizes = [2, 2, 1, 8, 128], strides = [1, 1, 1, 1, 1]} : vector<2x2x2x8x128xbf16> to vector<2x2x1x8x128xbf16>
    %165 = vector.shape_cast %164 : vector<2x2x1x8x128xbf16> to vector<2x2x8x128xbf16>
    %166 = vector.extract_strided_slice %141 {offsets = [0, 2, 0, 0], sizes = [2, 4, 8, 128], strides = [1, 1, 1, 1]} : vector<2x6x10x128xbf16> to vector<2x4x8x128xbf16>
    %167 = vector.shape_cast %166 : vector<2x4x8x128xbf16> to vector<2x2x2x8x128xbf16>
    %168 = vector.extract_strided_slice %167 {offsets = [0, 0, 0, 0, 0], sizes = [2, 2, 1, 8, 128], strides = [1, 1, 1, 1, 1]} : vector<2x2x2x8x128xbf16> to vector<2x2x1x8x128xbf16>
    %169 = vector.shape_cast %168 : vector<2x2x1x8x128xbf16> to vector<2x2x8x128xbf16>
    %170 = vector.extract_strided_slice %141 {offsets = [0, 2, 1, 0], sizes = [2, 4, 8, 128], strides = [1, 1, 1, 1]} : vector<2x6x10x128xbf16> to vector<2x4x8x128xbf16>
    %171 = vector.shape_cast %170 : vector<2x4x8x128xbf16> to vector<2x2x2x8x128xbf16>
    %172 = vector.extract_strided_slice %171 {offsets = [0, 0, 0, 0, 0], sizes = [2, 2, 1, 8, 128], strides = [1, 1, 1, 1, 1]} : vector<2x2x2x8x128xbf16> to vector<2x2x1x8x128xbf16>
    %173 = vector.shape_cast %172 : vector<2x2x1x8x128xbf16> to vector<2x2x8x128xbf16>
    %174 = vector.extract_strided_slice %141 {offsets = [0, 2, 2, 0], sizes = [2, 4, 8, 128], strides = [1, 1, 1, 1]} : vector<2x6x10x128xbf16> to vector<2x4x8x128xbf16>
    %175 = vector.shape_cast %174 : vector<2x4x8x128xbf16> to vector<2x2x2x8x128xbf16>
    %176 = vector.extract_strided_slice %175 {offsets = [0, 0, 0, 0, 0], sizes = [2, 2, 1, 8, 128], strides = [1, 1, 1, 1, 1]} : vector<2x2x2x8x128xbf16> to vector<2x2x1x8x128xbf16>
    %177 = vector.shape_cast %176 : vector<2x2x1x8x128xbf16> to vector<2x2x8x128xbf16>
    %178 = tpu.concatenate %145, %149, %153, %157, %161, %165, %169, %173, %177 in 3 : vector<2x2x8x128xbf16>, vector<2x2x8x128xbf16>, vector<2x2x8x128xbf16>, vector<2x2x8x128xbf16>, vector<2x2x8x128xbf16>, vector<2x2x8x128xbf16>, vector<2x2x8x128xbf16>, vector<2x2x8x128xbf16>, vector<2x2x8x128xbf16> -> vector<2x2x8x1152xbf16>
    %179 = vector.shape_cast %178 : vector<2x2x8x1152xbf16> to vector<32x1152xbf16>
    %c0_53 = arith.constant 0 : index
    %c0_54 = arith.constant 0 : index
    %180 = vector.load %arg7[%c0_53, %c0_54] : memref<1152x256xbf16, #tpu.memory_space<vmem>>, vector<1152x256xbf16>
    %cst_55 = arith.constant dense<0.000000e+00> : vector<32x256xf32>
    %181 = tpu.matmul %179, %180, %cst_55 {dimension_numbers = #tpu.dot_dimension_numbers<[1], [0], [0], [1], [0, 0, 1, 1], [], []>} : vector<32x1152xbf16>, vector<1152x256xbf16>, vector<32x256xf32> -> vector<32x256xf32>
    %c0_56 = arith.constant 0 : index
    %c0_57 = arith.constant 0 : index
    %182 = vector.load %arg8[%c0_56, %c0_57] : memref<1x256xf32, #tpu.memory_space<vmem>>, vector<1x256xf32>
    %183 = vector.broadcast %182 : vector<1x256xf32> to vector<32x256xf32>
    %184 = arith.addf %181, %183 : vector<32x256xf32>
    %185 = vector.shape_cast %184 : vector<32x256xf32> to vector<2x2x8x256xf32>
    %186 = vector.shape_cast %185 : vector<2x2x8x256xf32> to vector<2x2x4x2x256xf32>
    %187 = vector.extract_strided_slice %186 {offsets = [0, 0, 0, 0, 0], sizes = [2, 2, 4, 1, 256], strides = [1, 1, 1, 1, 1]} : vector<2x2x4x2x256xf32> to vector<2x2x4x1x256xf32>
    %188 = vector.shape_cast %187 : vector<2x2x4x1x256xf32> to vector<2x2x4x256xf32>
    %189 = vector.extract_strided_slice %188 {offsets = [0, 0, 0, 0], sizes = [2, 2, 2, 256], strides = [1, 1, 1, 1]} : vector<2x2x4x256xf32> to vector<2x2x2x256xf32>
    %cst_58 = arith.constant 0.000000e+00 : f32
    %190 = vector.broadcast %cst_58 : f32 to vector<2x2x2x256xf32>
    %191 = arith.subf %190, %189 : vector<2x2x2x256xf32>
    %192 = math.exp %191 : vector<2x2x2x256xf32>
    %cst_59 = arith.constant 1.000000e+00 : f32
    %193 = vector.broadcast %cst_59 : f32 to vector<2x2x2x256xf32>
    %194 = arith.addf %193, %192 : vector<2x2x2x256xf32>
    %195 = tpu.reciprocal %194 {approx = true} : vector<2x2x2x256xf32> -> vector<2x2x2x256xf32>
    %c0_60 = arith.constant 0 : index
    %c0_61 = arith.constant 0 : index
    %c0_62 = arith.constant 0 : index
    %c0_63 = arith.constant 0 : index
    %196 = vector.load %arg13[%c0_60, %c0_61, %c0_62, %c0_63] : memref<2x2x2x256xf32, #tpu.memory_space<vmem>>, vector<2x2x2x256xf32>
    tpu.vector_store %arg13[%c0_60, %c0_61, %c0_62, %c0_63], %195 {strides = array<i32>} : memref<2x2x2x256xf32, #tpu.memory_space<vmem>>, vector<2x2x2x256xf32>,
    %197 = vector.extract_strided_slice %195 {offsets = [0, 0, 0, 0], sizes = [2, 2, 1, 256], strides = [1, 1, 1, 1]} : vector<2x2x2x256xf32> to vector<2x2x1x256xf32>
    %198 = vector.extract_strided_slice %195 {offsets = [0, 0, 0, 0], sizes = [2, 2, 1, 256], strides = [1, 1, 1, 1]} : vector<2x2x2x256xf32> to vector<2x2x1x256xf32>
    %199 = tpu.concatenate %197, %198 in 2 : vector<2x2x1x256xf32>, vector<2x2x1x256xf32> -> vector<2x2x2x256xf32>
    %200 = vector.extract_strided_slice %195 {offsets = [0, 0, 1, 0], sizes = [2, 2, 1, 256], strides = [1, 1, 1, 1]} : vector<2x2x2x256xf32> to vector<2x2x1x256xf32>
    %201 = vector.extract_strided_slice %195 {offsets = [0, 0, 1, 0], sizes = [2, 2, 1, 256], strides = [1, 1, 1, 1]} : vector<2x2x2x256xf32> to vector<2x2x1x256xf32>
    %202 = tpu.concatenate %200, %201 in 2 : vector<2x2x1x256xf32>, vector<2x2x1x256xf32> -> vector<2x2x2x256xf32>
    %cst_64 = arith.constant 7.500000e-01 : f32
    %203 = vector.broadcast %cst_64 : f32 to vector<2x2x2x256xf32>
    %204 = arith.mulf %203, %195 : vector<2x2x2x256xf32>
    %cst_65 = arith.constant 2.500000e-01 : f32
    %205 = vector.broadcast %cst_65 : f32 to vector<2x2x2x256xf32>
    %206 = arith.mulf %205, %199 : vector<2x2x2x256xf32>
    %207 = arith.addf %204, %206 : vector<2x2x2x256xf32>
    %cst_66 = arith.constant 7.500000e-01 : f32
    %208 = vector.broadcast %cst_66 : f32 to vector<2x2x2x256xf32>
    %209 = arith.mulf %208, %195 : vector<2x2x2x256xf32>
    %cst_67 = arith.constant 2.500000e-01 : f32
    %210 = vector.broadcast %cst_67 : f32 to vector<2x2x2x256xf32>
    %211 = arith.mulf %210, %202 : vector<2x2x2x256xf32>
    %212 = arith.addf %209, %211 : vector<2x2x2x256xf32>
    %213 = vector.shape_cast %207 : vector<2x2x2x256xf32> to vector<2x2x2x1x256xf32>
    %214 = vector.shape_cast %212 : vector<2x2x2x256xf32> to vector<2x2x2x1x256xf32>
    %215 = tpu.concatenate %213, %214 in 3 : vector<2x2x2x1x256xf32>, vector<2x2x2x1x256xf32> -> vector<2x2x2x2x256xf32>
    %216 = vector.shape_cast %215 : vector<2x2x2x2x256xf32> to vector<2x2x4x256xf32>
    %217 = arith.truncf %216 : vector<2x2x4x256xf32> to vector<2x2x4x256xbf16>
    %cst_68 = arith.constant 0.000000e+00 : bf16
    %218 = vector.broadcast %cst_68 : bf16 to vector<2x1x4x256xbf16>
    %219 = tpu.concatenate %218, %217, %218 in 1 : vector<2x1x4x256xbf16>, vector<2x2x4x256xbf16>, vector<2x1x4x256xbf16> -> vector<2x4x4x256xbf16>
    %cst_69 = arith.constant 0.000000e+00 : bf16
    %220 = vector.broadcast %cst_69 : bf16 to vector<2x4x1x256xbf16>
    %cst_70 = arith.constant 0.000000e+00 : bf16
    %221 = vector.broadcast %cst_70 : bf16 to vector<2x4x5x256xbf16>
    %222 = tpu.concatenate %220, %219, %221 in 2 : vector<2x4x1x256xbf16>, vector<2x4x4x256xbf16>, vector<2x4x5x256xbf16> -> vector<2x4x10x256xbf16>
    %223 = vector.extract_strided_slice %222 {offsets = [0, 0, 0, 0], sizes = [2, 2, 8, 256], strides = [1, 1, 1, 1]} : vector<2x4x10x256xbf16> to vector<2x2x8x256xbf16>
    %224 = vector.extract_strided_slice %222 {offsets = [0, 0, 1, 0], sizes = [2, 2, 8, 256], strides = [1, 1, 1, 1]} : vector<2x4x10x256xbf16> to vector<2x2x8x256xbf16>
    %225 = vector.extract_strided_slice %222 {offsets = [0, 0, 2, 0], sizes = [2, 2, 8, 256], strides = [1, 1, 1, 1]} : vector<2x4x10x256xbf16> to vector<2x2x8x256xbf16>
    %226 = vector.extract_strided_slice %222 {offsets = [0, 1, 0, 0], sizes = [2, 2, 8, 256], strides = [1, 1, 1, 1]} : vector<2x4x10x256xbf16> to vector<2x2x8x256xbf16>
    %227 = vector.extract_strided_slice %222 {offsets = [0, 1, 1, 0], sizes = [2, 2, 8, 256], strides = [1, 1, 1, 1]} : vector<2x4x10x256xbf16> to vector<2x2x8x256xbf16>
    %228 = vector.extract_strided_slice %222 {offsets = [0, 1, 2, 0], sizes = [2, 2, 8, 256], strides = [1, 1, 1, 1]} : vector<2x4x10x256xbf16> to vector<2x2x8x256xbf16>
    %229 = vector.extract_strided_slice %222 {offsets = [0, 2, 0, 0], sizes = [2, 2, 8, 256], strides = [1, 1, 1, 1]} : vector<2x4x10x256xbf16> to vector<2x2x8x256xbf16>
    %230 = vector.extract_strided_slice %222 {offsets = [0, 2, 1, 0], sizes = [2, 2, 8, 256], strides = [1, 1, 1, 1]} : vector<2x4x10x256xbf16> to vector<2x2x8x256xbf16>
    %231 = vector.extract_strided_slice %222 {offsets = [0, 2, 2, 0], sizes = [2, 2, 8, 256], strides = [1, 1, 1, 1]} : vector<2x4x10x256xbf16> to vector<2x2x8x256xbf16>
    %232 = tpu.concatenate %223, %224, %225, %226, %227, %228, %229, %230, %231 in 3 : vector<2x2x8x256xbf16>, vector<2x2x8x256xbf16>, vector<2x2x8x256xbf16>, vector<2x2x8x256xbf16>, vector<2x2x8x256xbf16>, vector<2x2x8x256xbf16>, vector<2x2x8x256xbf16>, vector<2x2x8x256xbf16>, vector<2x2x8x256xbf16> -> vector<2x2x8x2304xbf16>
    %233 = vector.shape_cast %232 : vector<2x2x8x2304xbf16> to vector<32x2304xbf16>
    %c0_71 = arith.constant 0 : index
    %c0_72 = arith.constant 0 : index
    %234 = vector.load %arg9[%c0_71, %c0_72] : memref<2304x128xbf16, #tpu.memory_space<vmem>>, vector<2304x128xbf16>
    %cst_73 = arith.constant dense<0.000000e+00> : vector<32x128xf32>
    %235 = tpu.matmul %233, %234, %cst_73 {dimension_numbers = #tpu.dot_dimension_numbers<[1], [0], [0], [1], [0, 0, 1, 1], [], []>} : vector<32x2304xbf16>, vector<2304x128xbf16>, vector<32x128xf32> -> vector<32x128xf32>
    %c0_74 = arith.constant 0 : index
    %c0_75 = arith.constant 0 : index
    %236 = vector.load %arg10[%c0_74, %c0_75] : memref<1x128xf32, #tpu.memory_space<vmem>>, vector<1x128xf32>
    %237 = vector.broadcast %236 : vector<1x128xf32> to vector<32x128xf32>
    %238 = arith.addf %235, %237 : vector<32x128xf32>
    %239 = vector.shape_cast %238 : vector<32x128xf32> to vector<2x2x8x128xf32>
    %240 = vector.extract_strided_slice %239 {offsets = [0, 0, 0, 0], sizes = [2, 2, 4, 128], strides = [1, 1, 1, 1]} : vector<2x2x8x128xf32> to vector<2x2x4x128xf32>
    %241 = vector.extract_strided_slice %240 {offsets = [0, 0, 0, 0], sizes = [2, 2, 1, 128], strides = [1, 1, 1, 1]} : vector<2x2x4x128xf32> to vector<2x2x1x128xf32>
    %242 = vector.extract_strided_slice %240 {offsets = [0, 0, 0, 0], sizes = [2, 2, 3, 128], strides = [1, 1, 1, 1]} : vector<2x2x4x128xf32> to vector<2x2x3x128xf32>
    %243 = tpu.concatenate %241, %242 in 2 : vector<2x2x1x128xf32>, vector<2x2x3x128xf32> -> vector<2x2x4x128xf32>
    %244 = vector.extract_strided_slice %240 {offsets = [0, 0, 1, 0], sizes = [2, 2, 3, 128], strides = [1, 1, 1, 1]} : vector<2x2x4x128xf32> to vector<2x2x3x128xf32>
    %245 = vector.extract_strided_slice %240 {offsets = [0, 0, 3, 0], sizes = [2, 2, 1, 128], strides = [1, 1, 1, 1]} : vector<2x2x4x128xf32> to vector<2x2x1x128xf32>
    %246 = tpu.concatenate %244, %245 in 2 : vector<2x2x3x128xf32>, vector<2x2x1x128xf32> -> vector<2x2x4x128xf32>
    %cst_76 = arith.constant 7.500000e-01 : f32
    %247 = vector.broadcast %cst_76 : f32 to vector<2x2x4x128xf32>
    %248 = arith.mulf %247, %240 : vector<2x2x4x128xf32>
    %cst_77 = arith.constant 2.500000e-01 : f32
    %249 = vector.broadcast %cst_77 : f32 to vector<2x2x4x128xf32>
    %250 = arith.mulf %249, %243 : vector<2x2x4x128xf32>
    %251 = arith.addf %248, %250 : vector<2x2x4x128xf32>
    %cst_78 = arith.constant 7.500000e-01 : f32
    %252 = vector.broadcast %cst_78 : f32 to vector<2x2x4x128xf32>
    %253 = arith.mulf %252, %240 : vector<2x2x4x128xf32>
    %cst_79 = arith.constant 2.500000e-01 : f32
    %254 = vector.broadcast %cst_79 : f32 to vector<2x2x4x128xf32>
    %255 = arith.mulf %254, %246 : vector<2x2x4x128xf32>
    %256 = arith.addf %253, %255 : vector<2x2x4x128xf32>
    %257 = vector.shape_cast %251 : vector<2x2x4x128xf32> to vector<2x2x4x1x128xf32>
    %258 = vector.shape_cast %256 : vector<2x2x4x128xf32> to vector<2x2x4x1x128xf32>
    %259 = tpu.concatenate %257, %258 in 3 : vector<2x2x4x1x128xf32>, vector<2x2x4x1x128xf32> -> vector<2x2x4x2x128xf32>
    %260 = vector.shape_cast %259 : vector<2x2x4x2x128xf32> to vector<2x2x8x128xf32>
    %261 = vector.extract_strided_slice %260 {offsets = [0, 0, 0, 0], sizes = [2, 2, 1, 128], strides = [1, 1, 1, 1]} : vector<2x2x8x128xf32> to vector<2x2x1x128xf32>
    %262 = vector.extract_strided_slice %260 {offsets = [0, 0, 0, 0], sizes = [2, 2, 7, 128], strides = [1, 1, 1, 1]} : vector<2x2x8x128xf32> to vector<2x2x7x128xf32>
    %263 = tpu.concatenate %261, %262 in 2 : vector<2x2x1x128xf32>, vector<2x2x7x128xf32> -> vector<2x2x8x128xf32>
    %264 = vector.extract_strided_slice %260 {offsets = [0, 0, 1, 0], sizes = [2, 2, 7, 128], strides = [1, 1, 1, 1]} : vector<2x2x8x128xf32> to vector<2x2x7x128xf32>
    %265 = vector.extract_strided_slice %260 {offsets = [0, 0, 7, 0], sizes = [2, 2, 1, 128], strides = [1, 1, 1, 1]} : vector<2x2x8x128xf32> to vector<2x2x1x128xf32>
    %266 = tpu.concatenate %264, %265 in 2 : vector<2x2x7x128xf32>, vector<2x2x1x128xf32> -> vector<2x2x8x128xf32>
    %cst_80 = arith.constant 7.500000e-01 : f32
    %267 = vector.broadcast %cst_80 : f32 to vector<2x2x8x128xf32>
    %268 = arith.mulf %267, %260 : vector<2x2x8x128xf32>
    %cst_81 = arith.constant 2.500000e-01 : f32
    %269 = vector.broadcast %cst_81 : f32 to vector<2x2x8x128xf32>
    %270 = arith.mulf %269, %263 : vector<2x2x8x128xf32>
    %271 = arith.addf %268, %270 : vector<2x2x8x128xf32>
    %cst_82 = arith.constant 7.500000e-01 : f32
    %272 = vector.broadcast %cst_82 : f32 to vector<2x2x8x128xf32>
    %273 = arith.mulf %272, %260 : vector<2x2x8x128xf32>
    %cst_83 = arith.constant 2.500000e-01 : f32
    %274 = vector.broadcast %cst_83 : f32 to vector<2x2x8x128xf32>
    %275 = arith.mulf %274, %266 : vector<2x2x8x128xf32>
    %276 = arith.addf %273, %275 : vector<2x2x8x128xf32>
    %277 = vector.shape_cast %271 : vector<2x2x8x128xf32> to vector<2x2x8x1x128xf32>
    %278 = vector.shape_cast %276 : vector<2x2x8x128xf32> to vector<2x2x8x1x128xf32>
    %279 = tpu.concatenate %277, %278 in 3 : vector<2x2x8x1x128xf32>, vector<2x2x8x1x128xf32> -> vector<2x2x8x2x128xf32>
    %280 = vector.shape_cast %279 : vector<2x2x8x2x128xf32> to vector<2x2x16x128xf32>
    %281 = arith.truncf %280 : vector<2x2x16x128xf32> to vector<2x2x16x128xbf16>
    %cst_84 = arith.constant 0.000000e+00 : bf16
    %282 = vector.broadcast %cst_84 : bf16 to vector<2x1x16x128xbf16>
    %283 = tpu.concatenate %282, %281, %282 in 1 : vector<2x1x16x128xbf16>, vector<2x2x16x128xbf16>, vector<2x1x16x128xbf16> -> vector<2x4x16x128xbf16>
    %cst_85 = arith.constant 0.000000e+00 : bf16
    %284 = vector.broadcast %cst_85 : bf16 to vector<2x4x1x128xbf16>
    %cst_86 = arith.constant 0.000000e+00 : bf16
    %285 = vector.broadcast %cst_86 : bf16 to vector<2x4x1x128xbf16>
    %286 = tpu.concatenate %284, %283, %285 in 2 : vector<2x4x1x128xbf16>, vector<2x4x16x128xbf16>, vector<2x4x1x128xbf16> -> vector<2x4x18x128xbf16>
    %287 = vector.extract_strided_slice %286 {offsets = [0, 0, 0, 0], sizes = [2, 2, 16, 128], strides = [1, 1, 1, 1]} : vector<2x4x18x128xbf16> to vector<2x2x16x128xbf16>
    %288 = vector.extract_strided_slice %286 {offsets = [0, 0, 1, 0], sizes = [2, 2, 16, 128], strides = [1, 1, 1, 1]} : vector<2x4x18x128xbf16> to vector<2x2x16x128xbf16>
    %289 = vector.extract_strided_slice %286 {offsets = [0, 0, 2, 0], sizes = [2, 2, 16, 128], strides = [1, 1, 1, 1]} : vector<2x4x18x128xbf16> to vector<2x2x16x128xbf16>
    %290 = vector.extract_strided_slice %286 {offsets = [0, 1, 0, 0], sizes = [2, 2, 16, 128], strides = [1, 1, 1, 1]} : vector<2x4x18x128xbf16> to vector<2x2x16x128xbf16>
    %291 = vector.extract_strided_slice %286 {offsets = [0, 1, 1, 0], sizes = [2, 2, 16, 128], strides = [1, 1, 1, 1]} : vector<2x4x18x128xbf16> to vector<2x2x16x128xbf16>
    %292 = vector.extract_strided_slice %286 {offsets = [0, 1, 2, 0], sizes = [2, 2, 16, 128], strides = [1, 1, 1, 1]} : vector<2x4x18x128xbf16> to vector<2x2x16x128xbf16>
    %293 = vector.extract_strided_slice %286 {offsets = [0, 2, 0, 0], sizes = [2, 2, 16, 128], strides = [1, 1, 1, 1]} : vector<2x4x18x128xbf16> to vector<2x2x16x128xbf16>
    %294 = vector.extract_strided_slice %286 {offsets = [0, 2, 1, 0], sizes = [2, 2, 16, 128], strides = [1, 1, 1, 1]} : vector<2x4x18x128xbf16> to vector<2x2x16x128xbf16>
    %295 = vector.extract_strided_slice %286 {offsets = [0, 2, 2, 0], sizes = [2, 2, 16, 128], strides = [1, 1, 1, 1]} : vector<2x4x18x128xbf16> to vector<2x2x16x128xbf16>
    %296 = tpu.concatenate %287, %288, %289, %290, %291, %292, %293, %294, %295 in 3 : vector<2x2x16x128xbf16>, vector<2x2x16x128xbf16>, vector<2x2x16x128xbf16>, vector<2x2x16x128xbf16>, vector<2x2x16x128xbf16>, vector<2x2x16x128xbf16>, vector<2x2x16x128xbf16>, vector<2x2x16x128xbf16>, vector<2x2x16x128xbf16> -> vector<2x2x16x1152xbf16>
    %297 = vector.shape_cast %296 : vector<2x2x16x1152xbf16> to vector<64x1152xbf16>
    %c0_87 = arith.constant 0 : index
    %c0_88 = arith.constant 0 : index
    %298 = vector.load %arg11[%c0_87, %c0_88] : memref<1152x3xbf16, #tpu.memory_space<vmem>>, vector<1152x3xbf16>
    %cst_89 = arith.constant dense<0.000000e+00> : vector<64x3xf32>
    %299 = tpu.matmul %297, %298, %cst_89 {dimension_numbers = #tpu.dot_dimension_numbers<[1], [0], [0], [1], [0, 0, 1, 1], [], []>} : vector<64x1152xbf16>, vector<1152x3xbf16>, vector<64x3xf32> -> vector<64x3xf32>
    %c0_90 = arith.constant 0 : index
    %c0_91 = arith.constant 0 : index
    %300 = vector.load %arg12[%c0_90, %c0_91] : memref<1x3xf32, #tpu.memory_space<vmem>>, vector<1x3xf32>
    %301 = vector.broadcast %300 : vector<1x3xf32> to vector<64x3xf32>
    %302 = arith.addf %299, %301 : vector<64x3xf32>
    %303 = vector.shape_cast %302 : vector<64x3xf32> to vector<2x2x16x3xf32>
    %c0_92 = arith.constant 0 : index
    %c0_93 = arith.constant 0 : index
    %c0_94 = arith.constant 0 : index
    %c0_95 = arith.constant 0 : index
    %304 = vector.load %arg14[%c0_92, %c0_93, %c0_94, %c0_95] : memref<2x2x16x3xf32, #tpu.memory_space<vmem>>, vector<2x2x16x3xf32>
    tpu.vector_store %arg14[%c0_92, %c0_93, %c0_94, %c0_95], %303 {strides = array<i32>} : memref<2x2x16x3xf32, #tpu.memory_space<vmem>>, vector<2x2x16x3xf32>,
    return
  }
}

</mosaic_0001>

<llo_original>
// kernel: autoencoder_forward.1
$region0: #{autoencoder_forward.1}
  #allocation0 [shape = 'u32[]', space=smem, size = 0x4, offset = 0x4, fixed_abs, tag = 'smem constant byte address 0x4 - core index']
  #allocation1 [shape = 'u32[72,128]{1,0:T(1,128)}', space=vmem, size = 0x9000, scoped, tag = 'internal scratch']
  #allocation2 [shape = 'f32[2,16,16,32]{3,2,1,0:T(8,128)}', space=vmem, size = 0x40000, scoped, tag = 'scratch operand']
  #allocation3 [shape = 'f32[2,8,8,64]{3,2,1,0:T(8,128)}', space=vmem, size = 0x10000, scoped, tag = 'scratch operand']
  #allocation4 [shape = 'f32[2,4,4,128]{3,2,1,0:T(4,128)}', space=vmem, size = 0x4000, scoped, tag = 'scratch operand']
  %s0 = inlined_call_operand.vmem [shape: f32[2,16,16,3], index: 0, kind: input, shape index: {}]
  %s1 = inlined_call_operand.vmem [shape: bf16[27,32], index: 1, kind: input, shape index: {}]
  %s2 = inlined_call_operand.vmem [shape: f32[1,32], index: 2, kind: input, shape index: {}]
  %s3 = inlined_call_operand.vmem [shape: bf16[288,64], index: 3, kind: input, shape index: {}]
  %s4 = inlined_call_operand.vmem [shape: f32[1,64], index: 4, kind: input, shape index: {}]
  %s5 = inlined_call_operand.hbm [shape: bf16[576,128], index: 5, kind: input, shape index: {}]
  %s6 = inlined_call_operand.vmem [shape: f32[1,128], index: 6, kind: input, shape index: {}]
  %s7 = inlined_call_operand.vmem [shape: bf16[1152,256], index: 7, kind: input, shape index: {}]
  %s8 = inlined_call_operand.vmem [shape: f32[1,256], index: 8, kind: input, shape index: {}]
  %s9 = inlined_call_operand.hbm [shape: bf16[2304,128], index: 9, kind: input, shape index: {}]
  %s10 = inlined_call_operand.vmem [shape: f32[1,128], index: 10, kind: input, shape index: {}]
  %s11 = inlined_call_operand.vmem [shape: bf16[1152,3], index: 11, kind: input, shape index: {}]
  %s12 = inlined_call_operand.vmem [shape: f32[1,3], index: 12, kind: input, shape index: {}]
  %s13 = inlined_call_operand.hbm [shape: f32[2,2,2,256], index: 13, kind: output, shape index: {0}]
  %s14 = inlined_call_operand.vmem [shape: f32[2,2,16,3], index: 14, kind: output, shape index: {1}]
  %15 = xla_tuple %s13, %s14
  %s16 = sld [smem:[#allocation0]]
  $region78: #{autoencoder_forward.1} parent=0
    _
  %s18 = ssub.s32 1, %s16
  %s19 = scalar_select 0, %s18, %s16
  $region1: #{autoencoder_forward.1} parent=0
    #allocation5 [shape = 'u8[147456]{0}', space=vmem, size = 0x24000, scoped, tag = 'input window, operand 5, single buffered']
    #allocation6 [shape = 's32[1]{0}', space=sflag, size = 0x4, scoped, tag = 'scoped memory for autoencoder_forward.1']
    #allocation7 [shape = 's32[1]{0}', space=sflag, size = 0x4, scoped, tag = 'scoped memory for autoencoder_forward.1']
    #allocation8 [shape = 'u8[589824]{0}', space=vmem, size = 0x90000, scoped, tag = 'input window, operand 9, single buffered']
    #allocation9 [shape = 's32[1]{0}', space=sflag, size = 0x4, scoped, tag = 'scoped memory for autoencoder_forward.1']
    #allocation10 [shape = 'u8[8192]{0}', space=vmem, size = 0x2000, scoped, tag = 'output window, operand 0, single buffered']
    %20 = vsyncpa [#allocation6], 0
    %21 = vsyncpa [#allocation9], 0
    %22 = vsyncpa [#allocation7], 0
    // Predicated region
    $region2: #{autoencoder_forward.1} parent=1 // pred_check
      _
    $region3: #{autoencoder_forward.1} parent=1 // pred_check_branch
      %24 = sbr.rel (0) target = $region5
    $region4: #{autoencoder_forward.1} parent=1 // pred_region
      _
    $region5: #{autoencoder_forward.1} parent=1 // pred_fallthru
      _
    // Predicated region
    $region6: #{autoencoder_forward.1} parent=1 // pred_check
      _
    $region7: #{autoencoder_forward.1} parent=1 // pred_check_branch
      %26 = sbr.rel (0) target = $region9
    $region8: #{autoencoder_forward.1} parent=1 // pred_region
      _
    $region9: #{autoencoder_forward.1} parent=1 // pred_fallthru
      _
    // Predicated region
    $region10: #{autoencoder_forward.1} parent=1 // pred_check
      _
    $region11: #{autoencoder_forward.1} parent=1 // pred_check_branch
      %28 = sbr.rel (0) target = $region13
    $region12: #{autoencoder_forward.1} parent=1 // pred_region
      _
    $region13: #{autoencoder_forward.1} parent=1 // pred_fallthru
      _
    // Predicated region
    $region14: #{autoencoder_forward.1} parent=1 // pred_check
      _
    $region15: #{autoencoder_forward.1} parent=1 // pred_check_branch
      %30 = sbr.rel (0) target = $region17
    $region16: #{autoencoder_forward.1} parent=1 // pred_region
      _
    $region17: #{autoencoder_forward.1} parent=1 // pred_fallthru
      _
    // Predicated region
    $region18: #{autoencoder_forward.1} parent=1 // pred_check
      _
    $region19: #{autoencoder_forward.1} parent=1 // pred_check_branch
      %32 = sbr.rel (0) target = $region21
    $region20: #{autoencoder_forward.1} parent=1 // pred_region
      _
    $region21: #{autoencoder_forward.1} parent=1 // pred_fallthru
      _
    // Predicated region
    $region22: #{autoencoder_forward.1} parent=1 // pred_check
      _
    $region23: #{autoencoder_forward.1} parent=1 // pred_check_branch
      %34 = sbr.rel (0) target = $region25
    $region24: #{autoencoder_forward.1} parent=1 // pred_region
      %36 = vsyncadd [#allocation6], 0
      %s37 = sshll.u32 %s5, 4
      %s38 = int_to_ptr.hbm [resolvable:$true] %s37
      %s39 = sshll.u32 [#allocation5], 4
      %s40 = int_to_ptr.vmem [resolvable:$true] %s39
      %45 = dma.hbm_to_vmem [thread:$0]  %s38, 4608, %s40, [#allocation6], 64, 64, 4
    $region25: #{autoencoder_forward.1} parent=1 // pred_fallthru
      _
    // Predicated region
    $region26: #{autoencoder_forward.1} parent=1 // pred_check
      _
    $region27: #{autoencoder_forward.1} parent=1 // pred_check_branch
      %47 = sbr.rel (0) target = $region29
    $region28: #{autoencoder_forward.1} parent=1 // pred_region
      _
    $region29: #{autoencoder_forward.1} parent=1 // pred_fallthru
      _
    // Predicated region
    $region30: #{autoencoder_forward.1} parent=1 // pred_check
      _
    $region31: #{autoencoder_forward.1} parent=1 // pred_check_branch
      %49 = sbr.rel (0) target = $region33
    $region32: #{autoencoder_forward.1} parent=1 // pred_region
      _
    $region33: #{autoencoder_forward.1} parent=1 // pred_fallthru
      _
    // Predicated region
    $region34: #{autoencoder_forward.1} parent=1 // pred_check
      _
    $region35: #{autoencoder_forward.1} parent=1 // pred_check_branch
      %51 = sbr.rel (0) target = $region37
    $region36: #{autoencoder_forward.1} parent=1 // pred_region
      _
    $region37: #{autoencoder_forward.1} parent=1 // pred_fallthru
      _
    // Predicated region
    $region38: #{autoencoder_forward.1} parent=1 // pred_check
      _
    $region39: #{autoencoder_forward.1} parent=1 // pred_check_branch
      %53 = sbr.rel (0) target = $region41
    $region40: #{autoencoder_forward.1} parent=1 // pred_region
      %55 = vsyncadd [#allocation9], 0
      %s56 = sshll.u32 %s9, 4
      %s57 = int_to_ptr.hbm [resolvable:$true] %s56
      %s58 = sshll.u32 [#allocation8], 4
      %s59 = int_to_ptr.vmem [resolvable:$true] %s58
      %64 = dma.hbm_to_vmem [thread:$0]  %s57, 18432, %s59, [#allocation9], 64, 64, 4
    $region41: #{autoencoder_forward.1} parent=1 // pred_fallthru
      _
    // Predicated region
    $region42: #{autoencoder_forward.1} parent=1 // pred_check
      _
    $region43: #{autoencoder_forward.1} parent=1 // pred_check_branch
      %66 = sbr.rel (0) target = $region45
    $region44: #{autoencoder_forward.1} parent=1 // pred_region
      _
    $region45: #{autoencoder_forward.1} parent=1 // pred_fallthru
      _
    // Predicated region
    $region46: #{autoencoder_forward.1} parent=1 // pred_check
      _
    $region47: #{autoencoder_forward.1} parent=1 // pred_check_branch
      %68 = sbr.rel (0) target = $region49
    $region48: #{autoencoder_forward.1} parent=1 // pred_region
      _
    $region49: #{autoencoder_forward.1} parent=1 // pred_fallthru
      _
    // Predicated region
    $region50: #{autoencoder_forward.1} parent=1 // pred_check
      _
    $region51: #{autoencoder_forward.1} parent=1 // pred_check_branch
      %70 = sbr.rel (0) target = $region53
    $region52: #{autoencoder_forward.1} parent=1 // pred_region
      _
    $region53: #{autoencoder_forward.1} parent=1 // pred_fallthru
      _
    // Predicated region
    $region54: #{autoencoder_forward.1} parent=1 // pred_check
      _
    $region55: #{autoencoder_forward.1} parent=1 // pred_check_branch
      %72 = sbr.rel (0) target = $region57
    $region56: #{autoencoder_forward.1} parent=1 // pred_region
      %74 = dma.done [#allocation6], 4608
    $region57: #{autoencoder_forward.1} parent=1 // pred_fallthru
      _
    // Predicated region
    $region58: #{autoencoder_forward.1} parent=1 // pred_check
      _
    $region59: #{autoencoder_forward.1} parent=1 // pred_check_branch
      %76 = sbr.rel (0) target = $region61
    $region60: #{autoencoder_forward.1} parent=1 // pred_region
      %78 = dma.done [#allocation9], 18432
    $region61: #{autoencoder_forward.1} parent=1 // pred_fallthru
      _
    %v80 = vld [vmem:[%s0] sm:$0xff]
    %v81 = vld [vmem:[%s0 + $0x8] sm:$0xff]
    %v82 = vld [vmem:[%s0 + $0x10] sm:$0xff]
    %v83 = vld [vmem:[%s0 + $0x18] sm:$0xff]
    %v84 = vld [vmem:[%s0 + $0x20] sm:$0xff]
    %v85 = vld [vmem:[%s0 + $0x28] sm:$0xff]
    %v86 = vld [vmem:[%s0 + $0x30] sm:$0xff]
    %v87 = vld [vmem:[%s0 + $0x38] sm:$0xff]
    %v88 = vld [vmem:[%s0 + $0x40] sm:$0xff]
    %v89 = vld [vmem:[%s0 + $0x48] sm:$0xff]
    %v90 = vld [vmem:[%s0 + $0x50] sm:$0xff]
    %v91 = vld [vmem:[%s0 + $0x58] sm:$0xff]
    %v92 = vld [vmem:[%s0 + $0x60] sm:$0xff]
    %v93 = vld [vmem:[%s0 + $0x68] sm:$0xff]
    %v94 = vld [vmem:[%s0 + $0x70] sm:$0xff]
    %v95 = vld [vmem:[%s0 + $0x78] sm:$0xff]
    %v96 = vld [vmem:[%s0 + $0x80] sm:$0xff]
    %v97 = vld [vmem:[%s0 + $0x88] sm:$0xff]
    %v98 = vld [vmem:[%s0 + $0x90] sm:$0xff]
    %v99 = vld [vmem:[%s0 + $0x98] sm:$0xff]
    %v100 = vld [vmem:[%s0 + $0xa0] sm:$0xff]
    %v101 = vld [vmem:[%s0 + $0xa8] sm:$0xff]
    %v102 = vld [vmem:[%s0 + $0xb0] sm:$0xff]
    %v103 = vld [vmem:[%s0 + $0xb8] sm:$0xff]
    %v104 = vld [vmem:[%s0 + $0xc0] sm:$0xff]
    %v105 = vld [vmem:[%s0 + $0xc8] sm:$0xff]
    %v106 = vld [vmem:[%s0 + $0xd0] sm:$0xff]
    %v107 = vld [vmem:[%s0 + $0xd8] sm:$0xff]
    %v108 = vld [vmem:[%s0 + $0xe0] sm:$0xff]
    %v109 = vld [vmem:[%s0 + $0xe8] sm:$0xff]
    %v110 = vld [vmem:[%s0 + $0xf0] sm:$0xff]
    %v111 = vld [vmem:[%s0 + $0xf8] sm:$0xff]
    %v112 = vld [vmem:[%s0 + $0x100] sm:$0xff]
    %v113 = vld [vmem:[%s0 + $0x108] sm:$0xff]
    %v114 = vld [vmem:[%s0 + $0x110] sm:$0xff]
    %v115 = vld [vmem:[%s0 + $0x118] sm:$0xff]
    %v116 = vld [vmem:[%s0 + $0x120] sm:$0xff]
    %v117 = vld [vmem:[%s0 + $0x128] sm:$0xff]
    %v118 = vld [vmem:[%s0 + $0x130] sm:$0xff]
    %v119 = vld [vmem:[%s0 + $0x138] sm:$0xff]
    %v120 = vld [vmem:[%s0 + $0x140] sm:$0xff]
    %v121 = vld [vmem:[%s0 + $0x148] sm:$0xff]
    %v122 = vld [vmem:[%s0 + $0x150] sm:$0xff]
    %v123 = vld [vmem:[%s0 + $0x158] sm:$0xff]
    %v124 = vld [vmem:[%s0 + $0x160] sm:$0xff]
    %v125 = vld [vmem:[%s0 + $0x168] sm:$0xff]
    %v126 = vld [vmem:[%s0 + $0x170] sm:$0xff]
    %v127 = vld [vmem:[%s0 + $0x178] sm:$0xff]
    %v128 = vld [vmem:[%s0 + $0x180] sm:$0xff]
    %v129 = vld [vmem:[%s0 + $0x188] sm:$0xff]
    %v130 = vld [vmem:[%s0 + $0x190] sm:$0xff]
    %v131 = vld [vmem:[%s0 + $0x198] sm:$0xff]
    %v132 = vld [vmem:[%s0 + $0x1a0] sm:$0xff]
    %v133 = vld [vmem:[%s0 + $0x1a8] sm:$0xff]
    %v134 = vld [vmem:[%s0 + $0x1b0] sm:$0xff]
    %v135 = vld [vmem:[%s0 + $0x1b8] sm:$0xff]
    %v136 = vld [vmem:[%s0 + $0x1c0] sm:$0xff]
    %v137 = vld [vmem:[%s0 + $0x1c8] sm:$0xff]
    %v138 = vld [vmem:[%s0 + $0x1d0] sm:$0xff]
    %v139 = vld [vmem:[%s0 + $0x1d8] sm:$0xff]
    %v140 = vld [vmem:[%s0 + $0x1e0] sm:$0xff]
    %v141 = vld [vmem:[%s0 + $0x1e8] sm:$0xff]
    %v142 = vld [vmem:[%s0 + $0x1f0] sm:$0xff]
    %v143 = vld [vmem:[%s0 + $0x1f8] sm:$0xff]
    %v144 = vpack.c.bf16 %v80, %v80
    %v145 = vpack.c.bf16 %v81, %v81
    %v146 = vpack.c.bf16 %v82, %v82
    %v147 = vpack.c.bf16 %v83, %v83
    %v148 = vpack.c.bf16 %v84, %v84
    %v149 = vpack.c.bf16 %v85, %v85
    %v150 = vpack.c.bf16 %v86, %v86
    %v151 = vpack.c.bf16 %v87, %v87
    %v152 = vpack.c.bf16 %v88, %v88
    %v153 = vpack.c.bf16 %v89, %v89
    %v154 = vpack.c.bf16 %v90, %v90
    %v155 = vpack.c.bf16 %v91, %v91
    %v156 = vpack.c.bf16 %v92, %v92
    %v157 = vpack.c.bf16 %v93, %v93
    %v158 = vpack.c.bf16 %v94, %v94
    %v159 = vpack.c.bf16 %v95, %v95
    %v160 = vpack.c.bf16 %v96, %v96
    %v161 = vpack.c.bf16 %v97, %v97
    %v162 = vpack.c.bf16 %v98, %v98
    %v163 = vpack.c.bf16 %v99, %v99
    %v164 = vpack.c.bf16 %v100, %v100
    %v165 = vpack.c.bf16 %v101, %v101
    %v166 = vpack.c.bf16 %v102, %v102
    %v167 = vpack.c.bf16 %v103, %v103
    %v168 = vpack.c.bf16 %v104, %v104
    %v169 = vpack.c.bf16 %v105, %v105
    %v170 = vpack.c.bf16 %v106, %v106
    %v171 = vpack.c.bf16 %v107, %v107
    %v172 = vpack.c.bf16 %v108, %v108
    %v173 = vpack.c.bf16 %v109, %v109
    %v174 = vpack.c.bf16 %v110, %v110
    %v175 = vpack.c.bf16 %v111, %v111
    %v176 = vpack.c.bf16 %v112, %v112
    %v177 = vpack.c.bf16 %v113, %v113
    %v178 = vpack.c.bf16 %v114, %v114
    %v179 = vpack.c.bf16 %v115, %v115
    %v180 = vpack.c.bf16 %v116, %v116
    %v181 = vpack.c.bf16 %v117, %v117
    %v182 = vpack.c.bf16 %v118, %v118
    %v183 = vpack.c.bf16 %v119, %v119
    %v184 = vpack.c.bf16 %v120, %v120
    %v185 = vpack.c.bf16 %v121, %v121
    %v186 = vpack.c.bf16 %v122, %v122
    %v187 = vpack.c.bf16 %v123, %v123
    %v188 = vpack.c.bf16 %v124, %v124
    %v189 = vpack.c.bf16 %v125, %v125
    %v190 = vpack.c.bf16 %v126, %v126
    %v191 = vpack.c.bf16 %v127, %v127
    %v192 = vpack.c.bf16 %v128, %v128
    %v193 = vpack.c.bf16 %v129, %v129
    %v194 = vpack.c.bf16 %v130, %v130
    %v195 = vpack.c.bf16 %v131, %v131
    %v196 = vpack.c.bf16 %v132, %v132
    %v197 = vpack.c.bf16 %v133, %v133
    %v198 = vpack.c.bf16 %v134, %v134
    %v199 = vpack.c.bf16 %v135, %v135
    %v200 = vpack.c.bf16 %v136, %v136
    %v201 = vpack.c.bf16 %v137, %v137
    %v202 = vpack.c.bf16 %v138, %v138
    %v203 = vpack.c.bf16 %v139, %v139
    %v204 = vpack.c.bf16 %v140, %v140
    %v205 = vpack.c.bf16 %v141, %v141
    %v206 = vpack.c.bf16 %v142, %v142
    %v207 = vpack.c.bf16 %v143, %v143
    %v272 = vunpack.c.l.b16 %v144
    %v273 = vunpack.c.l.b16 %v145
    %v274 = vunpack.c.l.b16 %v146
    %v275 = vunpack.c.l.b16 %v147
    %v276 = vunpack.c.l.b16 %v148
    %v277 = vunpack.c.l.b16 %v149
    %v278 = vunpack.c.l.b16 %v150
    %v279 = vunpack.c.l.b16 %v151
    %v280 = vunpack.c.l.b16 %v152
    %v281 = vunpack.c.l.b16 %v153
    %v282 = vunpack.c.l.b16 %v154
    %v283 = vunpack.c.l.b16 %v155
    %v284 = vunpack.c.l.b16 %v156
    %v285 = vunpack.c.l.b16 %v157
    %v286 = vunpack.c.l.b16 %v158
    %v287 = vunpack.c.l.b16 %v159
    %v288 = vunpack.c.l.b16 %v160
    %v289 = vunpack.c.l.b16 %v161
    %v290 = vunpack.c.l.b16 %v162
    %v291 = vunpack.c.l.b16 %v163
    %v292 = vunpack.c.l.b16 %v164
    %v293 = vunpack.c.l.b16 %v165
    %v294 = vunpack.c.l.b16 %v166
    %v295 = vunpack.c.l.b16 %v167
    %v296 = vunpack.c.l.b16 %v168
    %v297 = vunpack.c.l.b16 %v169
    %v298 = vunpack.c.l.b16 %v170
    %v299 = vunpack.c.l.b16 %v171
    %v300 = vunpack.c.l.b16 %v172
    %v301 = vunpack.c.l.b16 %v173
    %v302 = vunpack.c.l.b16 %v174
    %v303 = vunpack.c.l.b16 %v175
    %v304 = vunpack.c.l.b16 %v176
    %v305 = vunpack.c.l.b16 %v177
    %v306 = vunpack.c.l.b16 %v178
    %v307 = vunpack.c.l.b16 %v179
    %v308 = vunpack.c.l.b16 %v180
    %v309 = vunpack.c.l.b16 %v181
    %v310 = vunpack.c.l.b16 %v182
    %v311 = vunpack.c.l.b16 %v183
    %v312 = vunpack.c.l.b16 %v184
    %v313 = vunpack.c.l.b16 %v185
    %v314 = vunpack.c.l.b16 %v186
    %v315 = vunpack.c.l.b16 %v187
    %v316 = vunpack.c.l.b16 %v188
    %v317 = vunpack.c.l.b16 %v189
    %v318 = vunpack.c.l.b16 %v190
    %v319 = vunpack.c.l.b16 %v191
    %v320 = vunpack.c.l.b16 %v192
    %v321 = vunpack.c.l.b16 %v193
    %v322 = vunpack.c.l.b16 %v194
    %v323 = vunpack.c.l.b16 %v195
    %v324 = vunpack.c.l.b16 %v196
    %v325 = vunpack.c.l.b16 %v197
    %v326 = vunpack.c.l.b16 %v198
    %v327 = vunpack.c.l.b16 %v199
    %v328 = vunpack.c.l.b16 %v200
    %v329 = vunpack.c.l.b16 %v201
    %v330 = vunpack.c.l.b16 %v202
    %v331 = vunpack.c.l.b16 %v203
    %v332 = vunpack.c.l.b16 %v204
    %v333 = vunpack.c.l.b16 %v205
    %v334 = vunpack.c.l.b16 %v206
    %v335 = vunpack.c.l.b16 %v207
    %v336 = vpack.c.b16 %v273, %v272
    %v337 = vpack.c.b16 %v275, %v274
    %v338 = vpack.c.b16 %v277, %v276
    %v339 = vpack.c.b16 %v279, %v278
    %v340 = vpack.c.b16 %v281, %v280
    %v341 = vpack.c.b16 %v283, %v282
    %v342 = vpack.c.b16 %v285, %v284
    %v343 = vpack.c.b16 %v287, %v286
    %v344 = vpack.c.b16 %v289, %v288
    %v345 = vpack.c.b16 %v291, %v290
    %v346 = vpack.c.b16 %v293, %v292
    %v347 = vpack.c.b16 %v295, %v294
    %v348 = vpack.c.b16 %v297, %v296
    %v349 = vpack.c.b16 %v299, %v298
    %v350 = vpack.c.b16 %v301, %v300
    %v351 = vpack.c.b16 %v303, %v302
    %v352 = vpack.c.b16 %v305, %v304
    %v353 = vpack.c.b16 %v307, %v306
    %v354 = vpack.c.b16 %v309, %v308
    %v355 = vpack.c.b16 %v311, %v310
    %v356 = vpack.c.b16 %v313, %v312
    %v357 = vpack.c.b16 %v315, %v314
    %v358 = vpack.c.b16 %v317, %v316
    %v359 = vpack.c.b16 %v319, %v318
    %v360 = vpack.c.b16 %v321, %v320
    %v361 = vpack.c.b16 %v323, %v322
    %v362 = vpack.c.b16 %v325, %v324
    %v363 = vpack.c.b16 %v327, %v326
    %v364 = vpack.c.b16 %v329, %v328
    %v365 = vpack.c.b16 %v331, %v330
    %v366 = vpack.c.b16 %v333, %v332
    %v367 = vpack.c.b16 %v335, %v334
    %v369 = vshrl.u32 0, 16
    %v371 = vrot.slane %v369, 7
    %v372 = vshll.u32 0, 16
    %v374 = vor.u32 %v371, %v372
    %v376 = vshrl.u32 %v336, 16
    %v378 = vrot.slane %v376, 7
    %v379 = vshll.u32 %v336, 16
    %v381 = vor.u32 %v378, %v379
    %v383 = vshrl.u32 %v337, 16
    %v385 = vrot.slane %v383, 7
    %v386 = vshll.u32 %v337, 16
    %v388 = vor.u32 %v385, %v386
    %v390 = vshrl.u32 %v338, 16
    %v392 = vrot.slane %v390, 7
    %v393 = vshll.u32 %v338, 16
    %v395 = vor.u32 %v392, %v393
    %v397 = vshrl.u32 %v339, 16
    %v399 = vrot.slane %v397, 7
    %v400 = vshll.u32 %v339, 16
    %v402 = vor.u32 %v399, %v400
    %v404 = vshrl.u32 %v340, 16
    %v406 = vrot.slane %v404, 7
    %v407 = vshll.u32 %v340, 16
    %v409 = vor.u32 %v406, %v407
    %v411 = vshrl.u32 %v341, 16
    %v413 = vrot.slane %v411, 7
    %v414 = vshll.u32 %v341, 16
    %v416 = vor.u32 %v413, %v414
    %v418 = vshrl.u32 %v342, 16
    %v420 = vrot.slane %v418, 7
    %v421 = vshll.u32 %v342, 16
    %v423 = vor.u32 %v420, %v421
    %v425 = vshrl.u32 %v343, 16
    %v427 = vrot.slane %v425, 7
    %v428 = vshll.u32 %v343, 16
    %v430 = vor.u32 %v427, %v428
    %v432 = vshrl.u32 %v344, 16
    %v434 = vrot.slane %v432, 7
    %v435 = vshll.u32 %v344, 16
    %v437 = vor.u32 %v434, %v435
    %v439 = vshrl.u32 %v345, 16
    %v441 = vrot.slane %v439, 7
    %v442 = vshll.u32 %v345, 16
    %v444 = vor.u32 %v441, %v442
    %v446 = vshrl.u32 %v346, 16
    %v448 = vrot.slane %v446, 7
    %v449 = vshll.u32 %v346, 16
    %v451 = vor.u32 %v448, %v449
    %v453 = vshrl.u32 %v347, 16
    %v455 = vrot.slane %v453, 7
    %v456 = vshll.u32 %v347, 16
    %v458 = vor.u32 %v455, %v456
    %v460 = vshrl.u32 %v348, 16
    %v462 = vrot.slane %v460, 7
    %v463 = vshll.u32 %v348, 16
    %v465 = vor.u32 %v462, %v463
    %v467 = vshrl.u32 %v349, 16
    %v469 = vrot.slane %v467, 7
    %v470 = vshll.u32 %v349, 16
    %v472 = vor.u32 %v469, %v470
    %v474 = vshrl.u32 %v350, 16
    %v476 = vrot.slane %v474, 7
    %v477 = vshll.u32 %v350, 16
    %v479 = vor.u32 %v476, %v477
    %v481 = vshrl.u32 %v351, 16
    %v483 = vrot.slane %v481, 7
    %v484 = vshll.u32 %v351, 16
    %v486 = vor.u32 %v483, %v484
    %v488 = vshrl.u32 %v352, 16
    %v490 = vrot.slane %v488, 7
    %v491 = vshll.u32 %v352, 16
    %v493 = vor.u32 %v490, %v491
    %v495 = vshrl.u32 %v353, 16
    %v497 = vrot.slane %v495, 7
    %v498 = vshll.u32 %v353, 16
    %v500 = vor.u32 %v497, %v498
    %v502 = vshrl.u32 %v354, 16
    %v504 = vrot.slane %v502, 7
    %v505 = vshll.u32 %v354, 16
    %v507 = vor.u32 %v504, %v505
    %v509 = vshrl.u32 %v355, 16
    %v511 = vrot.slane %v509, 7
    %v512 = vshll.u32 %v355, 16
    %v514 = vor.u32 %v511, %v512
    %v516 = vshrl.u32 %v356, 16
    %v518 = vrot.slane %v516, 7
    %v519 = vshll.u32 %v356, 16
    %v521 = vor.u32 %v518, %v519
    %v523 = vshrl.u32 %v357, 16
    %v525 = vrot.slane %v523, 7
    %v526 = vshll.u32 %v357, 16
    %v528 = vor.u32 %v525, %v526
    %v530 = vshrl.u32 %v358, 16
    %v532 = vrot.slane %v530, 7
    %v533 = vshll.u32 %v358, 16
    %v535 = vor.u32 %v532, %v533
    %v537 = vshrl.u32 %v359, 16
    %v539 = vrot.slane %v537, 7
    %v540 = vshll.u32 %v359, 16
    %v542 = vor.u32 %v539, %v540
    %v544 = vshrl.u32 %v360, 16
    %v546 = vrot.slane %v544, 7
    %v547 = vshll.u32 %v360, 16
    %v549 = vor.u32 %v546, %v547
    %v551 = vshrl.u32 %v361, 16
    %v553 = vrot.slane %v551, 7
    %v554 = vshll.u32 %v361, 16
    %v556 = vor.u32 %v553, %v554
    %v558 = vshrl.u32 %v362, 16
    %v560 = vrot.slane %v558, 7
    %v561 = vshll.u32 %v362, 16
    %v563 = vor.u32 %v560, %v561
    %v565 = vshrl.u32 %v363, 16
    %v567 = vrot.slane %v565, 7
    %v568 = vshll.u32 %v363, 16
    %v570 = vor.u32 %v567, %v568
    %v572 = vshrl.u32 %v364, 16
    %v574 = vrot.slane %v572, 7
    %v575 = vshll.u32 %v364, 16
    %v577 = vor.u32 %v574, %v575
    %v579 = vshrl.u32 %v365, 16
    %v581 = vrot.slane %v579, 7
    %v582 = vshll.u32 %v365, 16
    %v584 = vor.u32 %v581, %v582
    %v586 = vshrl.u32 %v366, 16
    %v588 = vrot.slane %v586, 7
    %v589 = vshll.u32 %v366, 16
    %v591 = vor.u32 %v588, %v589
    %v593 = vshrl.u32 %v367, 16
    %v595 = vrot.slane %v593, 7
    %v596 = vshll.u32 %v367, 16
    %v598 = vor.u32 %v595, %v596
    %vm665 = vcmask 1040384
    %vm666 = vsmask.f32 256
    %vm667 = vmand %vm665, %vm666
    %v668 = vsel %vm667, 0, %v374
    %v669 = vsel %vm667, 0, %v381
    %v670 = vsel %vm667, 0, %v388
    %v671 = vsel %vm667, 0, %v395
    %v672 = vsel %vm667, 0, %v402
    %v673 = vsel %vm667, 0, %v409
    %v674 = vsel %vm667, 0, %v416
    %v675 = vsel %vm667, 0, %v423
    %v676 = vsel %vm667, 0, %v430
    %v677 = vsel %vm667, 0, %v437
    %v678 = vsel %vm667, 0, %v444
    %v679 = vsel %vm667, 0, %v451
    %v680 = vsel %vm667, 0, %v458
    %v681 = vsel %vm667, 0, %v465
    %v682 = vsel %vm667, 0, %v472
    %v683 = vsel %vm667, 0, %v479
    %v684 = vsel %vm667, 0, %v486
    %v685 = vsel %vm667, 0, %v493
    %v686 = vsel %vm667, 0, %v500
    %v687 = vsel %vm667, 0, %v507
    %v688 = vsel %vm667, 0, %v514
    %v689 = vsel %vm667, 0, %v521
    %v690 = vsel %vm667, 0, %v528
    %v691 = vsel %vm667, 0, %v535
    %v692 = vsel %vm667, 0, %v542
    %v693 = vsel %vm667, 0, %v549
    %v694 = vsel %vm667, 0, %v556
    %v695 = vsel %vm667, 0, %v563
    %v696 = vsel %vm667, 0, %v570
    %v697 = vsel %vm667, 0, %v577
    %v698 = vsel %vm667, 0, %v584
    %v699 = vsel %vm667, 0, %v591
    %v700 = vsel %vm667, 0, %v598
    %v701 = vsel %vm667, %v371, 0
    %v702 = vsel %vm667, %v378, 0
    %v703 = vsel %vm667, %v385, 0
    %v704 = vsel %vm667, %v392, 0
    %v705 = vsel %vm667, %v399, 0
    %v706 = vsel %vm667, %v406, 0
    %v707 = vsel %vm667, %v413, 0
    %v708 = vsel %vm667, %v420, 0
    %v709 = vsel %vm667, %v427, 0
    %v710 = vsel %vm667, %v434, 0
    %v711 = vsel %vm667, %v441, 0
    %v712 = vsel %vm667, %v448, 0
    %v713 = vsel %vm667, %v455, 0
    %v714 = vsel %vm667, %v462, 0
    %v715 = vsel %vm667, %v469, 0
    %v716 = vsel %vm667, %v476, 0
    %v717 = vsel %vm667, %v483, 0
    %v718 = vsel %vm667, %v490, 0
    %v719 = vsel %vm667, %v497, 0
    %v720 = vsel %vm667, %v504, 0
    %v721 = vsel %vm667, %v511, 0
    %v722 = vsel %vm667, %v518, 0
    %v723 = vsel %vm667, %v525, 0
    %v724 = vsel %vm667, %v532, 0
    %v725 = vsel %vm667, %v539, 0
    %v726 = vsel %vm667, %v546, 0
    %v727 = vsel %vm667, %v553, 0
    %v728 = vsel %vm667, %v560, 0
    %v729 = vsel %vm667, %v567, 0
    %v730 = vsel %vm667, %v574, 0
    %v731 = vsel %vm667, %v581, 0
    %v732 = vsel %vm667, %v588, 0
    %v733 = vsel %vm667, %v595, 0
    %vm734 = vsmask.f32 7424
    %v736 = vshrl.u32 %v668, 16
    %v738 = vshll.u32 %v668, 16
    %v740 = vrot.slane %v738, 1
    %v741 = vor.u32 %v736, %v740
    %v743 = vshll.u32 %v701, 16
    %v745 = vrot.slane %v743, 1
    %v746 = vsel %vm734, %v741, %v745
    %v748 = vshrl.u32 %v669, 16
    %v750 = vshll.u32 %v669, 16
    %v752 = vrot.slane %v750, 1
    %v753 = vor.u32 %v748, %v752
    %v755 = vshll.u32 %v702, 16
    %v757 = vrot.slane %v755, 1
    %v758 = vsel %vm734, %v753, %v757
    %v760 = vshrl.u32 %v670, 16
    %v762 = vshll.u32 %v670, 16
    %v764 = vrot.slane %v762, 1
    %v765 = vor.u32 %v760, %v764
    %v767 = vshll.u32 %v703, 16
    %v769 = vrot.slane %v767, 1
    %v770 = vsel %vm734, %v765, %v769
    %v772 = vshrl.u32 %v671, 16
    %v774 = vshll.u32 %v671, 16
    %v776 = vrot.slane %v774, 1
    %v777 = vor.u32 %v772, %v776
    %v779 = vshll.u32 %v704, 16
    %v781 = vrot.slane %v779, 1
    %v782 = vsel %vm734, %v777, %v781
    %v784 = vshrl.u32 %v672, 16
    %v786 = vshll.u32 %v672, 16
    %v788 = vrot.slane %v786, 1
    %v789 = vor.u32 %v784, %v788
    %v791 = vshll.u32 %v705, 16
    %v793 = vrot.slane %v791, 1
    %v794 = vsel %vm734, %v789, %v793
    %v796 = vshrl.u32 %v673, 16
    %v798 = vshll.u32 %v673, 16
    %v800 = vrot.slane %v798, 1
    %v801 = vor.u32 %v796, %v800
    %v803 = vshll.u32 %v706, 16
    %v805 = vrot.slane %v803, 1
    %v806 = vsel %vm734, %v801, %v805
    %v808 = vshrl.u32 %v674, 16
    %v810 = vshll.u32 %v674, 16
    %v812 = vrot.slane %v810, 1
    %v813 = vor.u32 %v808, %v812
    %v815 = vshll.u32 %v707, 16
    %v817 = vrot.slane %v815, 1
    %v818 = vsel %vm734, %v813, %v817
    %v820 = vshrl.u32 %v675, 16
    %v822 = vshll.u32 %v675, 16
    %v824 = vrot.slane %v822, 1
    %v825 = vor.u32 %v820, %v824
    %v827 = vshll.u32 %v708, 16
    %v829 = vrot.slane %v827, 1
    %v830 = vsel %vm734, %v825, %v829
    %v832 = vshrl.u32 %v676, 16
    %v834 = vshll.u32 %v676, 16
    %v836 = vrot.slane %v834, 1
    %v837 = vor.u32 %v832, %v836
    %v839 = vshll.u32 %v709, 16
    %v841 = vrot.slane %v839, 1
    %v842 = vsel %vm734, %v837, %v841
    %v844 = vshrl.u32 %v677, 16
    %v846 = vshll.u32 %v677, 16
    %v848 = vrot.slane %v846, 1
    %v849 = vor.u32 %v844, %v848
    %v851 = vshll.u32 %v710, 16
    %v853 = vrot.slane %v851, 1
    %v854 = vsel %vm734, %v849, %v853
    %v856 = vshrl.u32 %v678, 16
    %v858 = vshll.u32 %v678, 16
    %v860 = vrot.slane %v858, 1
    %v861 = vor.u32 %v856, %v860
    %v863 = vshll.u32 %v711, 16
    %v865 = vrot.slane %v863, 1
    %v866 = vsel %vm734, %v861, %v865
    %v868 = vshrl.u32 %v679, 16
    %v870 = vshll.u32 %v679, 16
    %v872 = vrot.slane %v870, 1
    %v873 = vor.u32 %v868, %v872
    %v875 = vshll.u32 %v712, 16
    %v877 = vrot.slane %v875, 1
    %v878 = vsel %vm734, %v873, %v877
    %v880 = vshrl.u32 %v680, 16
    %v882 = vshll.u32 %v680, 16
    %v884 = vrot.slane %v882, 1
    %v885 = vor.u32 %v880, %v884
    %v887 = vshll.u32 %v713, 16
    %v889 = vrot.slane %v887, 1
    %v890 = vsel %vm734, %v885, %v889
    %v892 = vshrl.u32 %v681, 16
    %v894 = vshll.u32 %v681, 16
    %v896 = vrot.slane %v894, 1
    %v897 = vor.u32 %v892, %v896
    %v899 = vshll.u32 %v714, 16
    %v901 = vrot.slane %v899, 1
    %v902 = vsel %vm734, %v897, %v901
    %v904 = vshrl.u32 %v682, 16
    %v906 = vshll.u32 %v682, 16
    %v908 = vrot.slane %v906, 1
    %v909 = vor.u32 %v904, %v908
    %v911 = vshll.u32 %v715, 16
    %v913 = vrot.slane %v911, 1
    %v914 = vsel %vm734, %v909, %v913
    %v916 = vshrl.u32 %v683, 16
    %v918 = vshll.u32 %v683, 16
    %v920 = vrot.slane %v918, 1
    %v921 = vor.u32 %v916, %v920
    %v923 = vshll.u32 %v716, 16
    %v925 = vrot.slane %v923, 1
    %v926 = vsel %vm734, %v921, %v925
    %v928 = vshrl.u32 %v685, 16
    %v930 = vshll.u32 %v685, 16
    %v932 = vrot.slane %v930, 1
    %v933 = vor.u32 %v928, %v932
    %v935 = vshll.u32 %v718, 16
    %v937 = vrot.slane %v935, 1
    %v938 = vsel %vm734, %v933, %v937
    %v940 = vshrl.u32 %v686, 16
    %v942 = vshll.u32 %v686, 16
    %v944 = vrot.slane %v942, 1
    %v945 = vor.u32 %v940, %v944
    %v947 = vshll.u32 %v719, 16
    %v949 = vrot.slane %v947, 1
    %v950 = vsel %vm734, %v945, %v949
    %v952 = vshrl.u32 %v687, 16
    %v954 = vshll.u32 %v687, 16
    %v956 = vrot.slane %v954, 1
    %v957 = vor.u32 %v952, %v956
    %v959 = vshll.u32 %v720, 16
    %v961 = vrot.slane %v959, 1
    %v962 = vsel %vm734, %v957, %v961
    %v964 = vshrl.u32 %v688, 16
    %v966 = vshll.u32 %v688, 16
    %v968 = vrot.slane %v966, 1
    %v969 = vor.u32 %v964, %v968
    %v971 = vshll.u32 %v721, 16
    %v973 = vrot.slane %v971, 1
    %v974 = vsel %vm734, %v969, %v973
    %v976 = vshrl.u32 %v689, 16
    %v978 = vshll.u32 %v689, 16
    %v980 = vrot.slane %v978, 1
    %v981 = vor.u32 %v976, %v980
    %v983 = vshll.u32 %v722, 16
    %v985 = vrot.slane %v983, 1
    %v986 = vsel %vm734, %v981, %v985
    %v988 = vshrl.u32 %v690, 16
    %v990 = vshll.u32 %v690, 16
    %v992 = vrot.slane %v990, 1
    %v993 = vor.u32 %v988, %v992
    %v995 = vshll.u32 %v723, 16
    %v997 = vrot.slane %v995, 1
    %v998 = vsel %vm734, %v993, %v997
    %v1000 = vshrl.u32 %v691, 16
    %v1002 = vshll.u32 %v691, 16
    %v1004 = vrot.slane %v1002, 1
    %v1005 = vor.u32 %v1000, %v1004
    %v1007 = vshll.u32 %v724, 16
    %v1009 = vrot.slane %v1007, 1
    %v1010 = vsel %vm734, %v1005, %v1009
    %v1012 = vshrl.u32 %v692, 16
    %v1014 = vshll.u32 %v692, 16
    %v1016 = vrot.slane %v1014, 1
    %v1017 = vor.u32 %v1012, %v1016
    %v1019 = vshll.u32 %v725, 16
    %v1021 = vrot.slane %v1019, 1
    %v1022 = vsel %vm734, %v1017, %v1021
    %v1024 = vshrl.u32 %v693, 16
    %v1026 = vshll.u32 %v693, 16
    %v1028 = vrot.slane %v1026, 1
    %v1029 = vor.u32 %v1024, %v1028
    %v1031 = vshll.u32 %v726, 16
    %v1033 = vrot.slane %v1031, 1
    %v1034 = vsel %vm734, %v1029, %v1033
    %v1036 = vshrl.u32 %v694, 16
    %v1038 = vshll.u32 %v694, 16
    %v1040 = vrot.slane %v1038, 1
    %v1041 = vor.u32 %v1036, %v1040
    %v1043 = vshll.u32 %v727, 16
    %v1045 = vrot.slane %v1043, 1
    %v1046 = vsel %vm734, %v1041, %v1045
    %v1048 = vshrl.u32 %v695, 16
    %v1050 = vshll.u32 %v695, 16
    %v1052 = vrot.slane %v1050, 1
    %v1053 = vor.u32 %v1048, %v1052
    %v1055 = vshll.u32 %v728, 16
    %v1057 = vrot.slane %v1055, 1
    %v1058 = vsel %vm734, %v1053, %v1057
    %v1060 = vshrl.u32 %v696, 16
    %v1062 = vshll.u32 %v696, 16
    %v1064 = vrot.slane %v1062, 1
    %v1065 = vor.u32 %v1060, %v1064
    %v1067 = vshll.u32 %v729, 16
    %v1069 = vrot.slane %v1067, 1
    %v1070 = vsel %vm734, %v1065, %v1069
    %v1072 = vshrl.u32 %v697, 16
    %v1074 = vshll.u32 %v697, 16
    %v1076 = vrot.slane %v1074, 1
    %v1077 = vor.u32 %v1072, %v1076
    %v1079 = vshll.u32 %v730, 16
    %v1081 = vrot.slane %v1079, 1
    %v1082 = vsel %vm734, %v1077, %v1081
    %v1084 = vshrl.u32 %v698, 16
    %v1086 = vshll.u32 %v698, 16
    %v1088 = vrot.slane %v1086, 1
    %v1089 = vor.u32 %v1084, %v1088
    %v1091 = vshll.u32 %v731, 16
    %v1093 = vrot.slane %v1091, 1
    %v1094 = vsel %vm734, %v1089, %v1093
    %v1096 = vshrl.u32 %v699, 16
    %v1098 = vshll.u32 %v699, 16
    %v1100 = vrot.slane %v1098, 1
    %v1101 = vor.u32 %v1096, %v1100
    %v1103 = vshll.u32 %v732, 16
    %v1105 = vrot.slane %v1103, 1
    %v1106 = vsel %vm734, %v1101, %v1105
    %1107 = vrot.lane.b32.xlu0 %v746, 3
    %v1108 = vpop.permute.xlu0 %1107
    %1109 = vrot.lane.b32.xlu0 %v758, 3
    %v1110 = vpop.permute.xlu0 %1109
    %1111 = vrot.lane.b32.xlu0 %v770, 3
    %v1112 = vpop.permute.xlu0 %1111
    %1113 = vrot.lane.b32.xlu0 %v782, 3
    %v1114 = vpop.permute.xlu0 %1113
    %1115 = vrot.lane.b32.xlu0 %v794, 3
    %v1116 = vpop.permute.xlu0 %1115
    %1117 = vrot.lane.b32.xlu0 %v806, 3
    %v1118 = vpop.permute.xlu0 %1117
    %1119 = vrot.lane.b32.xlu0 %v818, 3
    %v1120 = vpop.permute.xlu0 %1119
    %1121 = vrot.lane.b32.xlu0 %v830, 3
    %v1122 = vpop.permute.xlu0 %1121
    %1123 = vrot.lane.b32.xlu0 %v842, 3
    %v1124 = vpop.permute.xlu0 %1123
    %1125 = vrot.lane.b32.xlu0 %v854, 3
    %v1126 = vpop.permute.xlu0 %1125
    %1127 = vrot.lane.b32.xlu0 %v866, 3
    %v1128 = vpop.permute.xlu0 %1127
    %1129 = vrot.lane.b32.xlu0 %v878, 3
    %v1130 = vpop.permute.xlu0 %1129
    %1131 = vrot.lane.b32.xlu0 %v890, 3
    %v1132 = vpop.permute.xlu0 %1131
    %1133 = vrot.lane.b32.xlu0 %v902, 3
    %v1134 = vpop.permute.xlu0 %1133
    %1135 = vrot.lane.b32.xlu0 %v914, 3
    %v1136 = vpop.permute.xlu0 %1135
    %1137 = vrot.lane.b32.xlu0 %v926, 3
    %v1138 = vpop.permute.xlu0 %1137
    %1139 = vrot.lane.b32.xlu0 %v938, 3
    %v1140 = vpop.permute.xlu0 %1139
    %1141 = vrot.lane.b32.xlu0 %v950, 3
    %v1142 = vpop.permute.xlu0 %1141
    %1143 = vrot.lane.b32.xlu0 %v962, 3
    %v1144 = vpop.permute.xlu0 %1143
    %1145 = vrot.lane.b32.xlu0 %v974, 3
    %v1146 = vpop.permute.xlu0 %1145
    %1147 = vrot.lane.b32.xlu0 %v986, 3
    %v1148 = vpop.permute.xlu0 %1147
    %1149 = vrot.lane.b32.xlu0 %v998, 3
    %v1150 = vpop.permute.xlu0 %1149
    %1151 = vrot.lane.b32.xlu0 %v1010, 3
    %v1152 = vpop.permute.xlu0 %1151
    %1153 = vrot.lane.b32.xlu0 %v1022, 3
    %v1154 = vpop.permute.xlu0 %1153
    %1155 = vrot.lane.b32.xlu0 %v1034, 3
    %v1156 = vpop.permute.xlu0 %1155
    %1157 = vrot.lane.b32.xlu0 %v1046, 3
    %v1158 = vpop.permute.xlu0 %1157
    %1159 = vrot.lane.b32.xlu0 %v1058, 3
    %v1160 = vpop.permute.xlu0 %1159
    %1161 = vrot.lane.b32.xlu0 %v1070, 3
    %v1162 = vpop.permute.xlu0 %1161
    %1163 = vrot.lane.b32.xlu0 %v1082, 3
    %v1164 = vpop.permute.xlu0 %1163
    %1165 = vrot.lane.b32.xlu0 %v1094, 3
    %v1166 = vpop.permute.xlu0 %1165
    %1167 = vrot.lane.b32.xlu0 %v1106, 3
    %v1168 = vpop.permute.xlu0 %1167
    %vm1231 = vcmask 1046528
    %v1232 = vrot.slane %v668, 1
    %v1233 = vrot.slane %v701, 1
    %v1234 = vsel %vm1231, %v1232, %v1233
    %v1235 = vrot.slane %v669, 1
    %v1236 = vrot.slane %v702, 1
    %v1237 = vsel %vm1231, %v1235, %v1236
    %v1238 = vrot.slane %v670, 1
    %v1239 = vrot.slane %v703, 1
    %v1240 = vsel %vm1231, %v1238, %v1239
    %v1241 = vrot.slane %v671, 1
    %v1242 = vrot.slane %v704, 1
    %v1243 = vsel %vm1231, %v1241, %v1242
    %v1244 = vrot.slane %v672, 1
    %v1245 = vrot.slane %v705, 1
    %v1246 = vsel %vm1231, %v1244, %v1245
    %v1247 = vrot.slane %v673, 1
    %v1248 = vrot.slane %v706, 1
    %v1249 = vsel %vm1231, %v1247, %v1248
    %v1250 = vrot.slane %v674, 1
    %v1251 = vrot.slane %v707, 1
    %v1252 = vsel %vm1231, %v1250, %v1251
    %v1253 = vrot.slane %v675, 1
    %v1254 = vrot.slane %v708, 1
    %v1255 = vsel %vm1231, %v1253, %v1254
    %v1256 = vrot.slane %v676, 1
    %v1257 = vrot.slane %v709, 1
    %v1258 = vsel %vm1231, %v1256, %v1257
    %v1259 = vrot.slane %v677, 1
    %v1260 = vrot.slane %v710, 1
    %v1261 = vsel %vm1231, %v1259, %v1260
    %v1262 = vrot.slane %v678, 1
    %v1263 = vrot.slane %v711, 1
    %v1264 = vsel %vm1231, %v1262, %v1263
    %v1265 = vrot.slane %v679, 1
    %v1266 = vrot.slane %v712, 1
    %v1267 = vsel %vm1231, %v1265, %v1266
    %v1268 = vrot.slane %v680, 1
    %v1269 = vrot.slane %v713, 1
    %v1270 = vsel %vm1231, %v1268, %v1269
    %v1271 = vrot.slane %v681, 1
    %v1272 = vrot.slane %v714, 1
    %v1273 = vsel %vm1231, %v1271, %v1272
    %v1274 = vrot.slane %v682, 1
    %v1275 = vrot.slane %v715, 1
    %v1276 = vsel %vm1231, %v1274, %v1275
    %v1277 = vrot.slane %v683, 1
    %v1278 = vrot.slane %v716, 1
    %v1279 = vsel %vm1231, %v1277, %v1278
    %v1280 = vrot.slane %v685, 1
    %v1281 = vrot.slane %v718, 1
    %v1282 = vsel %vm1231, %v1280, %v1281
    %v1283 = vrot.slane %v686, 1
    %v1284 = vrot.slane %v719, 1
    %v1285 = vsel %vm1231, %v1283, %v1284
    %v1286 = vrot.slane %v687, 1
    %v1287 = vrot.slane %v720, 1
    %v1288 = vsel %vm1231, %v1286, %v1287
    %v1289 = vrot.slane %v688, 1
    %v1290 = vrot.slane %v721, 1
    %v1291 = vsel %vm1231, %v1289, %v1290
    %v1292 = vrot.slane %v689, 1
    %v1293 = vrot.slane %v722, 1
    %v1294 = vsel %vm1231, %v1292, %v1293
    %v1295 = vrot.slane %v690, 1
    %v1296 = vrot.slane %v723, 1
    %v1297 = vsel %vm1231, %v1295, %v1296
    %v1298 = vrot.slane %v691, 1
    %v1299 = vrot.slane %v724, 1
    %v1300 = vsel %vm1231, %v1298, %v1299
    %v1301 = vrot.slane %v692, 1
    %v1302 = vrot.slane %v725, 1
    %v1303 = vsel %vm1231, %v1301, %v1302
    %v1304 = vrot.slane %v693, 1
    %v1305 = vrot.slane %v726, 1
    %v1306 = vsel %vm1231, %v1304, %v1305
    %v1307 = vrot.slane %v694, 1
    %v1308 = vrot.slane %v727, 1
    %v1309 = vsel %vm1231, %v1307, %v1308
    %v1310 = vrot.slane %v695, 1
    %v1311 = vrot.slane %v728, 1
    %v1312 = vsel %vm1231, %v1310, %v1311
    %v1313 = vrot.slane %v696, 1
    %v1314 = vrot.slane %v729, 1
    %v1315 = vsel %vm1231, %v1313, %v1314
    %v1316 = vrot.slane %v697, 1
    %v1317 = vrot.slane %v730, 1
    %v1318 = vsel %vm1231, %v1316, %v1317
    %v1319 = vrot.slane %v698, 1
    %v1320 = vrot.slane %v731, 1
    %v1321 = vsel %vm1231, %v1319, %v1320
    %v1322 = vrot.slane %v699, 1
    %v1323 = vrot.slane %v732, 1
    %v1324 = vsel %vm1231, %v1322, %v1323
    %1325 = vrot.lane.b32.xlu0 %v1234, 6
    %v1326 = vpop.permute.xlu0 %1325
    %1327 = vrot.lane.b32.xlu0 %v1237, 6
    %v1328 = vpop.permute.xlu0 %1327
    %1329 = vrot.lane.b32.xlu0 %v1240, 6
    %v1330 = vpop.permute.xlu0 %1329
    %1331 = vrot.lane.b32.xlu0 %v1243, 6
    %v1332 = vpop.permute.xlu0 %1331
    %1333 = vrot.lane.b32.xlu0 %v1246, 6
    %v1334 = vpop.permute.xlu0 %1333
    %1335 = vrot.lane.b32.xlu0 %v1249, 6
    %v1336 = vpop.permute.xlu0 %1335
    %1337 = vrot.lane.b32.xlu0 %v1252, 6
    %v1338 = vpop.permute.xlu0 %1337
    %1339 = vrot.lane.b32.xlu0 %v1255, 6
    %v1340 = vpop.permute.xlu0 %1339
    %1341 = vrot.lane.b32.xlu0 %v1258, 6
    %v1342 = vpop.permute.xlu0 %1341
    %1343 = vrot.lane.b32.xlu0 %v1261, 6
    %v1344 = vpop.permute.xlu0 %1343
    %1345 = vrot.lane.b32.xlu0 %v1264, 6
    %v1346 = vpop.permute.xlu0 %1345
    %1347 = vrot.lane.b32.xlu0 %v1267, 6
    %v1348 = vpop.permute.xlu0 %1347
    %1349 = vrot.lane.b32.xlu0 %v1270, 6
    %v1350 = vpop.permute.xlu0 %1349
    %1351 = vrot.lane.b32.xlu0 %v1273, 6
    %v1352 = vpop.permute.xlu0 %1351
    %1353 = vrot.lane.b32.xlu0 %v1276, 6
    %v1354 = vpop.permute.xlu0 %1353
    %1355 = vrot.lane.b32.xlu0 %v1279, 6
    %v1356 = vpop.permute.xlu0 %1355
    %1357 = vrot.lane.b32.xlu0 %v1282, 6
    %v1358 = vpop.permute.xlu0 %1357
    %1359 = vrot.lane.b32.xlu0 %v1285, 6
    %v1360 = vpop.permute.xlu0 %1359
    %1361 = vrot.lane.b32.xlu0 %v1288, 6
    %v1362 = vpop.permute.xlu0 %1361
    %1363 = vrot.lane.b32.xlu0 %v1291, 6
    %v1364 = vpop.permute.xlu0 %1363
    %1365 = vrot.lane.b32.xlu0 %v1294, 6
    %v1366 = vpop.permute.xlu0 %1365
    %1367 = vrot.lane.b32.xlu0 %v1297, 6
    %v1368 = vpop.permute.xlu0 %1367
    %1369 = vrot.lane.b32.xlu0 %v1300, 6
    %v1370 = vpop.permute.xlu0 %1369
    %1371 = vrot.lane.b32.xlu0 %v1303, 6
    %v1372 = vpop.permute.xlu0 %1371
    %1373 = vrot.lane.b32.xlu0 %v1306, 6
    %v1374 = vpop.permute.xlu0 %1373
    %1375 = vrot.lane.b32.xlu0 %v1309, 6
    %v1376 = vpop.permute.xlu0 %1375
    %1377 = vrot.lane.b32.xlu0 %v1312, 6
    %v1378 = vpop.permute.xlu0 %1377
    %1379 = vrot.lane.b32.xlu0 %v1315, 6
    %v1380 = vpop.permute.xlu0 %1379
    %1381 = vrot.lane.b32.xlu0 %v1318, 6
    %v1382 = vpop.permute.xlu0 %1381
    %1383 = vrot.lane.b32.xlu0 %v1321, 6
    %v1384 = vpop.permute.xlu0 %1383
    %1385 = vrot.lane.b32.xlu0 %v1324, 6
    %v1386 = vpop.permute.xlu0 %1385
    %1389 = vrot.lane.b32.xlu0 %v669, 9
    %v1390 = vpop.permute.xlu0 %1389
    %1391 = vrot.lane.b32.xlu0 %v670, 9
    %v1392 = vpop.permute.xlu0 %1391
    %1393 = vrot.lane.b32.xlu0 %v671, 9
    %v1394 = vpop.permute.xlu0 %1393
    %1395 = vrot.lane.b32.xlu0 %v672, 9
    %v1396 = vpop.permute.xlu0 %1395
    %1397 = vrot.lane.b32.xlu0 %v673, 9
    %v1398 = vpop.permute.xlu0 %1397
    %1399 = vrot.lane.b32.xlu0 %v674, 9
    %v1400 = vpop.permute.xlu0 %1399
    %1401 = vrot.lane.b32.xlu0 %v675, 9
    %v1402 = vpop.permute.xlu0 %1401
    %1403 = vrot.lane.b32.xlu0 %v676, 9
    %v1404 = vpop.permute.xlu0 %1403
    %1405 = vrot.lane.b32.xlu0 %v677, 9
    %v1406 = vpop.permute.xlu0 %1405
    %1407 = vrot.lane.b32.xlu0 %v678, 9
    %v1408 = vpop.permute.xlu0 %1407
    %1409 = vrot.lane.b32.xlu0 %v679, 9
    %v1410 = vpop.permute.xlu0 %1409
    %1411 = vrot.lane.b32.xlu0 %v680, 9
    %v1412 = vpop.permute.xlu0 %1411
    %1413 = vrot.lane.b32.xlu0 %v681, 9
    %v1414 = vpop.permute.xlu0 %1413
    %1415 = vrot.lane.b32.xlu0 %v682, 9
    %v1416 = vpop.permute.xlu0 %1415
    %1417 = vrot.lane.b32.xlu0 %v683, 9
    %v1418 = vpop.permute.xlu0 %1417
    %1419 = vrot.lane.b32.xlu0 %v684, 9
    %v1420 = vpop.permute.xlu0 %1419
    %1421 = vrot.lane.b32.xlu0 %v685, 9
    %v1422 = vpop.permute.xlu0 %1421
    %1423 = vrot.lane.b32.xlu0 %v686, 9
    %v1424 = vpop.permute.xlu0 %1423
    %1425 = vrot.lane.b32.xlu0 %v687, 9
    %v1426 = vpop.permute.xlu0 %1425
    %1427 = vrot.lane.b32.xlu0 %v688, 9
    %v1428 = vpop.permute.xlu0 %1427
    %1429 = vrot.lane.b32.xlu0 %v689, 9
    %v1430 = vpop.permute.xlu0 %1429
    %1431 = vrot.lane.b32.xlu0 %v690, 9
    %v1432 = vpop.permute.xlu0 %1431
    %1433 = vrot.lane.b32.xlu0 %v691, 9
    %v1434 = vpop.permute.xlu0 %1433
    %1435 = vrot.lane.b32.xlu0 %v692, 9
    %v1436 = vpop.permute.xlu0 %1435
    %1437 = vrot.lane.b32.xlu0 %v693, 9
    %v1438 = vpop.permute.xlu0 %1437
    %1439 = vrot.lane.b32.xlu0 %v694, 9
    %v1440 = vpop.permute.xlu0 %1439
    %1441 = vrot.lane.b32.xlu0 %v695, 9
    %v1442 = vpop.permute.xlu0 %1441
    %1443 = vrot.lane.b32.xlu0 %v696, 9
    %v1444 = vpop.permute.xlu0 %1443
    %1445 = vrot.lane.b32.xlu0 %v697, 9
    %v1446 = vpop.permute.xlu0 %1445
    %1447 = vrot.lane.b32.xlu0 %v698, 9
    %v1448 = vpop.permute.xlu0 %1447
    %1449 = vrot.lane.b32.xlu0 %v699, 9
    %v1450 = vpop.permute.xlu0 %1449
    %1451 = vrot.lane.b32.xlu0 %v700, 9
    %v1452 = vpop.permute.xlu0 %1451
    %v1454 = vshrl.u32 %v684, 16
    %v1456 = vshll.u32 %v684, 16
    %v1458 = vrot.slane %v1456, 1
    %v1459 = vor.u32 %v1454, %v1458
    %v1461 = vshll.u32 %v717, 16
    %v1463 = vrot.slane %v1461, 1
    %v1464 = vsel %vm734, %v1459, %v1463
    %v1466 = vshrl.u32 %v700, 16
    %v1468 = vshll.u32 %v700, 16
    %v1470 = vrot.slane %v1468, 1
    %v1471 = vor.u32 %v1466, %v1470
    %v1473 = vshll.u32 %v733, 16
    %v1475 = vrot.slane %v1473, 1
    %v1476 = vsel %vm734, %v1471, %v1475
    %1477 = vrot.lane.b32.xlu0 %v758, 12
    %v1478 = vpop.permute.xlu0 %1477
    %1479 = vrot.lane.b32.xlu0 %v770, 12
    %v1480 = vpop.permute.xlu0 %1479
    %1481 = vrot.lane.b32.xlu0 %v782, 12
    %v1482 = vpop.permute.xlu0 %1481
    %1483 = vrot.lane.b32.xlu0 %v794, 12
    %v1484 = vpop.permute.xlu0 %1483
    %1485 = vrot.lane.b32.xlu0 %v806, 12
    %v1486 = vpop.permute.xlu0 %1485
    %1487 = vrot.lane.b32.xlu0 %v818, 12
    %v1488 = vpop.permute.xlu0 %1487
    %1489 = vrot.lane.b32.xlu0 %v830, 12
    %v1490 = vpop.permute.xlu0 %1489
    %1491 = vrot.lane.b32.xlu0 %v842, 12
    %v1492 = vpop.permute.xlu0 %1491
    %1493 = vrot.lane.b32.xlu0 %v854, 12
    %v1494 = vpop.permute.xlu0 %1493
    %1495 = vrot.lane.b32.xlu0 %v866, 12
    %v1496 = vpop.permute.xlu0 %1495
    %1497 = vrot.lane.b32.xlu0 %v878, 12
    %v1498 = vpop.permute.xlu0 %1497
    %1499 = vrot.lane.b32.xlu0 %v890, 12
    %v1500 = vpop.permute.xlu0 %1499
    %1501 = vrot.lane.b32.xlu0 %v902, 12
    %v1502 = vpop.permute.xlu0 %1501
    %1503 = vrot.lane.b32.xlu0 %v914, 12
    %v1504 = vpop.permute.xlu0 %1503
    %1505 = vrot.lane.b32.xlu0 %v926, 12
    %v1506 = vpop.permute.xlu0 %1505
    %1507 = vrot.lane.b32.xlu0 %v1464, 12
    %v1508 = vpop.permute.xlu0 %1507
    %1509 = vrot.lane.b32.xlu0 %v938, 12
    %v1510 = vpop.permute.xlu0 %1509
    %1511 = vrot.lane.b32.xlu0 %v950, 12
    %v1512 = vpop.permute.xlu0 %1511
    %1513 = vrot.lane.b32.xlu0 %v962, 12
    %v1514 = vpop.permute.xlu0 %1513
    %1515 = vrot.lane.b32.xlu0 %v974, 12
    %v1516 = vpop.permute.xlu0 %1515
    %1517 = vrot.lane.b32.xlu0 %v986, 12
    %v1518 = vpop.permute.xlu0 %1517
    %1519 = vrot.lane.b32.xlu0 %v998, 12
    %v1520 = vpop.permute.xlu0 %1519
    %1521 = vrot.lane.b32.xlu0 %v1010, 12
    %v1522 = vpop.permute.xlu0 %1521
    %1523 = vrot.lane.b32.xlu0 %v1022, 12
    %v1524 = vpop.permute.xlu0 %1523
    %1525 = vrot.lane.b32.xlu0 %v1034, 12
    %v1526 = vpop.permute.xlu0 %1525
    %1527 = vrot.lane.b32.xlu0 %v1046, 12
    %v1528 = vpop.permute.xlu0 %1527
    %1529 = vrot.lane.b32.xlu0 %v1058, 12
    %v1530 = vpop.permute.xlu0 %1529
    %1531 = vrot.lane.b32.xlu0 %v1070, 12
    %v1532 = vpop.permute.xlu0 %1531
    %1533 = vrot.lane.b32.xlu0 %v1082, 12
    %v1534 = vpop.permute.xlu0 %1533
    %1535 = vrot.lane.b32.xlu0 %v1094, 12
    %v1536 = vpop.permute.xlu0 %1535
    %1537 = vrot.lane.b32.xlu0 %v1106, 12
    %v1538 = vpop.permute.xlu0 %1537
    %1539 = vrot.lane.b32.xlu0 %v1476, 12
    %v1540 = vpop.permute.xlu0 %1539
    %v1543 = vrot.slane %v684, 1
    %v1544 = vrot.slane %v717, 1
    %v1545 = vsel %vm1231, %v1543, %v1544
    %v1546 = vrot.slane %v700, 1
    %v1547 = vrot.slane %v733, 1
    %v1548 = vsel %vm1231, %v1546, %v1547
    %1549 = vrot.lane.b32.xlu0 %v1237, 15
    %v1550 = vpop.permute.xlu0 %1549
    %1551 = vrot.lane.b32.xlu0 %v1240, 15
    %v1552 = vpop.permute.xlu0 %1551
    %1553 = vrot.lane.b32.xlu0 %v1243, 15
    %v1554 = vpop.permute.xlu0 %1553
    %1555 = vrot.lane.b32.xlu0 %v1246, 15
    %v1556 = vpop.permute.xlu0 %1555
    %1557 = vrot.lane.b32.xlu0 %v1249, 15
    %v1558 = vpop.permute.xlu0 %1557
    %1559 = vrot.lane.b32.xlu0 %v1252, 15
    %v1560 = vpop.permute.xlu0 %1559
    %1561 = vrot.lane.b32.xlu0 %v1255, 15
    %v1562 = vpop.permute.xlu0 %1561
    %1563 = vrot.lane.b32.xlu0 %v1258, 15
    %v1564 = vpop.permute.xlu0 %1563
    %1565 = vrot.lane.b32.xlu0 %v1261, 15
    %v1566 = vpop.permute.xlu0 %1565
    %1567 = vrot.lane.b32.xlu0 %v1264, 15
    %v1568 = vpop.permute.xlu0 %1567
    %1569 = vrot.lane.b32.xlu0 %v1267, 15
    %v1570 = vpop.permute.xlu0 %1569
    %1571 = vrot.lane.b32.xlu0 %v1270, 15
    %v1572 = vpop.permute.xlu0 %1571
    %1573 = vrot.lane.b32.xlu0 %v1273, 15
    %v1574 = vpop.permute.xlu0 %1573
    %1575 = vrot.lane.b32.xlu0 %v1276, 15
    %v1576 = vpop.permute.xlu0 %1575
    %1577 = vrot.lane.b32.xlu0 %v1279, 15
    %v1578 = vpop.permute.xlu0 %1577
    %1579 = vrot.lane.b32.xlu0 %v1545, 15
    %v1580 = vpop.permute.xlu0 %1579
    %1581 = vrot.lane.b32.xlu0 %v1282, 15
    %v1582 = vpop.permute.xlu0 %1581
    %1583 = vrot.lane.b32.xlu0 %v1285, 15
    %v1584 = vpop.permute.xlu0 %1583
    %1585 = vrot.lane.b32.xlu0 %v1288, 15
    %v1586 = vpop.permute.xlu0 %1585
    %1587 = vrot.lane.b32.xlu0 %v1291, 15
    %v1588 = vpop.permute.xlu0 %1587
    %1589 = vrot.lane.b32.xlu0 %v1294, 15
    %v1590 = vpop.permute.xlu0 %1589
    %1591 = vrot.lane.b32.xlu0 %v1297, 15
    %v1592 = vpop.permute.xlu0 %1591
    %1593 = vrot.lane.b32.xlu0 %v1300, 15
    %v1594 = vpop.permute.xlu0 %1593
    %1595 = vrot.lane.b32.xlu0 %v1303, 15
    %v1596 = vpop.permute.xlu0 %1595
    %1597 = vrot.lane.b32.xlu0 %v1306, 15
    %v1598 = vpop.permute.xlu0 %1597
    %1599 = vrot.lane.b32.xlu0 %v1309, 15
    %v1600 = vpop.permute.xlu0 %1599
    %1601 = vrot.lane.b32.xlu0 %v1312, 15
    %v1602 = vpop.permute.xlu0 %1601
    %1603 = vrot.lane.b32.xlu0 %v1315, 15
    %v1604 = vpop.permute.xlu0 %1603
    %1605 = vrot.lane.b32.xlu0 %v1318, 15
    %v1606 = vpop.permute.xlu0 %1605
    %1607 = vrot.lane.b32.xlu0 %v1321, 15
    %v1608 = vpop.permute.xlu0 %1607
    %1609 = vrot.lane.b32.xlu0 %v1324, 15
    %v1610 = vpop.permute.xlu0 %1609
    %1611 = vrot.lane.b32.xlu0 %v1548, 15
    %v1612 = vpop.permute.xlu0 %1611
    %1613 = vrot.lane.b32.xlu0 %v670, 18
    %v1614 = vpop.permute.xlu0 %1613
    %1615 = vrot.lane.b32.xlu0 %v671, 18
    %v1616 = vpop.permute.xlu0 %1615
    %1617 = vrot.lane.b32.xlu0 %v672, 18
    %v1618 = vpop.permute.xlu0 %1617
    %1619 = vrot.lane.b32.xlu0 %v673, 18
    %v1620 = vpop.permute.xlu0 %1619
    %1621 = vrot.lane.b32.xlu0 %v674, 18
    %v1622 = vpop.permute.xlu0 %1621
    %1623 = vrot.lane.b32.xlu0 %v675, 18
    %v1624 = vpop.permute.xlu0 %1623
    %1625 = vrot.lane.b32.xlu0 %v676, 18
    %v1626 = vpop.permute.xlu0 %1625
    %1627 = vrot.lane.b32.xlu0 %v677, 18
    %v1628 = vpop.permute.xlu0 %1627
    %1629 = vrot.lane.b32.xlu0 %v678, 18
    %v1630 = vpop.permute.xlu0 %1629
    %1631 = vrot.lane.b32.xlu0 %v679, 18
    %v1632 = vpop.permute.xlu0 %1631
    %1633 = vrot.lane.b32.xlu0 %v680, 18
    %v1634 = vpop.permute.xlu0 %1633
    %1635 = vrot.lane.b32.xlu0 %v681, 18
    %v1636 = vpop.permute.xlu0 %1635
    %1637 = vrot.lane.b32.xlu0 %v682, 18
    %v1638 = vpop.permute.xlu0 %1637
    %1639 = vrot.lane.b32.xlu0 %v683, 18
    %v1640 = vpop.permute.xlu0 %1639
    %1641 = vrot.lane.b32.xlu0 %v684, 18
    %v1642 = vpop.permute.xlu0 %1641
    %1643 = vrot.lane.b32.xlu0 %v668, 18
    %v1644 = vpop.permute.xlu0 %1643
    %1645 = vrot.lane.b32.xlu0 %v686, 18
    %v1646 = vpop.permute.xlu0 %1645
    %1647 = vrot.lane.b32.xlu0 %v687, 18
    %v1648 = vpop.permute.xlu0 %1647
    %1649 = vrot.lane.b32.xlu0 %v688, 18
    %v1650 = vpop.permute.xlu0 %1649
    %1651 = vrot.lane.b32.xlu0 %v689, 18
    %v1652 = vpop.permute.xlu0 %1651
    %1653 = vrot.lane.b32.xlu0 %v690, 18
    %v1654 = vpop.permute.xlu0 %1653
    %1655 = vrot.lane.b32.xlu0 %v691, 18
    %v1656 = vpop.permute.xlu0 %1655
    %1657 = vrot.lane.b32.xlu0 %v692, 18
    %v1658 = vpop.permute.xlu0 %1657
    %1659 = vrot.lane.b32.xlu0 %v693, 18
    %v1660 = vpop.permute.xlu0 %1659
    %1661 = vrot.lane.b32.xlu0 %v694, 18
    %v1662 = vpop.permute.xlu0 %1661
    %1663 = vrot.lane.b32.xlu0 %v695, 18
    %v1664 = vpop.permute.xlu0 %1663
    %1665 = vrot.lane.b32.xlu0 %v696, 18
    %v1666 = vpop.permute.xlu0 %1665
    %1667 = vrot.lane.b32.xlu0 %v697, 18
    %v1668 = vpop.permute.xlu0 %1667
    %1669 = vrot.lane.b32.xlu0 %v698, 18
    %v1670 = vpop.permute.xlu0 %1669
    %1671 = vrot.lane.b32.xlu0 %v699, 18
    %v1672 = vpop.permute.xlu0 %1671
    %1673 = vrot.lane.b32.xlu0 %v700, 18
    %v1674 = vpop.permute.xlu0 %1673
    %1675 = vrot.lane.b32.xlu0 %v770, 21
    %v1676 = vpop.permute.xlu0 %1675
    %1677 = vrot.lane.b32.xlu0 %v782, 21
    %v1678 = vpop.permute.xlu0 %1677
    %1679 = vrot.lane.b32.xlu0 %v794, 21
    %v1680 = vpop.permute.xlu0 %1679
    %1681 = vrot.lane.b32.xlu0 %v806, 21
    %v1682 = vpop.permute.xlu0 %1681
    %1683 = vrot.lane.b32.xlu0 %v818, 21
    %v1684 = vpop.permute.xlu0 %1683
    %1685 = vrot.lane.b32.xlu0 %v830, 21
    %v1686 = vpop.permute.xlu0 %1685
    %1687 = vrot.lane.b32.xlu0 %v842, 21
    %v1688 = vpop.permute.xlu0 %1687
    %1689 = vrot.lane.b32.xlu0 %v854, 21
    %v1690 = vpop.permute.xlu0 %1689
    %1691 = vrot.lane.b32.xlu0 %v866, 21
    %v1692 = vpop.permute.xlu0 %1691
    %1693 = vrot.lane.b32.xlu0 %v878, 21
    %v1694 = vpop.permute.xlu0 %1693
    %1695 = vrot.lane.b32.xlu0 %v890, 21
    %v1696 = vpop.permute.xlu0 %1695
    %1697 = vrot.lane.b32.xlu0 %v902, 21
    %v1698 = vpop.permute.xlu0 %1697
    %1699 = vrot.lane.b32.xlu0 %v914, 21
    %v1700 = vpop.permute.xlu0 %1699
    %1701 = vrot.lane.b32.xlu0 %v926, 21
    %v1702 = vpop.permute.xlu0 %1701
    %1703 = vrot.lane.b32.xlu0 %v1464, 21
    %v1704 = vpop.permute.xlu0 %1703
    %1705 = vrot.lane.b32.xlu0 %v746, 21
    %v1706 = vpop.permute.xlu0 %1705
    %1707 = vrot.lane.b32.xlu0 %v950, 21
    %v1708 = vpop.permute.xlu0 %1707
    %1709 = vrot.lane.b32.xlu0 %v962, 21
    %v1710 = vpop.permute.xlu0 %1709
    %1711 = vrot.lane.b32.xlu0 %v974, 21
    %v1712 = vpop.permute.xlu0 %1711
    %1713 = vrot.lane.b32.xlu0 %v986, 21
    %v1714 = vpop.permute.xlu0 %1713
    %1715 = vrot.lane.b32.xlu0 %v998, 21
    %v1716 = vpop.permute.xlu0 %1715
    %1717 = vrot.lane.b32.xlu0 %v1010, 21
    %v1718 = vpop.permute.xlu0 %1717
    %1719 = vrot.lane.b32.xlu0 %v1022, 21
    %v1720 = vpop.permute.xlu0 %1719
    %1721 = vrot.lane.b32.xlu0 %v1034, 21
    %v1722 = vpop.permute.xlu0 %1721
    %1723 = vrot.lane.b32.xlu0 %v1046, 21
    %v1724 = vpop.permute.xlu0 %1723
    %1725 = vrot.lane.b32.xlu0 %v1058, 21
    %v1726 = vpop.permute.xlu0 %1725
    %1727 = vrot.lane.b32.xlu0 %v1070, 21
    %v1728 = vpop.permute.xlu0 %1727
    %1729 = vrot.lane.b32.xlu0 %v1082, 21
    %v1730 = vpop.permute.xlu0 %1729
    %1731 = vrot.lane.b32.xlu0 %v1094, 21
    %v1732 = vpop.permute.xlu0 %1731
    %1733 = vrot.lane.b32.xlu0 %v1106, 21
    %v1734 = vpop.permute.xlu0 %1733
    %1735 = vrot.lane.b32.xlu0 %v1476, 21
    %v1736 = vpop.permute.xlu0 %1735
    %1737 = vrot.lane.b32.xlu0 %v1240, 24
    %v1738 = vpop.permute.xlu0 %1737
    %1739 = vrot.lane.b32.xlu0 %v1243, 24
    %v1740 = vpop.permute.xlu0 %1739
    %1741 = vrot.lane.b32.xlu0 %v1246, 24
    %v1742 = vpop.permute.xlu0 %1741
    %1743 = vrot.lane.b32.xlu0 %v1249, 24
    %v1744 = vpop.permute.xlu0 %1743
    %1745 = vrot.lane.b32.xlu0 %v1252, 24
    %v1746 = vpop.permute.xlu0 %1745
    %1747 = vrot.lane.b32.xlu0 %v1255, 24
    %v1748 = vpop.permute.xlu0 %1747
    %1749 = vrot.lane.b32.xlu0 %v1258, 24
    %v1750 = vpop.permute.xlu0 %1749
    %1751 = vrot.lane.b32.xlu0 %v1261, 24
    %v1752 = vpop.permute.xlu0 %1751
    %1753 = vrot.lane.b32.xlu0 %v1264, 24
    %v1754 = vpop.permute.xlu0 %1753
    %1755 = vrot.lane.b32.xlu0 %v1267, 24
    %v1756 = vpop.permute.xlu0 %1755
    %1757 = vrot.lane.b32.xlu0 %v1270, 24
    %v1758 = vpop.permute.xlu0 %1757
    %1759 = vrot.lane.b32.xlu0 %v1273, 24
    %v1760 = vpop.permute.xlu0 %1759
    %1761 = vrot.lane.b32.xlu0 %v1276, 24
    %v1762 = vpop.permute.xlu0 %1761
    %1763 = vrot.lane.b32.xlu0 %v1279, 24
    %v1764 = vpop.permute.xlu0 %1763
    %1765 = vrot.lane.b32.xlu0 %v1545, 24
    %v1766 = vpop.permute.xlu0 %1765
    %1767 = vrot.lane.b32.xlu0 %v1234, 24
    %v1768 = vpop.permute.xlu0 %1767
    %1769 = vrot.lane.b32.xlu0 %v1285, 24
    %v1770 = vpop.permute.xlu0 %1769
    %1771 = vrot.lane.b32.xlu0 %v1288, 24
    %v1772 = vpop.permute.xlu0 %1771
    %1773 = vrot.lane.b32.xlu0 %v1291, 24
    %v1774 = vpop.permute.xlu0 %1773
    %1775 = vrot.lane.b32.xlu0 %v1294, 24
    %v1776 = vpop.permute.xlu0 %1775
    %1777 = vrot.lane.b32.xlu0 %v1297, 24
    %v1778 = vpop.permute.xlu0 %1777
    %1779 = vrot.lane.b32.xlu0 %v1300, 24
    %v1780 = vpop.permute.xlu0 %1779
    %1781 = vrot.lane.b32.xlu0 %v1303, 24
    %v1782 = vpop.permute.xlu0 %1781
    %1783 = vrot.lane.b32.xlu0 %v1306, 24
    %v1784 = vpop.permute.xlu0 %1783
    %1785 = vrot.lane.b32.xlu0 %v1309, 24
    %v1786 = vpop.permute.xlu0 %1785
    %1787 = vrot.lane.b32.xlu0 %v1312, 24
    %v1788 = vpop.permute.xlu0 %1787
    %1789 = vrot.lane.b32.xlu0 %v1315, 24
    %v1790 = vpop.permute.xlu0 %1789
    %1791 = vrot.lane.b32.xlu0 %v1318, 24
    %v1792 = vpop.permute.xlu0 %1791
    %1793 = vrot.lane.b32.xlu0 %v1321, 24
    %v1794 = vpop.permute.xlu0 %1793
    %1795 = vrot.lane.b32.xlu0 %v1324, 24
    %v1796 = vpop.permute.xlu0 %1795
    %1797 = vrot.lane.b32.xlu0 %v1548, 24
    %v1798 = vpop.permute.xlu0 %1797
    %vm1799 = vcmask 23552
    %v1801 = vsel %vm1799, %v668, %v1108
    %v1803 = vsel %vm1799, %v669, %v1110
    %v1805 = vsel %vm1799, %v670, %v1112
    %v1807 = vsel %vm1799, %v671, %v1114
    %v1809 = vsel %vm1799, %v672, %v1116
    %v1811 = vsel %vm1799, %v673, %v1118
    %v1813 = vsel %vm1799, %v674, %v1120
    %v1815 = vsel %vm1799, %v675, %v1122
    %v1817 = vsel %vm1799, %v676, %v1124
    %v1819 = vsel %vm1799, %v677, %v1126
    %v1821 = vsel %vm1799, %v678, %v1128
    %v1823 = vsel %vm1799, %v679, %v1130
    %v1825 = vsel %vm1799, %v680, %v1132
    %v1827 = vsel %vm1799, %v681, %v1134
    %v1829 = vsel %vm1799, %v682, %v1136
    %v1831 = vsel %vm1799, %v683, %v1138
    %v1833 = vsel %vm1799, %v685, %v1140
    %v1835 = vsel %vm1799, %v686, %v1142
    %v1837 = vsel %vm1799, %v687, %v1144
    %v1839 = vsel %vm1799, %v688, %v1146
    %v1841 = vsel %vm1799, %v689, %v1148
    %v1843 = vsel %vm1799, %v690, %v1150
    %v1845 = vsel %vm1799, %v691, %v1152
    %v1847 = vsel %vm1799, %v692, %v1154
    %v1849 = vsel %vm1799, %v693, %v1156
    %v1851 = vsel %vm1799, %v694, %v1158
    %v1853 = vsel %vm1799, %v695, %v1160
    %v1855 = vsel %vm1799, %v696, %v1162
    %v1857 = vsel %vm1799, %v697, %v1164
    %v1859 = vsel %vm1799, %v698, %v1166
    %v1861 = vsel %vm1799, %v699, %v1168
    %vm1862 = vcmask 48128
    %v1864 = vsel %vm1862, %v1801, %v1326
    %v1866 = vsel %vm1862, %v1803, %v1328
    %v1868 = vsel %vm1862, %v1805, %v1330
    %v1870 = vsel %vm1862, %v1807, %v1332
    %v1872 = vsel %vm1862, %v1809, %v1334
    %v1874 = vsel %vm1862, %v1811, %v1336
    %v1876 = vsel %vm1862, %v1813, %v1338
    %v1878 = vsel %vm1862, %v1815, %v1340
    %v1880 = vsel %vm1862, %v1817, %v1342
    %v1882 = vsel %vm1862, %v1819, %v1344
    %v1884 = vsel %vm1862, %v1821, %v1346
    %v1886 = vsel %vm1862, %v1823, %v1348
    %v1888 = vsel %vm1862, %v1825, %v1350
    %v1890 = vsel %vm1862, %v1827, %v1352
    %v1892 = vsel %vm1862, %v1829, %v1354
    %v1894 = vsel %vm1862, %v1831, %v1356
    %v1896 = vsel %vm1862, %v1833, %v1358
    %v1898 = vsel %vm1862, %v1835, %v1360
    %v1900 = vsel %vm1862, %v1837, %v1362
    %v1902 = vsel %vm1862, %v1839, %v1364
    %v1904 = vsel %vm1862, %v1841, %v1366
    %v1906 = vsel %vm1862, %v1843, %v1368
    %v1908 = vsel %vm1862, %v1845, %v1370
    %v1910 = vsel %vm1862, %v1847, %v1372
    %v1912 = vsel %vm1862, %v1849, %v1374
    %v1914 = vsel %vm1862, %v1851, %v1376
    %v1916 = vsel %vm1862, %v1853, %v1378
    %v1918 = vsel %vm1862, %v1855, %v1380
    %v1920 = vsel %vm1862, %v1857, %v1382
    %v1922 = vsel %vm1862, %v1859, %v1384
    %v1924 = vsel %vm1862, %v1861, %v1386
    %vm1925 = vcmask 72704
    %v1927 = vsel %vm1925, %v1864, %v1390
    %v1929 = vsel %vm1925, %v1866, %v1392
    %v1931 = vsel %vm1925, %v1868, %v1394
    %v1933 = vsel %vm1925, %v1870, %v1396
    %v1935 = vsel %vm1925, %v1872, %v1398
    %v1937 = vsel %vm1925, %v1874, %v1400
    %v1939 = vsel %vm1925, %v1876, %v1402
    %v1941 = vsel %vm1925, %v1878, %v1404
    %v1943 = vsel %vm1925, %v1880, %v1406
    %v1945 = vsel %vm1925, %v1882, %v1408
    %v1947 = vsel %vm1925, %v1884, %v1410
    %v1949 = vsel %vm1925, %v1886, %v1412
    %v1951 = vsel %vm1925, %v1888, %v1414
    %v1953 = vsel %vm1925, %v1890, %v1416
    %v1955 = vsel %vm1925, %v1892, %v1418
    %v1957 = vsel %vm1925, %v1894, %v1420
    %v1959 = vsel %vm1925, %v1864, %v1422
    %v1961 = vsel %vm1925, %v1896, %v1424
    %v1963 = vsel %vm1925, %v1898, %v1426
    %v1965 = vsel %vm1925, %v1900, %v1428
    %v1967 = vsel %vm1925, %v1902, %v1430
    %v1969 = vsel %vm1925, %v1904, %v1432
    %v1971 = vsel %vm1925, %v1906, %v1434
    %v1973 = vsel %vm1925, %v1908, %v1436
    %v1975 = vsel %vm1925, %v1910, %v1438
    %v1977 = vsel %vm1925, %v1912, %v1440
    %v1979 = vsel %vm1925, %v1914, %v1442
    %v1981 = vsel %vm1925, %v1916, %v1444
    %v1983 = vsel %vm1925, %v1918, %v1446
    %v1985 = vsel %vm1925, %v1920, %v1448
    %v1987 = vsel %vm1925, %v1922, %v1450
    %v1989 = vsel %vm1925, %v1924, %v1452
    %vm1990 = vcmask 97280
    %v1992 = vsel %vm1990, %v1927, %v1478
    %v1994 = vsel %vm1990, %v1929, %v1480
    %v1996 = vsel %vm1990, %v1931, %v1482
    %v1998 = vsel %vm1990, %v1933, %v1484
    %v2000 = vsel %vm1990, %v1935, %v1486
    %v2002 = vsel %vm1990, %v1937, %v1488
    %v2004 = vsel %vm1990, %v1939, %v1490
    %v2006 = vsel %vm1990, %v1941, %v1492
    %v2008 = vsel %vm1990, %v1943, %v1494
    %v2010 = vsel %vm1990, %v1945, %v1496
    %v2012 = vsel %vm1990, %v1947, %v1498
    %v2014 = vsel %vm1990, %v1949, %v1500
    %v2016 = vsel %vm1990, %v1951, %v1502
    %v2018 = vsel %vm1990, %v1953, %v1504
    %v2020 = vsel %vm1990, %v1955, %v1506
    %v2022 = vsel %vm1990, %v1957, %v1508
    %v2024 = vsel %vm1990, %v1959, %v1510
    %v2026 = vsel %vm1990, %v1961, %v1512
    %v2028 = vsel %vm1990, %v1963, %v1514
    %v2030 = vsel %vm1990, %v1965, %v1516
    %v2032 = vsel %vm1990, %v1967, %v1518
    %v2034 = vsel %vm1990, %v1969, %v1520
    %v2036 = vsel %vm1990, %v1971, %v1522
    %v2038 = vsel %vm1990, %v1973, %v1524
    %v2040 = vsel %vm1990, %v1975, %v1526
    %v2042 = vsel %vm1990, %v1977, %v1528
    %v2044 = vsel %vm1990, %v1979, %v1530
    %v2046 = vsel %vm1990, %v1981, %v1532
    %v2048 = vsel %vm1990, %v1983, %v1534
    %v2050 = vsel %vm1990, %v1985, %v1536
    %v2052 = vsel %vm1990, %v1987, %v1538
    %v2054 = vsel %vm1990, %v1989, %v1540
    %vm2055 = vcmask 121856
    %v2057 = vsel %vm2055, %v1992, %v1550
    %v2059 = vsel %vm2055, %v1994, %v1552
    %v2061 = vsel %vm2055, %v1996, %v1554
    %v2063 = vsel %vm2055, %v1998, %v1556
    %v2065 = vsel %vm2055, %v2000, %v1558
    %v2067 = vsel %vm2055, %v2002, %v1560
    %v2069 = vsel %vm2055, %v2004, %v1562
    %v2071 = vsel %vm2055, %v2006, %v1564
    %v2073 = vsel %vm2055, %v2008, %v1566
    %v2075 = vsel %vm2055, %v2010, %v1568
    %v2077 = vsel %vm2055, %v2012, %v1570
    %v2079 = vsel %vm2055, %v2014, %v1572
    %v2081 = vsel %vm2055, %v2016, %v1574
    %v2083 = vsel %vm2055, %v2018, %v1576
    %v2085 = vsel %vm2055, %v2020, %v1578
    %v2087 = vsel %vm2055, %v2022, %v1580
    %v2089 = vsel %vm2055, %v2024, %v1582
    %v2091 = vsel %vm2055, %v2026, %v1584
    %v2093 = vsel %vm2055, %v2028, %v1586
    %v2095 = vsel %vm2055, %v2030, %v1588
    %v2097 = vsel %vm2055, %v2032, %v1590
    %v2099 = vsel %vm2055, %v2034, %v1592
    %v2101 = vsel %vm2055, %v2036, %v1594
    %v2103 = vsel %vm2055, %v2038, %v1596
    %v2105 = vsel %vm2055, %v2040, %v1598
    %v2107 = vsel %vm2055, %v2042, %v1600
    %v2109 = vsel %vm2055, %v2044, %v1602
    %v2111 = vsel %vm2055, %v2046, %v1604
    %v2113 = vsel %vm2055, %v2048, %v1606
    %v2115 = vsel %vm2055, %v2050, %v1608
    %v2117 = vsel %vm2055, %v2052, %v1610
    %v2119 = vsel %vm2055, %v2054, %v1612
    %vm2120 = vcmask 146432
    %v2122 = vsel %vm2120, %v2057, %v1614
    %v2124 = vsel %vm2120, %v2059, %v1616
    %v2126 = vsel %vm2120, %v2061, %v1618
    %v2128 = vsel %vm2120, %v2063, %v1620
    %v2130 = vsel %vm2120, %v2065, %v1622
    %v2132 = vsel %vm2120, %v2067, %v1624
    %v2134 = vsel %vm2120, %v2069, %v1626
    %v2136 = vsel %vm2120, %v2071, %v1628
    %v2138 = vsel %vm2120, %v2073, %v1630
    %v2140 = vsel %vm2120, %v2075, %v1632
    %v2142 = vsel %vm2120, %v2077, %v1634
    %v2144 = vsel %vm2120, %v2079, %v1636
    %v2146 = vsel %vm2120, %v2081, %v1638
    %v2148 = vsel %vm2120, %v2083, %v1640
    %v2150 = vsel %vm2120, %v2085, %v1642
    %v2152 = vsel %vm2120, %v2087, %v1644
    %v2154 = vsel %vm2120, %v2089, %v1646
    %v2156 = vsel %vm2120, %v2091, %v1648
    %v2158 = vsel %vm2120, %v2093, %v1650
    %v2160 = vsel %vm2120, %v2095, %v1652
    %v2162 = vsel %vm2120, %v2097, %v1654
    %v2164 = vsel %vm2120, %v2099, %v1656
    %v2166 = vsel %vm2120, %v2101, %v1658
    %v2168 = vsel %vm2120, %v2103, %v1660
    %v2170 = vsel %vm2120, %v2105, %v1662
    %v2172 = vsel %vm2120, %v2107, %v1664
    %v2174 = vsel %vm2120, %v2109, %v1666
    %v2176 = vsel %vm2120, %v2111, %v1668
    %v2178 = vsel %vm2120, %v2113, %v1670
    %v2180 = vsel %vm2120, %v2115, %v1672
    %v2182 = vsel %vm2120, %v2117, %v1674
    %v2183 = vsel %vm2120, %v2119, %v1644
    %vm2184 = vcmask 171008
    %v2186 = vsel %vm2184, %v2122, %v1676
    %v2188 = vsel %vm2184, %v2124, %v1678
    %v2190 = vsel %vm2184, %v2126, %v1680
    %v2192 = vsel %vm2184, %v2128, %v1682
    %v2194 = vsel %vm2184, %v2130, %v1684
    %v2196 = vsel %vm2184, %v2132, %v1686
    %v2198 = vsel %vm2184, %v2134, %v1688
    %v2200 = vsel %vm2184, %v2136, %v1690
    %v2202 = vsel %vm2184, %v2138, %v1692
    %v2204 = vsel %vm2184, %v2140, %v1694
    %v2206 = vsel %vm2184, %v2142, %v1696
    %v2208 = vsel %vm2184, %v2144, %v1698
    %v2210 = vsel %vm2184, %v2146, %v1700
    %v2212 = vsel %vm2184, %v2148, %v1702
    %v2214 = vsel %vm2184, %v2150, %v1704
    %v2216 = vsel %vm2184, %v2152, %v1706
    %v2218 = vsel %vm2184, %v2154, %v1708
    %v2220 = vsel %vm2184, %v2156, %v1710
    %v2222 = vsel %vm2184, %v2158, %v1712
    %v2224 = vsel %vm2184, %v2160, %v1714
    %v2226 = vsel %vm2184, %v2162, %v1716
    %v2228 = vsel %vm2184, %v2164, %v1718
    %v2230 = vsel %vm2184, %v2166, %v1720
    %v2232 = vsel %vm2184, %v2168, %v1722
    %v2234 = vsel %vm2184, %v2170, %v1724
    %v2236 = vsel %vm2184, %v2172, %v1726
    %v2238 = vsel %vm2184, %v2174, %v1728
    %v2240 = vsel %vm2184, %v2176, %v1730
    %v2242 = vsel %vm2184, %v2178, %v1732
    %v2244 = vsel %vm2184, %v2180, %v1734
    %v2246 = vsel %vm2184, %v2182, %v1736
    %v2247 = vsel %vm2184, %v2183, %v1706
    %vm2248 = vcmask 195584
    %v2250 = vsel %vm2248, %v2186, %v1738
    %v2252 = vsel %vm2248, %v2188, %v1740
    %v2254 = vsel %vm2248, %v2190, %v1742
    %v2256 = vsel %vm2248, %v2192, %v1744
    %v2258 = vsel %vm2248, %v2194, %v1746
    %v2260 = vsel %vm2248, %v2196, %v1748
    %v2262 = vsel %vm2248, %v2198, %v1750
    %v2264 = vsel %vm2248, %v2200, %v1752
    %v2266 = vsel %vm2248, %v2202, %v1754
    %v2268 = vsel %vm2248, %v2204, %v1756
    %v2270 = vsel %vm2248, %v2206, %v1758
    %v2272 = vsel %vm2248, %v2208, %v1760
    %v2274 = vsel %vm2248, %v2210, %v1762
    %v2276 = vsel %vm2248, %v2212, %v1764
    %v2278 = vsel %vm2248, %v2214, %v1766
    %v2280 = vsel %vm2248, %v2216, %v1768
    %v2282 = vsel %vm2248, %v2218, %v1770
    %v2284 = vsel %vm2248, %v2220, %v1772
    %v2286 = vsel %vm2248, %v2222, %v1774
    %v2288 = vsel %vm2248, %v2224, %v1776
    %v2290 = vsel %vm2248, %v2226, %v1778
    %v2292 = vsel %vm2248, %v2228, %v1780
    %v2294 = vsel %vm2248, %v2230, %v1782
    %v2296 = vsel %vm2248, %v2232, %v1784
    %v2298 = vsel %vm2248, %v2234, %v1786
    %v2300 = vsel %vm2248, %v2236, %v1788
    %v2302 = vsel %vm2248, %v2238, %v1790
    %v2304 = vsel %vm2248, %v2240, %v1792
    %v2306 = vsel %vm2248, %v2242, %v1794
    %v2308 = vsel %vm2248, %v2244, %v1796
    %v2310 = vsel %vm2248, %v2246, %v1798
    %v2311 = vsel %vm2248, %v2247, %v1768
    %v2312 = vld [vmem:[%s1] sm:$0xf]
    %v2313 = vld [vmem:[%s1 + $0x4] sm:$0xf]
    %v2314 = vld [vmem:[%s1 + $0x8] sm:$0xf]
    %v2315 = vld [vmem:[%s1 + $0xc] sm:$0x3]
    %v2316 = vld [vmem:[%s2] sm:$0x1]
    %v2318 = vperm.slane %v2316, 0
    %v2324 = vunpack.c.l.b16 %v2312
    %v2325 = vunpack.c.l.b16 %v2313
    %v2326 = vunpack.c.l.b16 %v2314
    %v2327 = vunpack.c.l.b16 %v2315
    %v2328 = vpack.c.b16 %v2325, %v2324
    %v2329 = vpack.c.b16 %v2327, %v2326
    %vm2331 = vcmask 220160
    %v2332 = vsel %vm2331, %v2250, 0
    %v2334 = vsel %vm2331, %v2252, 0
    %v2336 = vsel %vm2331, %v2254, 0
    %v2338 = vsel %vm2331, %v2256, 0
    %v2340 = vsel %vm2331, %v2258, 0
    %v2342 = vsel %vm2331, %v2260, 0
    %v2344 = vsel %vm2331, %v2262, 0
    %v2346 = vsel %vm2331, %v2264, 0
    %v2348 = vsel %vm2331, %v2266, 0
    %v2350 = vsel %vm2331, %v2268, 0
    %v2352 = vsel %vm2331, %v2270, 0
    %v2354 = vsel %vm2331, %v2272, 0
    %v2356 = vsel %vm2331, %v2274, 0
    %v2358 = vsel %vm2331, %v2276, 0
    %v2360 = vsel %vm2331, %v2278, 0
    %v2362 = vsel %vm2331, %v2280, 0
    %v2364 = vsel %vm2331, %v2282, 0
    %v2366 = vsel %vm2331, %v2284, 0
    %v2368 = vsel %vm2331, %v2286, 0
    %v2370 = vsel %vm2331, %v2288, 0
    %v2372 = vsel %vm2331, %v2290, 0
    %v2374 = vsel %vm2331, %v2292, 0
    %v2376 = vsel %vm2331, %v2294, 0
    %v2378 = vsel %vm2331, %v2296, 0
    %v2380 = vsel %vm2331, %v2298, 0
    %v2382 = vsel %vm2331, %v2300, 0
    %v2384 = vsel %vm2331, %v2302, 0
    %v2386 = vsel %vm2331, %v2304, 0
    %v2388 = vsel %vm2331, %v2306, 0
    %v2390 = vsel %vm2331, %v2308, 0
    %v2392 = vsel %vm2331, %v2310, 0
    %v2394 = vsel %vm2331, %v2311, 0
    %vm2396 = vcmask 1044480
    %vm2397 = vcmask 1045504
    %v2398 = vsel %vm2396, 4294967295, 65535
    %v2399 = vsel %vm2397, %v2398, 0
    %v2401 = vand.u32 %v2329, %v2399
    %2403 = vmatpush.bf16.msra.mxu0 0
    %2404 = vmatpush.bf16.msra.mxu0 0
    %2405 = vmatpush.bf16.msra.mxu0 0
    %2406 = vmatpush.bf16.msra.mxu0 0
    %2407 = vmatpush.bf16.msra.mxu0 0
    %2408 = vmatpush.bf16.msra.mxu0 0
    %2409 = vmatpush.bf16.msra.mxu0 %v2401
    %2410 = vmatpush.bf16.msra.mxu0 %v2328
    %2411 = vmatmul.bf16.gmra.mxu0 %v2332
    %v2412 = vpop.f32.mrf.mxu0
    %v2413 = vadd.f32 %v2318, %v2412
    %v2414 = vpop.f32.mrf.mxu0
    %v2415 = vadd.f32 %v2318, %v2414
    %2416 = vmatmul.bf16.gmra.mxu0 %v2334
    %v2417 = vpop.f32.mrf.mxu0
    %v2418 = vadd.f32 %v2318, %v2417
    %v2419 = vpop.f32.mrf.mxu0
    %v2420 = vadd.f32 %v2318, %v2419
    %2421 = vmatmul.bf16.gmra.mxu0 %v2336
    %v2422 = vpop.f32.mrf.mxu0
    %v2423 = vadd.f32 %v2318, %v2422
    %v2424 = vpop.f32.mrf.mxu0
    %v2425 = vadd.f32 %v2318, %v2424
    %2426 = vmatmul.bf16.gmra.mxu0 %v2338
    %v2427 = vpop.f32.mrf.mxu0
    %v2428 = vadd.f32 %v2318, %v2427
    %v2429 = vpop.f32.mrf.mxu0
    %v2430 = vadd.f32 %v2318, %v2429
    %2431 = vmatmul.bf16.gmra.mxu0 %v2340
    %v2432 = vpop.f32.mrf.mxu0
    %v2433 = vadd.f32 %v2318, %v2432
    %v2434 = vpop.f32.mrf.mxu0
    %v2435 = vadd.f32 %v2318, %v2434
    %2436 = vmatmul.bf16.gmra.mxu0 %v2342
    %v2437 = vpop.f32.mrf.mxu0
    %v2438 = vadd.f32 %v2318, %v2437
    %v2439 = vpop.f32.mrf.mxu0
    %v2440 = vadd.f32 %v2318, %v2439
    %2441 = vmatmul.bf16.gmra.mxu0 %v2344
    %v2442 = vpop.f32.mrf.mxu0
    %v2443 = vadd.f32 %v2318, %v2442
    %v2444 = vpop.f32.mrf.mxu0
    %v2445 = vadd.f32 %v2318, %v2444
    %2446 = vmatmul.bf16.gmra.mxu0 %v2346
    %v2447 = vpop.f32.mrf.mxu0
    %v2448 = vadd.f32 %v2318, %v2447
    %v2449 = vpop.f32.mrf.mxu0
    %v2450 = vadd.f32 %v2318, %v2449
    %2451 = vmatmul.bf16.gmra.mxu0 %v2348
    %v2452 = vpop.f32.mrf.mxu0
    %v2453 = vadd.f32 %v2318, %v2452
    %v2454 = vpop.f32.mrf.mxu0
    %v2455 = vadd.f32 %v2318, %v2454
    %2456 = vmatmul.bf16.gmra.mxu0 %v2350
    %v2457 = vpop.f32.mrf.mxu0
    %v2458 = vadd.f32 %v2318, %v2457
    %v2459 = vpop.f32.mrf.mxu0
    %v2460 = vadd.f32 %v2318, %v2459
    %2461 = vmatmul.bf16.gmra.mxu0 %v2352
    %v2462 = vpop.f32.mrf.mxu0
    %v2463 = vadd.f32 %v2318, %v2462
    %v2464 = vpop.f32.mrf.mxu0
    %v2465 = vadd.f32 %v2318, %v2464
    %2466 = vmatmul.bf16.gmra.mxu0 %v2354
    %v2467 = vpop.f32.mrf.mxu0
    %v2468 = vadd.f32 %v2318, %v2467
    %v2469 = vpop.f32.mrf.mxu0
    %v2470 = vadd.f32 %v2318, %v2469
    %2471 = vmatmul.bf16.gmra.mxu0 %v2356
    %v2472 = vpop.f32.mrf.mxu0
    %v2473 = vadd.f32 %v2318, %v2472
    %v2474 = vpop.f32.mrf.mxu0
    %v2475 = vadd.f32 %v2318, %v2474
    %2476 = vmatmul.bf16.gmra.mxu0 %v2358
    %v2477 = vpop.f32.mrf.mxu0
    %v2478 = vadd.f32 %v2318, %v2477
    %v2479 = vpop.f32.mrf.mxu0
    %v2480 = vadd.f32 %v2318, %v2479
    %2481 = vmatmul.bf16.gmra.mxu0 %v2360
    %v2482 = vpop.f32.mrf.mxu0
    %v2483 = vadd.f32 %v2318, %v2482
    %v2484 = vpop.f32.mrf.mxu0
    %v2485 = vadd.f32 %v2318, %v2484
    %2486 = vmatmul.bf16.gmra.mxu0 %v2362
    %v2487 = vpop.f32.mrf.mxu0
    %v2488 = vadd.f32 %v2318, %v2487
    %v2489 = vpop.f32.mrf.mxu0
    %v2490 = vadd.f32 %v2318, %v2489
    %2491 = vmatmul.bf16.gmra.mxu0 %v2364
    %v2492 = vpop.f32.mrf.mxu0
    %v2493 = vadd.f32 %v2318, %v2492
    %v2494 = vpop.f32.mrf.mxu0
    %v2495 = vadd.f32 %v2318, %v2494
    %2496 = vmatmul.bf16.gmra.mxu0 %v2366
    %v2497 = vpop.f32.mrf.mxu0
    %v2498 = vadd.f32 %v2318, %v2497
    %v2499 = vpop.f32.mrf.mxu0
    %v2500 = vadd.f32 %v2318, %v2499
    %2501 = vmatmul.bf16.gmra.mxu0 %v2368
    %v2502 = vpop.f32.mrf.mxu0
    %v2503 = vadd.f32 %v2318, %v2502
    %v2504 = vpop.f32.mrf.mxu0
    %v2505 = vadd.f32 %v2318, %v2504
    %2506 = vmatmul.bf16.gmra.mxu0 %v2370
    %v2507 = vpop.f32.mrf.mxu0
    %v2508 = vadd.f32 %v2318, %v2507
    %v2509 = vpop.f32.mrf.mxu0
    %v2510 = vadd.f32 %v2318, %v2509
    %2511 = vmatmul.bf16.gmra.mxu0 %v2372
    %v2512 = vpop.f32.mrf.mxu0
    %v2513 = vadd.f32 %v2318, %v2512
    %v2514 = vpop.f32.mrf.mxu0
    %v2515 = vadd.f32 %v2318, %v2514
    %2516 = vmatmul.bf16.gmra.mxu0 %v2374
    %v2517 = vpop.f32.mrf.mxu0
    %v2518 = vadd.f32 %v2318, %v2517
    %v2519 = vpop.f32.mrf.mxu0
    %v2520 = vadd.f32 %v2318, %v2519
    %2521 = vmatmul.bf16.gmra.mxu0 %v2376
    %v2522 = vpop.f32.mrf.mxu0
    %v2523 = vadd.f32 %v2318, %v2522
    %v2524 = vpop.f32.mrf.mxu0
    %v2525 = vadd.f32 %v2318, %v2524
    %2526 = vmatmul.bf16.gmra.mxu0 %v2378
    %v2527 = vpop.f32.mrf.mxu0
    %v2528 = vadd.f32 %v2318, %v2527
    %v2529 = vpop.f32.mrf.mxu0
    %v2530 = vadd.f32 %v2318, %v2529
    %2531 = vmatmul.bf16.gmra.mxu0 %v2380
    %v2532 = vpop.f32.mrf.mxu0
    %v2533 = vadd.f32 %v2318, %v2532
    %v2534 = vpop.f32.mrf.mxu0
    %v2535 = vadd.f32 %v2318, %v2534
    %2536 = vmatmul.bf16.gmra.mxu0 %v2382
    %v2537 = vpop.f32.mrf.mxu0
    %v2538 = vadd.f32 %v2318, %v2537
    %v2539 = vpop.f32.mrf.mxu0
    %v2540 = vadd.f32 %v2318, %v2539
    %2541 = vmatmul.bf16.gmra.mxu0 %v2384
    %v2542 = vpop.f32.mrf.mxu0
    %v2543 = vadd.f32 %v2318, %v2542
    %v2544 = vpop.f32.mrf.mxu0
    %v2545 = vadd.f32 %v2318, %v2544
    %2546 = vmatmul.bf16.gmra.mxu0 %v2386
    %v2547 = vpop.f32.mrf.mxu0
    %v2548 = vadd.f32 %v2318, %v2547
    %v2549 = vpop.f32.mrf.mxu0
    %v2550 = vadd.f32 %v2318, %v2549
    %2551 = vmatmul.bf16.gmra.mxu0 %v2388
    %v2552 = vpop.f32.mrf.mxu0
    %v2553 = vadd.f32 %v2318, %v2552
    %v2554 = vpop.f32.mrf.mxu0
    %v2555 = vadd.f32 %v2318, %v2554
    %2556 = vmatmul.bf16.gmra.mxu0 %v2390
    %v2557 = vpop.f32.mrf.mxu0
    %v2558 = vadd.f32 %v2318, %v2557
    %v2559 = vpop.f32.mrf.mxu0
    %v2560 = vadd.f32 %v2318, %v2559
    %2561 = vmatmul.bf16.gmra.mxu0 %v2392
    %v2562 = vpop.f32.mrf.mxu0
    %v2563 = vadd.f32 %v2318, %v2562
    %v2564 = vpop.f32.mrf.mxu0
    %v2565 = vadd.f32 %v2318, %v2564
    %2566 = vmatmul.bf16.gmra.mxu0 %v2394
    %v2567 = vpop.f32.mrf.mxu0
    %v2568 = vadd.f32 %v2318, %v2567
    %v2569 = vpop.f32.mrf.mxu0
    %v2570 = vadd.f32 %v2318, %v2569
    %2571 = vdwg.mxu0
    %vm2572 = vcmask 261120
    %2573 = vst.msk [vmem:[#allocation2] sm:$0xff] %vm2572, %v2413
    %2574 = vst.msk [vmem:[#allocation2 + $0x8] sm:$0xff] %vm2572, %v2415
    %2575 = vst.msk [vmem:[#allocation2 + $0x10] sm:$0xff] %vm2572, %v2418
    %2576 = vst.msk [vmem:[#allocation2 + $0x18] sm:$0xff] %vm2572, %v2420
    %2577 = vst.msk [vmem:[#allocation2 + $0x20] sm:$0xff] %vm2572, %v2423
    %2578 = vst.msk [vmem:[#allocation2 + $0x28] sm:$0xff] %vm2572, %v2425
    %2579 = vst.msk [vmem:[#allocation2 + $0x30] sm:$0xff] %vm2572, %v2428
    %2580 = vst.msk [vmem:[#allocation2 + $0x38] sm:$0xff] %vm2572, %v2430
    %2581 = vst.msk [vmem:[#allocation2 + $0x40] sm:$0xff] %vm2572, %v2433
    %2582 = vst.msk [vmem:[#allocation2 + $0x48] sm:$0xff] %vm2572, %v2435
    %2583 = vst.msk [vmem:[#allocation2 + $0x50] sm:$0xff] %vm2572, %v2438
    %2584 = vst.msk [vmem:[#allocation2 + $0x58] sm:$0xff] %vm2572, %v2440
    %2585 = vst.msk [vmem:[#allocation2 + $0x60] sm:$0xff] %vm2572, %v2443
    %2586 = vst.msk [vmem:[#allocation2 + $0x68] sm:$0xff] %vm2572, %v2445
    %2587 = vst.msk [vmem:[#allocation2 + $0x70] sm:$0xff] %vm2572, %v2448
    %2588 = vst.msk [vmem:[#allocation2 + $0x78] sm:$0xff] %vm2572, %v2450
    %2589 = vst.msk [vmem:[#allocation2 + $0x80] sm:$0xff] %vm2572, %v2453
    %2590 = vst.msk [vmem:[#allocation2 + $0x88] sm:$0xff] %vm2572, %v2455
    %2591 = vst.msk [vmem:[#allocation2 + $0x90] sm:$0xff] %vm2572, %v2458
    %2592 = vst.msk [vmem:[#allocation2 + $0x98] sm:$0xff] %vm2572, %v2460
    %2593 = vst.msk [vmem:[#allocation2 + $0xa0] sm:$0xff] %vm2572, %v2463
    %2594 = vst.msk [vmem:[#allocation2 + $0xa8] sm:$0xff] %vm2572, %v2465
    %2595 = vst.msk [vmem:[#allocation2 + $0xb0] sm:$0xff] %vm2572, %v2468
    %2596 = vst.msk [vmem:[#allocation2 + $0xb8] sm:$0xff] %vm2572, %v2470
    %2597 = vst.msk [vmem:[#allocation2 + $0xc0] sm:$0xff] %vm2572, %v2473
    %2598 = vst.msk [vmem:[#allocation2 + $0xc8] sm:$0xff] %vm2572, %v2475
    %2599 = vst.msk [vmem:[#allocation2 + $0xd0] sm:$0xff] %vm2572, %v2478
    %2600 = vst.msk [vmem:[#allocation2 + $0xd8] sm:$0xff] %vm2572, %v2480
    %2601 = vst.msk [vmem:[#allocation2 + $0xe0] sm:$0xff] %vm2572, %v2483
    %2602 = vst.msk [vmem:[#allocation2 + $0xe8] sm:$0xff] %vm2572, %v2485
    %2603 = vst.msk [vmem:[#allocation2 + $0xf0] sm:$0xff] %vm2572, %v2488
    %2604 = vst.msk [vmem:[#allocation2 + $0xf8] sm:$0xff] %vm2572, %v2490
    %2605 = vst.msk [vmem:[#allocation2 + $0x100] sm:$0xff] %vm2572, %v2493
    %2606 = vst.msk [vmem:[#allocation2 + $0x108] sm:$0xff] %vm2572, %v2495
    %2607 = vst.msk [vmem:[#allocation2 + $0x110] sm:$0xff] %vm2572, %v2498
    %2608 = vst.msk [vmem:[#allocation2 + $0x118] sm:$0xff] %vm2572, %v2500
    %2609 = vst.msk [vmem:[#allocation2 + $0x120] sm:$0xff] %vm2572, %v2503
    %2610 = vst.msk [vmem:[#allocation2 + $0x128] sm:$0xff] %vm2572, %v2505
    %2611 = vst.msk [vmem:[#allocation2 + $0x130] sm:$0xff] %vm2572, %v2508
    %2612 = vst.msk [vmem:[#allocation2 + $0x138] sm:$0xff] %vm2572, %v2510
    %2613 = vst.msk [vmem:[#allocation2 + $0x140] sm:$0xff] %vm2572, %v2513
    %2614 = vst.msk [vmem:[#allocation2 + $0x148] sm:$0xff] %vm2572, %v2515
    %2615 = vst.msk [vmem:[#allocation2 + $0x150] sm:$0xff] %vm2572, %v2518
    %2616 = vst.msk [vmem:[#allocation2 + $0x158] sm:$0xff] %vm2572, %v2520
    %2617 = vst.msk [vmem:[#allocation2 + $0x160] sm:$0xff] %vm2572, %v2523
    %2618 = vst.msk [vmem:[#allocation2 + $0x168] sm:$0xff] %vm2572, %v2525
    %2619 = vst.msk [vmem:[#allocation2 + $0x170] sm:$0xff] %vm2572, %v2528
    %2620 = vst.msk [vmem:[#allocation2 + $0x178] sm:$0xff] %vm2572, %v2530
    %2621 = vst.msk [vmem:[#allocation2 + $0x180] sm:$0xff] %vm2572, %v2533
    %2622 = vst.msk [vmem:[#allocation2 + $0x188] sm:$0xff] %vm2572, %v2535
    %2623 = vst.msk [vmem:[#allocation2 + $0x190] sm:$0xff] %vm2572, %v2538
    %2624 = vst.msk [vmem:[#allocation2 + $0x198] sm:$0xff] %vm2572, %v2540
    %2625 = vst.msk [vmem:[#allocation2 + $0x1a0] sm:$0xff] %vm2572, %v2543
    %2626 = vst.msk [vmem:[#allocation2 + $0x1a8] sm:$0xff] %vm2572, %v2545
    %2627 = vst.msk [vmem:[#allocation2 + $0x1b0] sm:$0xff] %vm2572, %v2548
    %2628 = vst.msk [vmem:[#allocation2 + $0x1b8] sm:$0xff] %vm2572, %v2550
    %2629 = vst.msk [vmem:[#allocation2 + $0x1c0] sm:$0xff] %vm2572, %v2553
    %2630 = vst.msk [vmem:[#allocation2 + $0x1c8] sm:$0xff] %vm2572, %v2555
    %2631 = vst.msk [vmem:[#allocation2 + $0x1d0] sm:$0xff] %vm2572, %v2558
    %2632 = vst.msk [vmem:[#allocation2 + $0x1d8] sm:$0xff] %vm2572, %v2560
    %2633 = vst.msk [vmem:[#allocation2 + $0x1e0] sm:$0xff] %vm2572, %v2563
    %2634 = vst.msk [vmem:[#allocation2 + $0x1e8] sm:$0xff] %vm2572, %v2565
    %2635 = vst.msk [vmem:[#allocation2 + $0x1f0] sm:$0xff] %vm2572, %v2568
    %2636 = vst.msk [vmem:[#allocation2 + $0x1f8] sm:$0xff] %vm2572, %v2570
    %v2637 = vld [vmem:[#allocation2] sm:$0xff]
    %v2638 = vld [vmem:[#allocation2 + $0x8] sm:$0xff]
    %v2639 = vld [vmem:[#allocation2 + $0x10] sm:$0xff]
    %v2640 = vld [vmem:[#allocation2 + $0x18] sm:$0xff]
    %v2641 = vld [vmem:[#allocation2 + $0x20] sm:$0xff]
    %v2642 = vld [vmem:[#allocation2 + $0x28] sm:$0xff]
    %v2643 = vld [vmem:[#allocation2 + $0x30] sm:$0xff]
    %v2644 = vld [vmem:[#allocation2 + $0x38] sm:$0xff]
    %v2645 = vld [vmem:[#allocation2 + $0x40] sm:$0xff]
    %v2646 = vld [vmem:[#allocation2 + $0x48] sm:$0xff]
    %v2647 = vld [vmem:[#allocation2 + $0x50] sm:$0xff]
    %v2648 = vld [vmem:[#allocation2 + $0x58] sm:$0xff]
    %v2649 = vld [vmem:[#allocation2 + $0x60] sm:$0xff]
    %v2650 = vld [vmem:[#allocation2 + $0x68] sm:$0xff]
    %v2651 = vld [vmem:[#allocation2 + $0x70] sm:$0xff]
    %v2652 = vld [vmem:[#allocation2 + $0x78] sm:$0xff]
    %v2653 = vld [vmem:[#allocation2 + $0x80] sm:$0xff]
    %v2654 = vld [vmem:[#allocation2 + $0x88] sm:$0xff]
    %v2655 = vld [vmem:[#allocation2 + $0x90] sm:$0xff]
    %v2656 = vld [vmem:[#allocation2 + $0x98] sm:$0xff]
    %v2657 = vld [vmem:[#allocation2 + $0xa0] sm:$0xff]
    %v2658 = vld [vmem:[#allocation2 + $0xa8] sm:$0xff]
    %v2659 = vld [vmem:[#allocation2 + $0xb0] sm:$0xff]
    %v2660 = vld [vmem:[#allocation2 + $0xb8] sm:$0xff]
    %v2661 = vld [vmem:[#allocation2 + $0xc0] sm:$0xff]
    %v2662 = vld [vmem:[#allocation2 + $0xc8] sm:$0xff]
    %v2663 = vld [vmem:[#allocation2 + $0xd0] sm:$0xff]
    %v2664 = vld [vmem:[#allocation2 + $0xd8] sm:$0xff]
    %v2665 = vld [vmem:[#allocation2 + $0xe0] sm:$0xff]
    %v2666 = vld [vmem:[#allocation2 + $0xe8] sm:$0xff]
    %v2667 = vld [vmem:[#allocation2 + $0xf0] sm:$0xff]
    %v2668 = vld [vmem:[#allocation2 + $0xf8] sm:$0xff]
    %v2669 = vld [vmem:[#allocation2 + $0x100] sm:$0xff]
    %v2670 = vld [vmem:[#allocation2 + $0x108] sm:$0xff]
    %v2671 = vld [vmem:[#allocation2 + $0x110] sm:$0xff]
    %v2672 = vld [vmem:[#allocation2 + $0x118] sm:$0xff]
    %v2673 = vld [vmem:[#allocation2 + $0x120] sm:$0xff]
    %v2674 = vld [vmem:[#allocation2 + $0x128] sm:$0xff]
    %v2675 = vld [vmem:[#allocation2 + $0x130] sm:$0xff]
    %v2676 = vld [vmem:[#allocation2 + $0x138] sm:$0xff]
    %v2677 = vld [vmem:[#allocation2 + $0x140] sm:$0xff]
    %v2678 = vld [vmem:[#allocation2 + $0x148] sm:$0xff]
    %v2679 = vld [vmem:[#allocation2 + $0x150] sm:$0xff]
    %v2680 = vld [vmem:[#allocation2 + $0x158] sm:$0xff]
    %v2681 = vld [vmem:[#allocation2 + $0x160] sm:$0xff]
    %v2682 = vld [vmem:[#allocation2 + $0x168] sm:$0xff]
    %v2683 = vld [vmem:[#allocation2 + $0x170] sm:$0xff]
    %v2684 = vld [vmem:[#allocation2 + $0x178] sm:$0xff]
    %v2685 = vld [vmem:[#allocation2 + $0x180] sm:$0xff]
    %v2686 = vld [vmem:[#allocation2 + $0x188] sm:$0xff]
    %v2687 = vld [vmem:[#allocation2 + $0x190] sm:$0xff]
    %v2688 = vld [vmem:[#allocation2 + $0x198] sm:$0xff]
    %v2689 = vld [vmem:[#allocation2 + $0x1a0] sm:$0xff]
    %v2690 = vld [vmem:[#allocation2 + $0x1a8] sm:$0xff]
    %v2691 = vld [vmem:[#allocation2 + $0x1b0] sm:$0xff]
    %v2692 = vld [vmem:[#allocation2 + $0x1b8] sm:$0xff]
    %v2693 = vld [vmem:[#allocation2 + $0x1c0] sm:$0xff]
    %v2694 = vld [vmem:[#allocation2 + $0x1c8] sm:$0xff]
    %v2695 = vld [vmem:[#allocation2 + $0x1d0] sm:$0xff]
    %v2696 = vld [vmem:[#allocation2 + $0x1d8] sm:$0xff]
    %v2697 = vld [vmem:[#allocation2 + $0x1e0] sm:$0xff]
    %v2698 = vld [vmem:[#allocation2 + $0x1e8] sm:$0xff]
    %v2699 = vld [vmem:[#allocation2 + $0x1f0] sm:$0xff]
    %v2700 = vld [vmem:[#allocation2 + $0x1f8] sm:$0xff]
    %v2701 = vpack.c.bf16 %v2637, %v2637
    %v2702 = vpack.c.bf16 %v2638, %v2638
    %v2703 = vpack.c.bf16 %v2639, %v2639
    %v2704 = vpack.c.bf16 %v2640, %v2640
    %v2705 = vpack.c.bf16 %v2641, %v2641
    %v2706 = vpack.c.bf16 %v2642, %v2642
    %v2707 = vpack.c.bf16 %v2643, %v2643
    %v2708 = vpack.c.bf16 %v2644, %v2644
    %v2709 = vpack.c.bf16 %v2645, %v2645
    %v2710 = vpack.c.bf16 %v2646, %v2646
    %v2711 = vpack.c.bf16 %v2647, %v2647
    %v2712 = vpack.c.bf16 %v2648, %v2648
    %v2713 = vpack.c.bf16 %v2649, %v2649
    %v2714 = vpack.c.bf16 %v2650, %v2650
    %v2715 = vpack.c.bf16 %v2651, %v2651
    %v2716 = vpack.c.bf16 %v2652, %v2652
    %v2717 = vpack.c.bf16 %v2653, %v2653
    %v2718 = vpack.c.bf16 %v2654, %v2654
    %v2719 = vpack.c.bf16 %v2655, %v2655
    %v2720 = vpack.c.bf16 %v2656, %v2656
    %v2721 = vpack.c.bf16 %v2657, %v2657
    %v2722 = vpack.c.bf16 %v2658, %v2658
    %v2723 = vpack.c.bf16 %v2659, %v2659
    %v2724 = vpack.c.bf16 %v2660, %v2660
    %v2725 = vpack.c.bf16 %v2661, %v2661
    %v2726 = vpack.c.bf16 %v2662, %v2662
    %v2727 = vpack.c.bf16 %v2663, %v2663
    %v2728 = vpack.c.bf16 %v2664, %v2664
    %v2729 = vpack.c.bf16 %v2665, %v2665
    %v2730 = vpack.c.bf16 %v2666, %v2666
    %v2731 = vpack.c.bf16 %v2667, %v2667
    %v2732 = vpack.c.bf16 %v2668, %v2668
    %v2733 = vpack.c.bf16 %v2669, %v2669
    %v2734 = vpack.c.bf16 %v2670, %v2670
    %v2735 = vpack.c.bf16 %v2671, %v2671
    %v2736 = vpack.c.bf16 %v2672, %v2672
    %v2737 = vpack.c.bf16 %v2673, %v2673
    %v2738 = vpack.c.bf16 %v2674, %v2674
    %v2739 = vpack.c.bf16 %v2675, %v2675
    %v2740 = vpack.c.bf16 %v2676, %v2676
    %v2741 = vpack.c.bf16 %v2677, %v2677
    %v2742 = vpack.c.bf16 %v2678, %v2678
    %v2743 = vpack.c.bf16 %v2679, %v2679
    %v2744 = vpack.c.bf16 %v2680, %v2680
    %v2745 = vpack.c.bf16 %v2681, %v2681
    %v2746 = vpack.c.bf16 %v2682, %v2682
    %v2747 = vpack.c.bf16 %v2683, %v2683
    %v2748 = vpack.c.bf16 %v2684, %v2684
    %v2749 = vpack.c.bf16 %v2685, %v2685
    %v2750 = vpack.c.bf16 %v2686, %v2686
    %v2751 = vpack.c.bf16 %v2687, %v2687
    %v2752 = vpack.c.bf16 %v2688, %v2688
    %v2753 = vpack.c.bf16 %v2689, %v2689
    %v2754 = vpack.c.bf16 %v2690, %v2690
    %v2755 = vpack.c.bf16 %v2691, %v2691
    %v2756 = vpack.c.bf16 %v2692, %v2692
    %v2757 = vpack.c.bf16 %v2693, %v2693
    %v2758 = vpack.c.bf16 %v2694, %v2694
    %v2759 = vpack.c.bf16 %v2695, %v2695
    %v2760 = vpack.c.bf16 %v2696, %v2696
    %v2761 = vpack.c.bf16 %v2697, %v2697
    %v2762 = vpack.c.bf16 %v2698, %v2698
    %v2763 = vpack.c.bf16 %v2699, %v2699
    %v2764 = vpack.c.bf16 %v2700, %v2700
    %v2829 = vunpack.c.l.b16 %v2701
    %v2830 = vunpack.c.l.b16 %v2702
    %v2831 = vunpack.c.l.b16 %v2703
    %v2832 = vunpack.c.l.b16 %v2704
    %v2833 = vunpack.c.l.b16 %v2705
    %v2834 = vunpack.c.l.b16 %v2706
    %v2835 = vunpack.c.l.b16 %v2707
    %v2836 = vunpack.c.l.b16 %v2708
    %v2837 = vunpack.c.l.b16 %v2709
    %v2838 = vunpack.c.l.b16 %v2710
    %v2839 = vunpack.c.l.b16 %v2711
    %v2840 = vunpack.c.l.b16 %v2712
    %v2841 = vunpack.c.l.b16 %v2713
    %v2842 = vunpack.c.l.b16 %v2714
    %v2843 = vunpack.c.l.b16 %v2715
    %v2844 = vunpack.c.l.b16 %v2716
    %v2845 = vunpack.c.l.b16 %v2717
    %v2846 = vunpack.c.l.b16 %v2718
    %v2847 = vunpack.c.l.b16 %v2719
    %v2848 = vunpack.c.l.b16 %v2720
    %v2849 = vunpack.c.l.b16 %v2721
    %v2850 = vunpack.c.l.b16 %v2722
    %v2851 = vunpack.c.l.b16 %v2723
    %v2852 = vunpack.c.l.b16 %v2724
    %v2853 = vunpack.c.l.b16 %v2725
    %v2854 = vunpack.c.l.b16 %v2726
    %v2855 = vunpack.c.l.b16 %v2727
    %v2856 = vunpack.c.l.b16 %v2728
    %v2857 = vunpack.c.l.b16 %v2729
    %v2858 = vunpack.c.l.b16 %v2730
    %v2859 = vunpack.c.l.b16 %v2731
    %v2860 = vunpack.c.l.b16 %v2732
    %v2861 = vunpack.c.l.b16 %v2733
    %v2862 = vunpack.c.l.b16 %v2734
    %v2863 = vunpack.c.l.b16 %v2735
    %v2864 = vunpack.c.l.b16 %v2736
    %v2865 = vunpack.c.l.b16 %v2737
    %v2866 = vunpack.c.l.b16 %v2738
    %v2867 = vunpack.c.l.b16 %v2739
    %v2868 = vunpack.c.l.b16 %v2740
    %v2869 = vunpack.c.l.b16 %v2741
    %v2870 = vunpack.c.l.b16 %v2742
    %v2871 = vunpack.c.l.b16 %v2743
    %v2872 = vunpack.c.l.b16 %v2744
    %v2873 = vunpack.c.l.b16 %v2745
    %v2874 = vunpack.c.l.b16 %v2746
    %v2875 = vunpack.c.l.b16 %v2747
    %v2876 = vunpack.c.l.b16 %v2748
    %v2877 = vunpack.c.l.b16 %v2749
    %v2878 = vunpack.c.l.b16 %v2750
    %v2879 = vunpack.c.l.b16 %v2751
    %v2880 = vunpack.c.l.b16 %v2752
    %v2881 = vunpack.c.l.b16 %v2753
    %v2882 = vunpack.c.l.b16 %v2754
    %v2883 = vunpack.c.l.b16 %v2755
    %v2884 = vunpack.c.l.b16 %v2756
    %v2885 = vunpack.c.l.b16 %v2757
    %v2886 = vunpack.c.l.b16 %v2758
    %v2887 = vunpack.c.l.b16 %v2759
    %v2888 = vunpack.c.l.b16 %v2760
    %v2889 = vunpack.c.l.b16 %v2761
    %v2890 = vunpack.c.l.b16 %v2762
    %v2891 = vunpack.c.l.b16 %v2763
    %v2892 = vunpack.c.l.b16 %v2764
    %v2893 = vpack.c.b16 %v2830, %v2829
    %v2894 = vpack.c.b16 %v2832, %v2831
    %v2895 = vpack.c.b16 %v2834, %v2833
    %v2896 = vpack.c.b16 %v2836, %v2835
    %v2897 = vpack.c.b16 %v2838, %v2837
    %v2898 = vpack.c.b16 %v2840, %v2839
    %v2899 = vpack.c.b16 %v2842, %v2841
    %v2900 = vpack.c.b16 %v2844, %v2843
    %v2901 = vpack.c.b16 %v2846, %v2845
    %v2902 = vpack.c.b16 %v2848, %v2847
    %v2903 = vpack.c.b16 %v2850, %v2849
    %v2904 = vpack.c.b16 %v2852, %v2851
    %v2905 = vpack.c.b16 %v2854, %v2853
    %v2906 = vpack.c.b16 %v2856, %v2855
    %v2907 = vpack.c.b16 %v2858, %v2857
    %v2908 = vpack.c.b16 %v2860, %v2859
    %v2909 = vpack.c.b16 %v2862, %v2861
    %v2910 = vpack.c.b16 %v2864, %v2863
    %v2911 = vpack.c.b16 %v2866, %v2865
    %v2912 = vpack.c.b16 %v2868, %v2867
    %v2913 = vpack.c.b16 %v2870, %v2869
    %v2914 = vpack.c.b16 %v2872, %v2871
    %v2915 = vpack.c.b16 %v2874, %v2873
    %v2916 = vpack.c.b16 %v2876, %v2875
    %v2917 = vpack.c.b16 %v2878, %v2877
    %v2918 = vpack.c.b16 %v2880, %v2879
    %v2919 = vpack.c.b16 %v2882, %v2881
    %v2920 = vpack.c.b16 %v2884, %v2883
    %v2921 = vpack.c.b16 %v2886, %v2885
    %v2922 = vpack.c.b16 %v2888, %v2887
    %v2923 = vpack.c.b16 %v2890, %v2889
    %v2924 = vpack.c.b16 %v2892, %v2891
    %v2926 = vshrl.u32 %v2893, 16
    %v2928 = vrot.slane %v2926, 7
    %v2929 = vshll.u32 %v2893, 16
    %v2931 = vor.u32 %v2928, %v2929
    %v2933 = vshrl.u32 %v2894, 16
    %v2935 = vrot.slane %v2933, 7
    %v2936 = vshll.u32 %v2894, 16
    %v2938 = vor.u32 %v2935, %v2936
    %v2940 = vshrl.u32 %v2895, 16
    %v2942 = vrot.slane %v2940, 7
    %v2943 = vshll.u32 %v2895, 16
    %v2945 = vor.u32 %v2942, %v2943
    %v2947 = vshrl.u32 %v2896, 16
    %v2949 = vrot.slane %v2947, 7
    %v2950 = vshll.u32 %v2896, 16
    %v2952 = vor.u32 %v2949, %v2950
    %v2954 = vshrl.u32 %v2897, 16
    %v2956 = vrot.slane %v2954, 7
    %v2957 = vshll.u32 %v2897, 16
    %v2959 = vor.u32 %v2956, %v2957
    %v2961 = vshrl.u32 %v2898, 16
    %v2963 = vrot.slane %v2961, 7
    %v2964 = vshll.u32 %v2898, 16
    %v2966 = vor.u32 %v2963, %v2964
    %v2968 = vshrl.u32 %v2899, 16
    %v2970 = vrot.slane %v2968, 7
    %v2971 = vshll.u32 %v2899, 16
    %v2973 = vor.u32 %v2970, %v2971
    %v2975 = vshrl.u32 %v2900, 16
    %v2977 = vrot.slane %v2975, 7
    %v2978 = vshll.u32 %v2900, 16
    %v2980 = vor.u32 %v2977, %v2978
    %v2982 = vshrl.u32 %v2901, 16
    %v2984 = vrot.slane %v2982, 7
    %v2985 = vshll.u32 %v2901, 16
    %v2987 = vor.u32 %v2984, %v2985
    %v2989 = vshrl.u32 %v2902, 16
    %v2991 = vrot.slane %v2989, 7
    %v2992 = vshll.u32 %v2902, 16
    %v2994 = vor.u32 %v2991, %v2992
    %v2996 = vshrl.u32 %v2903, 16
    %v2998 = vrot.slane %v2996, 7
    %v2999 = vshll.u32 %v2903, 16
    %v3001 = vor.u32 %v2998, %v2999
    %v3003 = vshrl.u32 %v2904, 16
    %v3005 = vrot.slane %v3003, 7
    %v3006 = vshll.u32 %v2904, 16
    %v3008 = vor.u32 %v3005, %v3006
    %v3010 = vshrl.u32 %v2905, 16
    %v3012 = vrot.slane %v3010, 7
    %v3013 = vshll.u32 %v2905, 16
    %v3015 = vor.u32 %v3012, %v3013
    %v3017 = vshrl.u32 %v2906, 16
    %v3019 = vrot.slane %v3017, 7
    %v3020 = vshll.u32 %v2906, 16
    %v3022 = vor.u32 %v3019, %v3020
    %v3024 = vshrl.u32 %v2907, 16
    %v3026 = vrot.slane %v3024, 7
    %v3027 = vshll.u32 %v2907, 16
    %v3029 = vor.u32 %v3026, %v3027
    %v3031 = vshrl.u32 %v2908, 16
    %v3033 = vrot.slane %v3031, 7
    %v3034 = vshll.u32 %v2908, 16
    %v3036 = vor.u32 %v3033, %v3034
    %v3038 = vshrl.u32 %v2909, 16
    %v3040 = vrot.slane %v3038, 7
    %v3041 = vshll.u32 %v2909, 16
    %v3043 = vor.u32 %v3040, %v3041
    %v3045 = vshrl.u32 %v2910, 16
    %v3047 = vrot.slane %v3045, 7
    %v3048 = vshll.u32 %v2910, 16
    %v3050 = vor.u32 %v3047, %v3048
    %v3052 = vshrl.u32 %v2911, 16
    %v3054 = vrot.slane %v3052, 7
    %v3055 = vshll.u32 %v2911, 16
    %v3057 = vor.u32 %v3054, %v3055
    %v3059 = vshrl.u32 %v2912, 16
    %v3061 = vrot.slane %v3059, 7
    %v3062 = vshll.u32 %v2912, 16
    %v3064 = vor.u32 %v3061, %v3062
    %v3066 = vshrl.u32 %v2913, 16
    %v3068 = vrot.slane %v3066, 7
    %v3069 = vshll.u32 %v2913, 16
    %v3071 = vor.u32 %v3068, %v3069
    %v3073 = vshrl.u32 %v2914, 16
    %v3075 = vrot.slane %v3073, 7
    %v3076 = vshll.u32 %v2914, 16
    %v3078 = vor.u32 %v3075, %v3076
    %v3080 = vshrl.u32 %v2915, 16
    %v3082 = vrot.slane %v3080, 7
    %v3083 = vshll.u32 %v2915, 16
    %v3085 = vor.u32 %v3082, %v3083
    %v3087 = vshrl.u32 %v2916, 16
    %v3089 = vrot.slane %v3087, 7
    %v3090 = vshll.u32 %v2916, 16
    %v3092 = vor.u32 %v3089, %v3090
    %v3094 = vshrl.u32 %v2917, 16
    %v3096 = vrot.slane %v3094, 7
    %v3097 = vshll.u32 %v2917, 16
    %v3099 = vor.u32 %v3096, %v3097
    %v3101 = vshrl.u32 %v2918, 16
    %v3103 = vrot.slane %v3101, 7
    %v3104 = vshll.u32 %v2918, 16
    %v3106 = vor.u32 %v3103, %v3104
    %v3108 = vshrl.u32 %v2919, 16
    %v3110 = vrot.slane %v3108, 7
    %v3111 = vshll.u32 %v2919, 16
    %v3113 = vor.u32 %v3110, %v3111
    %v3115 = vshrl.u32 %v2920, 16
    %v3117 = vrot.slane %v3115, 7
    %v3118 = vshll.u32 %v2920, 16
    %v3120 = vor.u32 %v3117, %v3118
    %v3122 = vshrl.u32 %v2921, 16
    %v3124 = vrot.slane %v3122, 7
    %v3125 = vshll.u32 %v2921, 16
    %v3127 = vor.u32 %v3124, %v3125
    %v3129 = vshrl.u32 %v2922, 16
    %v3131 = vrot.slane %v3129, 7
    %v3132 = vshll.u32 %v2922, 16
    %v3134 = vor.u32 %v3131, %v3132
    %v3136 = vshrl.u32 %v2923, 16
    %v3138 = vrot.slane %v3136, 7
    %v3139 = vshll.u32 %v2923, 16
    %v3141 = vor.u32 %v3138, %v3139
    %v3143 = vshrl.u32 %v2924, 16
    %v3145 = vrot.slane %v3143, 7
    %v3146 = vshll.u32 %v2924, 16
    %v3148 = vor.u32 %v3145, %v3146
    %v3213 = vsel %vm667, 0, %v2931
    %v3214 = vsel %vm667, 0, %v2938
    %v3215 = vsel %vm667, 0, %v2945
    %v3216 = vsel %vm667, 0, %v2952
    %v3217 = vsel %vm667, 0, %v2959
    %v3218 = vsel %vm667, 0, %v2966
    %v3219 = vsel %vm667, 0, %v2973
    %v3220 = vsel %vm667, 0, %v2980
    %v3221 = vsel %vm667, 0, %v2987
    %v3222 = vsel %vm667, 0, %v2994
    %v3223 = vsel %vm667, 0, %v3001
    %v3224 = vsel %vm667, 0, %v3008
    %v3225 = vsel %vm667, 0, %v3015
    %v3226 = vsel %vm667, 0, %v3022
    %v3227 = vsel %vm667, 0, %v3029
    %v3228 = vsel %vm667, 0, %v3036
    %v3229 = vsel %vm667, 0, %v3043
    %v3230 = vsel %vm667, 0, %v3050
    %v3231 = vsel %vm667, 0, %v3057
    %v3232 = vsel %vm667, 0, %v3064
    %v3233 = vsel %vm667, 0, %v3071
    %v3234 = vsel %vm667, 0, %v3078
    %v3235 = vsel %vm667, 0, %v3085
    %v3236 = vsel %vm667, 0, %v3092
    %v3237 = vsel %vm667, 0, %v3099
    %v3238 = vsel %vm667, 0, %v3106
    %v3239 = vsel %vm667, 0, %v3113
    %v3240 = vsel %vm667, 0, %v3120
    %v3241 = vsel %vm667, 0, %v3127
    %v3242 = vsel %vm667, 0, %v3134
    %v3243 = vsel %vm667, 0, %v3141
    %v3244 = vsel %vm667, 0, %v3148
    %v3245 = vsel %vm667, %v2928, 0
    %v3246 = vsel %vm667, %v2935, 0
    %v3247 = vsel %vm667, %v2942, 0
    %v3248 = vsel %vm667, %v2949, 0
    %v3249 = vsel %vm667, %v2956, 0
    %v3250 = vsel %vm667, %v2963, 0
    %v3251 = vsel %vm667, %v2970, 0
    %v3252 = vsel %vm667, %v2977, 0
    %v3253 = vsel %vm667, %v2984, 0
    %v3254 = vsel %vm667, %v2991, 0
    %v3255 = vsel %vm667, %v2998, 0
    %v3256 = vsel %vm667, %v3005, 0
    %v3257 = vsel %vm667, %v3012, 0
    %v3258 = vsel %vm667, %v3019, 0
    %v3259 = vsel %vm667, %v3026, 0
    %v3260 = vsel %vm667, %v3033, 0
    %v3261 = vsel %vm667, %v3040, 0
    %v3262 = vsel %vm667, %v3047, 0
    %v3263 = vsel %vm667, %v3054, 0
    %v3264 = vsel %vm667, %v3061, 0
    %v3265 = vsel %vm667, %v3068, 0
    %v3266 = vsel %vm667, %v3075, 0
    %v3267 = vsel %vm667, %v3082, 0
    %v3268 = vsel %vm667, %v3089, 0
    %v3269 = vsel %vm667, %v3096, 0
    %v3270 = vsel %vm667, %v3103, 0
    %v3271 = vsel %vm667, %v3110, 0
    %v3272 = vsel %vm667, %v3117, 0
    %v3273 = vsel %vm667, %v3124, 0
    %v3274 = vsel %vm667, %v3131, 0
    %v3275 = vsel %vm667, %v3138, 0
    %v3276 = vsel %vm667, %v3145, 0
    %v3278 = vshrl.u32 %v3214, 16
    %v3280 = vshll.u32 %v3214, 16
    %v3282 = vrot.slane %v3280, 1
    %v3283 = vor.u32 %v3278, %v3282
    %v3285 = vshll.u32 %v3246, 16
    %v3287 = vrot.slane %v3285, 1
    %v3288 = vsel %vm734, %v3283, %v3287
    %v3290 = vshrl.u32 %v3216, 16
    %v3292 = vshll.u32 %v3216, 16
    %v3294 = vrot.slane %v3292, 1
    %v3295 = vor.u32 %v3290, %v3294
    %v3297 = vshll.u32 %v3248, 16
    %v3299 = vrot.slane %v3297, 1
    %v3300 = vsel %vm734, %v3295, %v3299
    %v3302 = vshrl.u32 %v3218, 16
    %v3304 = vshll.u32 %v3218, 16
    %v3306 = vrot.slane %v3304, 1
    %v3307 = vor.u32 %v3302, %v3306
    %v3309 = vshll.u32 %v3250, 16
    %v3311 = vrot.slane %v3309, 1
    %v3312 = vsel %vm734, %v3307, %v3311
    %v3314 = vshrl.u32 %v3220, 16
    %v3316 = vshll.u32 %v3220, 16
    %v3318 = vrot.slane %v3316, 1
    %v3319 = vor.u32 %v3314, %v3318
    %v3321 = vshll.u32 %v3252, 16
    %v3323 = vrot.slane %v3321, 1
    %v3324 = vsel %vm734, %v3319, %v3323
    %v3326 = vshrl.u32 %v3222, 16
    %v3328 = vshll.u32 %v3222, 16
    %v3330 = vrot.slane %v3328, 1
    %v3331 = vor.u32 %v3326, %v3330
    %v3333 = vshll.u32 %v3254, 16
    %v3335 = vrot.slane %v3333, 1
    %v3336 = vsel %vm734, %v3331, %v3335
    %v3338 = vshrl.u32 %v3224, 16
    %v3340 = vshll.u32 %v3224, 16
    %v3342 = vrot.slane %v3340, 1
    %v3343 = vor.u32 %v3338, %v3342
    %v3345 = vshll.u32 %v3256, 16
    %v3347 = vrot.slane %v3345, 1
    %v3348 = vsel %vm734, %v3343, %v3347
    %v3350 = vshrl.u32 %v3226, 16
    %v3352 = vshll.u32 %v3226, 16
    %v3354 = vrot.slane %v3352, 1
    %v3355 = vor.u32 %v3350, %v3354
    %v3357 = vshll.u32 %v3258, 16
    %v3359 = vrot.slane %v3357, 1
    %v3360 = vsel %vm734, %v3355, %v3359
    %v3362 = vshrl.u32 %v3230, 16
    %v3364 = vshll.u32 %v3230, 16
    %v3366 = vrot.slane %v3364, 1
    %v3367 = vor.u32 %v3362, %v3366
    %v3369 = vshll.u32 %v3262, 16
    %v3371 = vrot.slane %v3369, 1
    %v3372 = vsel %vm734, %v3367, %v3371
    %v3374 = vshrl.u32 %v3232, 16
    %v3376 = vshll.u32 %v3232, 16
    %v3378 = vrot.slane %v3376, 1
    %v3379 = vor.u32 %v3374, %v3378
    %v3381 = vshll.u32 %v3264, 16
    %v3383 = vrot.slane %v3381, 1
    %v3384 = vsel %vm734, %v3379, %v3383
    %v3386 = vshrl.u32 %v3234, 16
    %v3388 = vshll.u32 %v3234, 16
    %v3390 = vrot.slane %v3388, 1
    %v3391 = vor.u32 %v3386, %v3390
    %v3393 = vshll.u32 %v3266, 16
    %v3395 = vrot.slane %v3393, 1
    %v3396 = vsel %vm734, %v3391, %v3395
    %v3398 = vshrl.u32 %v3236, 16
    %v3400 = vshll.u32 %v3236, 16
    %v3402 = vrot.slane %v3400, 1
    %v3403 = vor.u32 %v3398, %v3402
    %v3405 = vshll.u32 %v3268, 16
    %v3407 = vrot.slane %v3405, 1
    %v3408 = vsel %vm734, %v3403, %v3407
    %v3410 = vshrl.u32 %v3238, 16
    %v3412 = vshll.u32 %v3238, 16
    %v3414 = vrot.slane %v3412, 1
    %v3415 = vor.u32 %v3410, %v3414
    %v3417 = vshll.u32 %v3270, 16
    %v3419 = vrot.slane %v3417, 1
    %v3420 = vsel %vm734, %v3415, %v3419
    %v3422 = vshrl.u32 %v3240, 16
    %v3424 = vshll.u32 %v3240, 16
    %v3426 = vrot.slane %v3424, 1
    %v3427 = vor.u32 %v3422, %v3426
    %v3429 = vshll.u32 %v3272, 16
    %v3431 = vrot.slane %v3429, 1
    %v3432 = vsel %vm734, %v3427, %v3431
    %v3434 = vshrl.u32 %v3242, 16
    %v3436 = vshll.u32 %v3242, 16
    %v3438 = vrot.slane %v3436, 1
    %v3439 = vor.u32 %v3434, %v3438
    %v3441 = vshll.u32 %v3274, 16
    %v3443 = vrot.slane %v3441, 1
    %v3444 = vsel %vm734, %v3439, %v3443
    %3445 = vrot.lane.b32.xlu0 %v746, 32
    %v3446 = vpop.permute.xlu0 %3445
    %3447 = vrot.lane.b32.xlu0 %v3288, 32
    %v3448 = vpop.permute.xlu0 %3447
    %3449 = vrot.lane.b32.xlu0 %v3300, 32
    %v3450 = vpop.permute.xlu0 %3449
    %3451 = vrot.lane.b32.xlu0 %v3312, 32
    %v3452 = vpop.permute.xlu0 %3451
    %3453 = vrot.lane.b32.xlu0 %v3324, 32
    %v3454 = vpop.permute.xlu0 %3453
    %3455 = vrot.lane.b32.xlu0 %v3336, 32
    %v3456 = vpop.permute.xlu0 %3455
    %3457 = vrot.lane.b32.xlu0 %v3348, 32
    %v3458 = vpop.permute.xlu0 %3457
    %3459 = vrot.lane.b32.xlu0 %v3360, 32
    %v3460 = vpop.permute.xlu0 %3459
    %3461 = vrot.lane.b32.xlu0 %v3372, 32
    %v3462 = vpop.permute.xlu0 %3461
    %3463 = vrot.lane.b32.xlu0 %v3384, 32
    %v3464 = vpop.permute.xlu0 %3463
    %3465 = vrot.lane.b32.xlu0 %v3396, 32
    %v3466 = vpop.permute.xlu0 %3465
    %3467 = vrot.lane.b32.xlu0 %v3408, 32
    %v3468 = vpop.permute.xlu0 %3467
    %3469 = vrot.lane.b32.xlu0 %v3420, 32
    %v3470 = vpop.permute.xlu0 %3469
    %3471 = vrot.lane.b32.xlu0 %v3432, 32
    %v3472 = vpop.permute.xlu0 %3471
    %3473 = vrot.lane.b32.xlu0 %v3444, 32
    %v3474 = vpop.permute.xlu0 %3473
    %v3503 = vrot.slane %v3214, 1
    %v3504 = vrot.slane %v3246, 1
    %v3505 = vsel %vm1231, %v3503, %v3504
    %v3506 = vrot.slane %v3216, 1
    %v3507 = vrot.slane %v3248, 1
    %v3508 = vsel %vm1231, %v3506, %v3507
    %v3509 = vrot.slane %v3218, 1
    %v3510 = vrot.slane %v3250, 1
    %v3511 = vsel %vm1231, %v3509, %v3510
    %v3512 = vrot.slane %v3220, 1
    %v3513 = vrot.slane %v3252, 1
    %v3514 = vsel %vm1231, %v3512, %v3513
    %v3515 = vrot.slane %v3222, 1
    %v3516 = vrot.slane %v3254, 1
    %v3517 = vsel %vm1231, %v3515, %v3516
    %v3518 = vrot.slane %v3224, 1
    %v3519 = vrot.slane %v3256, 1
    %v3520 = vsel %vm1231, %v3518, %v3519
    %v3521 = vrot.slane %v3226, 1
    %v3522 = vrot.slane %v3258, 1
    %v3523 = vsel %vm1231, %v3521, %v3522
    %v3524 = vrot.slane %v3230, 1
    %v3525 = vrot.slane %v3262, 1
    %v3526 = vsel %vm1231, %v3524, %v3525
    %v3527 = vrot.slane %v3232, 1
    %v3528 = vrot.slane %v3264, 1
    %v3529 = vsel %vm1231, %v3527, %v3528
    %v3530 = vrot.slane %v3234, 1
    %v3531 = vrot.slane %v3266, 1
    %v3532 = vsel %vm1231, %v3530, %v3531
    %v3533 = vrot.slane %v3236, 1
    %v3534 = vrot.slane %v3268, 1
    %v3535 = vsel %vm1231, %v3533, %v3534
    %v3536 = vrot.slane %v3238, 1
    %v3537 = vrot.slane %v3270, 1
    %v3538 = vsel %vm1231, %v3536, %v3537
    %v3539 = vrot.slane %v3240, 1
    %v3540 = vrot.slane %v3272, 1
    %v3541 = vsel %vm1231, %v3539, %v3540
    %v3542 = vrot.slane %v3242, 1
    %v3543 = vrot.slane %v3274, 1
    %v3544 = vsel %vm1231, %v3542, %v3543
    %3545 = vrot.lane.b32.xlu0 %v1234, 64
    %v3546 = vpop.permute.xlu0 %3545
    %3547 = vrot.lane.b32.xlu0 %v3505, 64
    %v3548 = vpop.permute.xlu0 %3547
    %3549 = vrot.lane.b32.xlu0 %v3508, 64
    %v3550 = vpop.permute.xlu0 %3549
    %3551 = vrot.lane.b32.xlu0 %v3511, 64
    %v3552 = vpop.permute.xlu0 %3551
    %3553 = vrot.lane.b32.xlu0 %v3514, 64
    %v3554 = vpop.permute.xlu0 %3553
    %3555 = vrot.lane.b32.xlu0 %v3517, 64
    %v3556 = vpop.permute.xlu0 %3555
    %3557 = vrot.lane.b32.xlu0 %v3520, 64
    %v3558 = vpop.permute.xlu0 %3557
    %3559 = vrot.lane.b32.xlu0 %v3523, 64
    %v3560 = vpop.permute.xlu0 %3559
    %3561 = vrot.lane.b32.xlu0 %v3526, 64
    %v3562 = vpop.permute.xlu0 %3561
    %3563 = vrot.lane.b32.xlu0 %v3529, 64
    %v3564 = vpop.permute.xlu0 %3563
    %3565 = vrot.lane.b32.xlu0 %v3532, 64
    %v3566 = vpop.permute.xlu0 %3565
    %3567 = vrot.lane.b32.xlu0 %v3535, 64
    %v3568 = vpop.permute.xlu0 %3567
    %3569 = vrot.lane.b32.xlu0 %v3538, 64
    %v3570 = vpop.permute.xlu0 %3569
    %3571 = vrot.lane.b32.xlu0 %v3541, 64
    %v3572 = vpop.permute.xlu0 %3571
    %3573 = vrot.lane.b32.xlu0 %v3544, 64
    %v3574 = vpop.permute.xlu0 %3573
    %3591 = vrot.lane.b32.xlu0 %v3213, 96
    %v3592 = vpop.permute.xlu0 %3591
    %3593 = vrot.lane.b32.xlu0 %v3215, 96
    %v3594 = vpop.permute.xlu0 %3593
    %3595 = vrot.lane.b32.xlu0 %v3217, 96
    %v3596 = vpop.permute.xlu0 %3595
    %3597 = vrot.lane.b32.xlu0 %v3219, 96
    %v3598 = vpop.permute.xlu0 %3597
    %3599 = vrot.lane.b32.xlu0 %v3221, 96
    %v3600 = vpop.permute.xlu0 %3599
    %3601 = vrot.lane.b32.xlu0 %v3223, 96
    %v3602 = vpop.permute.xlu0 %3601
    %3603 = vrot.lane.b32.xlu0 %v3225, 96
    %v3604 = vpop.permute.xlu0 %3603
    %3605 = vrot.lane.b32.xlu0 %v3227, 96
    %v3606 = vpop.permute.xlu0 %3605
    %3607 = vrot.lane.b32.xlu0 %v3229, 96
    %v3608 = vpop.permute.xlu0 %3607
    %3609 = vrot.lane.b32.xlu0 %v3231, 96
    %v3610 = vpop.permute.xlu0 %3609
    %3611 = vrot.lane.b32.xlu0 %v3233, 96
    %v3612 = vpop.permute.xlu0 %3611
    %3613 = vrot.lane.b32.xlu0 %v3235, 96
    %v3614 = vpop.permute.xlu0 %3613
    %3615 = vrot.lane.b32.xlu0 %v3237, 96
    %v3616 = vpop.permute.xlu0 %3615
    %3617 = vrot.lane.b32.xlu0 %v3239, 96
    %v3618 = vpop.permute.xlu0 %3617
    %3619 = vrot.lane.b32.xlu0 %v3241, 96
    %v3620 = vpop.permute.xlu0 %3619
    %3621 = vrot.lane.b32.xlu0 %v3243, 96
    %v3622 = vpop.permute.xlu0 %3621
    %v3624 = vshrl.u32 %v3213, 16
    %v3626 = vshll.u32 %v3213, 16
    %v3628 = vrot.slane %v3626, 1
    %v3629 = vor.u32 %v3624, %v3628
    %v3631 = vshll.u32 %v3245, 16
    %v3633 = vrot.slane %v3631, 1
    %v3634 = vsel %vm734, %v3629, %v3633
    %v3636 = vshrl.u32 %v3215, 16
    %v3638 = vshll.u32 %v3215, 16
    %v3640 = vrot.slane %v3638, 1
    %v3641 = vor.u32 %v3636, %v3640
    %v3643 = vshll.u32 %v3247, 16
    %v3645 = vrot.slane %v3643, 1
    %v3646 = vsel %vm734, %v3641, %v3645
    %v3648 = vshrl.u32 %v3217, 16
    %v3650 = vshll.u32 %v3217, 16
    %v3652 = vrot.slane %v3650, 1
    %v3653 = vor.u32 %v3648, %v3652
    %v3655 = vshll.u32 %v3249, 16
    %v3657 = vrot.slane %v3655, 1
    %v3658 = vsel %vm734, %v3653, %v3657
    %v3660 = vshrl.u32 %v3219, 16
    %v3662 = vshll.u32 %v3219, 16
    %v3664 = vrot.slane %v3662, 1
    %v3665 = vor.u32 %v3660, %v3664
    %v3667 = vshll.u32 %v3251, 16
    %v3669 = vrot.slane %v3667, 1
    %v3670 = vsel %vm734, %v3665, %v3669
    %v3672 = vshrl.u32 %v3221, 16
    %v3674 = vshll.u32 %v3221, 16
    %v3676 = vrot.slane %v3674, 1
    %v3677 = vor.u32 %v3672, %v3676
    %v3679 = vshll.u32 %v3253, 16
    %v3681 = vrot.slane %v3679, 1
    %v3682 = vsel %vm734, %v3677, %v3681
    %v3684 = vshrl.u32 %v3223, 16
    %v3686 = vshll.u32 %v3223, 16
    %v3688 = vrot.slane %v3686, 1
    %v3689 = vor.u32 %v3684, %v3688
    %v3691 = vshll.u32 %v3255, 16
    %v3693 = vrot.slane %v3691, 1
    %v3694 = vsel %vm734, %v3689, %v3693
    %v3696 = vshrl.u32 %v3225, 16
    %v3698 = vshll.u32 %v3225, 16
    %v3700 = vrot.slane %v3698, 1
    %v3701 = vor.u32 %v3696, %v3700
    %v3703 = vshll.u32 %v3257, 16
    %v3705 = vrot.slane %v3703, 1
    %v3706 = vsel %vm734, %v3701, %v3705
    %v3708 = vshrl.u32 %v3227, 16
    %v3710 = vshll.u32 %v3227, 16
    %v3712 = vrot.slane %v3710, 1
    %v3713 = vor.u32 %v3708, %v3712
    %v3715 = vshll.u32 %v3259, 16
    %v3717 = vrot.slane %v3715, 1
    %v3718 = vsel %vm734, %v3713, %v3717
    %v3720 = vshrl.u32 %v3229, 16
    %v3722 = vshll.u32 %v3229, 16
    %v3724 = vrot.slane %v3722, 1
    %v3725 = vor.u32 %v3720, %v3724
    %v3727 = vshll.u32 %v3261, 16
    %v3729 = vrot.slane %v3727, 1
    %v3730 = vsel %vm734, %v3725, %v3729
    %v3732 = vshrl.u32 %v3231, 16
    %v3734 = vshll.u32 %v3231, 16
    %v3736 = vrot.slane %v3734, 1
    %v3737 = vor.u32 %v3732, %v3736
    %v3739 = vshll.u32 %v3263, 16
    %v3741 = vrot.slane %v3739, 1
    %v3742 = vsel %vm734, %v3737, %v3741
    %v3744 = vshrl.u32 %v3233, 16
    %v3746 = vshll.u32 %v3233, 16
    %v3748 = vrot.slane %v3746, 1
    %v3749 = vor.u32 %v3744, %v3748
    %v3751 = vshll.u32 %v3265, 16
    %v3753 = vrot.slane %v3751, 1
    %v3754 = vsel %vm734, %v3749, %v3753
    %v3756 = vshrl.u32 %v3235, 16
    %v3758 = vshll.u32 %v3235, 16
    %v3760 = vrot.slane %v3758, 1
    %v3761 = vor.u32 %v3756, %v3760
    %v3763 = vshll.u32 %v3267, 16
    %v3765 = vrot.slane %v3763, 1
    %v3766 = vsel %vm734, %v3761, %v3765
    %v3768 = vshrl.u32 %v3237, 16
    %v3770 = vshll.u32 %v3237, 16
    %v3772 = vrot.slane %v3770, 1
    %v3773 = vor.u32 %v3768, %v3772
    %v3775 = vshll.u32 %v3269, 16
    %v3777 = vrot.slane %v3775, 1
    %v3778 = vsel %vm734, %v3773, %v3777
    %v3780 = vshrl.u32 %v3239, 16
    %v3782 = vshll.u32 %v3239, 16
    %v3784 = vrot.slane %v3782, 1
    %v3785 = vor.u32 %v3780, %v3784
    %v3787 = vshll.u32 %v3271, 16
    %v3789 = vrot.slane %v3787, 1
    %v3790 = vsel %vm734, %v3785, %v3789
    %v3792 = vshrl.u32 %v3241, 16
    %v3794 = vshll.u32 %v3241, 16
    %v3796 = vrot.slane %v3794, 1
    %v3797 = vor.u32 %v3792, %v3796
    %v3799 = vshll.u32 %v3273, 16
    %v3801 = vrot.slane %v3799, 1
    %v3802 = vsel %vm734, %v3797, %v3801
    %v3804 = vshrl.u32 %v3243, 16
    %v3806 = vshll.u32 %v3243, 16
    %v3808 = vrot.slane %v3806, 1
    %v3809 = vor.u32 %v3804, %v3808
    %v3811 = vshll.u32 %v3275, 16
    %v3813 = vrot.slane %v3811, 1
    %v3814 = vsel %vm734, %v3809, %v3813
    %v3831 = vrot.slane %v3213, 1
    %v3832 = vrot.slane %v3245, 1
    %v3833 = vsel %vm1231, %v3831, %v3832
    %v3834 = vrot.slane %v3215, 1
    %v3835 = vrot.slane %v3247, 1
    %v3836 = vsel %vm1231, %v3834, %v3835
    %v3837 = vrot.slane %v3217, 1
    %v3838 = vrot.slane %v3249, 1
    %v3839 = vsel %vm1231, %v3837, %v3838
    %v3840 = vrot.slane %v3219, 1
    %v3841 = vrot.slane %v3251, 1
    %v3842 = vsel %vm1231, %v3840, %v3841
    %v3843 = vrot.slane %v3221, 1
    %v3844 = vrot.slane %v3253, 1
    %v3845 = vsel %vm1231, %v3843, %v3844
    %v3846 = vrot.slane %v3223, 1
    %v3847 = vrot.slane %v3255, 1
    %v3848 = vsel %vm1231, %v3846, %v3847
    %v3849 = vrot.slane %v3225, 1
    %v3850 = vrot.slane %v3257, 1
    %v3851 = vsel %vm1231, %v3849, %v3850
    %v3852 = vrot.slane %v3227, 1
    %v3853 = vrot.slane %v3259, 1
    %v3854 = vsel %vm1231, %v3852, %v3853
    %v3855 = vrot.slane %v3229, 1
    %v3856 = vrot.slane %v3261, 1
    %v3857 = vsel %vm1231, %v3855, %v3856
    %v3858 = vrot.slane %v3231, 1
    %v3859 = vrot.slane %v3263, 1
    %v3860 = vsel %vm1231, %v3858, %v3859
    %v3861 = vrot.slane %v3233, 1
    %v3862 = vrot.slane %v3265, 1
    %v3863 = vsel %vm1231, %v3861, %v3862
    %v3864 = vrot.slane %v3235, 1
    %v3865 = vrot.slane %v3267, 1
    %v3866 = vsel %vm1231, %v3864, %v3865
    %v3867 = vrot.slane %v3237, 1
    %v3868 = vrot.slane %v3269, 1
    %v3869 = vsel %vm1231, %v3867, %v3868
    %v3870 = vrot.slane %v3239, 1
    %v3871 = vrot.slane %v3271, 1
    %v3872 = vsel %vm1231, %v3870, %v3871
    %v3873 = vrot.slane %v3241, 1
    %v3874 = vrot.slane %v3273, 1
    %v3875 = vsel %vm1231, %v3873, %v3874
    %v3876 = vrot.slane %v3243, 1
    %v3877 = vrot.slane %v3275, 1
    %v3878 = vsel %vm1231, %v3876, %v3877
    %3879 = vrot.lane.b32.xlu0 %v3833, 32
    %v3880 = vpop.permute.xlu0 %3879
    %3881 = vrot.lane.b32.xlu0 %v3836, 32
    %v3882 = vpop.permute.xlu0 %3881
    %3883 = vrot.lane.b32.xlu0 %v3839, 32
    %v3884 = vpop.permute.xlu0 %3883
    %3885 = vrot.lane.b32.xlu0 %v3842, 32
    %v3886 = vpop.permute.xlu0 %3885
    %3887 = vrot.lane.b32.xlu0 %v3845, 32
    %v3888 = vpop.permute.xlu0 %3887
    %3889 = vrot.lane.b32.xlu0 %v3848, 32
    %v3890 = vpop.permute.xlu0 %3889
    %3891 = vrot.lane.b32.xlu0 %v3851, 32
    %v3892 = vpop.permute.xlu0 %3891
    %3893 = vrot.lane.b32.xlu0 %v3854, 32
    %v3894 = vpop.permute.xlu0 %3893
    %3895 = vrot.lane.b32.xlu0 %v3857, 32
    %v3896 = vpop.permute.xlu0 %3895
    %3897 = vrot.lane.b32.xlu0 %v3860, 32
    %v3898 = vpop.permute.xlu0 %3897
    %3899 = vrot.lane.b32.xlu0 %v3863, 32
    %v3900 = vpop.permute.xlu0 %3899
    %3901 = vrot.lane.b32.xlu0 %v3866, 32
    %v3902 = vpop.permute.xlu0 %3901
    %3903 = vrot.lane.b32.xlu0 %v3869, 32
    %v3904 = vpop.permute.xlu0 %3903
    %3905 = vrot.lane.b32.xlu0 %v3872, 32
    %v3906 = vpop.permute.xlu0 %3905
    %3907 = vrot.lane.b32.xlu0 %v3875, 32
    %v3908 = vpop.permute.xlu0 %3907
    %3909 = vrot.lane.b32.xlu0 %v3878, 32
    %v3910 = vpop.permute.xlu0 %3909
    %3913 = vrot.lane.b32.xlu0 %v3214, 64
    %v3914 = vpop.permute.xlu0 %3913
    %3915 = vrot.lane.b32.xlu0 %v3216, 64
    %v3916 = vpop.permute.xlu0 %3915
    %3917 = vrot.lane.b32.xlu0 %v3218, 64
    %v3918 = vpop.permute.xlu0 %3917
    %3919 = vrot.lane.b32.xlu0 %v3220, 64
    %v3920 = vpop.permute.xlu0 %3919
    %3921 = vrot.lane.b32.xlu0 %v3222, 64
    %v3922 = vpop.permute.xlu0 %3921
    %3923 = vrot.lane.b32.xlu0 %v3224, 64
    %v3924 = vpop.permute.xlu0 %3923
    %3925 = vrot.lane.b32.xlu0 %v3226, 64
    %v3926 = vpop.permute.xlu0 %3925
    %3927 = vrot.lane.b32.xlu0 %v3228, 64
    %v3928 = vpop.permute.xlu0 %3927
    %3929 = vrot.lane.b32.xlu0 %v3230, 64
    %v3930 = vpop.permute.xlu0 %3929
    %3931 = vrot.lane.b32.xlu0 %v3232, 64
    %v3932 = vpop.permute.xlu0 %3931
    %3933 = vrot.lane.b32.xlu0 %v3234, 64
    %v3934 = vpop.permute.xlu0 %3933
    %3935 = vrot.lane.b32.xlu0 %v3236, 64
    %v3936 = vpop.permute.xlu0 %3935
    %3937 = vrot.lane.b32.xlu0 %v3238, 64
    %v3938 = vpop.permute.xlu0 %3937
    %3939 = vrot.lane.b32.xlu0 %v3240, 64
    %v3940 = vpop.permute.xlu0 %3939
    %3941 = vrot.lane.b32.xlu0 %v3242, 64
    %v3942 = vpop.permute.xlu0 %3941
    %3943 = vrot.lane.b32.xlu0 %v3244, 64
    %v3944 = vpop.permute.xlu0 %3943
    %v3946 = vshrl.u32 %v3228, 16
    %v3948 = vshll.u32 %v3228, 16
    %v3950 = vrot.slane %v3948, 1
    %v3951 = vor.u32 %v3946, %v3950
    %v3953 = vshll.u32 %v3260, 16
    %v3955 = vrot.slane %v3953, 1
    %v3956 = vsel %vm734, %v3951, %v3955
    %v3958 = vshrl.u32 %v3244, 16
    %v3960 = vshll.u32 %v3244, 16
    %v3962 = vrot.slane %v3960, 1
    %v3963 = vor.u32 %v3958, %v3962
    %v3965 = vshll.u32 %v3276, 16
    %v3967 = vrot.slane %v3965, 1
    %v3968 = vsel %vm734, %v3963, %v3967
    %3969 = vrot.lane.b32.xlu0 %v3288, 96
    %v3970 = vpop.permute.xlu0 %3969
    %3971 = vrot.lane.b32.xlu0 %v3300, 96
    %v3972 = vpop.permute.xlu0 %3971
    %3973 = vrot.lane.b32.xlu0 %v3312, 96
    %v3974 = vpop.permute.xlu0 %3973
    %3975 = vrot.lane.b32.xlu0 %v3324, 96
    %v3976 = vpop.permute.xlu0 %3975
    %3977 = vrot.lane.b32.xlu0 %v3336, 96
    %v3978 = vpop.permute.xlu0 %3977
    %3979 = vrot.lane.b32.xlu0 %v3348, 96
    %v3980 = vpop.permute.xlu0 %3979
    %3981 = vrot.lane.b32.xlu0 %v3360, 96
    %v3982 = vpop.permute.xlu0 %3981
    %3983 = vrot.lane.b32.xlu0 %v3956, 96
    %v3984 = vpop.permute.xlu0 %3983
    %3985 = vrot.lane.b32.xlu0 %v3372, 96
    %v3986 = vpop.permute.xlu0 %3985
    %3987 = vrot.lane.b32.xlu0 %v3384, 96
    %v3988 = vpop.permute.xlu0 %3987
    %3989 = vrot.lane.b32.xlu0 %v3396, 96
    %v3990 = vpop.permute.xlu0 %3989
    %3991 = vrot.lane.b32.xlu0 %v3408, 96
    %v3992 = vpop.permute.xlu0 %3991
    %3993 = vrot.lane.b32.xlu0 %v3420, 96
    %v3994 = vpop.permute.xlu0 %3993
    %3995 = vrot.lane.b32.xlu0 %v3432, 96
    %v3996 = vpop.permute.xlu0 %3995
    %3997 = vrot.lane.b32.xlu0 %v3444, 96
    %v3998 = vpop.permute.xlu0 %3997
    %3999 = vrot.lane.b32.xlu0 %v3968, 96
    %v4000 = vpop.permute.xlu0 %3999
    %v4003 = vrot.slane %v3228, 1
    %v4004 = vrot.slane %v3260, 1
    %v4005 = vsel %vm1231, %v4003, %v4004
    %v4006 = vrot.slane %v3244, 1
    %v4007 = vrot.slane %v3276, 1
    %v4008 = vsel %vm1231, %v4006, %v4007
    %v4010 = vsel %vm2572, %v668, %v3446
    %v4012 = vsel %vm2572, %v3214, %v3448
    %v4014 = vsel %vm2572, %v3216, %v3450
    %v4016 = vsel %vm2572, %v3218, %v3452
    %v4018 = vsel %vm2572, %v3220, %v3454
    %v4020 = vsel %vm2572, %v3222, %v3456
    %v4022 = vsel %vm2572, %v3224, %v3458
    %v4024 = vsel %vm2572, %v3226, %v3460
    %v4026 = vsel %vm2572, %v3230, %v3462
    %v4028 = vsel %vm2572, %v3232, %v3464
    %v4030 = vsel %vm2572, %v3234, %v3466
    %v4032 = vsel %vm2572, %v3236, %v3468
    %v4034 = vsel %vm2572, %v3238, %v3470
    %v4036 = vsel %vm2572, %v3240, %v3472
    %v4038 = vsel %vm2572, %v3242, %v3474
    %vm4039 = vcmask 523264
    %v4041 = vsel %vm4039, %v4010, %v3546
    %v4043 = vsel %vm4039, %v4012, %v3548
    %v4045 = vsel %vm4039, %v4014, %v3550
    %v4047 = vsel %vm4039, %v4016, %v3552
    %v4049 = vsel %vm4039, %v4018, %v3554
    %v4051 = vsel %vm4039, %v4020, %v3556
    %v4053 = vsel %vm4039, %v4022, %v3558
    %v4055 = vsel %vm4039, %v4024, %v3560
    %v4057 = vsel %vm4039, %v4026, %v3562
    %v4059 = vsel %vm4039, %v4028, %v3564
    %v4061 = vsel %vm4039, %v4030, %v3566
    %v4063 = vsel %vm4039, %v4032, %v3568
    %v4065 = vsel %vm4039, %v4034, %v3570
    %v4067 = vsel %vm4039, %v4036, %v3572
    %v4069 = vsel %vm4039, %v4038, %v3574
    %vm4070 = vcmask 785408
    %v4072 = vsel %vm4070, %v4041, %v3592
    %v4075 = vsel %vm4070, %v4043, %v3594
    %v4078 = vsel %vm4070, %v4045, %v3596
    %v4081 = vsel %vm4070, %v4047, %v3598
    %v4084 = vsel %vm4070, %v4049, %v3600
    %v4087 = vsel %vm4070, %v4051, %v3602
    %v4090 = vsel %vm4070, %v4053, %v3604
    %v4093 = vsel %vm4070, %v4055, %v3606
    %v4096 = vsel %vm4070, %v4041, %v3608
    %v4099 = vsel %vm4070, %v4057, %v3610
    %v4102 = vsel %vm4070, %v4059, %v3612
    %v4105 = vsel %vm4070, %v4061, %v3614
    %v4108 = vsel %vm4070, %v4063, %v3616
    %v4111 = vsel %vm4070, %v4065, %v3618
    %v4114 = vsel %vm4070, %v4067, %v3620
    %v4117 = vsel %vm4070, %v4069, %v3622
    %v4121 = vsel %vm2572, %v3634, %v3880
    %v4124 = vsel %vm2572, %v3646, %v3882
    %v4127 = vsel %vm2572, %v3658, %v3884
    %v4130 = vsel %vm2572, %v3670, %v3886
    %v4133 = vsel %vm2572, %v3682, %v3888
    %v4136 = vsel %vm2572, %v3694, %v3890
    %v4139 = vsel %vm2572, %v3706, %v3892
    %v4142 = vsel %vm2572, %v3718, %v3894
    %v4145 = vsel %vm2572, %v3730, %v3896
    %v4148 = vsel %vm2572, %v3742, %v3898
    %v4151 = vsel %vm2572, %v3754, %v3900
    %v4154 = vsel %vm2572, %v3766, %v3902
    %v4157 = vsel %vm2572, %v3778, %v3904
    %v4160 = vsel %vm2572, %v3790, %v3906
    %v4163 = vsel %vm2572, %v3802, %v3908
    %v4166 = vsel %vm2572, %v3814, %v3910
    %v4168 = vsel %vm4039, %v4121, %v3914
    %v4170 = vsel %vm4039, %v4124, %v3916
    %v4172 = vsel %vm4039, %v4127, %v3918
    %v4174 = vsel %vm4039, %v4130, %v3920
    %v4176 = vsel %vm4039, %v4133, %v3922
    %v4178 = vsel %vm4039, %v4136, %v3924
    %v4180 = vsel %vm4039, %v4139, %v3926
    %v4182 = vsel %vm4039, %v4142, %v3928
    %v4184 = vsel %vm4039, %v4145, %v3930
    %v4186 = vsel %vm4039, %v4148, %v3932
    %v4188 = vsel %vm4039, %v4151, %v3934
    %v4190 = vsel %vm4039, %v4154, %v3936
    %v4192 = vsel %vm4039, %v4157, %v3938
    %v4194 = vsel %vm4039, %v4160, %v3940
    %v4196 = vsel %vm4039, %v4163, %v3942
    %v4198 = vsel %vm4039, %v4166, %v3944
    %v4200 = vsel %vm4070, %v4168, %v3970
    %v4203 = vsel %vm4070, %v4170, %v3972
    %v4206 = vsel %vm4070, %v4172, %v3974
    %v4209 = vsel %vm4070, %v4174, %v3976
    %v4212 = vsel %vm4070, %v4176, %v3978
    %v4215 = vsel %vm4070, %v4178, %v3980
    %v4218 = vsel %vm4070, %v4180, %v3982
    %v4221 = vsel %vm4070, %v4182, %v3984
    %v4224 = vsel %vm4070, %v4184, %v3986
    %v4227 = vsel %vm4070, %v4186, %v3988
    %v4230 = vsel %vm4070, %v4188, %v3990
    %v4233 = vsel %vm4070, %v4190, %v3992
    %v4236 = vsel %vm4070, %v4192, %v3994
    %v4239 = vsel %vm4070, %v4194, %v3996
    %v4242 = vsel %vm4070, %v4196, %v3998
    %v4245 = vsel %vm4070, %v4198, %v4000
    %v4247 = vld [vmem:[%s3] sm:$0xf]
    %v4248 = vld [vmem:[%s3 + $0x4] sm:$0xf]
    %v4249 = vld [vmem:[%s3 + $0x8] sm:$0xf]
    %v4250 = vld [vmem:[%s3 + $0xc] sm:$0xf]
    %v4251 = vld [vmem:[%s3 + $0x10] sm:$0xf]
    %v4252 = vld [vmem:[%s3 + $0x14] sm:$0xf]
    %v4253 = vld [vmem:[%s3 + $0x18] sm:$0xf]
    %v4254 = vld [vmem:[%s3 + $0x1c] sm:$0xf]
    %v4255 = vld [vmem:[%s3 + $0x20] sm:$0xf]
    %v4256 = vld [vmem:[%s3 + $0x24] sm:$0xf]
    %v4257 = vld [vmem:[%s3 + $0x28] sm:$0xf]
    %v4258 = vld [vmem:[%s3 + $0x2c] sm:$0xf]
    %v4259 = vld [vmem:[%s3 + $0x30] sm:$0xf]
    %v4260 = vld [vmem:[%s3 + $0x34] sm:$0xf]
    %v4261 = vld [vmem:[%s3 + $0x38] sm:$0xf]
    %v4262 = vld [vmem:[%s3 + $0x3c] sm:$0xf]
    %v4263 = vld [vmem:[%s3 + $0x40] sm:$0xf]
    %v4264 = vld [vmem:[%s3 + $0x44] sm:$0xf]
    %v4265 = vld [vmem:[%s3 + $0x48] sm:$0xf]
    %v4266 = vld [vmem:[%s3 + $0x4c] sm:$0xf]
    %v4267 = vld [vmem:[%s3 + $0x50] sm:$0xf]
    %v4268 = vld [vmem:[%s3 + $0x54] sm:$0xf]
    %v4269 = vld [vmem:[%s3 + $0x58] sm:$0xf]
    %v4270 = vld [vmem:[%s3 + $0x5c] sm:$0xf]
    %v4271 = vld [vmem:[%s3 + $0x60] sm:$0xf]
    %v4272 = vld [vmem:[%s3 + $0x64] sm:$0xf]
    %v4273 = vld [vmem:[%s3 + $0x68] sm:$0xf]
    %v4274 = vld [vmem:[%s3 + $0x6c] sm:$0xf]
    %v4275 = vld [vmem:[%s3 + $0x70] sm:$0xf]
    %v4276 = vld [vmem:[%s3 + $0x74] sm:$0xf]
    %v4277 = vld [vmem:[%s3 + $0x78] sm:$0xf]
    %v4278 = vld [vmem:[%s3 + $0x7c] sm:$0xf]
    %v4279 = vld [vmem:[%s3 + $0x80] sm:$0xf]
    %v4280 = vld [vmem:[%s3 + $0x84] sm:$0xf]
    %v4281 = vld [vmem:[%s3 + $0x88] sm:$0xf]
    %v4282 = vld [vmem:[%s3 + $0x8c] sm:$0xf]
    %v4283 = vld [vmem:[%s4] sm:$0x1]
    %v4285 = vperm.slane %v4283, 0
    %v4323 = vunpack.c.l.b16 %v4247
    %v4324 = vunpack.c.l.b16 %v4248
    %v4325 = vunpack.c.l.b16 %v4249
    %v4326 = vunpack.c.l.b16 %v4250
    %v4327 = vunpack.c.l.b16 %v4251
    %v4328 = vunpack.c.l.b16 %v4252
    %v4329 = vunpack.c.l.b16 %v4253
    %v4330 = vunpack.c.l.b16 %v4254
    %v4331 = vunpack.c.l.b16 %v4255
    %v4332 = vunpack.c.l.b16 %v4256
    %v4333 = vunpack.c.l.b16 %v4257
    %v4334 = vunpack.c.l.b16 %v4258
    %v4335 = vunpack.c.l.b16 %v4259
    %v4336 = vunpack.c.l.b16 %v4260
    %v4337 = vunpack.c.l.b16 %v4261
    %v4338 = vunpack.c.l.b16 %v4262
    %v4339 = vunpack.c.l.b16 %v4263
    %v4340 = vunpack.c.l.b16 %v4264
    %v4341 = vunpack.c.l.b16 %v4265
    %v4342 = vunpack.c.l.b16 %v4266
    %v4343 = vunpack.c.l.b16 %v4267
    %v4344 = vunpack.c.l.b16 %v4268
    %v4345 = vunpack.c.l.b16 %v4269
    %v4346 = vunpack.c.l.b16 %v4270
    %v4347 = vunpack.c.l.b16 %v4271
    %v4348 = vunpack.c.l.b16 %v4272
    %v4349 = vunpack.c.l.b16 %v4273
    %v4350 = vunpack.c.l.b16 %v4274
    %v4351 = vunpack.c.l.b16 %v4275
    %v4352 = vunpack.c.l.b16 %v4276
    %v4353 = vunpack.c.l.b16 %v4277
    %v4354 = vunpack.c.l.b16 %v4278
    %v4355 = vunpack.c.l.b16 %v4279
    %v4356 = vunpack.c.l.b16 %v4280
    %v4357 = vunpack.c.l.b16 %v4281
    %v4358 = vunpack.c.l.b16 %v4282
    %v4359 = vpack.c.b16 %v4324, %v4323
    %v4360 = vpack.c.b16 %v4326, %v4325
    %v4361 = vpack.c.b16 %v4328, %v4327
    %v4362 = vpack.c.b16 %v4330, %v4329
    %v4363 = vpack.c.b16 %v4332, %v4331
    %v4364 = vpack.c.b16 %v4334, %v4333
    %v4365 = vpack.c.b16 %v4336, %v4335
    %v4366 = vpack.c.b16 %v4338, %v4337
    %v4367 = vpack.c.b16 %v4340, %v4339
    %v4368 = vpack.c.b16 %v4342, %v4341
    %v4369 = vpack.c.b16 %v4344, %v4343
    %v4370 = vpack.c.b16 %v4346, %v4345
    %v4371 = vpack.c.b16 %v4348, %v4347
    %v4372 = vpack.c.b16 %v4350, %v4349
    %v4373 = vpack.c.b16 %v4352, %v4351
    %v4374 = vpack.c.b16 %v4354, %v4353
    %v4375 = vpack.c.b16 %v4356, %v4355
    %v4376 = vpack.c.b16 %v4358, %v4357
    %v4396 = vsel %vm2572, %v3505, 0
    %v4399 = vsel %vm2572, %v3508, 0
    %v4402 = vsel %vm2572, %v3511, 0
    %v4405 = vsel %vm2572, %v3514, 0
    %v4408 = vsel %vm2572, %v3517, 0
    %v4411 = vsel %vm2572, %v3520, 0
    %v4414 = vsel %vm2572, %v3523, 0
    %v4417 = vsel %vm2572, %v4005, 0
    %v4420 = vsel %vm2572, %v3526, 0
    %v4423 = vsel %vm2572, %v3529, 0
    %v4426 = vsel %vm2572, %v3532, 0
    %v4429 = vsel %vm2572, %v3535, 0
    %v4432 = vsel %vm2572, %v3538, 0
    %v4435 = vsel %vm2572, %v3541, 0
    %v4438 = vsel %vm2572, %v3544, 0
    %v4441 = vsel %vm2572, %v4008, 0
    %4443 = vmatpush.bf16.msra.mxu0 %v4366
    %4444 = vmatpush.bf16.msra.mxu0 %v4365
    %4445 = vmatpush.bf16.msra.mxu0 %v4364
    %4446 = vmatpush.bf16.msra.mxu0 %v4363
    %4447 = vmatpush.bf16.msra.mxu0 %v4362
    %4448 = vmatpush.bf16.msra.mxu0 %v4361
    %4449 = vmatpush.bf16.msra.mxu0 %v4360
    %4450 = vmatpush.bf16.msra.mxu0 %v4359
    %4451 = vmatmul.bf16.gmra.mxu0 %v4072
    %v4452 = vpop.f32.mrf.mxu0
    %v4453 = vadd.f32 %v4285, %v4452
    %v4454 = vpop.f32.mrf.mxu0
    %v4455 = vadd.f32 %v4285, %v4454
    %4456 = vmatmul.bf16.gmra.mxu0 %v4075
    %v4457 = vpop.f32.mrf.mxu0
    %v4458 = vadd.f32 %v4285, %v4457
    %v4459 = vpop.f32.mrf.mxu0
    %v4460 = vadd.f32 %v4285, %v4459
    %4461 = vmatmul.bf16.gmra.mxu0 %v4078
    %v4462 = vpop.f32.mrf.mxu0
    %v4463 = vadd.f32 %v4285, %v4462
    %v4464 = vpop.f32.mrf.mxu0
    %v4465 = vadd.f32 %v4285, %v4464
    %4466 = vmatmul.bf16.gmra.mxu0 %v4081
    %v4467 = vpop.f32.mrf.mxu0
    %v4468 = vadd.f32 %v4285, %v4467
    %v4469 = vpop.f32.mrf.mxu0
    %v4470 = vadd.f32 %v4285, %v4469
    %4471 = vmatmul.bf16.gmra.mxu0 %v4084
    %v4472 = vpop.f32.mrf.mxu0
    %v4473 = vadd.f32 %v4285, %v4472
    %v4474 = vpop.f32.mrf.mxu0
    %v4475 = vadd.f32 %v4285, %v4474
    %4476 = vmatmul.bf16.gmra.mxu0 %v4087
    %v4477 = vpop.f32.mrf.mxu0
    %v4478 = vadd.f32 %v4285, %v4477
    %v4479 = vpop.f32.mrf.mxu0
    %v4480 = vadd.f32 %v4285, %v4479
    %4481 = vmatmul.bf16.gmra.mxu0 %v4090
    %v4482 = vpop.f32.mrf.mxu0
    %v4483 = vadd.f32 %v4285, %v4482
    %v4484 = vpop.f32.mrf.mxu0
    %v4485 = vadd.f32 %v4285, %v4484
    %4486 = vmatmul.bf16.gmra.mxu0 %v4093
    %v4487 = vpop.f32.mrf.mxu0
    %v4488 = vadd.f32 %v4285, %v4487
    %v4489 = vpop.f32.mrf.mxu0
    %v4490 = vadd.f32 %v4285, %v4489
    %4491 = vmatmul.bf16.gmra.mxu0 %v4096
    %v4492 = vpop.f32.mrf.mxu0
    %v4493 = vadd.f32 %v4285, %v4492
    %v4494 = vpop.f32.mrf.mxu0
    %v4495 = vadd.f32 %v4285, %v4494
    %4496 = vmatmul.bf16.gmra.mxu0 %v4099
    %v4497 = vpop.f32.mrf.mxu0
    %v4498 = vadd.f32 %v4285, %v4497
    %v4499 = vpop.f32.mrf.mxu0
    %v4500 = vadd.f32 %v4285, %v4499
    %4501 = vmatmul.bf16.gmra.mxu0 %v4102
    %v4502 = vpop.f32.mrf.mxu0
    %v4503 = vadd.f32 %v4285, %v4502
    %v4504 = vpop.f32.mrf.mxu0
    %v4505 = vadd.f32 %v4285, %v4504
    %4506 = vmatmul.bf16.gmra.mxu0 %v4105
    %v4507 = vpop.f32.mrf.mxu0
    %v4508 = vadd.f32 %v4285, %v4507
    %v4509 = vpop.f32.mrf.mxu0
    %v4510 = vadd.f32 %v4285, %v4509
    %4511 = vmatmul.bf16.gmra.mxu0 %v4108
    %v4512 = vpop.f32.mrf.mxu0
    %v4513 = vadd.f32 %v4285, %v4512
    %v4514 = vpop.f32.mrf.mxu0
    %v4515 = vadd.f32 %v4285, %v4514
    %4516 = vmatmul.bf16.gmra.mxu0 %v4111
    %v4517 = vpop.f32.mrf.mxu0
    %v4518 = vadd.f32 %v4285, %v4517
    %v4519 = vpop.f32.mrf.mxu0
    %v4520 = vadd.f32 %v4285, %v4519
    %4521 = vmatmul.bf16.gmra.mxu0 %v4114
    %v4522 = vpop.f32.mrf.mxu0
    %v4523 = vadd.f32 %v4285, %v4522
    %v4524 = vpop.f32.mrf.mxu0
    %v4525 = vadd.f32 %v4285, %v4524
    %4526 = vmatmul.bf16.gmra.mxu0 %v4117
    %v4527 = vpop.f32.mrf.mxu0
    %v4528 = vadd.f32 %v4285, %v4527
    %v4529 = vpop.f32.mrf.mxu0
    %v4530 = vadd.f32 %v4285, %v4529
    %4531 = vdwg.mxu0
    %4532 = vmatpush.bf16.msra.mxu0 %v4374
    %4533 = vmatpush.bf16.msra.mxu0 %v4373
    %4534 = vmatpush.bf16.msra.mxu0 %v4372
    %4535 = vmatpush.bf16.msra.mxu0 %v4371
    %4536 = vmatpush.bf16.msra.mxu0 %v4370
    %4537 = vmatpush.bf16.msra.mxu0 %v4369
    %4538 = vmatpush.bf16.msra.mxu0 %v4368
    %4539 = vmatpush.bf16.msra.mxu0 %v4367
    %4540 = vmatmul.bf16.gmra.mxu0 %v4200
    %v4541 = vpop.f32.mrf.mxu0
    %v4542 = vadd.f32 %v4453, %v4541
    %v4543 = vpop.f32.mrf.mxu0
    %v4544 = vadd.f32 %v4455, %v4543
    %4545 = vmatmul.bf16.gmra.mxu0 %v4203
    %v4546 = vpop.f32.mrf.mxu0
    %v4547 = vadd.f32 %v4458, %v4546
    %v4548 = vpop.f32.mrf.mxu0
    %v4549 = vadd.f32 %v4460, %v4548
    %4550 = vmatmul.bf16.gmra.mxu0 %v4206
    %v4551 = vpop.f32.mrf.mxu0
    %v4552 = vadd.f32 %v4463, %v4551
    %v4553 = vpop.f32.mrf.mxu0
    %v4554 = vadd.f32 %v4465, %v4553
    %4555 = vmatmul.bf16.gmra.mxu0 %v4209
    %v4556 = vpop.f32.mrf.mxu0
    %v4557 = vadd.f32 %v4468, %v4556
    %v4558 = vpop.f32.mrf.mxu0
    %v4559 = vadd.f32 %v4470, %v4558
    %4560 = vmatmul.bf16.gmra.mxu0 %v4212
    %v4561 = vpop.f32.mrf.mxu0
    %v4562 = vadd.f32 %v4473, %v4561
    %v4563 = vpop.f32.mrf.mxu0
    %v4564 = vadd.f32 %v4475, %v4563
    %4565 = vmatmul.bf16.gmra.mxu0 %v4215
    %v4566 = vpop.f32.mrf.mxu0
    %v4567 = vadd.f32 %v4478, %v4566
    %v4568 = vpop.f32.mrf.mxu0
    %v4569 = vadd.f32 %v4480, %v4568
    %4570 = vmatmul.bf16.gmra.mxu0 %v4218
    %v4571 = vpop.f32.mrf.mxu0
    %v4572 = vadd.f32 %v4483, %v4571
    %v4573 = vpop.f32.mrf.mxu0
    %v4574 = vadd.f32 %v4485, %v4573
    %4575 = vmatmul.bf16.gmra.mxu0 %v4221
    %v4576 = vpop.f32.mrf.mxu0
    %v4577 = vadd.f32 %v4488, %v4576
    %v4578 = vpop.f32.mrf.mxu0
    %v4579 = vadd.f32 %v4490, %v4578
    %4580 = vmatmul.bf16.gmra.mxu0 %v4224
    %v4581 = vpop.f32.mrf.mxu0
    %v4582 = vadd.f32 %v4493, %v4581
    %v4583 = vpop.f32.mrf.mxu0
    %v4584 = vadd.f32 %v4495, %v4583
    %4585 = vmatmul.bf16.gmra.mxu0 %v4227
    %v4586 = vpop.f32.mrf.mxu0
    %v4587 = vadd.f32 %v4498, %v4586
    %v4588 = vpop.f32.mrf.mxu0
    %v4589 = vadd.f32 %v4500, %v4588
    %4590 = vmatmul.bf16.gmra.mxu0 %v4230
    %v4591 = vpop.f32.mrf.mxu0
    %v4592 = vadd.f32 %v4503, %v4591
    %v4593 = vpop.f32.mrf.mxu0
    %v4594 = vadd.f32 %v4505, %v4593
    %4595 = vmatmul.bf16.gmra.mxu0 %v4233
    %v4596 = vpop.f32.mrf.mxu0
    %v4597 = vadd.f32 %v4508, %v4596
    %v4598 = vpop.f32.mrf.mxu0
    %v4599 = vadd.f32 %v4510, %v4598
    %4600 = vmatmul.bf16.gmra.mxu0 %v4236
    %v4601 = vpop.f32.mrf.mxu0
    %v4602 = vadd.f32 %v4513, %v4601
    %v4603 = vpop.f32.mrf.mxu0
    %v4604 = vadd.f32 %v4515, %v4603
    %4605 = vmatmul.bf16.gmra.mxu0 %v4239
    %v4606 = vpop.f32.mrf.mxu0
    %v4607 = vadd.f32 %v4518, %v4606
    %v4608 = vpop.f32.mrf.mxu0
    %v4609 = vadd.f32 %v4520, %v4608
    %4610 = vmatmul.bf16.gmra.mxu0 %v4242
    %v4611 = vpop.f32.mrf.mxu0
    %v4612 = vadd.f32 %v4523, %v4611
    %v4613 = vpop.f32.mrf.mxu0
    %v4614 = vadd.f32 %v4525, %v4613
    %4615 = vmatmul.bf16.gmra.mxu0 %v4245
    %v4616 = vpop.f32.mrf.mxu0
    %v4617 = vadd.f32 %v4528, %v4616
    %v4618 = vpop.f32.mrf.mxu0
    %v4619 = vadd.f32 %v4530, %v4618
    %4620 = vdwg.mxu0
    %4621 = vmatpush.bf16.msra.mxu0 0
    %4622 = vmatpush.bf16.msra.mxu0 0
    %4623 = vmatpush.bf16.msra.mxu0 0
    %4624 = vmatpush.bf16.msra.mxu0 0
    %4625 = vmatpush.bf16.msra.mxu0 0
    %4626 = vmatpush.bf16.msra.mxu0 0
    %4627 = vmatpush.bf16.msra.mxu0 %v4376
    %4628 = vmatpush.bf16.msra.mxu0 %v4375
    %4629 = vmatmul.bf16.gmra.mxu0 %v4396
    %v4630 = vpop.f32.mrf.mxu0
    %v4631 = vadd.f32 %v4542, %v4630
    %v4632 = vpop.f32.mrf.mxu0
    %v4633 = vadd.f32 %v4544, %v4632
    %4634 = vmatmul.bf16.gmra.mxu0 %v4399
    %v4635 = vpop.f32.mrf.mxu0
    %v4636 = vadd.f32 %v4547, %v4635
    %v4637 = vpop.f32.mrf.mxu0
    %v4638 = vadd.f32 %v4549, %v4637
    %4639 = vmatmul.bf16.gmra.mxu0 %v4402
    %v4640 = vpop.f32.mrf.mxu0
    %v4641 = vadd.f32 %v4552, %v4640
    %v4642 = vpop.f32.mrf.mxu0
    %v4643 = vadd.f32 %v4554, %v4642
    %4644 = vmatmul.bf16.gmra.mxu0 %v4405
    %v4645 = vpop.f32.mrf.mxu0
    %v4646 = vadd.f32 %v4557, %v4645
    %v4647 = vpop.f32.mrf.mxu0
    %v4648 = vadd.f32 %v4559, %v4647
    %4649 = vmatmul.bf16.gmra.mxu0 %v4408
    %v4650 = vpop.f32.mrf.mxu0
    %v4651 = vadd.f32 %v4562, %v4650
    %v4652 = vpop.f32.mrf.mxu0
    %v4653 = vadd.f32 %v4564, %v4652
    %4654 = vmatmul.bf16.gmra.mxu0 %v4411
    %v4655 = vpop.f32.mrf.mxu0
    %v4656 = vadd.f32 %v4567, %v4655
    %v4657 = vpop.f32.mrf.mxu0
    %v4658 = vadd.f32 %v4569, %v4657
    %4659 = vmatmul.bf16.gmra.mxu0 %v4414
    %v4660 = vpop.f32.mrf.mxu0
    %v4661 = vadd.f32 %v4572, %v4660
    %v4662 = vpop.f32.mrf.mxu0
    %v4663 = vadd.f32 %v4574, %v4662
    %4664 = vmatmul.bf16.gmra.mxu0 %v4417
    %v4665 = vpop.f32.mrf.mxu0
    %v4666 = vadd.f32 %v4577, %v4665
    %v4667 = vpop.f32.mrf.mxu0
    %v4668 = vadd.f32 %v4579, %v4667
    %4669 = vmatmul.bf16.gmra.mxu0 %v4420
    %v4670 = vpop.f32.mrf.mxu0
    %v4671 = vadd.f32 %v4582, %v4670
    %v4672 = vpop.f32.mrf.mxu0
    %v4673 = vadd.f32 %v4584, %v4672
    %4674 = vmatmul.bf16.gmra.mxu0 %v4423
    %v4675 = vpop.f32.mrf.mxu0
    %v4676 = vadd.f32 %v4587, %v4675
    %v4677 = vpop.f32.mrf.mxu0
    %v4678 = vadd.f32 %v4589, %v4677
    %4679 = vmatmul.bf16.gmra.mxu0 %v4426
    %v4680 = vpop.f32.mrf.mxu0
    %v4681 = vadd.f32 %v4592, %v4680
    %v4682 = vpop.f32.mrf.mxu0
    %v4683 = vadd.f32 %v4594, %v4682
    %4684 = vmatmul.bf16.gmra.mxu0 %v4429
    %v4685 = vpop.f32.mrf.mxu0
    %v4686 = vadd.f32 %v4597, %v4685
    %v4687 = vpop.f32.mrf.mxu0
    %v4688 = vadd.f32 %v4599, %v4687
    %4689 = vmatmul.bf16.gmra.mxu0 %v4432
    %v4690 = vpop.f32.mrf.mxu0
    %v4691 = vadd.f32 %v4602, %v4690
    %v4692 = vpop.f32.mrf.mxu0
    %v4693 = vadd.f32 %v4604, %v4692
    %4694 = vmatmul.bf16.gmra.mxu0 %v4435
    %v4695 = vpop.f32.mrf.mxu0
    %v4696 = vadd.f32 %v4607, %v4695
    %v4697 = vpop.f32.mrf.mxu0
    %v4698 = vadd.f32 %v4609, %v4697
    %4699 = vmatmul.bf16.gmra.mxu0 %v4438
    %v4700 = vpop.f32.mrf.mxu0
    %v4701 = vadd.f32 %v4612, %v4700
    %v4702 = vpop.f32.mrf.mxu0
    %v4703 = vadd.f32 %v4614, %v4702
    %4704 = vmatmul.bf16.gmra.mxu0 %v4441
    %v4705 = vpop.f32.mrf.mxu0
    %v4706 = vadd.f32 %v4617, %v4705
    %v4707 = vpop.f32.mrf.mxu0
    %v4708 = vadd.f32 %v4619, %v4707
    %4709 = vdwg.mxu0
    %v4742 = vrot.slane %v4631, 2
    %v4743 = vrot.slane %v4631, 4
    %v4744 = vrot.slane %v4631, 6
    %v4745 = vrot.slane %v4633, 2
    %v4746 = vrot.slane %v4633, 4
    %v4747 = vrot.slane %v4633, 6
    %v4748 = vrot.slane %v4636, 2
    %v4749 = vrot.slane %v4636, 4
    %v4750 = vrot.slane %v4636, 6
    %v4751 = vrot.slane %v4638, 2
    %v4752 = vrot.slane %v4638, 4
    %v4753 = vrot.slane %v4638, 6
    %v4754 = vrot.slane %v4641, 2
    %v4755 = vrot.slane %v4641, 4
    %v4756 = vrot.slane %v4641, 6
    %v4757 = vrot.slane %v4643, 2
    %v4758 = vrot.slane %v4643, 4
    %v4759 = vrot.slane %v4643, 6
    %v4760 = vrot.slane %v4646, 2
    %v4761 = vrot.slane %v4646, 4
    %v4762 = vrot.slane %v4646, 6
    %v4763 = vrot.slane %v4648, 2
    %v4764 = vrot.slane %v4648, 4
    %v4765 = vrot.slane %v4648, 6
    %v4766 = vrot.slane %v4651, 2
    %v4767 = vrot.slane %v4651, 4
    %v4768 = vrot.slane %v4651, 6
    %v4769 = vrot.slane %v4653, 2
    %v4770 = vrot.slane %v4653, 4
    %v4771 = vrot.slane %v4653, 6
    %v4772 = vrot.slane %v4656, 2
    %v4773 = vrot.slane %v4656, 4
    %v4774 = vrot.slane %v4656, 6
    %v4775 = vrot.slane %v4658, 2
    %v4776 = vrot.slane %v4658, 4
    %v4777 = vrot.slane %v4658, 6
    %v4778 = vrot.slane %v4661, 2
    %v4779 = vrot.slane %v4661, 4
    %v4780 = vrot.slane %v4661, 6
    %v4781 = vrot.slane %v4663, 2
    %v4782 = vrot.slane %v4663, 4
    %v4783 = vrot.slane %v4663, 6
    %v4784 = vrot.slane %v4666, 2
    %v4785 = vrot.slane %v4666, 4
    %v4786 = vrot.slane %v4666, 6
    %v4787 = vrot.slane %v4668, 2
    %v4788 = vrot.slane %v4668, 4
    %v4789 = vrot.slane %v4668, 6
    %v4790 = vrot.slane %v4671, 2
    %v4791 = vrot.slane %v4671, 4
    %v4792 = vrot.slane %v4671, 6
    %v4793 = vrot.slane %v4673, 2
    %v4794 = vrot.slane %v4673, 4
    %v4795 = vrot.slane %v4673, 6
    %v4796 = vrot.slane %v4676, 2
    %v4797 = vrot.slane %v4676, 4
    %v4798 = vrot.slane %v4676, 6
    %v4799 = vrot.slane %v4678, 2
    %v4800 = vrot.slane %v4678, 4
    %v4801 = vrot.slane %v4678, 6
    %v4802 = vrot.slane %v4681, 2
    %v4803 = vrot.slane %v4681, 4
    %v4804 = vrot.slane %v4681, 6
    %v4805 = vrot.slane %v4683, 2
    %v4806 = vrot.slane %v4683, 4
    %v4807 = vrot.slane %v4683, 6
    %v4808 = vrot.slane %v4686, 2
    %v4809 = vrot.slane %v4686, 4
    %v4810 = vrot.slane %v4686, 6
    %v4811 = vrot.slane %v4688, 2
    %v4812 = vrot.slane %v4688, 4
    %v4813 = vrot.slane %v4688, 6
    %v4814 = vrot.slane %v4691, 2
    %v4815 = vrot.slane %v4691, 4
    %v4816 = vrot.slane %v4691, 6
    %v4817 = vrot.slane %v4693, 2
    %v4818 = vrot.slane %v4693, 4
    %v4819 = vrot.slane %v4693, 6
    %v4820 = vrot.slane %v4696, 2
    %v4821 = vrot.slane %v4696, 4
    %v4822 = vrot.slane %v4696, 6
    %v4823 = vrot.slane %v4698, 2
    %v4824 = vrot.slane %v4698, 4
    %v4825 = vrot.slane %v4698, 6
    %v4826 = vrot.slane %v4701, 2
    %v4827 = vrot.slane %v4701, 4
    %v4828 = vrot.slane %v4701, 6
    %v4829 = vrot.slane %v4703, 2
    %v4830 = vrot.slane %v4703, 4
    %v4831 = vrot.slane %v4703, 6
    %v4832 = vrot.slane %v4706, 2
    %v4833 = vrot.slane %v4706, 4
    %v4834 = vrot.slane %v4706, 6
    %v4835 = vrot.slane %v4708, 2
    %v4836 = vrot.slane %v4708, 4
    %v4837 = vrot.slane %v4708, 6
    %v4838 = vperm.slane %v4631, 0
    %v4839 = vperm.slane %v4742, 0
    %v4840 = vperm.slane %v4743, 0
    %v4841 = vperm.slane %v4744, 0
    %v4842 = vperm.slane %v4633, 0
    %v4843 = vperm.slane %v4745, 0
    %v4844 = vperm.slane %v4746, 0
    %v4845 = vperm.slane %v4747, 0
    %v4846 = vperm.slane %v4636, 0
    %v4847 = vperm.slane %v4748, 0
    %v4848 = vperm.slane %v4749, 0
    %v4849 = vperm.slane %v4750, 0
    %v4850 = vperm.slane %v4638, 0
    %v4851 = vperm.slane %v4751, 0
    %v4852 = vperm.slane %v4752, 0
    %v4853 = vperm.slane %v4753, 0
    %v4854 = vperm.slane %v4641, 0
    %v4855 = vperm.slane %v4754, 0
    %v4856 = vperm.slane %v4755, 0
    %v4857 = vperm.slane %v4756, 0
    %v4858 = vperm.slane %v4643, 0
    %v4859 = vperm.slane %v4757, 0
    %v4860 = vperm.slane %v4758, 0
    %v4861 = vperm.slane %v4759, 0
    %v4862 = vperm.slane %v4646, 0
    %v4863 = vperm.slane %v4760, 0
    %v4864 = vperm.slane %v4761, 0
    %v4865 = vperm.slane %v4762, 0
    %v4866 = vperm.slane %v4648, 0
    %v4867 = vperm.slane %v4763, 0
    %v4868 = vperm.slane %v4764, 0
    %v4869 = vperm.slane %v4765, 0
    %v4870 = vperm.slane %v4651, 0
    %v4871 = vperm.slane %v4766, 0
    %v4872 = vperm.slane %v4767, 0
    %v4873 = vperm.slane %v4768, 0
    %v4874 = vperm.slane %v4653, 0
    %v4875 = vperm.slane %v4769, 0
    %v4876 = vperm.slane %v4770, 0
    %v4877 = vperm.slane %v4771, 0
    %v4878 = vperm.slane %v4656, 0
    %v4879 = vperm.slane %v4772, 0
    %v4880 = vperm.slane %v4773, 0
    %v4881 = vperm.slane %v4774, 0
    %v4882 = vperm.slane %v4658, 0
    %v4883 = vperm.slane %v4775, 0
    %v4884 = vperm.slane %v4776, 0
    %v4885 = vperm.slane %v4777, 0
    %v4886 = vperm.slane %v4661, 0
    %v4887 = vperm.slane %v4778, 0
    %v4888 = vperm.slane %v4779, 0
    %v4889 = vperm.slane %v4780, 0
    %v4890 = vperm.slane %v4663, 0
    %v4891 = vperm.slane %v4781, 0
    %v4892 = vperm.slane %v4782, 0
    %v4893 = vperm.slane %v4783, 0
    %v4894 = vperm.slane %v4666, 0
    %v4895 = vperm.slane %v4784, 0
    %v4896 = vperm.slane %v4785, 0
    %v4897 = vperm.slane %v4786, 0
    %v4898 = vperm.slane %v4668, 0
    %v4899 = vperm.slane %v4787, 0
    %v4900 = vperm.slane %v4788, 0
    %v4901 = vperm.slane %v4789, 0
    %v4902 = vperm.slane %v4671, 0
    %v4903 = vperm.slane %v4790, 0
    %v4904 = vperm.slane %v4791, 0
    %v4905 = vperm.slane %v4792, 0
    %v4906 = vperm.slane %v4673, 0
    %v4907 = vperm.slane %v4793, 0
    %v4908 = vperm.slane %v4794, 0
    %v4909 = vperm.slane %v4795, 0
    %v4910 = vperm.slane %v4676, 0
    %v4911 = vperm.slane %v4796, 0
    %v4912 = vperm.slane %v4797, 0
    %v4913 = vperm.slane %v4798, 0
    %v4914 = vperm.slane %v4678, 0
    %v4915 = vperm.slane %v4799, 0
    %v4916 = vperm.slane %v4800, 0
    %v4917 = vperm.slane %v4801, 0
    %v4918 = vperm.slane %v4681, 0
    %v4919 = vperm.slane %v4802, 0
    %v4920 = vperm.slane %v4803, 0
    %v4921 = vperm.slane %v4804, 0
    %v4922 = vperm.slane %v4683, 0
    %v4923 = vperm.slane %v4805, 0
    %v4924 = vperm.slane %v4806, 0
    %v4925 = vperm.slane %v4807, 0
    %v4926 = vperm.slane %v4686, 0
    %v4927 = vperm.slane %v4808, 0
    %v4928 = vperm.slane %v4809, 0
    %v4929 = vperm.slane %v4810, 0
    %v4930 = vperm.slane %v4688, 0
    %v4931 = vperm.slane %v4811, 0
    %v4932 = vperm.slane %v4812, 0
    %v4933 = vperm.slane %v4813, 0
    %v4934 = vperm.slane %v4691, 0
    %v4935 = vperm.slane %v4814, 0
    %v4936 = vperm.slane %v4815, 0
    %v4937 = vperm.slane %v4816, 0
    %v4938 = vperm.slane %v4693, 0
    %v4939 = vperm.slane %v4817, 0
    %v4940 = vperm.slane %v4818, 0
    %v4941 = vperm.slane %v4819, 0
    %v4942 = vperm.slane %v4696, 0
    %v4943 = vperm.slane %v4820, 0
    %v4944 = vperm.slane %v4821, 0
    %v4945 = vperm.slane %v4822, 0
    %v4946 = vperm.slane %v4698, 0
    %v4947 = vperm.slane %v4823, 0
    %v4948 = vperm.slane %v4824, 0
    %v4949 = vperm.slane %v4825, 0
    %v4950 = vperm.slane %v4701, 0
    %v4951 = vperm.slane %v4826, 0
    %v4952 = vperm.slane %v4827, 0
    %v4953 = vperm.slane %v4828, 0
    %v4954 = vperm.slane %v4703, 0
    %v4955 = vperm.slane %v4829, 0
    %v4956 = vperm.slane %v4830, 0
    %v4957 = vperm.slane %v4831, 0
    %v4958 = vperm.slane %v4706, 0
    %v4959 = vperm.slane %v4832, 0
    %v4960 = vperm.slane %v4833, 0
    %v4961 = vperm.slane %v4834, 0
    %v4962 = vperm.slane %v4708, 0
    %v4963 = vperm.slane %v4835, 0
    %v4964 = vperm.slane %v4836, 0
    %v4965 = vperm.slane %v4837, 0
    %vm4966 = vcmask 1041409
    %v4967 = vsel %vm4966, %v4839, %v4838
    %vm4968 = vcmask 1042434
    %v4969 = vsel %vm4968, %v4840, %v4967
    %vm4970 = vcmask 1043459
    %v4971 = vsel %vm4970, %v4841, %v4969
    %vm4972 = vcmask 1044484
    %v4973 = vsel %vm4972, %v4842, %v4971
    %vm4974 = vcmask 1045509
    %v4975 = vsel %vm4974, %v4843, %v4973
    %vm4976 = vcmask 1046534
    %v4977 = vsel %vm4976, %v4844, %v4975
    %vm4978 = vcmask 1047559
    %v4979 = vsel %vm4978, %v4845, %v4977
    %v4980 = vsel %vm4966, %v4847, %v4846
    %v4981 = vsel %vm4968, %v4848, %v4980
    %v4982 = vsel %vm4970, %v4849, %v4981
    %v4983 = vsel %vm4972, %v4850, %v4982
    %v4984 = vsel %vm4974, %v4851, %v4983
    %v4985 = vsel %vm4976, %v4852, %v4984
    %v4986 = vsel %vm4978, %v4853, %v4985
    %v4987 = vsel %vm4966, %v4855, %v4854
    %v4988 = vsel %vm4968, %v4856, %v4987
    %v4989 = vsel %vm4970, %v4857, %v4988
    %v4990 = vsel %vm4972, %v4858, %v4989
    %v4991 = vsel %vm4974, %v4859, %v4990
    %v4992 = vsel %vm4976, %v4860, %v4991
    %v4993 = vsel %vm4978, %v4861, %v4992
    %v4994 = vsel %vm4966, %v4863, %v4862
    %v4995 = vsel %vm4968, %v4864, %v4994
    %v4996 = vsel %vm4970, %v4865, %v4995
    %v4997 = vsel %vm4972, %v4866, %v4996
    %v4998 = vsel %vm4974, %v4867, %v4997
    %v4999 = vsel %vm4976, %v4868, %v4998
    %v5000 = vsel %vm4978, %v4869, %v4999
    %v5001 = vsel %vm4966, %v4871, %v4870
    %v5002 = vsel %vm4968, %v4872, %v5001
    %v5003 = vsel %vm4970, %v4873, %v5002
    %v5004 = vsel %vm4972, %v4874, %v5003
    %v5005 = vsel %vm4974, %v4875, %v5004
    %v5006 = vsel %vm4976, %v4876, %v5005
    %v5007 = vsel %vm4978, %v4877, %v5006
    %v5008 = vsel %vm4966, %v4879, %v4878
    %v5009 = vsel %vm4968, %v4880, %v5008
    %v5010 = vsel %vm4970, %v4881, %v5009
    %v5011 = vsel %vm4972, %v4882, %v5010
    %v5012 = vsel %vm4974, %v4883, %v5011
    %v5013 = vsel %vm4976, %v4884, %v5012
    %v5014 = vsel %vm4978, %v4885, %v5013
    %v5015 = vsel %vm4966, %v4887, %v4886
    %v5016 = vsel %vm4968, %v4888, %v5015
    %v5017 = vsel %vm4970, %v4889, %v5016
    %v5018 = vsel %vm4972, %v4890, %v5017
    %v5019 = vsel %vm4974, %v4891, %v5018
    %v5020 = vsel %vm4976, %v4892, %v5019
    %v5021 = vsel %vm4978, %v4893, %v5020
    %v5022 = vsel %vm4966, %v4895, %v4894
    %v5023 = vsel %vm4968, %v4896, %v5022
    %v5024 = vsel %vm4970, %v4897, %v5023
    %v5025 = vsel %vm4972, %v4898, %v5024
    %v5026 = vsel %vm4974, %v4899, %v5025
    %v5027 = vsel %vm4976, %v4900, %v5026
    %v5028 = vsel %vm4978, %v4901, %v5027
    %v5029 = vsel %vm4966, %v4903, %v4902
    %v5030 = vsel %vm4968, %v4904, %v5029
    %v5031 = vsel %vm4970, %v4905, %v5030
    %v5032 = vsel %vm4972, %v4906, %v5031
    %v5033 = vsel %vm4974, %v4907, %v5032
    %v5034 = vsel %vm4976, %v4908, %v5033
    %v5035 = vsel %vm4978, %v4909, %v5034
    %v5036 = vsel %vm4966, %v4911, %v4910
    %v5037 = vsel %vm4968, %v4912, %v5036
    %v5038 = vsel %vm4970, %v4913, %v5037
    %v5039 = vsel %vm4972, %v4914, %v5038
    %v5040 = vsel %vm4974, %v4915, %v5039
    %v5041 = vsel %vm4976, %v4916, %v5040
    %v5042 = vsel %vm4978, %v4917, %v5041
    %v5043 = vsel %vm4966, %v4919, %v4918
    %v5044 = vsel %vm4968, %v4920, %v5043
    %v5045 = vsel %vm4970, %v4921, %v5044
    %v5046 = vsel %vm4972, %v4922, %v5045
    %v5047 = vsel %vm4974, %v4923, %v5046
    %v5048 = vsel %vm4976, %v4924, %v5047
    %v5049 = vsel %vm4978, %v4925, %v5048
    %v5050 = vsel %vm4966, %v4927, %v4926
    %v5051 = vsel %vm4968, %v4928, %v5050
    %v5052 = vsel %vm4970, %v4929, %v5051
    %v5053 = vsel %vm4972, %v4930, %v5052
    %v5054 = vsel %vm4974, %v4931, %v5053
    %v5055 = vsel %vm4976, %v4932, %v5054
    %v5056 = vsel %vm4978, %v4933, %v5055
    %v5057 = vsel %vm4966, %v4935, %v4934
    %v5058 = vsel %vm4968, %v4936, %v5057
    %v5059 = vsel %vm4970, %v4937, %v5058
    %v5060 = vsel %vm4972, %v4938, %v5059
    %v5061 = vsel %vm4974, %v4939, %v5060
    %v5062 = vsel %vm4976, %v4940, %v5061
    %v5063 = vsel %vm4978, %v4941, %v5062
    %v5064 = vsel %vm4966, %v4943, %v4942
    %v5065 = vsel %vm4968, %v4944, %v5064
    %v5066 = vsel %vm4970, %v4945, %v5065
    %v5067 = vsel %vm4972, %v4946, %v5066
    %v5068 = vsel %vm4974, %v4947, %v5067
    %v5069 = vsel %vm4976, %v4948, %v5068
    %v5070 = vsel %vm4978, %v4949, %v5069
    %v5071 = vsel %vm4966, %v4951, %v4950
    %v5072 = vsel %vm4968, %v4952, %v5071
    %v5073 = vsel %vm4970, %v4953, %v5072
    %v5074 = vsel %vm4972, %v4954, %v5073
    %v5075 = vsel %vm4974, %v4955, %v5074
    %v5076 = vsel %vm4976, %v4956, %v5075
    %v5077 = vsel %vm4978, %v4957, %v5076
    %v5078 = vsel %vm4966, %v4959, %v4958
    %v5079 = vsel %vm4968, %v4960, %v5078
    %v5080 = vsel %vm4970, %v4961, %v5079
    %v5081 = vsel %vm4972, %v4962, %v5080
    %v5082 = vsel %vm4974, %v4963, %v5081
    %v5083 = vsel %vm4976, %v4964, %v5082
    %v5084 = vsel %vm4978, %v4965, %v5083
    %5101 = vst.msk [vmem:[#allocation3] sm:$0xff] %vm4039, %v4979
    %5102 = vst.msk [vmem:[#allocation3 + $0x8] sm:$0xff] %vm4039, %v4986
    %5103 = vst.msk [vmem:[#allocation3 + $0x10] sm:$0xff] %vm4039, %v4993
    %5104 = vst.msk [vmem:[#allocation3 + $0x18] sm:$0xff] %vm4039, %v5000
    %5105 = vst.msk [vmem:[#allocation3 + $0x20] sm:$0xff] %vm4039, %v5007
    %5106 = vst.msk [vmem:[#allocation3 + $0x28] sm:$0xff] %vm4039, %v5014
    %5107 = vst.msk [vmem:[#allocation3 + $0x30] sm:$0xff] %vm4039, %v5021
    %5108 = vst.msk [vmem:[#allocation3 + $0x38] sm:$0xff] %vm4039, %v5028
    %5109 = vst.msk [vmem:[#allocation3 + $0x40] sm:$0xff] %vm4039, %v5035
    %5110 = vst.msk [vmem:[#allocation3 + $0x48] sm:$0xff] %vm4039, %v5042
    %5111 = vst.msk [vmem:[#allocation3 + $0x50] sm:$0xff] %vm4039, %v5049
    %5112 = vst.msk [vmem:[#allocation3 + $0x58] sm:$0xff] %vm4039, %v5056
    %5113 = vst.msk [vmem:[#allocation3 + $0x60] sm:$0xff] %vm4039, %v5063
    %5114 = vst.msk [vmem:[#allocation3 + $0x68] sm:$0xff] %vm4039, %v5070
    %5115 = vst.msk [vmem:[#allocation3 + $0x70] sm:$0xff] %vm4039, %v5077
    %5116 = vst.msk [vmem:[#allocation3 + $0x78] sm:$0xff] %vm4039, %v5084
    %v5117 = vld [vmem:[#allocation3] sm:$0xff]
    %v5118 = vld [vmem:[#allocation3 + $0x8] sm:$0xff]
    %v5119 = vld [vmem:[#allocation3 + $0x10] sm:$0xff]
    %v5120 = vld [vmem:[#allocation3 + $0x18] sm:$0xff]
    %v5121 = vld [vmem:[#allocation3 + $0x20] sm:$0xff]
    %v5122 = vld [vmem:[#allocation3 + $0x28] sm:$0xff]
    %v5123 = vld [vmem:[#allocation3 + $0x30] sm:$0xff]
    %v5124 = vld [vmem:[#allocation3 + $0x38] sm:$0xff]
    %v5125 = vld [vmem:[#allocation3 + $0x40] sm:$0xff]
    %v5126 = vld [vmem:[#allocation3 + $0x48] sm:$0xff]
    %v5127 = vld [vmem:[#allocation3 + $0x50] sm:$0xff]
    %v5128 = vld [vmem:[#allocation3 + $0x58] sm:$0xff]
    %v5129 = vld [vmem:[#allocation3 + $0x60] sm:$0xff]
    %v5130 = vld [vmem:[#allocation3 + $0x68] sm:$0xff]
    %v5131 = vld [vmem:[#allocation3 + $0x70] sm:$0xff]
    %v5132 = vld [vmem:[#allocation3 + $0x78] sm:$0xff]
    %v5133 = vpack.c.bf16 %v5117, %v5117
    %v5134 = vpack.c.bf16 %v5118, %v5118
    %v5135 = vpack.c.bf16 %v5119, %v5119
    %v5136 = vpack.c.bf16 %v5120, %v5120
    %v5137 = vpack.c.bf16 %v5121, %v5121
    %v5138 = vpack.c.bf16 %v5122, %v5122
    %v5139 = vpack.c.bf16 %v5123, %v5123
    %v5140 = vpack.c.bf16 %v5124, %v5124
    %v5141 = vpack.c.bf16 %v5125, %v5125
    %v5142 = vpack.c.bf16 %v5126, %v5126
    %v5143 = vpack.c.bf16 %v5127, %v5127
    %v5144 = vpack.c.bf16 %v5128, %v5128
    %v5145 = vpack.c.bf16 %v5129, %v5129
    %v5146 = vpack.c.bf16 %v5130, %v5130
    %v5147 = vpack.c.bf16 %v5131, %v5131
    %v5148 = vpack.c.bf16 %v5132, %v5132
    %v5150 = vshrl.u32 %v5133, 16
    %v5152 = vrot.slane %v5150, 7
    %v5153 = vshll.u32 %v5133, 16
    %v5155 = vor.u32 %v5152, %v5153
    %v5157 = vshrl.u32 %v5134, 16
    %v5159 = vrot.slane %v5157, 7
    %v5160 = vshll.u32 %v5134, 16
    %v5162 = vor.u32 %v5159, %v5160
    %v5164 = vshrl.u32 %v5135, 16
    %v5166 = vrot.slane %v5164, 7
    %v5167 = vshll.u32 %v5135, 16
    %v5169 = vor.u32 %v5166, %v5167
    %v5171 = vshrl.u32 %v5136, 16
    %v5173 = vrot.slane %v5171, 7
    %v5174 = vshll.u32 %v5136, 16
    %v5176 = vor.u32 %v5173, %v5174
    %v5178 = vshrl.u32 %v5137, 16
    %v5180 = vrot.slane %v5178, 7
    %v5181 = vshll.u32 %v5137, 16
    %v5183 = vor.u32 %v5180, %v5181
    %v5185 = vshrl.u32 %v5138, 16
    %v5187 = vrot.slane %v5185, 7
    %v5188 = vshll.u32 %v5138, 16
    %v5190 = vor.u32 %v5187, %v5188
    %v5192 = vshrl.u32 %v5139, 16
    %v5194 = vrot.slane %v5192, 7
    %v5195 = vshll.u32 %v5139, 16
    %v5197 = vor.u32 %v5194, %v5195
    %v5199 = vshrl.u32 %v5140, 16
    %v5201 = vrot.slane %v5199, 7
    %v5202 = vshll.u32 %v5140, 16
    %v5204 = vor.u32 %v5201, %v5202
    %v5206 = vshrl.u32 %v5141, 16
    %v5208 = vrot.slane %v5206, 7
    %v5209 = vshll.u32 %v5141, 16
    %v5211 = vor.u32 %v5208, %v5209
    %v5213 = vshrl.u32 %v5142, 16
    %v5215 = vrot.slane %v5213, 7
    %v5216 = vshll.u32 %v5142, 16
    %v5218 = vor.u32 %v5215, %v5216
    %v5220 = vshrl.u32 %v5143, 16
    %v5222 = vrot.slane %v5220, 7
    %v5223 = vshll.u32 %v5143, 16
    %v5225 = vor.u32 %v5222, %v5223
    %v5227 = vshrl.u32 %v5144, 16
    %v5229 = vrot.slane %v5227, 7
    %v5230 = vshll.u32 %v5144, 16
    %v5232 = vor.u32 %v5229, %v5230
    %v5234 = vshrl.u32 %v5145, 16
    %v5236 = vrot.slane %v5234, 7
    %v5237 = vshll.u32 %v5145, 16
    %v5239 = vor.u32 %v5236, %v5237
    %v5241 = vshrl.u32 %v5146, 16
    %v5243 = vrot.slane %v5241, 7
    %v5244 = vshll.u32 %v5146, 16
    %v5246 = vor.u32 %v5243, %v5244
    %v5248 = vshrl.u32 %v5147, 16
    %v5250 = vrot.slane %v5248, 7
    %v5251 = vshll.u32 %v5147, 16
    %v5253 = vor.u32 %v5250, %v5251
    %v5255 = vshrl.u32 %v5148, 16
    %v5257 = vrot.slane %v5255, 7
    %v5258 = vshll.u32 %v5148, 16
    %v5260 = vor.u32 %v5257, %v5258
    %v5277 = vsel %vm667, 0, %v5155
    %v5278 = vsel %vm667, 0, %v5162
    %v5279 = vsel %vm667, 0, %v5169
    %v5280 = vsel %vm667, 0, %v5176
    %v5281 = vsel %vm667, 0, %v5183
    %v5282 = vsel %vm667, 0, %v5190
    %v5283 = vsel %vm667, 0, %v5197
    %v5284 = vsel %vm667, 0, %v5204
    %v5285 = vsel %vm667, 0, %v5211
    %v5286 = vsel %vm667, 0, %v5218
    %v5287 = vsel %vm667, 0, %v5225
    %v5288 = vsel %vm667, 0, %v5232
    %v5289 = vsel %vm667, 0, %v5239
    %v5290 = vsel %vm667, 0, %v5246
    %v5291 = vsel %vm667, 0, %v5253
    %v5292 = vsel %vm667, 0, %v5260
    %vm5293 = vcmask 1044480
    %vm5294 = vsmask.f32 4352
    %vm5295 = vmand %vm5293, %vm5294
    %v5296 = vsel %vm5295, %v668, 0
    %v5297 = vsel %vm5295, %v5277, 0
    %v5298 = vsel %vm5295, %v5278, 0
    %v5299 = vsel %vm5295, %v5279, 0
    %v5300 = vsel %vm5295, %v5280, 0
    %v5301 = vsel %vm5295, %v5281, 0
    %v5302 = vsel %vm5295, %v5282, 0
    %v5303 = vsel %vm5295, %v5283, 0
    %v5304 = vsel %vm5295, %v5284, 0
    %v5305 = vsel %vm5295, %v5285, 0
    %v5306 = vsel %vm5295, %v5286, 0
    %v5307 = vsel %vm5295, %v5287, 0
    %v5308 = vsel %vm5295, %v5288, 0
    %v5309 = vsel %vm5295, %v5289, 0
    %v5310 = vsel %vm5295, %v5290, 0
    %v5311 = vsel %vm5295, %v5291, 0
    %v5312 = vsel %vm5295, %v5292, 0
    %v5314 = vshrl.u32 %v5296, 16
    %v5316 = vshll.u32 %v5296, 16
    %v5318 = vrot.slane %v5316, 1
    %v5319 = vor.u32 %v5314, %v5318
    %v5321 = vshrl.u32 %v5298, 16
    %v5323 = vshll.u32 %v5298, 16
    %v5325 = vrot.slane %v5323, 1
    %v5326 = vor.u32 %v5321, %v5325
    %v5328 = vshrl.u32 %v5300, 16
    %v5330 = vshll.u32 %v5300, 16
    %v5332 = vrot.slane %v5330, 1
    %v5333 = vor.u32 %v5328, %v5332
    %v5335 = vshrl.u32 %v5302, 16
    %v5337 = vshll.u32 %v5302, 16
    %v5339 = vrot.slane %v5337, 1
    %v5340 = vor.u32 %v5335, %v5339
    %v5342 = vshrl.u32 %v5306, 16
    %v5344 = vshll.u32 %v5306, 16
    %v5346 = vrot.slane %v5344, 1
    %v5347 = vor.u32 %v5342, %v5346
    %v5349 = vshrl.u32 %v5308, 16
    %v5351 = vshll.u32 %v5308, 16
    %v5353 = vrot.slane %v5351, 1
    %v5354 = vor.u32 %v5349, %v5353
    %v5356 = vshrl.u32 %v5310, 16
    %v5358 = vshll.u32 %v5310, 16
    %v5360 = vrot.slane %v5358, 1
    %v5361 = vor.u32 %v5356, %v5360
    %5362 = vrot.lane.b32.xlu0 %v5319, 64
    %v5363 = vpop.permute.xlu0 %5362
    %5364 = vrot.lane.b32.xlu0 %v5326, 64
    %v5365 = vpop.permute.xlu0 %5364
    %5366 = vrot.lane.b32.xlu0 %v5333, 64
    %v5367 = vpop.permute.xlu0 %5366
    %5368 = vrot.lane.b32.xlu0 %v5340, 64
    %v5369 = vpop.permute.xlu0 %5368
    %5370 = vrot.lane.b32.xlu0 %v5347, 64
    %v5371 = vpop.permute.xlu0 %5370
    %5372 = vrot.lane.b32.xlu0 %v5354, 64
    %v5373 = vpop.permute.xlu0 %5372
    %5374 = vrot.lane.b32.xlu0 %v5361, 64
    %v5375 = vpop.permute.xlu0 %5374
    %v5383 = vrot.slane %v5296, 1
    %v5384 = vrot.slane %v5298, 1
    %v5385 = vrot.slane %v5300, 1
    %v5386 = vrot.slane %v5302, 1
    %v5387 = vrot.slane %v5306, 1
    %v5388 = vrot.slane %v5308, 1
    %v5389 = vrot.slane %v5310, 1
    %5398 = vrot.lane.b32.xlu0 %v5297, 64
    %v5399 = vpop.permute.xlu0 %5398
    %5400 = vrot.lane.b32.xlu0 %v5299, 64
    %v5401 = vpop.permute.xlu0 %5400
    %5402 = vrot.lane.b32.xlu0 %v5301, 64
    %v5403 = vpop.permute.xlu0 %5402
    %5404 = vrot.lane.b32.xlu0 %v5303, 64
    %v5405 = vpop.permute.xlu0 %5404
    %5406 = vrot.lane.b32.xlu0 %v5305, 64
    %v5407 = vpop.permute.xlu0 %5406
    %5408 = vrot.lane.b32.xlu0 %v5307, 64
    %v5409 = vpop.permute.xlu0 %5408
    %5410 = vrot.lane.b32.xlu0 %v5309, 64
    %v5411 = vpop.permute.xlu0 %5410
    %5412 = vrot.lane.b32.xlu0 %v5311, 64
    %v5413 = vpop.permute.xlu0 %5412
    %v5415 = vshrl.u32 %v5297, 16
    %v5417 = vshll.u32 %v5297, 16
    %v5419 = vrot.slane %v5417, 1
    %v5420 = vor.u32 %v5415, %v5419
    %v5422 = vshrl.u32 %v5299, 16
    %v5424 = vshll.u32 %v5299, 16
    %v5426 = vrot.slane %v5424, 1
    %v5427 = vor.u32 %v5422, %v5426
    %v5429 = vshrl.u32 %v5301, 16
    %v5431 = vshll.u32 %v5301, 16
    %v5433 = vrot.slane %v5431, 1
    %v5434 = vor.u32 %v5429, %v5433
    %v5436 = vshrl.u32 %v5303, 16
    %v5438 = vshll.u32 %v5303, 16
    %v5440 = vrot.slane %v5438, 1
    %v5441 = vor.u32 %v5436, %v5440
    %v5443 = vshrl.u32 %v5305, 16
    %v5445 = vshll.u32 %v5305, 16
    %v5447 = vrot.slane %v5445, 1
    %v5448 = vor.u32 %v5443, %v5447
    %v5450 = vshrl.u32 %v5307, 16
    %v5452 = vshll.u32 %v5307, 16
    %v5454 = vrot.slane %v5452, 1
    %v5455 = vor.u32 %v5450, %v5454
    %v5457 = vshrl.u32 %v5309, 16
    %v5459 = vshll.u32 %v5309, 16
    %v5461 = vrot.slane %v5459, 1
    %v5462 = vor.u32 %v5457, %v5461
    %v5464 = vshrl.u32 %v5311, 16
    %v5466 = vshll.u32 %v5311, 16
    %v5468 = vrot.slane %v5466, 1
    %v5469 = vor.u32 %v5464, %v5468
    %v5470 = vrot.slane %v5297, 1
    %v5471 = vrot.slane %v5299, 1
    %v5472 = vrot.slane %v5301, 1
    %v5473 = vrot.slane %v5303, 1
    %v5474 = vrot.slane %v5305, 1
    %v5475 = vrot.slane %v5307, 1
    %v5476 = vrot.slane %v5309, 1
    %v5477 = vrot.slane %v5311, 1
    %5478 = vrot.lane.b32.xlu0 %v5470, 64
    %v5479 = vpop.permute.xlu0 %5478
    %5480 = vrot.lane.b32.xlu0 %v5471, 64
    %v5481 = vpop.permute.xlu0 %5480
    %5482 = vrot.lane.b32.xlu0 %v5472, 64
    %v5483 = vpop.permute.xlu0 %5482
    %5484 = vrot.lane.b32.xlu0 %v5473, 64
    %v5485 = vpop.permute.xlu0 %5484
    %5486 = vrot.lane.b32.xlu0 %v5474, 64
    %v5487 = vpop.permute.xlu0 %5486
    %5488 = vrot.lane.b32.xlu0 %v5475, 64
    %v5489 = vpop.permute.xlu0 %5488
    %5490 = vrot.lane.b32.xlu0 %v5476, 64
    %v5491 = vpop.permute.xlu0 %5490
    %5492 = vrot.lane.b32.xlu0 %v5477, 64
    %v5493 = vpop.permute.xlu0 %5492
    %v5495 = vshrl.u32 %v5304, 16
    %v5497 = vshll.u32 %v5304, 16
    %v5499 = vrot.slane %v5497, 1
    %v5500 = vor.u32 %v5495, %v5499
    %v5502 = vshrl.u32 %v5312, 16
    %v5504 = vshll.u32 %v5312, 16
    %v5506 = vrot.slane %v5504, 1
    %v5507 = vor.u32 %v5502, %v5506
    %5508 = vrot.lane.b32.xlu0 %v5500, 64
    %v5509 = vpop.permute.xlu0 %5508
    %5510 = vrot.lane.b32.xlu0 %v5507, 64
    %v5511 = vpop.permute.xlu0 %5510
    %v5514 = vrot.slane %v5304, 1
    %v5515 = vrot.slane %v5312, 1
    %v5517 = vsel %vm4039, %v5296, %v5363
    %v5519 = vsel %vm4039, %v5298, %v5365
    %v5521 = vsel %vm4039, %v5300, %v5367
    %v5523 = vsel %vm4039, %v5302, %v5369
    %v5525 = vsel %vm4039, %v5306, %v5371
    %v5527 = vsel %vm4039, %v5308, %v5373
    %v5529 = vsel %vm4039, %v5310, %v5375
    %v5532 = vsel %vm4039, %v5383, %v5399
    %v5535 = vsel %vm4039, %v5384, %v5401
    %v5538 = vsel %vm4039, %v5385, %v5403
    %v5541 = vsel %vm4039, %v5386, %v5405
    %v5543 = vsel %vm4039, %v5383, %v5407
    %v5546 = vsel %vm4039, %v5387, %v5409
    %v5549 = vsel %vm4039, %v5388, %v5411
    %v5552 = vsel %vm4039, %v5389, %v5413
    %v5555 = vsel %vm4039, %v5420, %v5479
    %v5558 = vsel %vm4039, %v5427, %v5481
    %v5561 = vsel %vm4039, %v5434, %v5483
    %v5564 = vsel %vm4039, %v5441, %v5485
    %v5567 = vsel %vm4039, %v5448, %v5487
    %v5570 = vsel %vm4039, %v5455, %v5489
    %v5573 = vsel %vm4039, %v5462, %v5491
    %v5576 = vsel %vm4039, %v5469, %v5493
    %v5578 = vsel %vm4039, %v5304, %v5509
    %v5580 = vsel %vm4039, %v5312, %v5511
    %v5606 = vunpack.c.l.b16 %v5517
    %v5607 = vunpack.c.l.b16 %v5532
    %v5608 = vunpack.c.l.b16 %v5555
    %v5609 = vunpack.c.l.b16 %v5519
    %v5610 = vunpack.c.l.b16 %v5384
    %v5611 = vunpack.c.l.b16 %v5535
    %v5612 = vunpack.c.l.b16 %v5558
    %v5613 = vunpack.c.l.b16 %v5521
    %v5614 = vunpack.c.l.b16 %v5385
    %v5615 = vunpack.c.l.b16 %v5538
    %v5616 = vunpack.c.l.b16 %v5561
    %v5617 = vunpack.c.l.b16 %v5523
    %v5618 = vunpack.c.l.b16 %v5386
    %v5619 = vunpack.c.l.b16 %v5541
    %v5620 = vunpack.c.l.b16 %v5564
    %v5621 = vunpack.c.l.b16 %v5578
    %v5622 = vunpack.c.l.b16 %v5514
    %v5623 = vunpack.c.l.b16 %v5543
    %v5624 = vunpack.c.l.b16 %v5567
    %v5625 = vunpack.c.l.b16 %v5525
    %v5626 = vunpack.c.l.b16 %v5387
    %v5627 = vunpack.c.l.b16 %v5546
    %v5628 = vunpack.c.l.b16 %v5570
    %v5629 = vunpack.c.l.b16 %v5527
    %v5630 = vunpack.c.l.b16 %v5388
    %v5631 = vunpack.c.l.b16 %v5549
    %v5632 = vunpack.c.l.b16 %v5573
    %v5633 = vunpack.c.l.b16 %v5529
    %v5634 = vunpack.c.l.b16 %v5389
    %v5635 = vunpack.c.l.b16 %v5552
    %v5636 = vunpack.c.l.b16 %v5576
    %v5637 = vunpack.c.l.b16 %v5580
    %v5638 = vunpack.c.l.b16 %v5515
    %v5639 = vld [vmem:[#allocation5] sm:$0xf]
    %v5640 = vld [vmem:[#allocation5 + $0x4] sm:$0xf]
    %v5641 = vld [vmem:[#allocation5 + $0x8] sm:$0xf]
    %v5642 = vld [vmem:[#allocation5 + $0xc] sm:$0xf]
    %v5643 = vld [vmem:[#allocation5 + $0x10] sm:$0xf]
    %v5644 = vld [vmem:[#allocation5 + $0x14] sm:$0xf]
    %v5645 = vld [vmem:[#allocation5 + $0x18] sm:$0xf]
    %v5646 = vld [vmem:[#allocation5 + $0x1c] sm:$0xf]
    %v5647 = vld [vmem:[#allocation5 + $0x20] sm:$0xf]
    %v5648 = vld [vmem:[#allocation5 + $0x24] sm:$0xf]
    %v5649 = vld [vmem:[#allocation5 + $0x28] sm:$0xf]
    %v5650 = vld [vmem:[#allocation5 + $0x2c] sm:$0xf]
    %v5651 = vld [vmem:[#allocation5 + $0x30] sm:$0xf]
    %v5652 = vld [vmem:[#allocation5 + $0x34] sm:$0xf]
    %v5653 = vld [vmem:[#allocation5 + $0x38] sm:$0xf]
    %v5654 = vld [vmem:[#allocation5 + $0x3c] sm:$0xf]
    %v5655 = vld [vmem:[#allocation5 + $0x40] sm:$0xf]
    %v5656 = vld [vmem:[#allocation5 + $0x44] sm:$0xf]
    %v5657 = vld [vmem:[#allocation5 + $0x48] sm:$0xf]
    %v5658 = vld [vmem:[#allocation5 + $0x4c] sm:$0xf]
    %v5659 = vld [vmem:[#allocation5 + $0x50] sm:$0xf]
    %v5660 = vld [vmem:[#allocation5 + $0x54] sm:$0xf]
    %v5661 = vld [vmem:[#allocation5 + $0x58] sm:$0xf]
    %v5662 = vld [vmem:[#allocation5 + $0x5c] sm:$0xf]
    %v5663 = vld [vmem:[#allocation5 + $0x60] sm:$0xf]
    %v5664 = vld [vmem:[#allocation5 + $0x64] sm:$0xf]
    %v5665 = vld [vmem:[#allocation5 + $0x68] sm:$0xf]
    %v5666 = vld [vmem:[#allocation5 + $0x6c] sm:$0xf]
    %v5667 = vld [vmem:[#allocation5 + $0x70] sm:$0xf]
    %v5668 = vld [vmem:[#allocation5 + $0x74] sm:$0xf]
    %v5669 = vld [vmem:[#allocation5 + $0x78] sm:$0xf]
    %v5670 = vld [vmem:[#allocation5 + $0x7c] sm:$0xf]
    %v5671 = vld [vmem:[#allocation5 + $0x80] sm:$0xf]
    %v5672 = vld [vmem:[#allocation5 + $0x84] sm:$0xf]
    %v5673 = vld [vmem:[#allocation5 + $0x88] sm:$0xf]
    %v5674 = vld [vmem:[#allocation5 + $0x8c] sm:$0xf]
    %v5675 = vld [vmem:[#allocation5 + $0x90] sm:$0xf]
    %v5676 = vld [vmem:[#allocation5 + $0x94] sm:$0xf]
    %v5677 = vld [vmem:[#allocation5 + $0x98] sm:$0xf]
    %v5678 = vld [vmem:[#allocation5 + $0x9c] sm:$0xf]
    %v5679 = vld [vmem:[#allocation5 + $0xa0] sm:$0xf]
    %v5680 = vld [vmem:[#allocation5 + $0xa4] sm:$0xf]
    %v5681 = vld [vmem:[#allocation5 + $0xa8] sm:$0xf]
    %v5682 = vld [vmem:[#allocation5 + $0xac] sm:$0xf]
    %v5683 = vld [vmem:[#allocation5 + $0xb0] sm:$0xf]
    %v5684 = vld [vmem:[#allocation5 + $0xb4] sm:$0xf]
    %v5685 = vld [vmem:[#allocation5 + $0xb8] sm:$0xf]
    %v5686 = vld [vmem:[#allocation5 + $0xbc] sm:$0xf]
    %v5687 = vld [vmem:[#allocation5 + $0xc0] sm:$0xf]
    %v5688 = vld [vmem:[#allocation5 + $0xc4] sm:$0xf]
    %v5689 = vld [vmem:[#allocation5 + $0xc8] sm:$0xf]
    %v5690 = vld [vmem:[#allocation5 + $0xcc] sm:$0xf]
    %v5691 = vld [vmem:[#allocation5 + $0xd0] sm:$0xf]
    %v5692 = vld [vmem:[#allocation5 + $0xd4] sm:$0xf]
    %v5693 = vld [vmem:[#allocation5 + $0xd8] sm:$0xf]
    %v5694 = vld [vmem:[#allocation5 + $0xdc] sm:$0xf]
    %v5695 = vld [vmem:[#allocation5 + $0xe0] sm:$0xf]
    %v5696 = vld [vmem:[#allocation5 + $0xe4] sm:$0xf]
    %v5697 = vld [vmem:[#allocation5 + $0xe8] sm:$0xf]
    %v5698 = vld [vmem:[#allocation5 + $0xec] sm:$0xf]
    %v5699 = vld [vmem:[#allocation5 + $0xf0] sm:$0xf]
    %v5700 = vld [vmem:[#allocation5 + $0xf4] sm:$0xf]
    %v5701 = vld [vmem:[#allocation5 + $0xf8] sm:$0xf]
    %v5702 = vld [vmem:[#allocation5 + $0xfc] sm:$0xf]
    %v5703 = vld [vmem:[#allocation5 + $0x100] sm:$0xf]
    %v5704 = vld [vmem:[#allocation5 + $0x104] sm:$0xf]
    %v5705 = vld [vmem:[#allocation5 + $0x108] sm:$0xf]
    %v5706 = vld [vmem:[#allocation5 + $0x10c] sm:$0xf]
    %v5707 = vld [vmem:[#allocation5 + $0x110] sm:$0xf]
    %v5708 = vld [vmem:[#allocation5 + $0x114] sm:$0xf]
    %v5709 = vld [vmem:[#allocation5 + $0x118] sm:$0xf]
    %v5710 = vld [vmem:[#allocation5 + $0x11c] sm:$0xf]
    %v5711 = vld [vmem:[%s6] sm:$0x1]
    %v5713 = vperm.slane %v5711, 0
    %v5715 = vpack.c.b16 %v5609, %v5606
    %v5716 = vpack.c.b16 %v5611, %v5607
    %v5717 = vpack.c.b16 %v5612, %v5608
    %v5718 = vpack.c.b16 %v5613, %v5609
    %v5719 = vpack.c.b16 %v5614, %v5610
    %v5720 = vpack.c.b16 %v5617, %v5613
    %v5721 = vpack.c.b16 %v5619, %v5615
    %v5722 = vpack.c.b16 %v5620, %v5616
    %v5723 = vpack.c.b16 %v5621, %v5617
    %v5724 = vpack.c.b16 %v5622, %v5618
    %v5725 = vpack.c.b16 %v5625, %v5606
    %v5726 = vpack.c.b16 %v5627, %v5623
    %v5727 = vpack.c.b16 %v5628, %v5624
    %v5728 = vpack.c.b16 %v5629, %v5625
    %v5729 = vpack.c.b16 %v5630, %v5626
    %v5730 = vpack.c.b16 %v5633, %v5629
    %v5731 = vpack.c.b16 %v5635, %v5631
    %v5732 = vpack.c.b16 %v5636, %v5632
    %v5733 = vpack.c.b16 %v5637, %v5633
    %v5734 = vpack.c.b16 %v5638, %v5634
    %v5823 = vunpack.c.l.b16 %v5639
    %v5824 = vunpack.c.l.b16 %v5640
    %v5825 = vunpack.c.l.b16 %v5641
    %v5826 = vunpack.c.l.b16 %v5642
    %v5827 = vunpack.c.l.b16 %v5643
    %v5828 = vunpack.c.l.b16 %v5644
    %v5829 = vunpack.c.l.b16 %v5645
    %v5830 = vunpack.c.l.b16 %v5646
    %v5831 = vunpack.c.l.b16 %v5647
    %v5832 = vunpack.c.l.b16 %v5648
    %v5833 = vunpack.c.l.b16 %v5649
    %v5834 = vunpack.c.l.b16 %v5650
    %v5835 = vunpack.c.l.b16 %v5651
    %v5836 = vunpack.c.l.b16 %v5652
    %v5837 = vunpack.c.l.b16 %v5653
    %v5838 = vunpack.c.l.b16 %v5654
    %v5839 = vunpack.c.l.b16 %v5655
    %v5840 = vunpack.c.l.b16 %v5656
    %v5841 = vunpack.c.l.b16 %v5657
    %v5842 = vunpack.c.l.b16 %v5658
    %v5843 = vunpack.c.l.b16 %v5659
    %v5844 = vunpack.c.l.b16 %v5660
    %v5845 = vunpack.c.l.b16 %v5661
    %v5846 = vunpack.c.l.b16 %v5662
    %v5847 = vunpack.c.l.b16 %v5663
    %v5848 = vunpack.c.l.b16 %v5664
    %v5849 = vunpack.c.l.b16 %v5665
    %v5850 = vunpack.c.l.b16 %v5666
    %v5851 = vunpack.c.l.b16 %v5667
    %v5852 = vunpack.c.l.b16 %v5668
    %v5853 = vunpack.c.l.b16 %v5669
    %v5854 = vunpack.c.l.b16 %v5670
    %v5855 = vunpack.c.l.b16 %v5671
    %v5856 = vunpack.c.l.b16 %v5672
    %v5857 = vunpack.c.l.b16 %v5673
    %v5858 = vunpack.c.l.b16 %v5674
    %v5859 = vunpack.c.l.b16 %v5675
    %v5860 = vunpack.c.l.b16 %v5676
    %v5861 = vunpack.c.l.b16 %v5677
    %v5862 = vunpack.c.l.b16 %v5678
    %v5863 = vunpack.c.l.b16 %v5679
    %v5864 = vunpack.c.l.b16 %v5680
    %v5865 = vunpack.c.l.b16 %v5681
    %v5866 = vunpack.c.l.b16 %v5682
    %v5867 = vunpack.c.l.b16 %v5683
    %v5868 = vunpack.c.l.b16 %v5684
    %v5869 = vunpack.c.l.b16 %v5685
    %v5870 = vunpack.c.l.b16 %v5686
    %v5871 = vunpack.c.l.b16 %v5687
    %v5872 = vunpack.c.l.b16 %v5688
    %v5873 = vunpack.c.l.b16 %v5689
    %v5874 = vunpack.c.l.b16 %v5690
    %v5875 = vunpack.c.l.b16 %v5691
    %v5876 = vunpack.c.l.b16 %v5692
    %v5877 = vunpack.c.l.b16 %v5693
    %v5878 = vunpack.c.l.b16 %v5694
    %v5879 = vunpack.c.l.b16 %v5695
    %v5880 = vunpack.c.l.b16 %v5696
    %v5881 = vunpack.c.l.b16 %v5697
    %v5882 = vunpack.c.l.b16 %v5698
    %v5883 = vunpack.c.l.b16 %v5699
    %v5884 = vunpack.c.l.b16 %v5700
    %v5885 = vunpack.c.l.b16 %v5701
    %v5886 = vunpack.c.l.b16 %v5702
    %v5887 = vunpack.c.l.b16 %v5703
    %v5888 = vunpack.c.l.b16 %v5704
    %v5889 = vunpack.c.l.b16 %v5705
    %v5890 = vunpack.c.l.b16 %v5706
    %v5891 = vunpack.c.l.b16 %v5707
    %v5892 = vunpack.c.l.b16 %v5708
    %v5893 = vunpack.c.l.b16 %v5709
    %v5894 = vunpack.c.l.b16 %v5710
    %v5895 = vpack.c.b16 %v5824, %v5823
    %v5896 = vpack.c.b16 %v5826, %v5825
    %v5897 = vpack.c.b16 %v5828, %v5827
    %v5898 = vpack.c.b16 %v5830, %v5829
    %v5899 = vpack.c.b16 %v5832, %v5831
    %v5900 = vpack.c.b16 %v5834, %v5833
    %v5901 = vpack.c.b16 %v5836, %v5835
    %v5902 = vpack.c.b16 %v5838, %v5837
    %v5903 = vpack.c.b16 %v5840, %v5839
    %v5904 = vpack.c.b16 %v5842, %v5841
    %v5905 = vpack.c.b16 %v5844, %v5843
    %v5906 = vpack.c.b16 %v5846, %v5845
    %v5907 = vpack.c.b16 %v5848, %v5847
    %v5908 = vpack.c.b16 %v5850, %v5849
    %v5909 = vpack.c.b16 %v5852, %v5851
    %v5910 = vpack.c.b16 %v5854, %v5853
    %v5911 = vpack.c.b16 %v5856, %v5855
    %v5912 = vpack.c.b16 %v5858, %v5857
    %v5913 = vpack.c.b16 %v5860, %v5859
    %v5914 = vpack.c.b16 %v5862, %v5861
    %v5915 = vpack.c.b16 %v5864, %v5863
    %v5916 = vpack.c.b16 %v5866, %v5865
    %v5917 = vpack.c.b16 %v5868, %v5867
    %v5918 = vpack.c.b16 %v5870, %v5869
    %v5919 = vpack.c.b16 %v5872, %v5871
    %v5920 = vpack.c.b16 %v5874, %v5873
    %v5921 = vpack.c.b16 %v5876, %v5875
    %v5922 = vpack.c.b16 %v5878, %v5877
    %v5923 = vpack.c.b16 %v5880, %v5879
    %v5924 = vpack.c.b16 %v5882, %v5881
    %v5925 = vpack.c.b16 %v5884, %v5883
    %v5926 = vpack.c.b16 %v5886, %v5885
    %v5927 = vpack.c.b16 %v5888, %v5887
    %v5928 = vpack.c.b16 %v5890, %v5889
    %v5929 = vpack.c.b16 %v5892, %v5891
    %v5930 = vpack.c.b16 %v5894, %v5893
    %v5968 = vsel %vm4039, %v5719, 0
    %v5971 = vsel %vm4039, %v5724, 0
    %v5974 = vsel %vm4039, %v5729, 0
    %v5977 = vsel %vm4039, %v5734, 0
    %5979 = vmatpush.bf16.msra.mxu0 %v5902
    %5980 = vmatpush.bf16.msra.mxu0 %v5901
    %5981 = vmatpush.bf16.msra.mxu0 %v5900
    %5982 = vmatpush.bf16.msra.mxu0 %v5899
    %5983 = vmatpush.bf16.msra.mxu0 %v5898
    %5984 = vmatpush.bf16.msra.mxu0 %v5897
    %5985 = vmatpush.bf16.msra.mxu0 %v5896
    %5986 = vmatpush.bf16.msra.mxu0 %v5895
    %5987 = vmatmul.bf16.gmra.mxu0 %v5715
    %v5988 = vpop.f32.mrf.mxu0
    %v5989 = vadd.f32 %v5713, %v5988
    %v5990 = vpop.f32.mrf.mxu0
    %v5991 = vadd.f32 %v5713, %v5990
    %5992 = vmatmul.bf16.gmra.mxu0 %v5720
    %v5993 = vpop.f32.mrf.mxu0
    %v5994 = vadd.f32 %v5713, %v5993
    %v5995 = vpop.f32.mrf.mxu0
    %v5996 = vadd.f32 %v5713, %v5995
    %5997 = vmatmul.bf16.gmra.mxu0 %v5725
    %v5998 = vpop.f32.mrf.mxu0
    %v5999 = vadd.f32 %v5713, %v5998
    %v6000 = vpop.f32.mrf.mxu0
    %v6001 = vadd.f32 %v5713, %v6000
    %6002 = vmatmul.bf16.gmra.mxu0 %v5730
    %v6003 = vpop.f32.mrf.mxu0
    %v6004 = vadd.f32 %v5713, %v6003
    %v6005 = vpop.f32.mrf.mxu0
    %v6006 = vadd.f32 %v5713, %v6005
    %6007 = vdwg.mxu0
    %6008 = vmatpush.bf16.msra.mxu0 %v5910
    %6009 = vmatpush.bf16.msra.mxu0 %v5909
    %6010 = vmatpush.bf16.msra.mxu0 %v5908
    %6011 = vmatpush.bf16.msra.mxu0 %v5907
    %6012 = vmatpush.bf16.msra.mxu0 %v5906
    %6013 = vmatpush.bf16.msra.mxu0 %v5905
    %6014 = vmatpush.bf16.msra.mxu0 %v5904
    %6015 = vmatpush.bf16.msra.mxu0 %v5903
    %6016 = vmatmul.bf16.gmra.mxu0 %v5716
    %v6017 = vpop.f32.mrf.mxu0
    %v6018 = vadd.f32 %v5989, %v6017
    %v6019 = vpop.f32.mrf.mxu0
    %v6020 = vadd.f32 %v5991, %v6019
    %6021 = vmatmul.bf16.gmra.mxu0 %v5721
    %v6022 = vpop.f32.mrf.mxu0
    %v6023 = vadd.f32 %v5994, %v6022
    %v6024 = vpop.f32.mrf.mxu0
    %v6025 = vadd.f32 %v5996, %v6024
    %6026 = vmatmul.bf16.gmra.mxu0 %v5726
    %v6027 = vpop.f32.mrf.mxu0
    %v6028 = vadd.f32 %v5999, %v6027
    %v6029 = vpop.f32.mrf.mxu0
    %v6030 = vadd.f32 %v6001, %v6029
    %6031 = vmatmul.bf16.gmra.mxu0 %v5731
    %v6032 = vpop.f32.mrf.mxu0
    %v6033 = vadd.f32 %v6004, %v6032
    %v6034 = vpop.f32.mrf.mxu0
    %v6035 = vadd.f32 %v6006, %v6034
    %6036 = vdwg.mxu0
    %6037 = vmatpush.bf16.msra.mxu0 %v5918
    %6038 = vmatpush.bf16.msra.mxu0 %v5917
    %6039 = vmatpush.bf16.msra.mxu0 %v5916
    %6040 = vmatpush.bf16.msra.mxu0 %v5915
    %6041 = vmatpush.bf16.msra.mxu0 %v5914
    %6042 = vmatpush.bf16.msra.mxu0 %v5913
    %6043 = vmatpush.bf16.msra.mxu0 %v5912
    %6044 = vmatpush.bf16.msra.mxu0 %v5911
    %6045 = vmatmul.bf16.gmra.mxu0 %v5717
    %v6046 = vpop.f32.mrf.mxu0
    %v6047 = vadd.f32 %v6018, %v6046
    %v6048 = vpop.f32.mrf.mxu0
    %v6049 = vadd.f32 %v6020, %v6048
    %6050 = vmatmul.bf16.gmra.mxu0 %v5722
    %v6051 = vpop.f32.mrf.mxu0
    %v6052 = vadd.f32 %v6023, %v6051
    %v6053 = vpop.f32.mrf.mxu0
    %v6054 = vadd.f32 %v6025, %v6053
    %6055 = vmatmul.bf16.gmra.mxu0 %v5727
    %v6056 = vpop.f32.mrf.mxu0
    %v6057 = vadd.f32 %v6028, %v6056
    %v6058 = vpop.f32.mrf.mxu0
    %v6059 = vadd.f32 %v6030, %v6058
    %6060 = vmatmul.bf16.gmra.mxu0 %v5732
    %v6061 = vpop.f32.mrf.mxu0
    %v6062 = vadd.f32 %v6033, %v6061
    %v6063 = vpop.f32.mrf.mxu0
    %v6064 = vadd.f32 %v6035, %v6063
    %6065 = vdwg.mxu0
    %6066 = vmatpush.bf16.msra.mxu0 %v5926
    %6067 = vmatpush.bf16.msra.mxu0 %v5925
    %6068 = vmatpush.bf16.msra.mxu0 %v5924
    %6069 = vmatpush.bf16.msra.mxu0 %v5923
    %6070 = vmatpush.bf16.msra.mxu0 %v5922
    %6071 = vmatpush.bf16.msra.mxu0 %v5921
    %6072 = vmatpush.bf16.msra.mxu0 %v5920
    %6073 = vmatpush.bf16.msra.mxu0 %v5919
    %6074 = vmatmul.bf16.gmra.mxu0 %v5718
    %v6075 = vpop.f32.mrf.mxu0
    %v6076 = vadd.f32 %v6047, %v6075
    %v6077 = vpop.f32.mrf.mxu0
    %v6078 = vadd.f32 %v6049, %v6077
    %6079 = vmatmul.bf16.gmra.mxu0 %v5723
    %v6080 = vpop.f32.mrf.mxu0
    %v6081 = vadd.f32 %v6052, %v6080
    %v6082 = vpop.f32.mrf.mxu0
    %v6083 = vadd.f32 %v6054, %v6082
    %6084 = vmatmul.bf16.gmra.mxu0 %v5728
    %v6085 = vpop.f32.mrf.mxu0
    %v6086 = vadd.f32 %v6057, %v6085
    %v6087 = vpop.f32.mrf.mxu0
    %v6088 = vadd.f32 %v6059, %v6087
    %6089 = vmatmul.bf16.gmra.mxu0 %v5733
    %v6090 = vpop.f32.mrf.mxu0
    %v6091 = vadd.f32 %v6062, %v6090
    %v6092 = vpop.f32.mrf.mxu0
    %v6093 = vadd.f32 %v6064, %v6092
    %6094 = vdwg.mxu0
    %6095 = vmatpush.bf16.msra.mxu0 0
    %6096 = vmatpush.bf16.msra.mxu0 0
    %6097 = vmatpush.bf16.msra.mxu0 0
    %6098 = vmatpush.bf16.msra.mxu0 0
    %6099 = vmatpush.bf16.msra.mxu0 %v5930
    %6100 = vmatpush.bf16.msra.mxu0 %v5929
    %6101 = vmatpush.bf16.msra.mxu0 %v5928
    %6102 = vmatpush.bf16.msra.mxu0 %v5927
    %6103 = vmatmul.bf16.gmra.mxu0 %v5968
    %v6104 = vpop.f32.mrf.mxu0
    %v6105 = vadd.f32 %v6076, %v6104
    %v6106 = vpop.f32.mrf.mxu0
    %v6107 = vadd.f32 %v6078, %v6106
    %6108 = vmatmul.bf16.gmra.mxu0 %v5971
    %v6109 = vpop.f32.mrf.mxu0
    %v6110 = vadd.f32 %v6081, %v6109
    %v6111 = vpop.f32.mrf.mxu0
    %v6112 = vadd.f32 %v6083, %v6111
    %6113 = vmatmul.bf16.gmra.mxu0 %v5974
    %v6114 = vpop.f32.mrf.mxu0
    %v6115 = vadd.f32 %v6086, %v6114
    %v6116 = vpop.f32.mrf.mxu0
    %v6117 = vadd.f32 %v6088, %v6116
    %6118 = vmatmul.bf16.gmra.mxu0 %v5977
    %v6119 = vpop.f32.mrf.mxu0
    %v6120 = vadd.f32 %v6091, %v6119
    %v6121 = vpop.f32.mrf.mxu0
    %v6122 = vadd.f32 %v6093, %v6121
    %6123 = vdwg.mxu0
    %v6132 = vrot.slane %v6105, 2
    %v6133 = vrot.slane %v6105, 4
    %v6134 = vrot.slane %v6105, 6
    %v6135 = vrot.slane %v6107, 2
    %v6136 = vrot.slane %v6107, 4
    %v6137 = vrot.slane %v6107, 6
    %v6138 = vrot.slane %v6110, 2
    %v6139 = vrot.slane %v6110, 4
    %v6140 = vrot.slane %v6110, 6
    %v6141 = vrot.slane %v6112, 2
    %v6142 = vrot.slane %v6112, 4
    %v6143 = vrot.slane %v6112, 6
    %v6144 = vrot.slane %v6115, 2
    %v6145 = vrot.slane %v6115, 4
    %v6146 = vrot.slane %v6115, 6
    %v6147 = vrot.slane %v6117, 2
    %v6148 = vrot.slane %v6117, 4
    %v6149 = vrot.slane %v6117, 6
    %v6150 = vrot.slane %v6120, 2
    %v6151 = vrot.slane %v6120, 4
    %v6152 = vrot.slane %v6120, 6
    %v6153 = vrot.slane %v6122, 2
    %v6154 = vrot.slane %v6122, 4
    %v6155 = vrot.slane %v6122, 6
    %v6156 = vperm.slane %v6105, 0
    %v6157 = vperm.slane %v6132, 0
    %v6158 = vperm.slane %v6133, 0
    %v6159 = vperm.slane %v6134, 0
    %v6160 = vperm.slane %v6107, 0
    %v6161 = vperm.slane %v6135, 0
    %v6162 = vperm.slane %v6136, 0
    %v6163 = vperm.slane %v6137, 0
    %v6164 = vperm.slane %v6110, 0
    %v6165 = vperm.slane %v6138, 0
    %v6166 = vperm.slane %v6139, 0
    %v6167 = vperm.slane %v6140, 0
    %v6168 = vperm.slane %v6112, 0
    %v6169 = vperm.slane %v6141, 0
    %v6170 = vperm.slane %v6142, 0
    %v6171 = vperm.slane %v6143, 0
    %v6172 = vperm.slane %v6115, 0
    %v6173 = vperm.slane %v6144, 0
    %v6174 = vperm.slane %v6145, 0
    %v6175 = vperm.slane %v6146, 0
    %v6176 = vperm.slane %v6117, 0
    %v6177 = vperm.slane %v6147, 0
    %v6178 = vperm.slane %v6148, 0
    %v6179 = vperm.slane %v6149, 0
    %v6180 = vperm.slane %v6120, 0
    %v6181 = vperm.slane %v6150, 0
    %v6182 = vperm.slane %v6151, 0
    %v6183 = vperm.slane %v6152, 0
    %v6184 = vperm.slane %v6122, 0
    %v6185 = vperm.slane %v6153, 0
    %v6186 = vperm.slane %v6154, 0
    %v6187 = vperm.slane %v6155, 0
    %v6188 = vsel %vm4966, %v6157, %v6156
    %v6189 = vsel %vm4968, %v6158, %v6188
    %v6190 = vsel %vm4970, %v6159, %v6189
    %v6191 = vsel %vm4966, %v6161, %v6160
    %v6192 = vsel %vm4968, %v6162, %v6191
    %v6193 = vsel %vm4970, %v6163, %v6192
    %v6194 = vsel %vm4966, %v6165, %v6164
    %v6195 = vsel %vm4968, %v6166, %v6194
    %v6196 = vsel %vm4970, %v6167, %v6195
    %v6197 = vsel %vm4966, %v6169, %v6168
    %v6198 = vsel %vm4968, %v6170, %v6197
    %v6199 = vsel %vm4970, %v6171, %v6198
    %v6200 = vsel %vm4966, %v6173, %v6172
    %v6201 = vsel %vm4968, %v6174, %v6200
    %v6202 = vsel %vm4970, %v6175, %v6201
    %v6203 = vsel %vm4966, %v6177, %v6176
    %v6204 = vsel %vm4968, %v6178, %v6203
    %v6205 = vsel %vm4970, %v6179, %v6204
    %v6206 = vsel %vm4966, %v6181, %v6180
    %v6207 = vsel %vm4968, %v6182, %v6206
    %v6208 = vsel %vm4970, %v6183, %v6207
    %v6209 = vsel %vm4966, %v6185, %v6184
    %v6210 = vsel %vm4968, %v6186, %v6209
    %v6211 = vsel %vm4970, %v6187, %v6210
    %6220 = vst [vmem:[#allocation4] sm:$0xf] %v6190
    %6221 = vst [vmem:[#allocation4 + $0x4] sm:$0xf] %v6193
    %6222 = vst [vmem:[#allocation4 + $0x8] sm:$0xf] %v6196
    %6223 = vst [vmem:[#allocation4 + $0xc] sm:$0xf] %v6199
    %6224 = vst [vmem:[#allocation4 + $0x10] sm:$0xf] %v6202
    %6225 = vst [vmem:[#allocation4 + $0x14] sm:$0xf] %v6205
    %6226 = vst [vmem:[#allocation4 + $0x18] sm:$0xf] %v6208
    %6227 = vst [vmem:[#allocation4 + $0x1c] sm:$0xf] %v6211
    %v6228 = vld [vmem:[#allocation4] sm:$0xf]
    %v6229 = vld [vmem:[#allocation4 + $0x4] sm:$0xf]
    %v6230 = vld [vmem:[#allocation4 + $0x8] sm:$0xf]
    %v6231 = vld [vmem:[#allocation4 + $0xc] sm:$0xf]
    %v6232 = vld [vmem:[#allocation4 + $0x10] sm:$0xf]
    %v6233 = vld [vmem:[#allocation4 + $0x14] sm:$0xf]
    %v6234 = vld [vmem:[#allocation4 + $0x18] sm:$0xf]
    %v6235 = vld [vmem:[#allocation4 + $0x1c] sm:$0xf]
    %v6236 = vpack.c.bf16 %v6228, %v6228
    %v6237 = vpack.c.bf16 %v6229, %v6229
    %v6238 = vpack.c.bf16 %v6230, %v6230
    %v6239 = vpack.c.bf16 %v6231, %v6231
    %v6240 = vpack.c.bf16 %v6232, %v6232
    %v6241 = vpack.c.bf16 %v6233, %v6233
    %v6242 = vpack.c.bf16 %v6234, %v6234
    %v6243 = vpack.c.bf16 %v6235, %v6235
    %v6245 = vshrl.u32 %v6236, 16
    %v6247 = vrot.slane %v6245, 7
    %v6248 = vshll.u32 %v6236, 16
    %v6250 = vor.u32 %v6247, %v6248
    %v6252 = vshrl.u32 %v6237, 16
    %v6254 = vrot.slane %v6252, 7
    %v6255 = vshll.u32 %v6237, 16
    %v6257 = vor.u32 %v6254, %v6255
    %v6259 = vshrl.u32 %v6238, 16
    %v6261 = vrot.slane %v6259, 7
    %v6262 = vshll.u32 %v6238, 16
    %v6264 = vor.u32 %v6261, %v6262
    %v6266 = vshrl.u32 %v6239, 16
    %v6268 = vrot.slane %v6266, 7
    %v6269 = vshll.u32 %v6239, 16
    %v6271 = vor.u32 %v6268, %v6269
    %v6273 = vshrl.u32 %v6240, 16
    %v6275 = vrot.slane %v6273, 7
    %v6276 = vshll.u32 %v6240, 16
    %v6278 = vor.u32 %v6275, %v6276
    %v6280 = vshrl.u32 %v6241, 16
    %v6282 = vrot.slane %v6280, 7
    %v6283 = vshll.u32 %v6241, 16
    %v6285 = vor.u32 %v6282, %v6283
    %v6287 = vshrl.u32 %v6242, 16
    %v6289 = vrot.slane %v6287, 7
    %v6290 = vshll.u32 %v6242, 16
    %v6292 = vor.u32 %v6289, %v6290
    %v6294 = vshrl.u32 %v6243, 16
    %v6296 = vrot.slane %v6294, 7
    %v6297 = vshll.u32 %v6243, 16
    %v6299 = vor.u32 %v6296, %v6297
    %v6308 = vsel %vm667, 0, %v6250
    %v6309 = vsel %vm667, 0, %v6257
    %v6310 = vsel %vm667, 0, %v6264
    %v6311 = vsel %vm667, 0, %v6271
    %v6312 = vsel %vm667, 0, %v6278
    %v6313 = vsel %vm667, 0, %v6285
    %v6314 = vsel %vm667, 0, %v6292
    %v6315 = vsel %vm667, 0, %v6299
    %vm6316 = vcmask 1042432
    %vm6317 = vsmask.f32 2304
    %vm6318 = vmand %vm6316, %vm6317
    %v6319 = vsel %vm6318, %v668, 0
    %v6320 = vsel %vm6318, %v6308, 0
    %v6321 = vsel %vm6318, %v6309, 0
    %v6322 = vsel %vm6318, %v6310, 0
    %v6323 = vsel %vm6318, %v6311, 0
    %v6324 = vsel %vm6318, %v6312, 0
    %v6325 = vsel %vm6318, %v6313, 0
    %v6326 = vsel %vm6318, %v6314, 0
    %v6327 = vsel %vm6318, %v6315, 0
    %v6329 = vshrl.u32 %v6319, 16
    %v6331 = vshll.u32 %v6319, 16
    %v6333 = vrot.slane %v6331, 1
    %v6334 = vor.u32 %v6329, %v6333
    %v6336 = vshrl.u32 %v6321, 16
    %v6338 = vshll.u32 %v6321, 16
    %v6340 = vrot.slane %v6338, 1
    %v6341 = vor.u32 %v6336, %v6340
    %v6343 = vshrl.u32 %v6325, 16
    %v6345 = vshll.u32 %v6325, 16
    %v6347 = vrot.slane %v6345, 1
    %v6348 = vor.u32 %v6343, %v6347
    %v6352 = vrot.slane %v6319, 1
    %v6353 = vrot.slane %v6321, 1
    %v6354 = vrot.slane %v6325, 1
    %v6356 = vshrl.u32 %v6320, 16
    %v6358 = vshll.u32 %v6320, 16
    %v6360 = vrot.slane %v6358, 1
    %v6361 = vor.u32 %v6356, %v6360
    %v6363 = vshrl.u32 %v6322, 16
    %v6365 = vshll.u32 %v6322, 16
    %v6367 = vrot.slane %v6365, 1
    %v6368 = vor.u32 %v6363, %v6367
    %v6370 = vshrl.u32 %v6324, 16
    %v6372 = vshll.u32 %v6324, 16
    %v6374 = vrot.slane %v6372, 1
    %v6375 = vor.u32 %v6370, %v6374
    %v6377 = vshrl.u32 %v6326, 16
    %v6379 = vshll.u32 %v6326, 16
    %v6381 = vrot.slane %v6379, 1
    %v6382 = vor.u32 %v6377, %v6381
    %v6387 = vrot.slane %v6320, 1
    %v6388 = vrot.slane %v6322, 1
    %v6389 = vrot.slane %v6324, 1
    %v6390 = vrot.slane %v6326, 1
    %v6392 = vshrl.u32 %v6323, 16
    %v6394 = vshll.u32 %v6323, 16
    %v6396 = vrot.slane %v6394, 1
    %v6397 = vor.u32 %v6392, %v6396
    %v6399 = vshrl.u32 %v6327, 16
    %v6401 = vshll.u32 %v6327, 16
    %v6403 = vrot.slane %v6401, 1
    %v6404 = vor.u32 %v6399, %v6403
    %v6407 = vrot.slane %v6323, 1
    %v6408 = vrot.slane %v6327, 1
    %v6409 = vunpack.c.l.b16 %v6319
    %v6410 = vunpack.c.l.b16 %v6334
    %v6411 = vunpack.c.l.b16 %v6352
    %v6412 = vunpack.c.l.b16 %v6320
    %v6413 = vunpack.c.l.b16 %v6361
    %v6414 = vunpack.c.l.b16 %v6387
    %v6415 = vunpack.c.l.b16 %v6321
    %v6416 = vunpack.c.l.b16 %v6341
    %v6417 = vunpack.c.l.b16 %v6353
    %v6418 = vunpack.c.l.b16 %v6322
    %v6419 = vunpack.c.l.b16 %v6368
    %v6420 = vunpack.c.l.b16 %v6388
    %v6421 = vunpack.c.l.b16 %v6323
    %v6422 = vunpack.c.l.b16 %v6397
    %v6423 = vunpack.c.l.b16 %v6407
    %v6424 = vunpack.c.l.b16 %v6324
    %v6425 = vunpack.c.l.b16 %v6375
    %v6426 = vunpack.c.l.b16 %v6389
    %v6427 = vunpack.c.l.b16 %v6325
    %v6428 = vunpack.c.l.b16 %v6348
    %v6429 = vunpack.c.l.b16 %v6354
    %v6430 = vunpack.c.l.b16 %v6326
    %v6431 = vunpack.c.l.b16 %v6382
    %v6432 = vunpack.c.l.b16 %v6390
    %v6433 = vunpack.c.l.b16 %v6327
    %v6434 = vunpack.c.l.b16 %v6404
    %v6435 = vunpack.c.l.b16 %v6408
    %v6436 = vld [vmem:[%s7] sm:$0xff]
    %v6437 = vld [vmem:[%s7 + $0x8] sm:$0xff]
    %v6438 = vld [vmem:[%s7 + $0x10] sm:$0xff]
    %v6439 = vld [vmem:[%s7 + $0x18] sm:$0xff]
    %v6440 = vld [vmem:[%s7 + $0x20] sm:$0xff]
    %v6441 = vld [vmem:[%s7 + $0x28] sm:$0xff]
    %v6442 = vld [vmem:[%s7 + $0x30] sm:$0xff]
    %v6443 = vld [vmem:[%s7 + $0x38] sm:$0xff]
    %v6444 = vld [vmem:[%s7 + $0x40] sm:$0xff]
    %v6445 = vld [vmem:[%s7 + $0x48] sm:$0xff]
    %v6446 = vld [vmem:[%s7 + $0x50] sm:$0xff]
    %v6447 = vld [vmem:[%s7 + $0x58] sm:$0xff]
    %v6448 = vld [vmem:[%s7 + $0x60] sm:$0xff]
    %v6449 = vld [vmem:[%s7 + $0x68] sm:$0xff]
    %v6450 = vld [vmem:[%s7 + $0x70] sm:$0xff]
    %v6451 = vld [vmem:[%s7 + $0x78] sm:$0xff]
    %v6452 = vld [vmem:[%s7 + $0x80] sm:$0xff]
    %v6453 = vld [vmem:[%s7 + $0x88] sm:$0xff]
    %v6454 = vld [vmem:[%s7 + $0x90] sm:$0xff]
    %v6455 = vld [vmem:[%s7 + $0x98] sm:$0xff]
    %v6456 = vld [vmem:[%s7 + $0xa0] sm:$0xff]
    %v6457 = vld [vmem:[%s7 + $0xa8] sm:$0xff]
    %v6458 = vld [vmem:[%s7 + $0xb0] sm:$0xff]
    %v6459 = vld [vmem:[%s7 + $0xb8] sm:$0xff]
    %v6460 = vld [vmem:[%s7 + $0xc0] sm:$0xff]
    %v6461 = vld [vmem:[%s7 + $0xc8] sm:$0xff]
    %v6462 = vld [vmem:[%s7 + $0xd0] sm:$0xff]
    %v6463 = vld [vmem:[%s7 + $0xd8] sm:$0xff]
    %v6464 = vld [vmem:[%s7 + $0xe0] sm:$0xff]
    %v6465 = vld [vmem:[%s7 + $0xe8] sm:$0xff]
    %v6466 = vld [vmem:[%s7 + $0xf0] sm:$0xff]
    %v6467 = vld [vmem:[%s7 + $0xf8] sm:$0xff]
    %v6468 = vld [vmem:[%s7 + $0x100] sm:$0xff]
    %v6469 = vld [vmem:[%s7 + $0x108] sm:$0xff]
    %v6470 = vld [vmem:[%s7 + $0x110] sm:$0xff]
    %v6471 = vld [vmem:[%s7 + $0x118] sm:$0xff]
    %v6472 = vld [vmem:[%s7 + $0x120] sm:$0xff]
    %v6473 = vld [vmem:[%s7 + $0x128] sm:$0xff]
    %v6474 = vld [vmem:[%s7 + $0x130] sm:$0xff]
    %v6475 = vld [vmem:[%s7 + $0x138] sm:$0xff]
    %v6476 = vld [vmem:[%s7 + $0x140] sm:$0xff]
    %v6477 = vld [vmem:[%s7 + $0x148] sm:$0xff]
    %v6478 = vld [vmem:[%s7 + $0x150] sm:$0xff]
    %v6479 = vld [vmem:[%s7 + $0x158] sm:$0xff]
    %v6480 = vld [vmem:[%s7 + $0x160] sm:$0xff]
    %v6481 = vld [vmem:[%s7 + $0x168] sm:$0xff]
    %v6482 = vld [vmem:[%s7 + $0x170] sm:$0xff]
    %v6483 = vld [vmem:[%s7 + $0x178] sm:$0xff]
    %v6484 = vld [vmem:[%s7 + $0x180] sm:$0xff]
    %v6485 = vld [vmem:[%s7 + $0x188] sm:$0xff]
    %v6486 = vld [vmem:[%s7 + $0x190] sm:$0xff]
    %v6487 = vld [vmem:[%s7 + $0x198] sm:$0xff]
    %v6488 = vld [vmem:[%s7 + $0x1a0] sm:$0xff]
    %v6489 = vld [vmem:[%s7 + $0x1a8] sm:$0xff]
    %v6490 = vld [vmem:[%s7 + $0x1b0] sm:$0xff]
    %v6491 = vld [vmem:[%s7 + $0x1b8] sm:$0xff]
    %v6492 = vld [vmem:[%s7 + $0x1c0] sm:$0xff]
    %v6493 = vld [vmem:[%s7 + $0x1c8] sm:$0xff]
    %v6494 = vld [vmem:[%s7 + $0x1d0] sm:$0xff]
    %v6495 = vld [vmem:[%s7 + $0x1d8] sm:$0xff]
    %v6496 = vld [vmem:[%s7 + $0x1e0] sm:$0xff]
    %v6497 = vld [vmem:[%s7 + $0x1e8] sm:$0xff]
    %v6498 = vld [vmem:[%s7 + $0x1f0] sm:$0xff]
    %v6499 = vld [vmem:[%s7 + $0x1f8] sm:$0xff]
    %v6500 = vld [vmem:[%s7 + $0x200] sm:$0xff]
    %v6501 = vld [vmem:[%s7 + $0x208] sm:$0xff]
    %v6502 = vld [vmem:[%s7 + $0x210] sm:$0xff]
    %v6503 = vld [vmem:[%s7 + $0x218] sm:$0xff]
    %v6504 = vld [vmem:[%s7 + $0x220] sm:$0xff]
    %v6505 = vld [vmem:[%s7 + $0x228] sm:$0xff]
    %v6506 = vld [vmem:[%s7 + $0x230] sm:$0xff]
    %v6507 = vld [vmem:[%s7 + $0x238] sm:$0xff]
    %v6508 = vld [vmem:[%s7 + $0x240] sm:$0xff]
    %v6509 = vld [vmem:[%s7 + $0x248] sm:$0xff]
    %v6510 = vld [vmem:[%s7 + $0x250] sm:$0xff]
    %v6511 = vld [vmem:[%s7 + $0x258] sm:$0xff]
    %v6512 = vld [vmem:[%s7 + $0x260] sm:$0xff]
    %v6513 = vld [vmem:[%s7 + $0x268] sm:$0xff]
    %v6514 = vld [vmem:[%s7 + $0x270] sm:$0xff]
    %v6515 = vld [vmem:[%s7 + $0x278] sm:$0xff]
    %v6516 = vld [vmem:[%s7 + $0x280] sm:$0xff]
    %v6517 = vld [vmem:[%s7 + $0x288] sm:$0xff]
    %v6518 = vld [vmem:[%s7 + $0x290] sm:$0xff]
    %v6519 = vld [vmem:[%s7 + $0x298] sm:$0xff]
    %v6520 = vld [vmem:[%s7 + $0x2a0] sm:$0xff]
    %v6521 = vld [vmem:[%s7 + $0x2a8] sm:$0xff]
    %v6522 = vld [vmem:[%s7 + $0x2b0] sm:$0xff]
    %v6523 = vld [vmem:[%s7 + $0x2b8] sm:$0xff]
    %v6524 = vld [vmem:[%s7 + $0x2c0] sm:$0xff]
    %v6525 = vld [vmem:[%s7 + $0x2c8] sm:$0xff]
    %v6526 = vld [vmem:[%s7 + $0x2d0] sm:$0xff]
    %v6527 = vld [vmem:[%s7 + $0x2d8] sm:$0xff]
    %v6528 = vld [vmem:[%s7 + $0x2e0] sm:$0xff]
    %v6529 = vld [vmem:[%s7 + $0x2e8] sm:$0xff]
    %v6530 = vld [vmem:[%s7 + $0x2f0] sm:$0xff]
    %v6531 = vld [vmem:[%s7 + $0x2f8] sm:$0xff]
    %v6532 = vld [vmem:[%s7 + $0x300] sm:$0xff]
    %v6533 = vld [vmem:[%s7 + $0x308] sm:$0xff]
    %v6534 = vld [vmem:[%s7 + $0x310] sm:$0xff]
    %v6535 = vld [vmem:[%s7 + $0x318] sm:$0xff]
    %v6536 = vld [vmem:[%s7 + $0x320] sm:$0xff]
    %v6537 = vld [vmem:[%s7 + $0x328] sm:$0xff]
    %v6538 = vld [vmem:[%s7 + $0x330] sm:$0xff]
    %v6539 = vld [vmem:[%s7 + $0x338] sm:$0xff]
    %v6540 = vld [vmem:[%s7 + $0x340] sm:$0xff]
    %v6541 = vld [vmem:[%s7 + $0x348] sm:$0xff]
    %v6542 = vld [vmem:[%s7 + $0x350] sm:$0xff]
    %v6543 = vld [vmem:[%s7 + $0x358] sm:$0xff]
    %v6544 = vld [vmem:[%s7 + $0x360] sm:$0xff]
    %v6545 = vld [vmem:[%s7 + $0x368] sm:$0xff]
    %v6546 = vld [vmem:[%s7 + $0x370] sm:$0xff]
    %v6547 = vld [vmem:[%s7 + $0x378] sm:$0xff]
    %v6548 = vld [vmem:[%s7 + $0x380] sm:$0xff]
    %v6549 = vld [vmem:[%s7 + $0x388] sm:$0xff]
    %v6550 = vld [vmem:[%s7 + $0x390] sm:$0xff]
    %v6551 = vld [vmem:[%s7 + $0x398] sm:$0xff]
    %v6552 = vld [vmem:[%s7 + $0x3a0] sm:$0xff]
    %v6553 = vld [vmem:[%s7 + $0x3a8] sm:$0xff]
    %v6554 = vld [vmem:[%s7 + $0x3b0] sm:$0xff]
    %v6555 = vld [vmem:[%s7 + $0x3b8] sm:$0xff]
    %v6556 = vld [vmem:[%s7 + $0x3c0] sm:$0xff]
    %v6557 = vld [vmem:[%s7 + $0x3c8] sm:$0xff]
    %v6558 = vld [vmem:[%s7 + $0x3d0] sm:$0xff]
    %v6559 = vld [vmem:[%s7 + $0x3d8] sm:$0xff]
    %v6560 = vld [vmem:[%s7 + $0x3e0] sm:$0xff]
    %v6561 = vld [vmem:[%s7 + $0x3e8] sm:$0xff]
    %v6562 = vld [vmem:[%s7 + $0x3f0] sm:$0xff]
    %v6563 = vld [vmem:[%s7 + $0x3f8] sm:$0xff]
    %v6564 = vld [vmem:[%s7 + $0x400] sm:$0xff]
    %v6565 = vld [vmem:[%s7 + $0x408] sm:$0xff]
    %v6566 = vld [vmem:[%s7 + $0x410] sm:$0xff]
    %v6567 = vld [vmem:[%s7 + $0x418] sm:$0xff]
    %v6568 = vld [vmem:[%s7 + $0x420] sm:$0xff]
    %v6569 = vld [vmem:[%s7 + $0x428] sm:$0xff]
    %v6570 = vld [vmem:[%s7 + $0x430] sm:$0xff]
    %v6571 = vld [vmem:[%s7 + $0x438] sm:$0xff]
    %v6572 = vld [vmem:[%s7 + $0x440] sm:$0xff]
    %v6573 = vld [vmem:[%s7 + $0x448] sm:$0xff]
    %v6574 = vld [vmem:[%s7 + $0x450] sm:$0xff]
    %v6575 = vld [vmem:[%s7 + $0x458] sm:$0xff]
    %v6576 = vld [vmem:[%s7 + $0x460] sm:$0xff]
    %v6577 = vld [vmem:[%s7 + $0x468] sm:$0xff]
    %v6578 = vld [vmem:[%s7 + $0x470] sm:$0xff]
    %v6579 = vld [vmem:[%s7 + $0x478] sm:$0xff]
    %v6580 = vld [vmem:[%s8] sm:$0x3]
    %v6582 = vperm.slane %v6580, 0
    %v6583 = vperm.slane %v6580, 1
    %v6586 = vpack.c.b16 %v6415, %v6409
    %v6587 = vpack.c.b16 %v6416, %v6410
    %v6588 = vpack.c.b16 %v6417, %v6411
    %v6589 = vpack.c.b16 %v6418, %v6412
    %v6590 = vpack.c.b16 %v6419, %v6413
    %v6591 = vpack.c.b16 %v6420, %v6414
    %v6592 = vpack.c.b16 %v6421, %v6415
    %v6593 = vpack.c.b16 %v6422, %v6416
    %v6594 = vpack.c.b16 %v6423, %v6417
    %v6595 = vpack.c.b16 %v6427, %v6409
    %v6596 = vpack.c.b16 %v6428, %v6410
    %v6597 = vpack.c.b16 %v6429, %v6411
    %v6598 = vpack.c.b16 %v6430, %v6424
    %v6599 = vpack.c.b16 %v6431, %v6425
    %v6600 = vpack.c.b16 %v6432, %v6426
    %v6601 = vpack.c.b16 %v6433, %v6427
    %v6602 = vpack.c.b16 %v6434, %v6428
    %v6603 = vpack.c.b16 %v6435, %v6429
    %v6766 = vunpack.c.l.b16 %v6436
    %v6767 = vunpack.c.h.b16 %v6436
    %v6768 = vunpack.c.l.b16 %v6437
    %v6769 = vunpack.c.h.b16 %v6437
    %v6770 = vunpack.c.l.b16 %v6438
    %v6771 = vunpack.c.h.b16 %v6438
    %v6772 = vunpack.c.l.b16 %v6439
    %v6773 = vunpack.c.h.b16 %v6439
    %v6774 = vunpack.c.l.b16 %v6440
    %v6775 = vunpack.c.h.b16 %v6440
    %v6776 = vunpack.c.l.b16 %v6441
    %v6777 = vunpack.c.h.b16 %v6441
    %v6778 = vunpack.c.l.b16 %v6442
    %v6779 = vunpack.c.h.b16 %v6442
    %v6780 = vunpack.c.l.b16 %v6443
    %v6781 = vunpack.c.h.b16 %v6443
    %v6782 = vunpack.c.l.b16 %v6444
    %v6783 = vunpack.c.h.b16 %v6444
    %v6784 = vunpack.c.l.b16 %v6445
    %v6785 = vunpack.c.h.b16 %v6445
    %v6786 = vunpack.c.l.b16 %v6446
    %v6787 = vunpack.c.h.b16 %v6446
    %v6788 = vunpack.c.l.b16 %v6447
    %v6789 = vunpack.c.h.b16 %v6447
    %v6790 = vunpack.c.l.b16 %v6448
    %v6791 = vunpack.c.h.b16 %v6448
    %v6792 = vunpack.c.l.b16 %v6449
    %v6793 = vunpack.c.h.b16 %v6449
    %v6794 = vunpack.c.l.b16 %v6450
    %v6795 = vunpack.c.h.b16 %v6450
    %v6796 = vunpack.c.l.b16 %v6451
    %v6797 = vunpack.c.h.b16 %v6451
    %v6798 = vunpack.c.l.b16 %v6452
    %v6799 = vunpack.c.h.b16 %v6452
    %v6800 = vunpack.c.l.b16 %v6453
    %v6801 = vunpack.c.h.b16 %v6453
    %v6802 = vunpack.c.l.b16 %v6454
    %v6803 = vunpack.c.h.b16 %v6454
    %v6804 = vunpack.c.l.b16 %v6455
    %v6805 = vunpack.c.h.b16 %v6455
    %v6806 = vunpack.c.l.b16 %v6456
    %v6807 = vunpack.c.h.b16 %v6456
    %v6808 = vunpack.c.l.b16 %v6457
    %v6809 = vunpack.c.h.b16 %v6457
    %v6810 = vunpack.c.l.b16 %v6458
    %v6811 = vunpack.c.h.b16 %v6458
    %v6812 = vunpack.c.l.b16 %v6459
    %v6813 = vunpack.c.h.b16 %v6459
    %v6814 = vunpack.c.l.b16 %v6460
    %v6815 = vunpack.c.h.b16 %v6460
    %v6816 = vunpack.c.l.b16 %v6461
    %v6817 = vunpack.c.h.b16 %v6461
    %v6818 = vunpack.c.l.b16 %v6462
    %v6819 = vunpack.c.h.b16 %v6462
    %v6820 = vunpack.c.l.b16 %v6463
    %v6821 = vunpack.c.h.b16 %v6463
    %v6822 = vunpack.c.l.b16 %v6464
    %v6823 = vunpack.c.h.b16 %v6464
    %v6824 = vunpack.c.l.b16 %v6465
    %v6825 = vunpack.c.h.b16 %v6465
    %v6826 = vunpack.c.l.b16 %v6466
    %v6827 = vunpack.c.h.b16 %v6466
    %v6828 = vunpack.c.l.b16 %v6467
    %v6829 = vunpack.c.h.b16 %v6467
    %v6830 = vunpack.c.l.b16 %v6468
    %v6831 = vunpack.c.h.b16 %v6468
    %v6832 = vunpack.c.l.b16 %v6469
    %v6833 = vunpack.c.h.b16 %v6469
    %v6834 = vunpack.c.l.b16 %v6470
    %v6835 = vunpack.c.h.b16 %v6470
    %v6836 = vunpack.c.l.b16 %v6471
    %v6837 = vunpack.c.h.b16 %v6471
    %v6838 = vunpack.c.l.b16 %v6472
    %v6839 = vunpack.c.h.b16 %v6472
    %v6840 = vunpack.c.l.b16 %v6473
    %v6841 = vunpack.c.h.b16 %v6473
    %v6842 = vunpack.c.l.b16 %v6474
    %v6843 = vunpack.c.h.b16 %v6474
    %v6844 = vunpack.c.l.b16 %v6475
    %v6845 = vunpack.c.h.b16 %v6475
    %v6846 = vunpack.c.l.b16 %v6476
    %v6847 = vunpack.c.h.b16 %v6476
    %v6848 = vunpack.c.l.b16 %v6477
    %v6849 = vunpack.c.h.b16 %v6477
    %v6850 = vunpack.c.l.b16 %v6478
    %v6851 = vunpack.c.h.b16 %v6478
    %v6852 = vunpack.c.l.b16 %v6479
    %v6853 = vunpack.c.h.b16 %v6479
    %v6854 = vunpack.c.l.b16 %v6480
    %v6855 = vunpack.c.h.b16 %v6480
    %v6856 = vunpack.c.l.b16 %v6481
    %v6857 = vunpack.c.h.b16 %v6481
    %v6858 = vunpack.c.l.b16 %v6482
    %v6859 = vunpack.c.h.b16 %v6482
    %v6860 = vunpack.c.l.b16 %v6483
    %v6861 = vunpack.c.h.b16 %v6483
    %v6862 = vunpack.c.l.b16 %v6484
    %v6863 = vunpack.c.h.b16 %v6484
    %v6864 = vunpack.c.l.b16 %v6485
    %v6865 = vunpack.c.h.b16 %v6485
    %v6866 = vunpack.c.l.b16 %v6486
    %v6867 = vunpack.c.h.b16 %v6486
    %v6868 = vunpack.c.l.b16 %v6487
    %v6869 = vunpack.c.h.b16 %v6487
    %v6870 = vunpack.c.l.b16 %v6488
    %v6871 = vunpack.c.h.b16 %v6488
    %v6872 = vunpack.c.l.b16 %v6489
    %v6873 = vunpack.c.h.b16 %v6489
    %v6874 = vunpack.c.l.b16 %v6490
    %v6875 = vunpack.c.h.b16 %v6490
    %v6876 = vunpack.c.l.b16 %v6491
    %v6877 = vunpack.c.h.b16 %v6491
    %v6878 = vunpack.c.l.b16 %v6492
    %v6879 = vunpack.c.h.b16 %v6492
    %v6880 = vunpack.c.l.b16 %v6493
    %v6881 = vunpack.c.h.b16 %v6493
    %v6882 = vunpack.c.l.b16 %v6494
    %v6883 = vunpack.c.h.b16 %v6494
    %v6884 = vunpack.c.l.b16 %v6495
    %v6885 = vunpack.c.h.b16 %v6495
    %v6886 = vunpack.c.l.b16 %v6496
    %v6887 = vunpack.c.h.b16 %v6496
    %v6888 = vunpack.c.l.b16 %v6497
    %v6889 = vunpack.c.h.b16 %v6497
    %v6890 = vunpack.c.l.b16 %v6498
    %v6891 = vunpack.c.h.b16 %v6498
    %v6892 = vunpack.c.l.b16 %v6499
    %v6893 = vunpack.c.h.b16 %v6499
    %v6894 = vunpack.c.l.b16 %v6500
    %v6895 = vunpack.c.h.b16 %v6500
    %v6896 = vunpack.c.l.b16 %v6501
    %v6897 = vunpack.c.h.b16 %v6501
    %v6898 = vunpack.c.l.b16 %v6502
    %v6899 = vunpack.c.h.b16 %v6502
    %v6900 = vunpack.c.l.b16 %v6503
    %v6901 = vunpack.c.h.b16 %v6503
    %v6902 = vunpack.c.l.b16 %v6504
    %v6903 = vunpack.c.h.b16 %v6504
    %v6904 = vunpack.c.l.b16 %v6505
    %v6905 = vunpack.c.h.b16 %v6505
    %v6906 = vunpack.c.l.b16 %v6506
    %v6907 = vunpack.c.h.b16 %v6506
    %v6908 = vunpack.c.l.b16 %v6507
    %v6909 = vunpack.c.h.b16 %v6507
    %v6910 = vunpack.c.l.b16 %v6508
    %v6911 = vunpack.c.h.b16 %v6508
    %v6912 = vunpack.c.l.b16 %v6509
    %v6913 = vunpack.c.h.b16 %v6509
    %v6914 = vunpack.c.l.b16 %v6510
    %v6915 = vunpack.c.h.b16 %v6510
    %v6916 = vunpack.c.l.b16 %v6511
    %v6917 = vunpack.c.h.b16 %v6511
    %v6918 = vunpack.c.l.b16 %v6512
    %v6919 = vunpack.c.h.b16 %v6512
    %v6920 = vunpack.c.l.b16 %v6513
    %v6921 = vunpack.c.h.b16 %v6513
    %v6922 = vunpack.c.l.b16 %v6514
    %v6923 = vunpack.c.h.b16 %v6514
    %v6924 = vunpack.c.l.b16 %v6515
    %v6925 = vunpack.c.h.b16 %v6515
    %v6926 = vunpack.c.l.b16 %v6516
    %v6927 = vunpack.c.h.b16 %v6516
    %v6928 = vunpack.c.l.b16 %v6517
    %v6929 = vunpack.c.h.b16 %v6517
    %v6930 = vunpack.c.l.b16 %v6518
    %v6931 = vunpack.c.h.b16 %v6518
    %v6932 = vunpack.c.l.b16 %v6519
    %v6933 = vunpack.c.h.b16 %v6519
    %v6934 = vunpack.c.l.b16 %v6520
    %v6935 = vunpack.c.h.b16 %v6520
    %v6936 = vunpack.c.l.b16 %v6521
    %v6937 = vunpack.c.h.b16 %v6521
    %v6938 = vunpack.c.l.b16 %v6522
    %v6939 = vunpack.c.h.b16 %v6522
    %v6940 = vunpack.c.l.b16 %v6523
    %v6941 = vunpack.c.h.b16 %v6523
    %v6942 = vunpack.c.l.b16 %v6524
    %v6943 = vunpack.c.h.b16 %v6524
    %v6944 = vunpack.c.l.b16 %v6525
    %v6945 = vunpack.c.h.b16 %v6525
    %v6946 = vunpack.c.l.b16 %v6526
    %v6947 = vunpack.c.h.b16 %v6526
    %v6948 = vunpack.c.l.b16 %v6527
    %v6949 = vunpack.c.h.b16 %v6527
    %v6950 = vunpack.c.l.b16 %v6528
    %v6951 = vunpack.c.h.b16 %v6528
    %v6952 = vunpack.c.l.b16 %v6529
    %v6953 = vunpack.c.h.b16 %v6529
    %v6954 = vunpack.c.l.b16 %v6530
    %v6955 = vunpack.c.h.b16 %v6530
    %v6956 = vunpack.c.l.b16 %v6531
    %v6957 = vunpack.c.h.b16 %v6531
    %v6958 = vunpack.c.l.b16 %v6532
    %v6959 = vunpack.c.h.b16 %v6532
    %v6960 = vunpack.c.l.b16 %v6533
    %v6961 = vunpack.c.h.b16 %v6533
    %v6962 = vunpack.c.l.b16 %v6534
    %v6963 = vunpack.c.h.b16 %v6534
    %v6964 = vunpack.c.l.b16 %v6535
    %v6965 = vunpack.c.h.b16 %v6535
    %v6966 = vunpack.c.l.b16 %v6536
    %v6967 = vunpack.c.h.b16 %v6536
    %v6968 = vunpack.c.l.b16 %v6537
    %v6969 = vunpack.c.h.b16 %v6537
    %v6970 = vunpack.c.l.b16 %v6538
    %v6971 = vunpack.c.h.b16 %v6538
    %v6972 = vunpack.c.l.b16 %v6539
    %v6973 = vunpack.c.h.b16 %v6539
    %v6974 = vunpack.c.l.b16 %v6540
    %v6975 = vunpack.c.h.b16 %v6540
    %v6976 = vunpack.c.l.b16 %v6541
    %v6977 = vunpack.c.h.b16 %v6541
    %v6978 = vunpack.c.l.b16 %v6542
    %v6979 = vunpack.c.h.b16 %v6542
    %v6980 = vunpack.c.l.b16 %v6543
    %v6981 = vunpack.c.h.b16 %v6543
    %v6982 = vunpack.c.l.b16 %v6544
    %v6983 = vunpack.c.h.b16 %v6544
    %v6984 = vunpack.c.l.b16 %v6545
    %v6985 = vunpack.c.h.b16 %v6545
    %v6986 = vunpack.c.l.b16 %v6546
    %v6987 = vunpack.c.h.b16 %v6546
    %v6988 = vunpack.c.l.b16 %v6547
    %v6989 = vunpack.c.h.b16 %v6547
    %v6990 = vunpack.c.l.b16 %v6548
    %v6991 = vunpack.c.h.b16 %v6548
    %v6992 = vunpack.c.l.b16 %v6549
    %v6993 = vunpack.c.h.b16 %v6549
    %v6994 = vunpack.c.l.b16 %v6550
    %v6995 = vunpack.c.h.b16 %v6550
    %v6996 = vunpack.c.l.b16 %v6551
    %v6997 = vunpack.c.h.b16 %v6551
    %v6998 = vunpack.c.l.b16 %v6552
    %v6999 = vunpack.c.h.b16 %v6552
    %v7000 = vunpack.c.l.b16 %v6553
    %v7001 = vunpack.c.h.b16 %v6553
    %v7002 = vunpack.c.l.b16 %v6554
    %v7003 = vunpack.c.h.b16 %v6554
    %v7004 = vunpack.c.l.b16 %v6555
    %v7005 = vunpack.c.h.b16 %v6555
    %v7006 = vunpack.c.l.b16 %v6556
    %v7007 = vunpack.c.h.b16 %v6556
    %v7008 = vunpack.c.l.b16 %v6557
    %v7009 = vunpack.c.h.b16 %v6557
    %v7010 = vunpack.c.l.b16 %v6558
    %v7011 = vunpack.c.h.b16 %v6558
    %v7012 = vunpack.c.l.b16 %v6559
    %v7013 = vunpack.c.h.b16 %v6559
    %v7014 = vunpack.c.l.b16 %v6560
    %v7015 = vunpack.c.h.b16 %v6560
    %v7016 = vunpack.c.l.b16 %v6561
    %v7017 = vunpack.c.h.b16 %v6561
    %v7018 = vunpack.c.l.b16 %v6562
    %v7019 = vunpack.c.h.b16 %v6562
    %v7020 = vunpack.c.l.b16 %v6563
    %v7021 = vunpack.c.h.b16 %v6563
    %v7022 = vunpack.c.l.b16 %v6564
    %v7023 = vunpack.c.h.b16 %v6564
    %v7024 = vunpack.c.l.b16 %v6565
    %v7025 = vunpack.c.h.b16 %v6565
    %v7026 = vunpack.c.l.b16 %v6566
    %v7027 = vunpack.c.h.b16 %v6566
    %v7028 = vunpack.c.l.b16 %v6567
    %v7029 = vunpack.c.h.b16 %v6567
    %v7030 = vunpack.c.l.b16 %v6568
    %v7031 = vunpack.c.h.b16 %v6568
    %v7032 = vunpack.c.l.b16 %v6569
    %v7033 = vunpack.c.h.b16 %v6569
    %v7034 = vunpack.c.l.b16 %v6570
    %v7035 = vunpack.c.h.b16 %v6570
    %v7036 = vunpack.c.l.b16 %v6571
    %v7037 = vunpack.c.h.b16 %v6571
    %v7038 = vunpack.c.l.b16 %v6572
    %v7039 = vunpack.c.h.b16 %v6572
    %v7040 = vunpack.c.l.b16 %v6573
    %v7041 = vunpack.c.h.b16 %v6573
    %v7042 = vunpack.c.l.b16 %v6574
    %v7043 = vunpack.c.h.b16 %v6574
    %v7044 = vunpack.c.l.b16 %v6575
    %v7045 = vunpack.c.h.b16 %v6575
    %v7046 = vunpack.c.l.b16 %v6576
    %v7047 = vunpack.c.h.b16 %v6576
    %v7048 = vunpack.c.l.b16 %v6577
    %v7049 = vunpack.c.h.b16 %v6577
    %v7050 = vunpack.c.l.b16 %v6578
    %v7051 = vunpack.c.h.b16 %v6578
    %v7052 = vunpack.c.l.b16 %v6579
    %v7053 = vunpack.c.h.b16 %v6579
    %v7054 = vpack.c.b16 %v6768, %v6766
    %v7055 = vpack.c.b16 %v6769, %v6767
    %v7056 = vpack.c.b16 %v6772, %v6770
    %v7057 = vpack.c.b16 %v6773, %v6771
    %v7058 = vpack.c.b16 %v6776, %v6774
    %v7059 = vpack.c.b16 %v6777, %v6775
    %v7060 = vpack.c.b16 %v6780, %v6778
    %v7061 = vpack.c.b16 %v6781, %v6779
    %v7062 = vpack.c.b16 %v6784, %v6782
    %v7063 = vpack.c.b16 %v6785, %v6783
    %v7064 = vpack.c.b16 %v6788, %v6786
    %v7065 = vpack.c.b16 %v6789, %v6787
    %v7066 = vpack.c.b16 %v6792, %v6790
    %v7067 = vpack.c.b16 %v6793, %v6791
    %v7068 = vpack.c.b16 %v6796, %v6794
    %v7069 = vpack.c.b16 %v6797, %v6795
    %v7070 = vpack.c.b16 %v6800, %v6798
    %v7071 = vpack.c.b16 %v6801, %v6799
    %v7072 = vpack.c.b16 %v6804, %v6802
    %v7073 = vpack.c.b16 %v6805, %v6803
    %v7074 = vpack.c.b16 %v6808, %v6806
    %v7075 = vpack.c.b16 %v6809, %v6807
    %v7076 = vpack.c.b16 %v6812, %v6810
    %v7077 = vpack.c.b16 %v6813, %v6811
    %v7078 = vpack.c.b16 %v6816, %v6814
    %v7079 = vpack.c.b16 %v6817, %v6815
    %v7080 = vpack.c.b16 %v6820, %v6818
    %v7081 = vpack.c.b16 %v6821, %v6819
    %v7082 = vpack.c.b16 %v6824, %v6822
    %v7083 = vpack.c.b16 %v6825, %v6823
    %v7084 = vpack.c.b16 %v6828, %v6826
    %v7085 = vpack.c.b16 %v6829, %v6827
    %v7086 = vpack.c.b16 %v6832, %v6830
    %v7087 = vpack.c.b16 %v6833, %v6831
    %v7088 = vpack.c.b16 %v6836, %v6834
    %v7089 = vpack.c.b16 %v6837, %v6835
    %v7090 = vpack.c.b16 %v6840, %v6838
    %v7091 = vpack.c.b16 %v6841, %v6839
    %v7092 = vpack.c.b16 %v6844, %v6842
    %v7093 = vpack.c.b16 %v6845, %v6843
    %v7094 = vpack.c.b16 %v6848, %v6846
    %v7095 = vpack.c.b16 %v6849, %v6847
    %v7096 = vpack.c.b16 %v6852, %v6850
    %v7097 = vpack.c.b16 %v6853, %v6851
    %v7098 = vpack.c.b16 %v6856, %v6854
    %v7099 = vpack.c.b16 %v6857, %v6855
    %v7100 = vpack.c.b16 %v6860, %v6858
    %v7101 = vpack.c.b16 %v6861, %v6859
    %v7102 = vpack.c.b16 %v6864, %v6862
    %v7103 = vpack.c.b16 %v6865, %v6863
    %v7104 = vpack.c.b16 %v6868, %v6866
    %v7105 = vpack.c.b16 %v6869, %v6867
    %v7106 = vpack.c.b16 %v6872, %v6870
    %v7107 = vpack.c.b16 %v6873, %v6871
    %v7108 = vpack.c.b16 %v6876, %v6874
    %v7109 = vpack.c.b16 %v6877, %v6875
    %v7110 = vpack.c.b16 %v6880, %v6878
    %v7111 = vpack.c.b16 %v6881, %v6879
    %v7112 = vpack.c.b16 %v6884, %v6882
    %v7113 = vpack.c.b16 %v6885, %v6883
    %v7114 = vpack.c.b16 %v6888, %v6886
    %v7115 = vpack.c.b16 %v6889, %v6887
    %v7116 = vpack.c.b16 %v6892, %v6890
    %v7117 = vpack.c.b16 %v6893, %v6891
    %v7118 = vpack.c.b16 %v6896, %v6894
    %v7119 = vpack.c.b16 %v6897, %v6895
    %v7120 = vpack.c.b16 %v6900, %v6898
    %v7121 = vpack.c.b16 %v6901, %v6899
    %v7122 = vpack.c.b16 %v6904, %v6902
    %v7123 = vpack.c.b16 %v6905, %v6903
    %v7124 = vpack.c.b16 %v6908, %v6906
    %v7125 = vpack.c.b16 %v6909, %v6907
    %v7126 = vpack.c.b16 %v6912, %v6910
    %v7127 = vpack.c.b16 %v6913, %v6911
    %v7128 = vpack.c.b16 %v6916, %v6914
    %v7129 = vpack.c.b16 %v6917, %v6915
    %v7130 = vpack.c.b16 %v6920, %v6918
    %v7131 = vpack.c.b16 %v6921, %v6919
    %v7132 = vpack.c.b16 %v6924, %v6922
    %v7133 = vpack.c.b16 %v6925, %v6923
    %v7134 = vpack.c.b16 %v6928, %v6926
    %v7135 = vpack.c.b16 %v6929, %v6927
    %v7136 = vpack.c.b16 %v6932, %v6930
    %v7137 = vpack.c.b16 %v6933, %v6931
    %v7138 = vpack.c.b16 %v6936, %v6934
    %v7139 = vpack.c.b16 %v6937, %v6935
    %v7140 = vpack.c.b16 %v6940, %v6938
    %v7141 = vpack.c.b16 %v6941, %v6939
    %v7142 = vpack.c.b16 %v6944, %v6942
    %v7143 = vpack.c.b16 %v6945, %v6943
    %v7144 = vpack.c.b16 %v6948, %v6946
    %v7145 = vpack.c.b16 %v6949, %v6947
    %v7146 = vpack.c.b16 %v6952, %v6950
    %v7147 = vpack.c.b16 %v6953, %v6951
    %v7148 = vpack.c.b16 %v6956, %v6954
    %v7149 = vpack.c.b16 %v6957, %v6955
    %v7150 = vpack.c.b16 %v6960, %v6958
    %v7151 = vpack.c.b16 %v6961, %v6959
    %v7152 = vpack.c.b16 %v6964, %v6962
    %v7153 = vpack.c.b16 %v6965, %v6963
    %v7154 = vpack.c.b16 %v6968, %v6966
    %v7155 = vpack.c.b16 %v6969, %v6967
    %v7156 = vpack.c.b16 %v6972, %v6970
    %v7157 = vpack.c.b16 %v6973, %v6971
    %v7158 = vpack.c.b16 %v6976, %v6974
    %v7159 = vpack.c.b16 %v6977, %v6975
    %v7160 = vpack.c.b16 %v6980, %v6978
    %v7161 = vpack.c.b16 %v6981, %v6979
    %v7162 = vpack.c.b16 %v6984, %v6982
    %v7163 = vpack.c.b16 %v6985, %v6983
    %v7164 = vpack.c.b16 %v6988, %v6986
    %v7165 = vpack.c.b16 %v6989, %v6987
    %v7166 = vpack.c.b16 %v6992, %v6990
    %v7167 = vpack.c.b16 %v6993, %v6991
    %v7168 = vpack.c.b16 %v6996, %v6994
    %v7169 = vpack.c.b16 %v6997, %v6995
    %v7170 = vpack.c.b16 %v7000, %v6998
    %v7171 = vpack.c.b16 %v7001, %v6999
    %v7172 = vpack.c.b16 %v7004, %v7002
    %v7173 = vpack.c.b16 %v7005, %v7003
    %v7174 = vpack.c.b16 %v7008, %v7006
    %v7175 = vpack.c.b16 %v7009, %v7007
    %v7176 = vpack.c.b16 %v7012, %v7010
    %v7177 = vpack.c.b16 %v7013, %v7011
    %v7178 = vpack.c.b16 %v7016, %v7014
    %v7179 = vpack.c.b16 %v7017, %v7015
    %v7180 = vpack.c.b16 %v7020, %v7018
    %v7181 = vpack.c.b16 %v7021, %v7019
    %v7182 = vpack.c.b16 %v7024, %v7022
    %v7183 = vpack.c.b16 %v7025, %v7023
    %v7184 = vpack.c.b16 %v7028, %v7026
    %v7185 = vpack.c.b16 %v7029, %v7027
    %v7186 = vpack.c.b16 %v7032, %v7030
    %v7187 = vpack.c.b16 %v7033, %v7031
    %v7188 = vpack.c.b16 %v7036, %v7034
    %v7189 = vpack.c.b16 %v7037, %v7035
    %v7190 = vpack.c.b16 %v7040, %v7038
    %v7191 = vpack.c.b16 %v7041, %v7039
    %v7192 = vpack.c.b16 %v7044, %v7042
    %v7193 = vpack.c.b16 %v7045, %v7043
    %v7194 = vpack.c.b16 %v7048, %v7046
    %v7195 = vpack.c.b16 %v7049, %v7047
    %v7196 = vpack.c.b16 %v7052, %v7050
    %v7197 = vpack.c.b16 %v7053, %v7051
    %7342 = vmatpush.bf16.msra.mxu0 %v7068
    %7343 = vmatpush.bf16.msra.mxu0 %v7066
    %7344 = vmatpush.bf16.msra.mxu0 %v7064
    %7345 = vmatpush.bf16.msra.mxu0 %v7062
    %7346 = vmatpush.bf16.msra.mxu0 %v7060
    %7347 = vmatpush.bf16.msra.mxu0 %v7058
    %7348 = vmatpush.bf16.msra.mxu0 %v7056
    %7349 = vmatpush.bf16.msra.mxu0 %v7054
    %7350 = vmatmul.bf16.gmra.mxu0 %v6586
    %v7351 = vpop.f32.mrf.mxu0
    %v7352 = vadd.f32 %v6582, %v7351
    %v7353 = vpop.f32.mrf.mxu0
    %v7354 = vadd.f32 %v6582, %v7353
    %7355 = vmatmul.bf16.gmra.mxu0 %v6595
    %v7356 = vpop.f32.mrf.mxu0
    %v7357 = vadd.f32 %v6582, %v7356
    %v7358 = vpop.f32.mrf.mxu0
    %v7359 = vadd.f32 %v6582, %v7358
    %7360 = vdwg.mxu0
    %7361 = vmatpush.bf16.msra.mxu0 %v7084
    %7362 = vmatpush.bf16.msra.mxu0 %v7082
    %7363 = vmatpush.bf16.msra.mxu0 %v7080
    %7364 = vmatpush.bf16.msra.mxu0 %v7078
    %7365 = vmatpush.bf16.msra.mxu0 %v7076
    %7366 = vmatpush.bf16.msra.mxu0 %v7074
    %7367 = vmatpush.bf16.msra.mxu0 %v7072
    %7368 = vmatpush.bf16.msra.mxu0 %v7070
    %7369 = vmatmul.bf16.gmra.mxu0 %v6587
    %v7370 = vpop.f32.mrf.mxu0
    %v7371 = vadd.f32 %v7352, %v7370
    %v7372 = vpop.f32.mrf.mxu0
    %v7373 = vadd.f32 %v7354, %v7372
    %7374 = vmatmul.bf16.gmra.mxu0 %v6596
    %v7375 = vpop.f32.mrf.mxu0
    %v7376 = vadd.f32 %v7357, %v7375
    %v7377 = vpop.f32.mrf.mxu0
    %v7378 = vadd.f32 %v7359, %v7377
    %7379 = vdwg.mxu0
    %7380 = vmatpush.bf16.msra.mxu0 %v7100
    %7381 = vmatpush.bf16.msra.mxu0 %v7098
    %7382 = vmatpush.bf16.msra.mxu0 %v7096
    %7383 = vmatpush.bf16.msra.mxu0 %v7094
    %7384 = vmatpush.bf16.msra.mxu0 %v7092
    %7385 = vmatpush.bf16.msra.mxu0 %v7090
    %7386 = vmatpush.bf16.msra.mxu0 %v7088
    %7387 = vmatpush.bf16.msra.mxu0 %v7086
    %7388 = vmatmul.bf16.gmra.mxu0 %v6588
    %v7389 = vpop.f32.mrf.mxu0
    %v7390 = vadd.f32 %v7371, %v7389
    %v7391 = vpop.f32.mrf.mxu0
    %v7392 = vadd.f32 %v7373, %v7391
    %7393 = vmatmul.bf16.gmra.mxu0 %v6597
    %v7394 = vpop.f32.mrf.mxu0
    %v7395 = vadd.f32 %v7376, %v7394
    %v7396 = vpop.f32.mrf.mxu0
    %v7397 = vadd.f32 %v7378, %v7396
    %7398 = vdwg.mxu0
    %7399 = vmatpush.bf16.msra.mxu0 %v7116
    %7400 = vmatpush.bf16.msra.mxu0 %v7114
    %7401 = vmatpush.bf16.msra.mxu0 %v7112
    %7402 = vmatpush.bf16.msra.mxu0 %v7110
    %7403 = vmatpush.bf16.msra.mxu0 %v7108
    %7404 = vmatpush.bf16.msra.mxu0 %v7106
    %7405 = vmatpush.bf16.msra.mxu0 %v7104
    %7406 = vmatpush.bf16.msra.mxu0 %v7102
    %7407 = vmatmul.bf16.gmra.mxu0 %v6589
    %v7408 = vpop.f32.mrf.mxu0
    %v7409 = vadd.f32 %v7390, %v7408
    %v7410 = vpop.f32.mrf.mxu0
    %v7411 = vadd.f32 %v7392, %v7410
    %7412 = vmatmul.bf16.gmra.mxu0 %v6598
    %v7413 = vpop.f32.mrf.mxu0
    %v7414 = vadd.f32 %v7395, %v7413
    %v7415 = vpop.f32.mrf.mxu0
    %v7416 = vadd.f32 %v7397, %v7415
    %7417 = vdwg.mxu0
    %7418 = vmatpush.bf16.msra.mxu0 %v7132
    %7419 = vmatpush.bf16.msra.mxu0 %v7130
    %7420 = vmatpush.bf16.msra.mxu0 %v7128
    %7421 = vmatpush.bf16.msra.mxu0 %v7126
    %7422 = vmatpush.bf16.msra.mxu0 %v7124
    %7423 = vmatpush.bf16.msra.mxu0 %v7122
    %7424 = vmatpush.bf16.msra.mxu0 %v7120
    %7425 = vmatpush.bf16.msra.mxu0 %v7118
    %7426 = vmatmul.bf16.gmra.mxu0 %v6590
    %v7427 = vpop.f32.mrf.mxu0
    %v7428 = vadd.f32 %v7409, %v7427
    %v7429 = vpop.f32.mrf.mxu0
    %v7430 = vadd.f32 %v7411, %v7429
    %7431 = vmatmul.bf16.gmra.mxu0 %v6599
    %v7432 = vpop.f32.mrf.mxu0
    %v7433 = vadd.f32 %v7414, %v7432
    %v7434 = vpop.f32.mrf.mxu0
    %v7435 = vadd.f32 %v7416, %v7434
    %7436 = vdwg.mxu0
    %7437 = vmatpush.bf16.msra.mxu0 %v7148
    %7438 = vmatpush.bf16.msra.mxu0 %v7146
    %7439 = vmatpush.bf16.msra.mxu0 %v7144
    %7440 = vmatpush.bf16.msra.mxu0 %v7142
    %7441 = vmatpush.bf16.msra.mxu0 %v7140
    %7442 = vmatpush.bf16.msra.mxu0 %v7138
    %7443 = vmatpush.bf16.msra.mxu0 %v7136
    %7444 = vmatpush.bf16.msra.mxu0 %v7134
    %7445 = vmatmul.bf16.gmra.mxu0 %v6591
    %v7446 = vpop.f32.mrf.mxu0
    %v7447 = vadd.f32 %v7428, %v7446
    %v7448 = vpop.f32.mrf.mxu0
    %v7449 = vadd.f32 %v7430, %v7448
    %7450 = vmatmul.bf16.gmra.mxu0 %v6600
    %v7451 = vpop.f32.mrf.mxu0
    %v7452 = vadd.f32 %v7433, %v7451
    %v7453 = vpop.f32.mrf.mxu0
    %v7454 = vadd.f32 %v7435, %v7453
    %7455 = vdwg.mxu0
    %7456 = vmatpush.bf16.msra.mxu0 %v7164
    %7457 = vmatpush.bf16.msra.mxu0 %v7162
    %7458 = vmatpush.bf16.msra.mxu0 %v7160
    %7459 = vmatpush.bf16.msra.mxu0 %v7158
    %7460 = vmatpush.bf16.msra.mxu0 %v7156
    %7461 = vmatpush.bf16.msra.mxu0 %v7154
    %7462 = vmatpush.bf16.msra.mxu0 %v7152
    %7463 = vmatpush.bf16.msra.mxu0 %v7150
    %7464 = vmatmul.bf16.gmra.mxu0 %v6592
    %v7465 = vpop.f32.mrf.mxu0
    %v7466 = vadd.f32 %v7447, %v7465
    %v7467 = vpop.f32.mrf.mxu0
    %v7468 = vadd.f32 %v7449, %v7467
    %7469 = vmatmul.bf16.gmra.mxu0 %v6601
    %v7470 = vpop.f32.mrf.mxu0
    %v7471 = vadd.f32 %v7452, %v7470
    %v7472 = vpop.f32.mrf.mxu0
    %v7473 = vadd.f32 %v7454, %v7472
    %7474 = vdwg.mxu0
    %7475 = vmatpush.bf16.msra.mxu0 %v7180
    %7476 = vmatpush.bf16.msra.mxu0 %v7178
    %7477 = vmatpush.bf16.msra.mxu0 %v7176
    %7478 = vmatpush.bf16.msra.mxu0 %v7174
    %7479 = vmatpush.bf16.msra.mxu0 %v7172
    %7480 = vmatpush.bf16.msra.mxu0 %v7170
    %7481 = vmatpush.bf16.msra.mxu0 %v7168
    %7482 = vmatpush.bf16.msra.mxu0 %v7166
    %7483 = vmatmul.bf16.gmra.mxu0 %v6593
    %v7484 = vpop.f32.mrf.mxu0
    %v7485 = vadd.f32 %v7466, %v7484
    %v7486 = vpop.f32.mrf.mxu0
    %v7487 = vadd.f32 %v7468, %v7486
    %7488 = vmatmul.bf16.gmra.mxu0 %v6602
    %v7489 = vpop.f32.mrf.mxu0
    %v7490 = vadd.f32 %v7471, %v7489
    %v7491 = vpop.f32.mrf.mxu0
    %v7492 = vadd.f32 %v7473, %v7491
    %7493 = vdwg.mxu0
    %7494 = vmatpush.bf16.msra.mxu0 %v7196
    %7495 = vmatpush.bf16.msra.mxu0 %v7194
    %7496 = vmatpush.bf16.msra.mxu0 %v7192
    %7497 = vmatpush.bf16.msra.mxu0 %v7190
    %7498 = vmatpush.bf16.msra.mxu0 %v7188
    %7499 = vmatpush.bf16.msra.mxu0 %v7186
    %7500 = vmatpush.bf16.msra.mxu0 %v7184
    %7501 = vmatpush.bf16.msra.mxu0 %v7182
    %7502 = vmatmul.bf16.gmra.mxu0 %v6594
    %v7503 = vpop.f32.mrf.mxu0
    %v7504 = vadd.f32 %v7485, %v7503
    %v7505 = vpop.f32.mrf.mxu0
    %v7506 = vadd.f32 %v7487, %v7505
    %7507 = vmatmul.bf16.gmra.mxu0 %v6603
    %v7508 = vpop.f32.mrf.mxu0
    %v7509 = vadd.f32 %v7490, %v7508
    %v7510 = vpop.f32.mrf.mxu0
    %v7511 = vadd.f32 %v7492, %v7510
    %7512 = vdwg.mxu0
    %7513 = vmatpush.bf16.msra.mxu0 %v7069
    %7514 = vmatpush.bf16.msra.mxu0 %v7067
    %7515 = vmatpush.bf16.msra.mxu0 %v7065
    %7516 = vmatpush.bf16.msra.mxu0 %v7063
    %7517 = vmatpush.bf16.msra.mxu0 %v7061
    %7518 = vmatpush.bf16.msra.mxu0 %v7059
    %7519 = vmatpush.bf16.msra.mxu0 %v7057
    %7520 = vmatpush.bf16.msra.mxu0 %v7055
    %7521 = vmatmul.bf16.gmra.mxu0 %v6586
    %v7522 = vpop.f32.mrf.mxu0
    %v7523 = vadd.f32 %v6583, %v7522
    %v7524 = vpop.f32.mrf.mxu0
    %v7525 = vadd.f32 %v6583, %v7524
    %7526 = vmatmul.bf16.gmra.mxu0 %v6595
    %v7527 = vpop.f32.mrf.mxu0
    %v7528 = vadd.f32 %v6583, %v7527
    %v7529 = vpop.f32.mrf.mxu0
    %v7530 = vadd.f32 %v6583, %v7529
    %7531 = vdwg.mxu0
    %7532 = vmatpush.bf16.msra.mxu0 %v7085
    %7533 = vmatpush.bf16.msra.mxu0 %v7083
    %7534 = vmatpush.bf16.msra.mxu0 %v7081
    %7535 = vmatpush.bf16.msra.mxu0 %v7079
    %7536 = vmatpush.bf16.msra.mxu0 %v7077
    %7537 = vmatpush.bf16.msra.mxu0 %v7075
    %7538 = vmatpush.bf16.msra.mxu0 %v7073
    %7539 = vmatpush.bf16.msra.mxu0 %v7071
    %7540 = vmatmul.bf16.gmra.mxu0 %v6587
    %v7541 = vpop.f32.mrf.mxu0
    %v7542 = vadd.f32 %v7523, %v7541
    %v7543 = vpop.f32.mrf.mxu0
    %v7544 = vadd.f32 %v7525, %v7543
    %7545 = vmatmul.bf16.gmra.mxu0 %v6596
    %v7546 = vpop.f32.mrf.mxu0
    %v7547 = vadd.f32 %v7528, %v7546
    %v7548 = vpop.f32.mrf.mxu0
    %v7549 = vadd.f32 %v7530, %v7548
    %7550 = vdwg.mxu0
    %7551 = vmatpush.bf16.msra.mxu0 %v7101
    %7552 = vmatpush.bf16.msra.mxu0 %v7099
    %7553 = vmatpush.bf16.msra.mxu0 %v7097
    %7554 = vmatpush.bf16.msra.mxu0 %v7095
    %7555 = vmatpush.bf16.msra.mxu0 %v7093
    %7556 = vmatpush.bf16.msra.mxu0 %v7091
    %7557 = vmatpush.bf16.msra.mxu0 %v7089
    %7558 = vmatpush.bf16.msra.mxu0 %v7087
    %7559 = vmatmul.bf16.gmra.mxu0 %v6588
    %v7560 = vpop.f32.mrf.mxu0
    %v7561 = vadd.f32 %v7542, %v7560
    %v7562 = vpop.f32.mrf.mxu0
    %v7563 = vadd.f32 %v7544, %v7562
    %7564 = vmatmul.bf16.gmra.mxu0 %v6597
    %v7565 = vpop.f32.mrf.mxu0
    %v7566 = vadd.f32 %v7547, %v7565
    %v7567 = vpop.f32.mrf.mxu0
    %v7568 = vadd.f32 %v7549, %v7567
    %7569 = vdwg.mxu0
    %7570 = vmatpush.bf16.msra.mxu0 %v7117
    %7571 = vmatpush.bf16.msra.mxu0 %v7115
    %7572 = vmatpush.bf16.msra.mxu0 %v7113
    %7573 = vmatpush.bf16.msra.mxu0 %v7111
    %7574 = vmatpush.bf16.msra.mxu0 %v7109
    %7575 = vmatpush.bf16.msra.mxu0 %v7107
    %7576 = vmatpush.bf16.msra.mxu0 %v7105
    %7577 = vmatpush.bf16.msra.mxu0 %v7103
    %7578 = vmatmul.bf16.gmra.mxu0 %v6589
    %v7579 = vpop.f32.mrf.mxu0
    %v7580 = vadd.f32 %v7561, %v7579
    %v7581 = vpop.f32.mrf.mxu0
    %v7582 = vadd.f32 %v7563, %v7581
    %7583 = vmatmul.bf16.gmra.mxu0 %v6598
    %v7584 = vpop.f32.mrf.mxu0
    %v7585 = vadd.f32 %v7566, %v7584
    %v7586 = vpop.f32.mrf.mxu0
    %v7587 = vadd.f32 %v7568, %v7586
    %7588 = vdwg.mxu0
    %7589 = vmatpush.bf16.msra.mxu0 %v7133
    %7590 = vmatpush.bf16.msra.mxu0 %v7131
    %7591 = vmatpush.bf16.msra.mxu0 %v7129
    %7592 = vmatpush.bf16.msra.mxu0 %v7127
    %7593 = vmatpush.bf16.msra.mxu0 %v7125
    %7594 = vmatpush.bf16.msra.mxu0 %v7123
    %7595 = vmatpush.bf16.msra.mxu0 %v7121
    %7596 = vmatpush.bf16.msra.mxu0 %v7119
    %7597 = vmatmul.bf16.gmra.mxu0 %v6590
    %v7598 = vpop.f32.mrf.mxu0
    %v7599 = vadd.f32 %v7580, %v7598
    %v7600 = vpop.f32.mrf.mxu0
    %v7601 = vadd.f32 %v7582, %v7600
    %7602 = vmatmul.bf16.gmra.mxu0 %v6599
    %v7603 = vpop.f32.mrf.mxu0
    %v7604 = vadd.f32 %v7585, %v7603
    %v7605 = vpop.f32.mrf.mxu0
    %v7606 = vadd.f32 %v7587, %v7605
    %7607 = vdwg.mxu0
    %7608 = vmatpush.bf16.msra.mxu0 %v7149
    %7609 = vmatpush.bf16.msra.mxu0 %v7147
    %7610 = vmatpush.bf16.msra.mxu0 %v7145
    %7611 = vmatpush.bf16.msra.mxu0 %v7143
    %7612 = vmatpush.bf16.msra.mxu0 %v7141
    %7613 = vmatpush.bf16.msra.mxu0 %v7139
    %7614 = vmatpush.bf16.msra.mxu0 %v7137
    %7615 = vmatpush.bf16.msra.mxu0 %v7135
    %7616 = vmatmul.bf16.gmra.mxu0 %v6591
    %v7617 = vpop.f32.mrf.mxu0
    %v7618 = vadd.f32 %v7599, %v7617
    %v7619 = vpop.f32.mrf.mxu0
    %v7620 = vadd.f32 %v7601, %v7619
    %7621 = vmatmul.bf16.gmra.mxu0 %v6600
    %v7622 = vpop.f32.mrf.mxu0
    %v7623 = vadd.f32 %v7604, %v7622
    %v7624 = vpop.f32.mrf.mxu0
    %v7625 = vadd.f32 %v7606, %v7624
    %7626 = vdwg.mxu0
    %7627 = vmatpush.bf16.msra.mxu0 %v7165
    %7628 = vmatpush.bf16.msra.mxu0 %v7163
    %7629 = vmatpush.bf16.msra.mxu0 %v7161
    %7630 = vmatpush.bf16.msra.mxu0 %v7159
    %7631 = vmatpush.bf16.msra.mxu0 %v7157
    %7632 = vmatpush.bf16.msra.mxu0 %v7155
    %7633 = vmatpush.bf16.msra.mxu0 %v7153
    %7634 = vmatpush.bf16.msra.mxu0 %v7151
    %7635 = vmatmul.bf16.gmra.mxu0 %v6592
    %v7636 = vpop.f32.mrf.mxu0
    %v7637 = vadd.f32 %v7618, %v7636
    %v7638 = vpop.f32.mrf.mxu0
    %v7639 = vadd.f32 %v7620, %v7638
    %7640 = vmatmul.bf16.gmra.mxu0 %v6601
    %v7641 = vpop.f32.mrf.mxu0
    %v7642 = vadd.f32 %v7623, %v7641
    %v7643 = vpop.f32.mrf.mxu0
    %v7644 = vadd.f32 %v7625, %v7643
    %7645 = vdwg.mxu0
    %7646 = vmatpush.bf16.msra.mxu0 %v7181
    %7647 = vmatpush.bf16.msra.mxu0 %v7179
    %7648 = vmatpush.bf16.msra.mxu0 %v7177
    %7649 = vmatpush.bf16.msra.mxu0 %v7175
    %7650 = vmatpush.bf16.msra.mxu0 %v7173
    %7651 = vmatpush.bf16.msra.mxu0 %v7171
    %7652 = vmatpush.bf16.msra.mxu0 %v7169
    %7653 = vmatpush.bf16.msra.mxu0 %v7167
    %7654 = vmatmul.bf16.gmra.mxu0 %v6593
    %v7655 = vpop.f32.mrf.mxu0
    %v7656 = vadd.f32 %v7637, %v7655
    %v7657 = vpop.f32.mrf.mxu0
    %v7658 = vadd.f32 %v7639, %v7657
    %7659 = vmatmul.bf16.gmra.mxu0 %v6602
    %v7660 = vpop.f32.mrf.mxu0
    %v7661 = vadd.f32 %v7642, %v7660
    %v7662 = vpop.f32.mrf.mxu0
    %v7663 = vadd.f32 %v7644, %v7662
    %7664 = vdwg.mxu0
    %7665 = vmatpush.bf16.msra.mxu0 %v7197
    %7666 = vmatpush.bf16.msra.mxu0 %v7195
    %7667 = vmatpush.bf16.msra.mxu0 %v7193
    %7668 = vmatpush.bf16.msra.mxu0 %v7191
    %7669 = vmatpush.bf16.msra.mxu0 %v7189
    %7670 = vmatpush.bf16.msra.mxu0 %v7187
    %7671 = vmatpush.bf16.msra.mxu0 %v7185
    %7672 = vmatpush.bf16.msra.mxu0 %v7183
    %7673 = vmatmul.bf16.gmra.mxu0 %v6594
    %v7674 = vpop.f32.mrf.mxu0
    %v7675 = vadd.f32 %v7656, %v7674
    %v7676 = vpop.f32.mrf.mxu0
    %v7677 = vadd.f32 %v7658, %v7676
    %7678 = vmatmul.bf16.gmra.mxu0 %v6603
    %v7679 = vpop.f32.mrf.mxu0
    %v7680 = vadd.f32 %v7661, %v7679
    %v7681 = vpop.f32.mrf.mxu0
    %v7682 = vadd.f32 %v7663, %v7681
    %7683 = vdwg.mxu0
    %v7692 = vrot.slane %v7675, 6
    %v7693 = vrot.slane %v7677, 6
    %v7694 = vrot.slane %v7680, 6
    %v7695 = vrot.slane %v7682, 6
    %vm7696 = vcmask 1041408
    %v7697 = vsel %vm7696, %v7504, %v7692
    %vm7698 = vcmask 1043458
    %v7699 = vsel %vm7698, %v7504, %v7692
    %v7700 = vrot.slane %v7699, 2
    %v7701 = vsel %vm7696, %v7506, %v7693
    %v7702 = vsel %vm7698, %v7506, %v7693
    %v7703 = vrot.slane %v7702, 2
    %v7704 = vsel %vm7696, %v7509, %v7694
    %v7705 = vsel %vm7698, %v7509, %v7694
    %v7706 = vrot.slane %v7705, 2
    %v7707 = vsel %vm7696, %v7511, %v7695
    %v7708 = vsel %vm7698, %v7511, %v7695
    %v7709 = vrot.slane %v7708, 2
    %v7718 = vsub.f32 0.0, %v7697
    %v7719 = vsub.f32 0.0, %v7700
    %v7720 = vsub.f32 0.0, %v7701
    %v7721 = vsub.f32 0.0, %v7703
    %v7722 = vsub.f32 0.0, %v7704
    %v7723 = vsub.f32 0.0, %v7706
    %v7724 = vsub.f32 0.0, %v7707
    %v7725 = vsub.f32 0.0, %v7709
    %v7726 = vmul.f32 %v7718, 1.442695
    %v7727 = vpow.pop %v7726
    %v7728 = vmul.f32 %v7719, 1.442695
    %v7729 = vpow.pop %v7728
    %v7730 = vmul.f32 %v7720, 1.442695
    %v7731 = vpow.pop %v7730
    %v7732 = vmul.f32 %v7721, 1.442695
    %v7733 = vpow.pop %v7732
    %v7734 = vmul.f32 %v7722, 1.442695
    %v7735 = vpow.pop %v7734
    %v7736 = vmul.f32 %v7723, 1.442695
    %v7737 = vpow.pop %v7736
    %v7738 = vmul.f32 %v7724, 1.442695
    %v7739 = vpow.pop %v7738
    %v7740 = vmul.f32 %v7725, 1.442695
    %v7741 = vpow.pop %v7740
    %v7742 = vadd.f32 %v7727, 1.0
    %v7743 = vadd.f32 %v7729, 1.0
    %v7744 = vadd.f32 %v7731, 1.0
    %v7745 = vadd.f32 %v7733, 1.0
    %v7746 = vadd.f32 %v7735, 1.0
    %v7747 = vadd.f32 %v7737, 1.0
    %v7748 = vadd.f32 %v7739, 1.0
    %v7749 = vadd.f32 %v7741, 1.0
    %v7750 = vrcp.pop %v7742
    %v7751 = vrcp.pop %v7743
    %v7752 = vrcp.pop %v7744
    %v7753 = vrcp.pop %v7745
    %v7754 = vrcp.pop %v7746
    %v7755 = vrcp.pop %v7747
    %v7756 = vrcp.pop %v7748
    %v7757 = vrcp.pop %v7749
    %v7766 = vsel %vm4972, %v7750, %v7750
    %v7767 = vsel %vm4976, %v7750, %v7766
    %v7768 = vrot.slane %v7751, 7
    %v7769 = vsel %vm4966, %v7768, %v7767
    %v7770 = vsel %vm4970, %v7768, %v7769
    %v7771 = vsel %vm4974, %v7768, %v7770
    %v7772 = vsel %vm4978, %v7768, %v7771
    %v7773 = vsel %vm4972, %v7752, %v7752
    %v7774 = vsel %vm4976, %v7752, %v7773
    %v7775 = vrot.slane %v7753, 7
    %v7776 = vsel %vm4966, %v7775, %v7774
    %v7777 = vsel %vm4970, %v7775, %v7776
    %v7778 = vsel %vm4974, %v7775, %v7777
    %v7779 = vsel %vm4978, %v7775, %v7778
    %v7780 = vsel %vm4972, %v7754, %v7754
    %v7781 = vsel %vm4976, %v7754, %v7780
    %v7782 = vrot.slane %v7755, 7
    %v7783 = vsel %vm4966, %v7782, %v7781
    %v7784 = vsel %vm4970, %v7782, %v7783
    %v7785 = vsel %vm4974, %v7782, %v7784
    %v7786 = vsel %vm4978, %v7782, %v7785
    %v7787 = vsel %vm4972, %v7756, %v7756
    %v7788 = vsel %vm4976, %v7756, %v7787
    %v7789 = vrot.slane %v7757, 7
    %v7790 = vsel %vm4966, %v7789, %v7788
    %v7791 = vsel %vm4970, %v7789, %v7790
    %v7792 = vsel %vm4974, %v7789, %v7791
    %v7793 = vsel %vm4978, %v7789, %v7792
    %7798 = vst [vmem:[#allocation10] sm:$0xf] %v7772
    %7799 = vst [vmem:[#allocation10 + $0x4] sm:$0xf] %v7779
    %7800 = vst [vmem:[#allocation10 + $0x8] sm:$0xf] %v7786
    %7801 = vst [vmem:[#allocation10 + $0xc] sm:$0xf] %v7793
    %v7802 = vperm.slane %v7750, 0
    %v7803 = vperm.slane %v7750, 2
    %v7804 = vperm.slane %v7752, 0
    %v7805 = vperm.slane %v7752, 2
    %v7806 = vperm.slane %v7754, 0
    %v7807 = vperm.slane %v7754, 2
    %v7808 = vperm.slane %v7756, 0
    %v7809 = vperm.slane %v7756, 2
    %vm7818 = vcmask 1040384
    %v7819 = vperm.slane %v7751, 0
    %v7820 = vperm.slane %v7751, 2
    %v7821 = vperm.slane %v7753, 0
    %v7822 = vperm.slane %v7753, 2
    %v7823 = vperm.slane %v7755, 0
    %v7824 = vperm.slane %v7755, 2
    %v7825 = vperm.slane %v7757, 0
    %v7826 = vperm.slane %v7757, 2
    %v7835 = vmul.f32 %v7750, 0.75
    %v7836 = vmul.f32 %v7751, 0.75
    %v7837 = vmul.f32 %v7752, 0.75
    %v7838 = vmul.f32 %v7753, 0.75
    %v7839 = vmul.f32 %v7754, 0.75
    %v7840 = vmul.f32 %v7755, 0.75
    %v7841 = vmul.f32 %v7756, 0.75
    %v7842 = vmul.f32 %v7757, 0.75
    %v7843 = vmul.f32 %v7802, 0.25
    %v7844 = vmul.f32 %v7803, 0.25
    %v7845 = vmul.f32 %v7804, 0.25
    %v7846 = vmul.f32 %v7805, 0.25
    %v7847 = vmul.f32 %v7806, 0.25
    %v7848 = vmul.f32 %v7807, 0.25
    %v7849 = vmul.f32 %v7808, 0.25
    %v7850 = vmul.f32 %v7809, 0.25
    %v7859 = vrot.slane %v7844, 6
    %v7860 = vrot.slane %v7846, 6
    %v7861 = vrot.slane %v7848, 6
    %v7862 = vrot.slane %v7850, 6
    %v7863 = vsel %vm7696, %v7843, %v7859
    %v7864 = vsel %vm7696, %v7845, %v7860
    %v7865 = vsel %vm7696, %v7847, %v7861
    %v7866 = vsel %vm7696, %v7849, %v7862
    %v7867 = vrot.slane %v7863, 1
    %v7868 = vrot.slane %v7864, 1
    %v7869 = vrot.slane %v7865, 1
    %v7870 = vrot.slane %v7866, 1
    %v7879 = vadd.f32 %v7835, %v7863
    %v7880 = vadd.f32 %v7836, %v7867
    %v7881 = vadd.f32 %v7837, %v7864
    %v7882 = vadd.f32 %v7838, %v7868
    %v7883 = vadd.f32 %v7839, %v7865
    %v7884 = vadd.f32 %v7840, %v7869
    %v7885 = vadd.f32 %v7841, %v7866
    %v7886 = vadd.f32 %v7842, %v7870
    %v7887 = vmul.f32 %v7819, 0.25
    %v7888 = vmul.f32 %v7820, 0.25
    %v7889 = vmul.f32 %v7821, 0.25
    %v7890 = vmul.f32 %v7822, 0.25
    %v7891 = vmul.f32 %v7823, 0.25
    %v7892 = vmul.f32 %v7824, 0.25
    %v7893 = vmul.f32 %v7825, 0.25
    %v7894 = vmul.f32 %v7826, 0.25
    %v7903 = vrot.slane %v7888, 6
    %v7904 = vrot.slane %v7890, 6
    %v7905 = vrot.slane %v7892, 6
    %v7906 = vrot.slane %v7894, 6
    %v7907 = vsel %vm7696, %v7887, %v7903
    %v7908 = vsel %vm7696, %v7889, %v7904
    %v7909 = vsel %vm7696, %v7891, %v7905
    %v7910 = vsel %vm7696, %v7893, %v7906
    %v7911 = vrot.slane %v7907, 1
    %v7912 = vrot.slane %v7908, 1
    %v7913 = vrot.slane %v7909, 1
    %v7914 = vrot.slane %v7910, 1
    %v7923 = vadd.f32 %v7835, %v7907
    %v7924 = vadd.f32 %v7836, %v7911
    %v7925 = vadd.f32 %v7837, %v7908
    %v7926 = vadd.f32 %v7838, %v7912
    %v7927 = vadd.f32 %v7839, %v7909
    %v7928 = vadd.f32 %v7840, %v7913
    %v7929 = vadd.f32 %v7841, %v7910
    %v7930 = vadd.f32 %v7842, %v7914
    %v7939 = vperm.slane %v7879, 0
    %v7940 = vperm.slane %v7879, 2
    %v7941 = vperm.slane %v7880, 0
    %v7942 = vperm.slane %v7880, 2
    %v7943 = vperm.slane %v7881, 0
    %v7944 = vperm.slane %v7881, 2
    %v7945 = vperm.slane %v7882, 0
    %v7946 = vperm.slane %v7882, 2
    %v7947 = vperm.slane %v7883, 0
    %v7948 = vperm.slane %v7883, 2
    %v7949 = vperm.slane %v7884, 0
    %v7950 = vperm.slane %v7884, 2
    %v7951 = vperm.slane %v7885, 0
    %v7952 = vperm.slane %v7885, 2
    %v7953 = vperm.slane %v7886, 0
    %v7954 = vperm.slane %v7886, 2
    %v7979 = vperm.slane %v7923, 0
    %v7980 = vperm.slane %v7923, 2
    %v7981 = vperm.slane %v7924, 0
    %v7982 = vperm.slane %v7924, 2
    %v7983 = vperm.slane %v7925, 0
    %v7984 = vperm.slane %v7925, 2
    %v7985 = vperm.slane %v7926, 0
    %v7986 = vperm.slane %v7926, 2
    %v7987 = vperm.slane %v7927, 0
    %v7988 = vperm.slane %v7927, 2
    %v7989 = vperm.slane %v7928, 0
    %v7990 = vperm.slane %v7928, 2
    %v7991 = vperm.slane %v7929, 0
    %v7992 = vperm.slane %v7929, 2
    %v7993 = vperm.slane %v7930, 0
    %v7994 = vperm.slane %v7930, 2
    %v8011 = vsel %vm7818, %v7939, %v7979
    %v8012 = vsel %vm7818, %v7940, %v7980
    %v8013 = vsel %vm7818, %v7941, %v7981
    %v8014 = vsel %vm7818, %v7942, %v7982
    %v8015 = vsel %vm7818, %v7943, %v7983
    %v8016 = vsel %vm7818, %v7944, %v7984
    %v8017 = vsel %vm7818, %v7945, %v7985
    %v8018 = vsel %vm7818, %v7946, %v7986
    %v8019 = vsel %vm7818, %v7947, %v7987
    %v8020 = vsel %vm7818, %v7948, %v7988
    %v8021 = vsel %vm7818, %v7949, %v7989
    %v8022 = vsel %vm7818, %v7950, %v7990
    %v8023 = vsel %vm7818, %v7951, %v7991
    %v8024 = vsel %vm7818, %v7952, %v7992
    %v8025 = vsel %vm7818, %v7953, %v7993
    %v8026 = vsel %vm7818, %v7954, %v7994
    %v8043 = vrot.slane %v8012, 6
    %v8044 = vrot.slane %v8014, 6
    %v8045 = vrot.slane %v8016, 6
    %v8046 = vrot.slane %v8018, 6
    %v8047 = vrot.slane %v8020, 6
    %v8048 = vrot.slane %v8022, 6
    %v8049 = vrot.slane %v8024, 6
    %v8050 = vrot.slane %v8026, 6
    %v8051 = vsel %vm7696, %v8011, %v8043
    %v8052 = vsel %vm7696, %v8013, %v8044
    %v8053 = vsel %vm7696, %v8015, %v8045
    %v8054 = vsel %vm7696, %v8017, %v8046
    %v8055 = vsel %vm7696, %v8019, %v8047
    %v8056 = vsel %vm7696, %v8021, %v8048
    %v8057 = vsel %vm7696, %v8023, %v8049
    %v8058 = vsel %vm7696, %v8025, %v8050
    %8059 = vst [vmem:[#allocation1] ss:$4 sm:$0xff] %v8051
    %s8060 = scalar_lea.vmem [#allocation1], 1
    %8061 = vst [vmem:[%s8060] ss:$4 sm:$0xff] %v8052
    %v8062 = vld.sshfl [vmem:[#allocation1] sm:$0xff pattern:$0x73625140]
    %v8063 = vld.sshfl [vmem:[#allocation1 + $0x8] sm:$0xff pattern:$0x73625140]
    %s8064 = scalar_lea.vmem [#allocation1], 32
    %8065 = vst [vmem:[%s8064] ss:$4 sm:$0xff] %v8053
    %s8066 = scalar_lea.vmem [#allocation1], 33
    %8067 = vst [vmem:[%s8066] ss:$4 sm:$0xff] %v8054
    %v8068 = vld.sshfl [vmem:[#allocation1 + $0x20] sm:$0xff pattern:$0x73625140]
    %v8069 = vld.sshfl [vmem:[#allocation1 + $0x28] sm:$0xff pattern:$0x73625140]
    %8070 = vst [vmem:[#allocation1] ss:$4 sm:$0xff] %v8055
    %8071 = vst [vmem:[%s8060] ss:$4 sm:$0xff] %v8056
    %v8072 = vld.sshfl [vmem:[#allocation1] sm:$0xff pattern:$0x73625140]
    %v8073 = vld.sshfl [vmem:[#allocation1 + $0x8] sm:$0xff pattern:$0x73625140]
    %8074 = vst [vmem:[%s8064] ss:$4 sm:$0xff] %v8057
    %8075 = vst [vmem:[%s8066] ss:$4 sm:$0xff] %v8058
    %v8076 = vld.sshfl [vmem:[#allocation1 + $0x20] sm:$0xff pattern:$0x73625140]
    %v8077 = vld.sshfl [vmem:[#allocation1 + $0x28] sm:$0xff pattern:$0x73625140]
    %v8086 = vpack.c.bf16 %v8063, %v8062
    %v8087 = vpack.c.bf16 %v8069, %v8068
    %v8088 = vpack.c.bf16 %v8073, %v8072
    %v8089 = vpack.c.bf16 %v8077, %v8076
    %v8094 = vunpack.c.l.b16 %v8086
    %v8095 = vunpack.c.h.b16 %v8086
    %v8096 = vunpack.c.l.b16 %v8087
    %v8097 = vunpack.c.h.b16 %v8087
    %v8098 = vunpack.c.l.b16 %v8088
    %v8099 = vunpack.c.h.b16 %v8088
    %v8100 = vunpack.c.l.b16 %v8089
    %v8101 = vunpack.c.h.b16 %v8089
    %v8102 = vpack.c.b16 %v8094, %v8094
    %v8103 = vpack.c.b16 %v8095, %v8095
    %v8104 = vpack.c.b16 %v8096, %v8096
    %v8105 = vpack.c.b16 %v8097, %v8097
    %v8106 = vpack.c.b16 %v8098, %v8098
    %v8107 = vpack.c.b16 %v8099, %v8099
    %v8108 = vpack.c.b16 %v8100, %v8100
    %v8109 = vpack.c.b16 %v8101, %v8101
    %v8111 = vshrl.u32 %v8102, 16
    %v8113 = vrot.slane %v8111, 7
    %v8114 = vshll.u32 %v8102, 16
    %v8116 = vor.u32 %v8113, %v8114
    %v8118 = vshrl.u32 %v8103, 16
    %v8120 = vrot.slane %v8118, 7
    %v8121 = vshll.u32 %v8103, 16
    %v8123 = vor.u32 %v8120, %v8121
    %v8125 = vshrl.u32 %v8104, 16
    %v8127 = vrot.slane %v8125, 7
    %v8128 = vshll.u32 %v8104, 16
    %v8130 = vor.u32 %v8127, %v8128
    %v8132 = vshrl.u32 %v8105, 16
    %v8134 = vrot.slane %v8132, 7
    %v8135 = vshll.u32 %v8105, 16
    %v8137 = vor.u32 %v8134, %v8135
    %v8139 = vshrl.u32 %v8106, 16
    %v8141 = vrot.slane %v8139, 7
    %v8142 = vshll.u32 %v8106, 16
    %v8144 = vor.u32 %v8141, %v8142
    %v8146 = vshrl.u32 %v8107, 16
    %v8148 = vrot.slane %v8146, 7
    %v8149 = vshll.u32 %v8107, 16
    %v8151 = vor.u32 %v8148, %v8149
    %v8153 = vshrl.u32 %v8108, 16
    %v8155 = vrot.slane %v8153, 7
    %v8156 = vshll.u32 %v8108, 16
    %v8158 = vor.u32 %v8155, %v8156
    %v8160 = vshrl.u32 %v8109, 16
    %v8162 = vrot.slane %v8160, 7
    %v8163 = vshll.u32 %v8109, 16
    %v8165 = vor.u32 %v8162, %v8163
    %v8174 = vsel %vm667, 0, %v8116
    %v8175 = vsel %vm667, 0, %v8123
    %v8176 = vsel %vm667, 0, %v8130
    %v8177 = vsel %vm667, 0, %v8137
    %v8178 = vsel %vm667, 0, %v8144
    %v8179 = vsel %vm667, 0, %v8151
    %v8180 = vsel %vm667, 0, %v8158
    %v8181 = vsel %vm667, 0, %v8165
    %v8182 = vsel %vm6318, %v8174, 0
    %v8183 = vsel %vm6318, %v8175, 0
    %v8184 = vsel %vm6318, %v8176, 0
    %v8185 = vsel %vm6318, %v8177, 0
    %v8186 = vsel %vm6318, %v8178, 0
    %v8187 = vsel %vm6318, %v8179, 0
    %v8188 = vsel %vm6318, %v8180, 0
    %v8189 = vsel %vm6318, %v8181, 0
    %v8191 = vshrl.u32 %v8182, 16
    %v8193 = vshll.u32 %v8182, 16
    %v8195 = vrot.slane %v8193, 1
    %v8196 = vor.u32 %v8191, %v8195
    %v8198 = vshrl.u32 %v8183, 16
    %v8200 = vshll.u32 %v8183, 16
    %v8202 = vrot.slane %v8200, 1
    %v8203 = vor.u32 %v8198, %v8202
    %v8205 = vshrl.u32 %v8186, 16
    %v8207 = vshll.u32 %v8186, 16
    %v8209 = vrot.slane %v8207, 1
    %v8210 = vor.u32 %v8205, %v8209
    %v8212 = vshrl.u32 %v8187, 16
    %v8214 = vshll.u32 %v8187, 16
    %v8216 = vrot.slane %v8214, 1
    %v8217 = vor.u32 %v8212, %v8216
    %v8222 = vrot.slane %v8182, 1
    %v8223 = vrot.slane %v8183, 1
    %v8224 = vrot.slane %v8186, 1
    %v8225 = vrot.slane %v8187, 1
    %v8227 = vshrl.u32 %v8184, 16
    %v8229 = vshll.u32 %v8184, 16
    %v8231 = vrot.slane %v8229, 1
    %v8232 = vor.u32 %v8227, %v8231
    %v8234 = vshrl.u32 %v8185, 16
    %v8236 = vshll.u32 %v8185, 16
    %v8238 = vrot.slane %v8236, 1
    %v8239 = vor.u32 %v8234, %v8238
    %v8241 = vshrl.u32 %v8188, 16
    %v8243 = vshll.u32 %v8188, 16
    %v8245 = vrot.slane %v8243, 1
    %v8246 = vor.u32 %v8241, %v8245
    %v8248 = vshrl.u32 %v8189, 16
    %v8250 = vshll.u32 %v8189, 16
    %v8252 = vrot.slane %v8250, 1
    %v8253 = vor.u32 %v8248, %v8252
    %v8258 = vrot.slane %v8184, 1
    %v8259 = vrot.slane %v8185, 1
    %v8260 = vrot.slane %v8188, 1
    %v8261 = vrot.slane %v8189, 1
    %v8262 = vunpack.c.l.b16 %v8182
    %v8263 = vunpack.c.l.b16 %v8183
    %v8264 = vunpack.c.l.b16 %v8196
    %v8265 = vunpack.c.l.b16 %v8203
    %v8266 = vunpack.c.l.b16 %v8222
    %v8267 = vunpack.c.l.b16 %v8223
    %v8268 = vunpack.c.l.b16 %v8184
    %v8269 = vunpack.c.l.b16 %v8185
    %v8270 = vunpack.c.l.b16 %v8232
    %v8271 = vunpack.c.l.b16 %v8239
    %v8272 = vunpack.c.l.b16 %v8258
    %v8273 = vunpack.c.l.b16 %v8259
    %v8274 = vunpack.c.l.b16 %v8186
    %v8275 = vunpack.c.l.b16 %v8187
    %v8276 = vunpack.c.l.b16 %v8210
    %v8277 = vunpack.c.l.b16 %v8217
    %v8278 = vunpack.c.l.b16 %v8224
    %v8279 = vunpack.c.l.b16 %v8225
    %v8280 = vunpack.c.l.b16 %v8188
    %v8281 = vunpack.c.l.b16 %v8189
    %v8282 = vunpack.c.l.b16 %v8246
    %v8283 = vunpack.c.l.b16 %v8253
    %v8284 = vunpack.c.l.b16 %v8260
    %v8285 = vunpack.c.l.b16 %v8261
    %v8286 = vld [vmem:[#allocation8] sm:$0xf]
    %v8287 = vld [vmem:[#allocation8 + $0x4] sm:$0xf]
    %v8288 = vld [vmem:[#allocation8 + $0x8] sm:$0xf]
    %v8289 = vld [vmem:[#allocation8 + $0xc] sm:$0xf]
    %v8290 = vld [vmem:[#allocation8 + $0x10] sm:$0xf]
    %v8291 = vld [vmem:[#allocation8 + $0x14] sm:$0xf]
    %v8292 = vld [vmem:[#allocation8 + $0x18] sm:$0xf]
    %v8293 = vld [vmem:[#allocation8 + $0x1c] sm:$0xf]
    %v8294 = vld [vmem:[#allocation8 + $0x20] sm:$0xf]
    %v8295 = vld [vmem:[#allocation8 + $0x24] sm:$0xf]
    %v8296 = vld [vmem:[#allocation8 + $0x28] sm:$0xf]
    %v8297 = vld [vmem:[#allocation8 + $0x2c] sm:$0xf]
    %v8298 = vld [vmem:[#allocation8 + $0x30] sm:$0xf]
    %v8299 = vld [vmem:[#allocation8 + $0x34] sm:$0xf]
    %v8300 = vld [vmem:[#allocation8 + $0x38] sm:$0xf]
    %v8301 = vld [vmem:[#allocation8 + $0x3c] sm:$0xf]
    %v8302 = vld [vmem:[#allocation8 + $0x40] sm:$0xf]
    %v8303 = vld [vmem:[#allocation8 + $0x44] sm:$0xf]
    %v8304 = vld [vmem:[#allocation8 + $0x48] sm:$0xf]
    %v8305 = vld [vmem:[#allocation8 + $0x4c] sm:$0xf]
    %v8306 = vld [vmem:[#allocation8 + $0x50] sm:$0xf]
    %v8307 = vld [vmem:[#allocation8 + $0x54] sm:$0xf]
    %v8308 = vld [vmem:[#allocation8 + $0x58] sm:$0xf]
    %v8309 = vld [vmem:[#allocation8 + $0x5c] sm:$0xf]
    %v8310 = vld [vmem:[#allocation8 + $0x60] sm:$0xf]
    %v8311 = vld [vmem:[#allocation8 + $0x64] sm:$0xf]
    %v8312 = vld [vmem:[#allocation8 + $0x68] sm:$0xf]
    %v8313 = vld [vmem:[#allocation8 + $0x6c] sm:$0xf]
    %v8314 = vld [vmem:[#allocation8 + $0x70] sm:$0xf]
    %v8315 = vld [vmem:[#allocation8 + $0x74] sm:$0xf]
    %v8316 = vld [vmem:[#allocation8 + $0x78] sm:$0xf]
    %v8317 = vld [vmem:[#allocation8 + $0x7c] sm:$0xf]
    %v8318 = vld [vmem:[#allocation8 + $0x80] sm:$0xf]
    %v8319 = vld [vmem:[#allocation8 + $0x84] sm:$0xf]
    %v8320 = vld [vmem:[#allocation8 + $0x88] sm:$0xf]
    %v8321 = vld [vmem:[#allocation8 + $0x8c] sm:$0xf]
    %v8322 = vld [vmem:[#allocation8 + $0x90] sm:$0xf]
    %v8323 = vld [vmem:[#allocation8 + $0x94] sm:$0xf]
    %v8324 = vld [vmem:[#allocation8 + $0x98] sm:$0xf]
    %v8325 = vld [vmem:[#allocation8 + $0x9c] sm:$0xf]
    %v8326 = vld [vmem:[#allocation8 + $0xa0] sm:$0xf]
    %v8327 = vld [vmem:[#allocation8 + $0xa4] sm:$0xf]
    %v8328 = vld [vmem:[#allocation8 + $0xa8] sm:$0xf]
    %v8329 = vld [vmem:[#allocation8 + $0xac] sm:$0xf]
    %v8330 = vld [vmem:[#allocation8 + $0xb0] sm:$0xf]
    %v8331 = vld [vmem:[#allocation8 + $0xb4] sm:$0xf]
    %v8332 = vld [vmem:[#allocation8 + $0xb8] sm:$0xf]
    %v8333 = vld [vmem:[#allocation8 + $0xbc] sm:$0xf]
    %v8334 = vld [vmem:[#allocation8 + $0xc0] sm:$0xf]
    %v8335 = vld [vmem:[#allocation8 + $0xc4] sm:$0xf]
    %v8336 = vld [vmem:[#allocation8 + $0xc8] sm:$0xf]
    %v8337 = vld [vmem:[#allocation8 + $0xcc] sm:$0xf]
    %v8338 = vld [vmem:[#allocation8 + $0xd0] sm:$0xf]
    %v8339 = vld [vmem:[#allocation8 + $0xd4] sm:$0xf]
    %v8340 = vld [vmem:[#allocation8 + $0xd8] sm:$0xf]
    %v8341 = vld [vmem:[#allocation8 + $0xdc] sm:$0xf]
    %v8342 = vld [vmem:[#allocation8 + $0xe0] sm:$0xf]
    %v8343 = vld [vmem:[#allocation8 + $0xe4] sm:$0xf]
    %v8344 = vld [vmem:[#allocation8 + $0xe8] sm:$0xf]
    %v8345 = vld [vmem:[#allocation8 + $0xec] sm:$0xf]
    %v8346 = vld [vmem:[#allocation8 + $0xf0] sm:$0xf]
    %v8347 = vld [vmem:[#allocation8 + $0xf4] sm:$0xf]
    %v8348 = vld [vmem:[#allocation8 + $0xf8] sm:$0xf]
    %v8349 = vld [vmem:[#allocation8 + $0xfc] sm:$0xf]
    %v8350 = vld [vmem:[#allocation8 + $0x100] sm:$0xf]
    %v8351 = vld [vmem:[#allocation8 + $0x104] sm:$0xf]
    %v8352 = vld [vmem:[#allocation8 + $0x108] sm:$0xf]
    %v8353 = vld [vmem:[#allocation8 + $0x10c] sm:$0xf]
    %v8354 = vld [vmem:[#allocation8 + $0x110] sm:$0xf]
    %v8355 = vld [vmem:[#allocation8 + $0x114] sm:$0xf]
    %v8356 = vld [vmem:[#allocation8 + $0x118] sm:$0xf]
    %v8357 = vld [vmem:[#allocation8 + $0x11c] sm:$0xf]
    %v8358 = vld [vmem:[#allocation8 + $0x120] sm:$0xf]
    %v8359 = vld [vmem:[#allocation8 + $0x124] sm:$0xf]
    %v8360 = vld [vmem:[#allocation8 + $0x128] sm:$0xf]
    %v8361 = vld [vmem:[#allocation8 + $0x12c] sm:$0xf]
    %v8362 = vld [vmem:[#allocation8 + $0x130] sm:$0xf]
    %v8363 = vld [vmem:[#allocation8 + $0x134] sm:$0xf]
    %v8364 = vld [vmem:[#allocation8 + $0x138] sm:$0xf]
    %v8365 = vld [vmem:[#allocation8 + $0x13c] sm:$0xf]
    %v8366 = vld [vmem:[#allocation8 + $0x140] sm:$0xf]
    %v8367 = vld [vmem:[#allocation8 + $0x144] sm:$0xf]
    %v8368 = vld [vmem:[#allocation8 + $0x148] sm:$0xf]
    %v8369 = vld [vmem:[#allocation8 + $0x14c] sm:$0xf]
    %v8370 = vld [vmem:[#allocation8 + $0x150] sm:$0xf]
    %v8371 = vld [vmem:[#allocation8 + $0x154] sm:$0xf]
    %v8372 = vld [vmem:[#allocation8 + $0x158] sm:$0xf]
    %v8373 = vld [vmem:[#allocation8 + $0x15c] sm:$0xf]
    %v8374 = vld [vmem:[#allocation8 + $0x160] sm:$0xf]
    %v8375 = vld [vmem:[#allocation8 + $0x164] sm:$0xf]
    %v8376 = vld [vmem:[#allocation8 + $0x168] sm:$0xf]
    %v8377 = vld [vmem:[#allocation8 + $0x16c] sm:$0xf]
    %v8378 = vld [vmem:[#allocation8 + $0x170] sm:$0xf]
    %v8379 = vld [vmem:[#allocation8 + $0x174] sm:$0xf]
    %v8380 = vld [vmem:[#allocation8 + $0x178] sm:$0xf]
    %v8381 = vld [vmem:[#allocation8 + $0x17c] sm:$0xf]
    %v8382 = vld [vmem:[#allocation8 + $0x180] sm:$0xf]
    %v8383 = vld [vmem:[#allocation8 + $0x184] sm:$0xf]
    %v8384 = vld [vmem:[#allocation8 + $0x188] sm:$0xf]
    %v8385 = vld [vmem:[#allocation8 + $0x18c] sm:$0xf]
    %v8386 = vld [vmem:[#allocation8 + $0x190] sm:$0xf]
    %v8387 = vld [vmem:[#allocation8 + $0x194] sm:$0xf]
    %v8388 = vld [vmem:[#allocation8 + $0x198] sm:$0xf]
    %v8389 = vld [vmem:[#allocation8 + $0x19c] sm:$0xf]
    %v8390 = vld [vmem:[#allocation8 + $0x1a0] sm:$0xf]
    %v8391 = vld [vmem:[#allocation8 + $0x1a4] sm:$0xf]
    %v8392 = vld [vmem:[#allocation8 + $0x1a8] sm:$0xf]
    %v8393 = vld [vmem:[#allocation8 + $0x1ac] sm:$0xf]
    %v8394 = vld [vmem:[#allocation8 + $0x1b0] sm:$0xf]
    %v8395 = vld [vmem:[#allocation8 + $0x1b4] sm:$0xf]
    %v8396 = vld [vmem:[#allocation8 + $0x1b8] sm:$0xf]
    %v8397 = vld [vmem:[#allocation8 + $0x1bc] sm:$0xf]
    %v8398 = vld [vmem:[#allocation8 + $0x1c0] sm:$0xf]
    %v8399 = vld [vmem:[#allocation8 + $0x1c4] sm:$0xf]
    %v8400 = vld [vmem:[#allocation8 + $0x1c8] sm:$0xf]
    %v8401 = vld [vmem:[#allocation8 + $0x1cc] sm:$0xf]
    %v8402 = vld [vmem:[#allocation8 + $0x1d0] sm:$0xf]
    %v8403 = vld [vmem:[#allocation8 + $0x1d4] sm:$0xf]
    %v8404 = vld [vmem:[#allocation8 + $0x1d8] sm:$0xf]
    %v8405 = vld [vmem:[#allocation8 + $0x1dc] sm:$0xf]
    %v8406 = vld [vmem:[#allocation8 + $0x1e0] sm:$0xf]
    %v8407 = vld [vmem:[#allocation8 + $0x1e4] sm:$0xf]
    %v8408 = vld [vmem:[#allocation8 + $0x1e8] sm:$0xf]
    %v8409 = vld [vmem:[#allocation8 + $0x1ec] sm:$0xf]
    %v8410 = vld [vmem:[#allocation8 + $0x1f0] sm:$0xf]
    %v8411 = vld [vmem:[#allocation8 + $0x1f4] sm:$0xf]
    %v8412 = vld [vmem:[#allocation8 + $0x1f8] sm:$0xf]
    %v8413 = vld [vmem:[#allocation8 + $0x1fc] sm:$0xf]
    %v8414 = vld [vmem:[#allocation8 + $0x200] sm:$0xf]
    %v8415 = vld [vmem:[#allocation8 + $0x204] sm:$0xf]
    %v8416 = vld [vmem:[#allocation8 + $0x208] sm:$0xf]
    %v8417 = vld [vmem:[#allocation8 + $0x20c] sm:$0xf]
    %v8418 = vld [vmem:[#allocation8 + $0x210] sm:$0xf]
    %v8419 = vld [vmem:[#allocation8 + $0x214] sm:$0xf]
    %v8420 = vld [vmem:[#allocation8 + $0x218] sm:$0xf]
    %v8421 = vld [vmem:[#allocation8 + $0x21c] sm:$0xf]
    %v8422 = vld [vmem:[#allocation8 + $0x220] sm:$0xf]
    %v8423 = vld [vmem:[#allocation8 + $0x224] sm:$0xf]
    %v8424 = vld [vmem:[#allocation8 + $0x228] sm:$0xf]
    %v8425 = vld [vmem:[#allocation8 + $0x22c] sm:$0xf]
    %v8426 = vld [vmem:[#allocation8 + $0x230] sm:$0xf]
    %v8427 = vld [vmem:[#allocation8 + $0x234] sm:$0xf]
    %v8428 = vld [vmem:[#allocation8 + $0x238] sm:$0xf]
    %v8429 = vld [vmem:[#allocation8 + $0x23c] sm:$0xf]
    %v8430 = vld [vmem:[#allocation8 + $0x240] sm:$0xf]
    %v8431 = vld [vmem:[#allocation8 + $0x244] sm:$0xf]
    %v8432 = vld [vmem:[#allocation8 + $0x248] sm:$0xf]
    %v8433 = vld [vmem:[#allocation8 + $0x24c] sm:$0xf]
    %v8434 = vld [vmem:[#allocation8 + $0x250] sm:$0xf]
    %v8435 = vld [vmem:[#allocation8 + $0x254] sm:$0xf]
    %v8436 = vld [vmem:[#allocation8 + $0x258] sm:$0xf]
    %v8437 = vld [vmem:[#allocation8 + $0x25c] sm:$0xf]
    %v8438 = vld [vmem:[#allocation8 + $0x260] sm:$0xf]
    %v8439 = vld [vmem:[#allocation8 + $0x264] sm:$0xf]
    %v8440 = vld [vmem:[#allocation8 + $0x268] sm:$0xf]
    %v8441 = vld [vmem:[#allocation8 + $0x26c] sm:$0xf]
    %v8442 = vld [vmem:[#allocation8 + $0x270] sm:$0xf]
    %v8443 = vld [vmem:[#allocation8 + $0x274] sm:$0xf]
    %v8444 = vld [vmem:[#allocation8 + $0x278] sm:$0xf]
    %v8445 = vld [vmem:[#allocation8 + $0x27c] sm:$0xf]
    %v8446 = vld [vmem:[#allocation8 + $0x280] sm:$0xf]
    %v8447 = vld [vmem:[#allocation8 + $0x284] sm:$0xf]
    %v8448 = vld [vmem:[#allocation8 + $0x288] sm:$0xf]
    %v8449 = vld [vmem:[#allocation8 + $0x28c] sm:$0xf]
    %v8450 = vld [vmem:[#allocation8 + $0x290] sm:$0xf]
    %v8451 = vld [vmem:[#allocation8 + $0x294] sm:$0xf]
    %v8452 = vld [vmem:[#allocation8 + $0x298] sm:$0xf]
    %v8453 = vld [vmem:[#allocation8 + $0x29c] sm:$0xf]
    %v8454 = vld [vmem:[#allocation8 + $0x2a0] sm:$0xf]
    %v8455 = vld [vmem:[#allocation8 + $0x2a4] sm:$0xf]
    %v8456 = vld [vmem:[#allocation8 + $0x2a8] sm:$0xf]
    %v8457 = vld [vmem:[#allocation8 + $0x2ac] sm:$0xf]
    %v8458 = vld [vmem:[#allocation8 + $0x2b0] sm:$0xf]
    %v8459 = vld [vmem:[#allocation8 + $0x2b4] sm:$0xf]
    %v8460 = vld [vmem:[#allocation8 + $0x2b8] sm:$0xf]
    %v8461 = vld [vmem:[#allocation8 + $0x2bc] sm:$0xf]
    %v8462 = vld [vmem:[#allocation8 + $0x2c0] sm:$0xf]
    %v8463 = vld [vmem:[#allocation8 + $0x2c4] sm:$0xf]
    %v8464 = vld [vmem:[#allocation8 + $0x2c8] sm:$0xf]
    %v8465 = vld [vmem:[#allocation8 + $0x2cc] sm:$0xf]
    %v8466 = vld [vmem:[#allocation8 + $0x2d0] sm:$0xf]
    %v8467 = vld [vmem:[#allocation8 + $0x2d4] sm:$0xf]
    %v8468 = vld [vmem:[#allocation8 + $0x2d8] sm:$0xf]
    %v8469 = vld [vmem:[#allocation8 + $0x2dc] sm:$0xf]
    %v8470 = vld [vmem:[#allocation8 + $0x2e0] sm:$0xf]
    %v8471 = vld [vmem:[#allocation8 + $0x2e4] sm:$0xf]
    %v8472 = vld [vmem:[#allocation8 + $0x2e8] sm:$0xf]
    %v8473 = vld [vmem:[#allocation8 + $0x2ec] sm:$0xf]
    %v8474 = vld [vmem:[#allocation8 + $0x2f0] sm:$0xf]
    %v8475 = vld [vmem:[#allocation8 + $0x2f4] sm:$0xf]
    %v8476 = vld [vmem:[#allocation8 + $0x2f8] sm:$0xf]
    %v8477 = vld [vmem:[#allocation8 + $0x2fc] sm:$0xf]
    %v8478 = vld [vmem:[#allocation8 + $0x300] sm:$0xf]
    %v8479 = vld [vmem:[#allocation8 + $0x304] sm:$0xf]
    %v8480 = vld [vmem:[#allocation8 + $0x308] sm:$0xf]
    %v8481 = vld [vmem:[#allocation8 + $0x30c] sm:$0xf]
    %v8482 = vld [vmem:[#allocation8 + $0x310] sm:$0xf]
    %v8483 = vld [vmem:[#allocation8 + $0x314] sm:$0xf]
    %v8484 = vld [vmem:[#allocation8 + $0x318] sm:$0xf]
    %v8485 = vld [vmem:[#allocation8 + $0x31c] sm:$0xf]
    %v8486 = vld [vmem:[#allocation8 + $0x320] sm:$0xf]
    %v8487 = vld [vmem:[#allocation8 + $0x324] sm:$0xf]
    %v8488 = vld [vmem:[#allocation8 + $0x328] sm:$0xf]
    %v8489 = vld [vmem:[#allocation8 + $0x32c] sm:$0xf]
    %v8490 = vld [vmem:[#allocation8 + $0x330] sm:$0xf]
    %v8491 = vld [vmem:[#allocation8 + $0x334] sm:$0xf]
    %v8492 = vld [vmem:[#allocation8 + $0x338] sm:$0xf]
    %v8493 = vld [vmem:[#allocation8 + $0x33c] sm:$0xf]
    %v8494 = vld [vmem:[#allocation8 + $0x340] sm:$0xf]
    %v8495 = vld [vmem:[#allocation8 + $0x344] sm:$0xf]
    %v8496 = vld [vmem:[#allocation8 + $0x348] sm:$0xf]
    %v8497 = vld [vmem:[#allocation8 + $0x34c] sm:$0xf]
    %v8498 = vld [vmem:[#allocation8 + $0x350] sm:$0xf]
    %v8499 = vld [vmem:[#allocation8 + $0x354] sm:$0xf]
    %v8500 = vld [vmem:[#allocation8 + $0x358] sm:$0xf]
    %v8501 = vld [vmem:[#allocation8 + $0x35c] sm:$0xf]
    %v8502 = vld [vmem:[#allocation8 + $0x360] sm:$0xf]
    %v8503 = vld [vmem:[#allocation8 + $0x364] sm:$0xf]
    %v8504 = vld [vmem:[#allocation8 + $0x368] sm:$0xf]
    %v8505 = vld [vmem:[#allocation8 + $0x36c] sm:$0xf]
    %v8506 = vld [vmem:[#allocation8 + $0x370] sm:$0xf]
    %v8507 = vld [vmem:[#allocation8 + $0x374] sm:$0xf]
    %v8508 = vld [vmem:[#allocation8 + $0x378] sm:$0xf]
    %v8509 = vld [vmem:[#allocation8 + $0x37c] sm:$0xf]
    %v8510 = vld [vmem:[#allocation8 + $0x380] sm:$0xf]
    %v8511 = vld [vmem:[#allocation8 + $0x384] sm:$0xf]
    %v8512 = vld [vmem:[#allocation8 + $0x388] sm:$0xf]
    %v8513 = vld [vmem:[#allocation8 + $0x38c] sm:$0xf]
    %v8514 = vld [vmem:[#allocation8 + $0x390] sm:$0xf]
    %v8515 = vld [vmem:[#allocation8 + $0x394] sm:$0xf]
    %v8516 = vld [vmem:[#allocation8 + $0x398] sm:$0xf]
    %v8517 = vld [vmem:[#allocation8 + $0x39c] sm:$0xf]
    %v8518 = vld [vmem:[#allocation8 + $0x3a0] sm:$0xf]
    %v8519 = vld [vmem:[#allocation8 + $0x3a4] sm:$0xf]
    %v8520 = vld [vmem:[#allocation8 + $0x3a8] sm:$0xf]
    %v8521 = vld [vmem:[#allocation8 + $0x3ac] sm:$0xf]
    %v8522 = vld [vmem:[#allocation8 + $0x3b0] sm:$0xf]
    %v8523 = vld [vmem:[#allocation8 + $0x3b4] sm:$0xf]
    %v8524 = vld [vmem:[#allocation8 + $0x3b8] sm:$0xf]
    %v8525 = vld [vmem:[#allocation8 + $0x3bc] sm:$0xf]
    %v8526 = vld [vmem:[#allocation8 + $0x3c0] sm:$0xf]
    %v8527 = vld [vmem:[#allocation8 + $0x3c4] sm:$0xf]
    %v8528 = vld [vmem:[#allocation8 + $0x3c8] sm:$0xf]
    %v8529 = vld [vmem:[#allocation8 + $0x3cc] sm:$0xf]
    %v8530 = vld [vmem:[#allocation8 + $0x3d0] sm:$0xf]
    %v8531 = vld [vmem:[#allocation8 + $0x3d4] sm:$0xf]
    %v8532 = vld [vmem:[#allocation8 + $0x3d8] sm:$0xf]
    %v8533 = vld [vmem:[#allocation8 + $0x3dc] sm:$0xf]
    %v8534 = vld [vmem:[#allocation8 + $0x3e0] sm:$0xf]
    %v8535 = vld [vmem:[#allocation8 + $0x3e4] sm:$0xf]
    %v8536 = vld [vmem:[#allocation8 + $0x3e8] sm:$0xf]
    %v8537 = vld [vmem:[#allocation8 + $0x3ec] sm:$0xf]
    %v8538 = vld [vmem:[#allocation8 + $0x3f0] sm:$0xf]
    %v8539 = vld [vmem:[#allocation8 + $0x3f4] sm:$0xf]
    %v8540 = vld [vmem:[#allocation8 + $0x3f8] sm:$0xf]
    %v8541 = vld [vmem:[#allocation8 + $0x3fc] sm:$0xf]
    %v8542 = vld [vmem:[#allocation8 + $0x400] sm:$0xf]
    %v8543 = vld [vmem:[#allocation8 + $0x404] sm:$0xf]
    %v8544 = vld [vmem:[#allocation8 + $0x408] sm:$0xf]
    %v8545 = vld [vmem:[#allocation8 + $0x40c] sm:$0xf]
    %v8546 = vld [vmem:[#allocation8 + $0x410] sm:$0xf]
    %v8547 = vld [vmem:[#allocation8 + $0x414] sm:$0xf]
    %v8548 = vld [vmem:[#allocation8 + $0x418] sm:$0xf]
    %v8549 = vld [vmem:[#allocation8 + $0x41c] sm:$0xf]
    %v8550 = vld [vmem:[#allocation8 + $0x420] sm:$0xf]
    %v8551 = vld [vmem:[#allocation8 + $0x424] sm:$0xf]
    %v8552 = vld [vmem:[#allocation8 + $0x428] sm:$0xf]
    %v8553 = vld [vmem:[#allocation8 + $0x42c] sm:$0xf]
    %v8554 = vld [vmem:[#allocation8 + $0x430] sm:$0xf]
    %v8555 = vld [vmem:[#allocation8 + $0x434] sm:$0xf]
    %v8556 = vld [vmem:[#allocation8 + $0x438] sm:$0xf]
    %v8557 = vld [vmem:[#allocation8 + $0x43c] sm:$0xf]
    %v8558 = vld [vmem:[#allocation8 + $0x440] sm:$0xf]
    %v8559 = vld [vmem:[#allocation8 + $0x444] sm:$0xf]
    %v8560 = vld [vmem:[#allocation8 + $0x448] sm:$0xf]
    %v8561 = vld [vmem:[#allocation8 + $0x44c] sm:$0xf]
    %v8562 = vld [vmem:[#allocation8 + $0x450] sm:$0xf]
    %v8563 = vld [vmem:[#allocation8 + $0x454] sm:$0xf]
    %v8564 = vld [vmem:[#allocation8 + $0x458] sm:$0xf]
    %v8565 = vld [vmem:[#allocation8 + $0x45c] sm:$0xf]
    %v8566 = vld [vmem:[#allocation8 + $0x460] sm:$0xf]
    %v8567 = vld [vmem:[#allocation8 + $0x464] sm:$0xf]
    %v8568 = vld [vmem:[#allocation8 + $0x468] sm:$0xf]
    %v8569 = vld [vmem:[#allocation8 + $0x46c] sm:$0xf]
    %v8570 = vld [vmem:[#allocation8 + $0x470] sm:$0xf]
    %v8571 = vld [vmem:[#allocation8 + $0x474] sm:$0xf]
    %v8572 = vld [vmem:[#allocation8 + $0x478] sm:$0xf]
    %v8573 = vld [vmem:[#allocation8 + $0x47c] sm:$0xf]
    %v8574 = vld [vmem:[%s10] sm:$0x1]
    %v8576 = vperm.slane %v8574, 0
    %v8578 = vpack.c.b16 %v8262, %v6409
    %v8579 = vpack.c.b16 %v8263, %v6409
    %v8580 = vpack.c.b16 %v8264, %v6410
    %v8581 = vpack.c.b16 %v8265, %v6410
    %v8582 = vpack.c.b16 %v8266, %v6411
    %v8583 = vpack.c.b16 %v8267, %v6411
    %v8584 = vpack.c.b16 %v8268, %v8262
    %v8585 = vpack.c.b16 %v8269, %v8263
    %v8586 = vpack.c.b16 %v8270, %v8264
    %v8587 = vpack.c.b16 %v8271, %v8265
    %v8588 = vpack.c.b16 %v8272, %v8266
    %v8589 = vpack.c.b16 %v8273, %v8267
    %v8590 = vpack.c.b16 %v6409, %v8268
    %v8591 = vpack.c.b16 %v6409, %v8269
    %v8592 = vpack.c.b16 %v6410, %v8270
    %v8593 = vpack.c.b16 %v6410, %v8271
    %v8594 = vpack.c.b16 %v6411, %v8272
    %v8595 = vpack.c.b16 %v6411, %v8273
    %v8596 = vpack.c.b16 %v8274, %v6409
    %v8597 = vpack.c.b16 %v8275, %v6409
    %v8598 = vpack.c.b16 %v8276, %v6410
    %v8599 = vpack.c.b16 %v8277, %v6410
    %v8600 = vpack.c.b16 %v8278, %v6411
    %v8601 = vpack.c.b16 %v8279, %v6411
    %v8602 = vpack.c.b16 %v8280, %v8274
    %v8603 = vpack.c.b16 %v8281, %v8275
    %v8604 = vpack.c.b16 %v8282, %v8276
    %v8605 = vpack.c.b16 %v8283, %v8277
    %v8606 = vpack.c.b16 %v8284, %v8278
    %v8607 = vpack.c.b16 %v8285, %v8279
    %v8608 = vpack.c.b16 %v6409, %v8280
    %v8609 = vpack.c.b16 %v6409, %v8281
    %v8610 = vpack.c.b16 %v6410, %v8282
    %v8611 = vpack.c.b16 %v6410, %v8283
    %v8612 = vpack.c.b16 %v6411, %v8284
    %v8613 = vpack.c.b16 %v6411, %v8285
    %v8938 = vunpack.c.l.b16 %v8286
    %v8939 = vunpack.c.l.b16 %v8287
    %v8940 = vunpack.c.l.b16 %v8288
    %v8941 = vunpack.c.l.b16 %v8289
    %v8942 = vunpack.c.l.b16 %v8290
    %v8943 = vunpack.c.l.b16 %v8291
    %v8944 = vunpack.c.l.b16 %v8292
    %v8945 = vunpack.c.l.b16 %v8293
    %v8946 = vunpack.c.l.b16 %v8294
    %v8947 = vunpack.c.l.b16 %v8295
    %v8948 = vunpack.c.l.b16 %v8296
    %v8949 = vunpack.c.l.b16 %v8297
    %v8950 = vunpack.c.l.b16 %v8298
    %v8951 = vunpack.c.l.b16 %v8299
    %v8952 = vunpack.c.l.b16 %v8300
    %v8953 = vunpack.c.l.b16 %v8301
    %v8954 = vunpack.c.l.b16 %v8302
    %v8955 = vunpack.c.l.b16 %v8303
    %v8956 = vunpack.c.l.b16 %v8304
    %v8957 = vunpack.c.l.b16 %v8305
    %v8958 = vunpack.c.l.b16 %v8306
    %v8959 = vunpack.c.l.b16 %v8307
    %v8960 = vunpack.c.l.b16 %v8308
    %v8961 = vunpack.c.l.b16 %v8309
    %v8962 = vunpack.c.l.b16 %v8310
    %v8963 = vunpack.c.l.b16 %v8311
    %v8964 = vunpack.c.l.b16 %v8312
    %v8965 = vunpack.c.l.b16 %v8313
    %v8966 = vunpack.c.l.b16 %v8314
    %v8967 = vunpack.c.l.b16 %v8315
    %v8968 = vunpack.c.l.b16 %v8316
    %v8969 = vunpack.c.l.b16 %v8317
    %v8970 = vunpack.c.l.b16 %v8318
    %v8971 = vunpack.c.l.b16 %v8319
    %v8972 = vunpack.c.l.b16 %v8320
    %v8973 = vunpack.c.l.b16 %v8321
    %v8974 = vunpack.c.l.b16 %v8322
    %v8975 = vunpack.c.l.b16 %v8323
    %v8976 = vunpack.c.l.b16 %v8324
    %v8977 = vunpack.c.l.b16 %v8325
    %v8978 = vunpack.c.l.b16 %v8326
    %v8979 = vunpack.c.l.b16 %v8327
    %v8980 = vunpack.c.l.b16 %v8328
    %v8981 = vunpack.c.l.b16 %v8329
    %v8982 = vunpack.c.l.b16 %v8330
    %v8983 = vunpack.c.l.b16 %v8331
    %v8984 = vunpack.c.l.b16 %v8332
    %v8985 = vunpack.c.l.b16 %v8333
    %v8986 = vunpack.c.l.b16 %v8334
    %v8987 = vunpack.c.l.b16 %v8335
    %v8988 = vunpack.c.l.b16 %v8336
    %v8989 = vunpack.c.l.b16 %v8337
    %v8990 = vunpack.c.l.b16 %v8338
    %v8991 = vunpack.c.l.b16 %v8339
    %v8992 = vunpack.c.l.b16 %v8340
    %v8993 = vunpack.c.l.b16 %v8341
    %v8994 = vunpack.c.l.b16 %v8342
    %v8995 = vunpack.c.l.b16 %v8343
    %v8996 = vunpack.c.l.b16 %v8344
    %v8997 = vunpack.c.l.b16 %v8345
    %v8998 = vunpack.c.l.b16 %v8346
    %v8999 = vunpack.c.l.b16 %v8347
    %v9000 = vunpack.c.l.b16 %v8348
    %v9001 = vunpack.c.l.b16 %v8349
    %v9002 = vunpack.c.l.b16 %v8350
    %v9003 = vunpack.c.l.b16 %v8351
    %v9004 = vunpack.c.l.b16 %v8352
    %v9005 = vunpack.c.l.b16 %v8353
    %v9006 = vunpack.c.l.b16 %v8354
    %v9007 = vunpack.c.l.b16 %v8355
    %v9008 = vunpack.c.l.b16 %v8356
    %v9009 = vunpack.c.l.b16 %v8357
    %v9010 = vunpack.c.l.b16 %v8358
    %v9011 = vunpack.c.l.b16 %v8359
    %v9012 = vunpack.c.l.b16 %v8360
    %v9013 = vunpack.c.l.b16 %v8361
    %v9014 = vunpack.c.l.b16 %v8362
    %v9015 = vunpack.c.l.b16 %v8363
    %v9016 = vunpack.c.l.b16 %v8364
    %v9017 = vunpack.c.l.b16 %v8365
    %v9018 = vunpack.c.l.b16 %v8366
    %v9019 = vunpack.c.l.b16 %v8367
    %v9020 = vunpack.c.l.b16 %v8368
    %v9021 = vunpack.c.l.b16 %v8369
    %v9022 = vunpack.c.l.b16 %v8370
    %v9023 = vunpack.c.l.b16 %v8371
    %v9024 = vunpack.c.l.b16 %v8372
    %v9025 = vunpack.c.l.b16 %v8373
    %v9026 = vunpack.c.l.b16 %v8374
    %v9027 = vunpack.c.l.b16 %v8375
    %v9028 = vunpack.c.l.b16 %v8376
    %v9029 = vunpack.c.l.b16 %v8377
    %v9030 = vunpack.c.l.b16 %v8378
    %v9031 = vunpack.c.l.b16 %v8379
    %v9032 = vunpack.c.l.b16 %v8380
    %v9033 = vunpack.c.l.b16 %v8381
    %v9034 = vunpack.c.l.b16 %v8382
    %v9035 = vunpack.c.l.b16 %v8383
    %v9036 = vunpack.c.l.b16 %v8384
    %v9037 = vunpack.c.l.b16 %v8385
    %v9038 = vunpack.c.l.b16 %v8386
    %v9039 = vunpack.c.l.b16 %v8387
    %v9040 = vunpack.c.l.b16 %v8388
    %v9041 = vunpack.c.l.b16 %v8389
    %v9042 = vunpack.c.l.b16 %v8390
    %v9043 = vunpack.c.l.b16 %v8391
    %v9044 = vunpack.c.l.b16 %v8392
    %v9045 = vunpack.c.l.b16 %v8393
    %v9046 = vunpack.c.l.b16 %v8394
    %v9047 = vunpack.c.l.b16 %v8395
    %v9048 = vunpack.c.l.b16 %v8396
    %v9049 = vunpack.c.l.b16 %v8397
    %v9050 = vunpack.c.l.b16 %v8398
    %v9051 = vunpack.c.l.b16 %v8399
    %v9052 = vunpack.c.l.b16 %v8400
    %v9053 = vunpack.c.l.b16 %v8401
    %v9054 = vunpack.c.l.b16 %v8402
    %v9055 = vunpack.c.l.b16 %v8403
    %v9056 = vunpack.c.l.b16 %v8404
    %v9057 = vunpack.c.l.b16 %v8405
    %v9058 = vunpack.c.l.b16 %v8406
    %v9059 = vunpack.c.l.b16 %v8407
    %v9060 = vunpack.c.l.b16 %v8408
    %v9061 = vunpack.c.l.b16 %v8409
    %v9062 = vunpack.c.l.b16 %v8410
    %v9063 = vunpack.c.l.b16 %v8411
    %v9064 = vunpack.c.l.b16 %v8412
    %v9065 = vunpack.c.l.b16 %v8413
    %v9066 = vunpack.c.l.b16 %v8414
    %v9067 = vunpack.c.l.b16 %v8415
    %v9068 = vunpack.c.l.b16 %v8416
    %v9069 = vunpack.c.l.b16 %v8417
    %v9070 = vunpack.c.l.b16 %v8418
    %v9071 = vunpack.c.l.b16 %v8419
    %v9072 = vunpack.c.l.b16 %v8420
    %v9073 = vunpack.c.l.b16 %v8421
    %v9074 = vunpack.c.l.b16 %v8422
    %v9075 = vunpack.c.l.b16 %v8423
    %v9076 = vunpack.c.l.b16 %v8424
    %v9077 = vunpack.c.l.b16 %v8425
    %v9078 = vunpack.c.l.b16 %v8426
    %v9079 = vunpack.c.l.b16 %v8427
    %v9080 = vunpack.c.l.b16 %v8428
    %v9081 = vunpack.c.l.b16 %v8429
    %v9082 = vunpack.c.l.b16 %v8430
    %v9083 = vunpack.c.l.b16 %v8431
    %v9084 = vunpack.c.l.b16 %v8432
    %v9085 = vunpack.c.l.b16 %v8433
    %v9086 = vunpack.c.l.b16 %v8434
    %v9087 = vunpack.c.l.b16 %v8435
    %v9088 = vunpack.c.l.b16 %v8436
    %v9089 = vunpack.c.l.b16 %v8437
    %v9090 = vunpack.c.l.b16 %v8438
    %v9091 = vunpack.c.l.b16 %v8439
    %v9092 = vunpack.c.l.b16 %v8440
    %v9093 = vunpack.c.l.b16 %v8441
    %v9094 = vunpack.c.l.b16 %v8442
    %v9095 = vunpack.c.l.b16 %v8443
    %v9096 = vunpack.c.l.b16 %v8444
    %v9097 = vunpack.c.l.b16 %v8445
    %v9098 = vunpack.c.l.b16 %v8446
    %v9099 = vunpack.c.l.b16 %v8447
    %v9100 = vunpack.c.l.b16 %v8448
    %v9101 = vunpack.c.l.b16 %v8449
    %v9102 = vunpack.c.l.b16 %v8450
    %v9103 = vunpack.c.l.b16 %v8451
    %v9104 = vunpack.c.l.b16 %v8452
    %v9105 = vunpack.c.l.b16 %v8453
    %v9106 = vunpack.c.l.b16 %v8454
    %v9107 = vunpack.c.l.b16 %v8455
    %v9108 = vunpack.c.l.b16 %v8456
    %v9109 = vunpack.c.l.b16 %v8457
    %v9110 = vunpack.c.l.b16 %v8458
    %v9111 = vunpack.c.l.b16 %v8459
    %v9112 = vunpack.c.l.b16 %v8460
    %v9113 = vunpack.c.l.b16 %v8461
    %v9114 = vunpack.c.l.b16 %v8462
    %v9115 = vunpack.c.l.b16 %v8463
    %v9116 = vunpack.c.l.b16 %v8464
    %v9117 = vunpack.c.l.b16 %v8465
    %v9118 = vunpack.c.l.b16 %v8466
    %v9119 = vunpack.c.l.b16 %v8467
    %v9120 = vunpack.c.l.b16 %v8468
    %v9121 = vunpack.c.l.b16 %v8469
    %v9122 = vunpack.c.l.b16 %v8470
    %v9123 = vunpack.c.l.b16 %v8471
    %v9124 = vunpack.c.l.b16 %v8472
    %v9125 = vunpack.c.l.b16 %v8473
    %v9126 = vunpack.c.l.b16 %v8474
    %v9127 = vunpack.c.l.b16 %v8475
    %v9128 = vunpack.c.l.b16 %v8476
    %v9129 = vunpack.c.l.b16 %v8477
    %v9130 = vunpack.c.l.b16 %v8478
    %v9131 = vunpack.c.l.b16 %v8479
    %v9132 = vunpack.c.l.b16 %v8480
    %v9133 = vunpack.c.l.b16 %v8481
    %v9134 = vunpack.c.l.b16 %v8482
    %v9135 = vunpack.c.l.b16 %v8483
    %v9136 = vunpack.c.l.b16 %v8484
    %v9137 = vunpack.c.l.b16 %v8485
    %v9138 = vunpack.c.l.b16 %v8486
    %v9139 = vunpack.c.l.b16 %v8487
    %v9140 = vunpack.c.l.b16 %v8488
    %v9141 = vunpack.c.l.b16 %v8489
    %v9142 = vunpack.c.l.b16 %v8490
    %v9143 = vunpack.c.l.b16 %v8491
    %v9144 = vunpack.c.l.b16 %v8492
    %v9145 = vunpack.c.l.b16 %v8493
    %v9146 = vunpack.c.l.b16 %v8494
    %v9147 = vunpack.c.l.b16 %v8495
    %v9148 = vunpack.c.l.b16 %v8496
    %v9149 = vunpack.c.l.b16 %v8497
    %v9150 = vunpack.c.l.b16 %v8498
    %v9151 = vunpack.c.l.b16 %v8499
    %v9152 = vunpack.c.l.b16 %v8500
    %v9153 = vunpack.c.l.b16 %v8501
    %v9154 = vunpack.c.l.b16 %v8502
    %v9155 = vunpack.c.l.b16 %v8503
    %v9156 = vunpack.c.l.b16 %v8504
    %v9157 = vunpack.c.l.b16 %v8505
    %v9158 = vunpack.c.l.b16 %v8506
    %v9159 = vunpack.c.l.b16 %v8507
    %v9160 = vunpack.c.l.b16 %v8508
    %v9161 = vunpack.c.l.b16 %v8509
    %v9162 = vunpack.c.l.b16 %v8510
    %v9163 = vunpack.c.l.b16 %v8511
    %v9164 = vunpack.c.l.b16 %v8512
    %v9165 = vunpack.c.l.b16 %v8513
    %v9166 = vunpack.c.l.b16 %v8514
    %v9167 = vunpack.c.l.b16 %v8515
    %v9168 = vunpack.c.l.b16 %v8516
    %v9169 = vunpack.c.l.b16 %v8517
    %v9170 = vunpack.c.l.b16 %v8518
    %v9171 = vunpack.c.l.b16 %v8519
    %v9172 = vunpack.c.l.b16 %v8520
    %v9173 = vunpack.c.l.b16 %v8521
    %v9174 = vunpack.c.l.b16 %v8522
    %v9175 = vunpack.c.l.b16 %v8523
    %v9176 = vunpack.c.l.b16 %v8524
    %v9177 = vunpack.c.l.b16 %v8525
    %v9178 = vunpack.c.l.b16 %v8526
    %v9179 = vunpack.c.l.b16 %v8527
    %v9180 = vunpack.c.l.b16 %v8528
    %v9181 = vunpack.c.l.b16 %v8529
    %v9182 = vunpack.c.l.b16 %v8530
    %v9183 = vunpack.c.l.b16 %v8531
    %v9184 = vunpack.c.l.b16 %v8532
    %v9185 = vunpack.c.l.b16 %v8533
    %v9186 = vunpack.c.l.b16 %v8534
    %v9187 = vunpack.c.l.b16 %v8535
    %v9188 = vunpack.c.l.b16 %v8536
    %v9189 = vunpack.c.l.b16 %v8537
    %v9190 = vunpack.c.l.b16 %v8538
    %v9191 = vunpack.c.l.b16 %v8539
    %v9192 = vunpack.c.l.b16 %v8540
    %v9193 = vunpack.c.l.b16 %v8541
    %v9194 = vunpack.c.l.b16 %v8542
    %v9195 = vunpack.c.l.b16 %v8543
    %v9196 = vunpack.c.l.b16 %v8544
    %v9197 = vunpack.c.l.b16 %v8545
    %v9198 = vunpack.c.l.b16 %v8546
    %v9199 = vunpack.c.l.b16 %v8547
    %v9200 = vunpack.c.l.b16 %v8548
    %v9201 = vunpack.c.l.b16 %v8549
    %v9202 = vunpack.c.l.b16 %v8550
    %v9203 = vunpack.c.l.b16 %v8551
    %v9204 = vunpack.c.l.b16 %v8552
    %v9205 = vunpack.c.l.b16 %v8553
    %v9206 = vunpack.c.l.b16 %v8554
    %v9207 = vunpack.c.l.b16 %v8555
    %v9208 = vunpack.c.l.b16 %v8556
    %v9209 = vunpack.c.l.b16 %v8557
    %v9210 = vunpack.c.l.b16 %v8558
    %v9211 = vunpack.c.l.b16 %v8559
    %v9212 = vunpack.c.l.b16 %v8560
    %v9213 = vunpack.c.l.b16 %v8561
    %v9214 = vunpack.c.l.b16 %v8562
    %v9215 = vunpack.c.l.b16 %v8563
    %v9216 = vunpack.c.l.b16 %v8564
    %v9217 = vunpack.c.l.b16 %v8565
    %v9218 = vunpack.c.l.b16 %v8566
    %v9219 = vunpack.c.l.b16 %v8567
    %v9220 = vunpack.c.l.b16 %v8568
    %v9221 = vunpack.c.l.b16 %v8569
    %v9222 = vunpack.c.l.b16 %v8570
    %v9223 = vunpack.c.l.b16 %v8571
    %v9224 = vunpack.c.l.b16 %v8572
    %v9225 = vunpack.c.l.b16 %v8573
    %v9226 = vpack.c.b16 %v8939, %v8938
    %v9227 = vpack.c.b16 %v8941, %v8940
    %v9228 = vpack.c.b16 %v8943, %v8942
    %v9229 = vpack.c.b16 %v8945, %v8944
    %v9230 = vpack.c.b16 %v8947, %v8946
    %v9231 = vpack.c.b16 %v8949, %v8948
    %v9232 = vpack.c.b16 %v8951, %v8950
    %v9233 = vpack.c.b16 %v8953, %v8952
    %v9234 = vpack.c.b16 %v8955, %v8954
    %v9235 = vpack.c.b16 %v8957, %v8956
    %v9236 = vpack.c.b16 %v8959, %v8958
    %v9237 = vpack.c.b16 %v8961, %v8960
    %v9238 = vpack.c.b16 %v8963, %v8962
    %v9239 = vpack.c.b16 %v8965, %v8964
    %v9240 = vpack.c.b16 %v8967, %v8966
    %v9241 = vpack.c.b16 %v8969, %v8968
    %v9242 = vpack.c.b16 %v8971, %v8970
    %v9243 = vpack.c.b16 %v8973, %v8972
    %v9244 = vpack.c.b16 %v8975, %v8974
    %v9245 = vpack.c.b16 %v8977, %v8976
    %v9246 = vpack.c.b16 %v8979, %v8978
    %v9247 = vpack.c.b16 %v8981, %v8980
    %v9248 = vpack.c.b16 %v8983, %v8982
    %v9249 = vpack.c.b16 %v8985, %v8984
    %v9250 = vpack.c.b16 %v8987, %v8986
    %v9251 = vpack.c.b16 %v8989, %v8988
    %v9252 = vpack.c.b16 %v8991, %v8990
    %v9253 = vpack.c.b16 %v8993, %v8992
    %v9254 = vpack.c.b16 %v8995, %v8994
    %v9255 = vpack.c.b16 %v8997, %v8996
    %v9256 = vpack.c.b16 %v8999, %v8998
    %v9257 = vpack.c.b16 %v9001, %v9000
    %v9258 = vpack.c.b16 %v9003, %v9002
    %v9259 = vpack.c.b16 %v9005, %v9004
    %v9260 = vpack.c.b16 %v9007, %v9006
    %v9261 = vpack.c.b16 %v9009, %v9008
    %v9262 = vpack.c.b16 %v9011, %v9010
    %v9263 = vpack.c.b16 %v9013, %v9012
    %v9264 = vpack.c.b16 %v9015, %v9014
    %v9265 = vpack.c.b16 %v9017, %v9016
    %v9266 = vpack.c.b16 %v9019, %v9018
    %v9267 = vpack.c.b16 %v9021, %v9020
    %v9268 = vpack.c.b16 %v9023, %v9022
    %v9269 = vpack.c.b16 %v9025, %v9024
    %v9270 = vpack.c.b16 %v9027, %v9026
    %v9271 = vpack.c.b16 %v9029, %v9028
    %v9272 = vpack.c.b16 %v9031, %v9030
    %v9273 = vpack.c.b16 %v9033, %v9032
    %v9274 = vpack.c.b16 %v9035, %v9034
    %v9275 = vpack.c.b16 %v9037, %v9036
    %v9276 = vpack.c.b16 %v9039, %v9038
    %v9277 = vpack.c.b16 %v9041, %v9040
    %v9278 = vpack.c.b16 %v9043, %v9042
    %v9279 = vpack.c.b16 %v9045, %v9044
    %v9280 = vpack.c.b16 %v9047, %v9046
    %v9281 = vpack.c.b16 %v9049, %v9048
    %v9282 = vpack.c.b16 %v9051, %v9050
    %v9283 = vpack.c.b16 %v9053, %v9052
    %v9284 = vpack.c.b16 %v9055, %v9054
    %v9285 = vpack.c.b16 %v9057, %v9056
    %v9286 = vpack.c.b16 %v9059, %v9058
    %v9287 = vpack.c.b16 %v9061, %v9060
    %v9288 = vpack.c.b16 %v9063, %v9062
    %v9289 = vpack.c.b16 %v9065, %v9064
    %v9290 = vpack.c.b16 %v9067, %v9066
    %v9291 = vpack.c.b16 %v9069, %v9068
    %v9292 = vpack.c.b16 %v9071, %v9070
    %v9293 = vpack.c.b16 %v9073, %v9072
    %v9294 = vpack.c.b16 %v9075, %v9074
    %v9295 = vpack.c.b16 %v9077, %v9076
    %v9296 = vpack.c.b16 %v9079, %v9078
    %v9297 = vpack.c.b16 %v9081, %v9080
    %v9298 = vpack.c.b16 %v9083, %v9082
    %v9299 = vpack.c.b16 %v9085, %v9084
    %v9300 = vpack.c.b16 %v9087, %v9086
    %v9301 = vpack.c.b16 %v9089, %v9088
    %v9302 = vpack.c.b16 %v9091, %v9090
    %v9303 = vpack.c.b16 %v9093, %v9092
    %v9304 = vpack.c.b16 %v9095, %v9094
    %v9305 = vpack.c.b16 %v9097, %v9096
    %v9306 = vpack.c.b16 %v9099, %v9098
    %v9307 = vpack.c.b16 %v9101, %v9100
    %v9308 = vpack.c.b16 %v9103, %v9102
    %v9309 = vpack.c.b16 %v9105, %v9104
    %v9310 = vpack.c.b16 %v9107, %v9106
    %v9311 = vpack.c.b16 %v9109, %v9108
    %v9312 = vpack.c.b16 %v9111, %v9110
    %v9313 = vpack.c.b16 %v9113, %v9112
    %v9314 = vpack.c.b16 %v9115, %v9114
    %v9315 = vpack.c.b16 %v9117, %v9116
    %v9316 = vpack.c.b16 %v9119, %v9118
    %v9317 = vpack.c.b16 %v9121, %v9120
    %v9318 = vpack.c.b16 %v9123, %v9122
    %v9319 = vpack.c.b16 %v9125, %v9124
    %v9320 = vpack.c.b16 %v9127, %v9126
    %v9321 = vpack.c.b16 %v9129, %v9128
    %v9322 = vpack.c.b16 %v9131, %v9130
    %v9323 = vpack.c.b16 %v9133, %v9132
    %v9324 = vpack.c.b16 %v9135, %v9134
    %v9325 = vpack.c.b16 %v9137, %v9136
    %v9326 = vpack.c.b16 %v9139, %v9138
    %v9327 = vpack.c.b16 %v9141, %v9140
    %v9328 = vpack.c.b16 %v9143, %v9142
    %v9329 = vpack.c.b16 %v9145, %v9144
    %v9330 = vpack.c.b16 %v9147, %v9146
    %v9331 = vpack.c.b16 %v9149, %v9148
    %v9332 = vpack.c.b16 %v9151, %v9150
    %v9333 = vpack.c.b16 %v9153, %v9152
    %v9334 = vpack.c.b16 %v9155, %v9154
    %v9335 = vpack.c.b16 %v9157, %v9156
    %v9336 = vpack.c.b16 %v9159, %v9158
    %v9337 = vpack.c.b16 %v9161, %v9160
    %v9338 = vpack.c.b16 %v9163, %v9162
    %v9339 = vpack.c.b16 %v9165, %v9164
    %v9340 = vpack.c.b16 %v9167, %v9166
    %v9341 = vpack.c.b16 %v9169, %v9168
    %v9342 = vpack.c.b16 %v9171, %v9170
    %v9343 = vpack.c.b16 %v9173, %v9172
    %v9344 = vpack.c.b16 %v9175, %v9174
    %v9345 = vpack.c.b16 %v9177, %v9176
    %v9346 = vpack.c.b16 %v9179, %v9178
    %v9347 = vpack.c.b16 %v9181, %v9180
    %v9348 = vpack.c.b16 %v9183, %v9182
    %v9349 = vpack.c.b16 %v9185, %v9184
    %v9350 = vpack.c.b16 %v9187, %v9186
    %v9351 = vpack.c.b16 %v9189, %v9188
    %v9352 = vpack.c.b16 %v9191, %v9190
    %v9353 = vpack.c.b16 %v9193, %v9192
    %v9354 = vpack.c.b16 %v9195, %v9194
    %v9355 = vpack.c.b16 %v9197, %v9196
    %v9356 = vpack.c.b16 %v9199, %v9198
    %v9357 = vpack.c.b16 %v9201, %v9200
    %v9358 = vpack.c.b16 %v9203, %v9202
    %v9359 = vpack.c.b16 %v9205, %v9204
    %v9360 = vpack.c.b16 %v9207, %v9206
    %v9361 = vpack.c.b16 %v9209, %v9208
    %v9362 = vpack.c.b16 %v9211, %v9210
    %v9363 = vpack.c.b16 %v9213, %v9212
    %v9364 = vpack.c.b16 %v9215, %v9214
    %v9365 = vpack.c.b16 %v9217, %v9216
    %v9366 = vpack.c.b16 %v9219, %v9218
    %v9367 = vpack.c.b16 %v9221, %v9220
    %v9368 = vpack.c.b16 %v9223, %v9222
    %v9369 = vpack.c.b16 %v9225, %v9224
    %9514 = vmatpush.bf16.msra.mxu0 %v9233
    %9515 = vmatpush.bf16.msra.mxu0 %v9232
    %9516 = vmatpush.bf16.msra.mxu0 %v9231
    %9517 = vmatpush.bf16.msra.mxu0 %v9230
    %9518 = vmatpush.bf16.msra.mxu0 %v9229
    %9519 = vmatpush.bf16.msra.mxu0 %v9228
    %9520 = vmatpush.bf16.msra.mxu0 %v9227
    %9521 = vmatpush.bf16.msra.mxu0 %v9226
    %9522 = vmatmul.bf16.gmra.mxu0 %v8578
    %v9523 = vpop.f32.mrf.mxu0
    %v9524 = vadd.f32 %v8576, %v9523
    %v9525 = vpop.f32.mrf.mxu0
    %v9526 = vadd.f32 %v8576, %v9525
    %9527 = vmatmul.bf16.gmra.mxu0 %v8596
    %v9528 = vpop.f32.mrf.mxu0
    %v9529 = vadd.f32 %v8576, %v9528
    %v9530 = vpop.f32.mrf.mxu0
    %v9531 = vadd.f32 %v8576, %v9530
    %9532 = vdwg.mxu0
    %9533 = vmatpush.bf16.msra.mxu0 %v9241
    %9534 = vmatpush.bf16.msra.mxu0 %v9240
    %9535 = vmatpush.bf16.msra.mxu0 %v9239
    %9536 = vmatpush.bf16.msra.mxu0 %v9238
    %9537 = vmatpush.bf16.msra.mxu0 %v9237
    %9538 = vmatpush.bf16.msra.mxu0 %v9236
    %9539 = vmatpush.bf16.msra.mxu0 %v9235
    %9540 = vmatpush.bf16.msra.mxu0 %v9234
    %9541 = vmatmul.bf16.gmra.mxu0 %v8579
    %v9542 = vpop.f32.mrf.mxu0
    %v9543 = vadd.f32 %v9524, %v9542
    %v9544 = vpop.f32.mrf.mxu0
    %v9545 = vadd.f32 %v9526, %v9544
    %9546 = vmatmul.bf16.gmra.mxu0 %v8597
    %v9547 = vpop.f32.mrf.mxu0
    %v9548 = vadd.f32 %v9529, %v9547
    %v9549 = vpop.f32.mrf.mxu0
    %v9550 = vadd.f32 %v9531, %v9549
    %9551 = vdwg.mxu0
    %9552 = vmatpush.bf16.msra.mxu0 %v9249
    %9553 = vmatpush.bf16.msra.mxu0 %v9248
    %9554 = vmatpush.bf16.msra.mxu0 %v9247
    %9555 = vmatpush.bf16.msra.mxu0 %v9246
    %9556 = vmatpush.bf16.msra.mxu0 %v9245
    %9557 = vmatpush.bf16.msra.mxu0 %v9244
    %9558 = vmatpush.bf16.msra.mxu0 %v9243
    %9559 = vmatpush.bf16.msra.mxu0 %v9242
    %9560 = vmatmul.bf16.gmra.mxu0 %v8580
    %v9561 = vpop.f32.mrf.mxu0
    %v9562 = vadd.f32 %v9543, %v9561
    %v9563 = vpop.f32.mrf.mxu0
    %v9564 = vadd.f32 %v9545, %v9563
    %9565 = vmatmul.bf16.gmra.mxu0 %v8598
    %v9566 = vpop.f32.mrf.mxu0
    %v9567 = vadd.f32 %v9548, %v9566
    %v9568 = vpop.f32.mrf.mxu0
    %v9569 = vadd.f32 %v9550, %v9568
    %9570 = vdwg.mxu0
    %9571 = vmatpush.bf16.msra.mxu0 %v9257
    %9572 = vmatpush.bf16.msra.mxu0 %v9256
    %9573 = vmatpush.bf16.msra.mxu0 %v9255
    %9574 = vmatpush.bf16.msra.mxu0 %v9254
    %9575 = vmatpush.bf16.msra.mxu0 %v9253
    %9576 = vmatpush.bf16.msra.mxu0 %v9252
    %9577 = vmatpush.bf16.msra.mxu0 %v9251
    %9578 = vmatpush.bf16.msra.mxu0 %v9250
    %9579 = vmatmul.bf16.gmra.mxu0 %v8581
    %v9580 = vpop.f32.mrf.mxu0
    %v9581 = vadd.f32 %v9562, %v9580
    %v9582 = vpop.f32.mrf.mxu0
    %v9583 = vadd.f32 %v9564, %v9582
    %9584 = vmatmul.bf16.gmra.mxu0 %v8599
    %v9585 = vpop.f32.mrf.mxu0
    %v9586 = vadd.f32 %v9567, %v9585
    %v9587 = vpop.f32.mrf.mxu0
    %v9588 = vadd.f32 %v9569, %v9587
    %9589 = vdwg.mxu0
    %9590 = vmatpush.bf16.msra.mxu0 %v9265
    %9591 = vmatpush.bf16.msra.mxu0 %v9264
    %9592 = vmatpush.bf16.msra.mxu0 %v9263
    %9593 = vmatpush.bf16.msra.mxu0 %v9262
    %9594 = vmatpush.bf16.msra.mxu0 %v9261
    %9595 = vmatpush.bf16.msra.mxu0 %v9260
    %9596 = vmatpush.bf16.msra.mxu0 %v9259
    %9597 = vmatpush.bf16.msra.mxu0 %v9258
    %9598 = vmatmul.bf16.gmra.mxu0 %v8582
    %v9599 = vpop.f32.mrf.mxu0
    %v9600 = vadd.f32 %v9581, %v9599
    %v9601 = vpop.f32.mrf.mxu0
    %v9602 = vadd.f32 %v9583, %v9601
    %9603 = vmatmul.bf16.gmra.mxu0 %v8600
    %v9604 = vpop.f32.mrf.mxu0
    %v9605 = vadd.f32 %v9586, %v9604
    %v9606 = vpop.f32.mrf.mxu0
    %v9607 = vadd.f32 %v9588, %v9606
    %9608 = vdwg.mxu0
    %9609 = vmatpush.bf16.msra.mxu0 %v9273
    %9610 = vmatpush.bf16.msra.mxu0 %v9272
    %9611 = vmatpush.bf16.msra.mxu0 %v9271
    %9612 = vmatpush.bf16.msra.mxu0 %v9270
    %9613 = vmatpush.bf16.msra.mxu0 %v9269
    %9614 = vmatpush.bf16.msra.mxu0 %v9268
    %9615 = vmatpush.bf16.msra.mxu0 %v9267
    %9616 = vmatpush.bf16.msra.mxu0 %v9266
    %9617 = vmatmul.bf16.gmra.mxu0 %v8583
    %v9618 = vpop.f32.mrf.mxu0
    %v9619 = vadd.f32 %v9600, %v9618
    %v9620 = vpop.f32.mrf.mxu0
    %v9621 = vadd.f32 %v9602, %v9620
    %9622 = vmatmul.bf16.gmra.mxu0 %v8601
    %v9623 = vpop.f32.mrf.mxu0
    %v9624 = vadd.f32 %v9605, %v9623
    %v9625 = vpop.f32.mrf.mxu0
    %v9626 = vadd.f32 %v9607, %v9625
    %9627 = vdwg.mxu0
    %9628 = vmatpush.bf16.msra.mxu0 %v9281
    %9629 = vmatpush.bf16.msra.mxu0 %v9280
    %9630 = vmatpush.bf16.msra.mxu0 %v9279
    %9631 = vmatpush.bf16.msra.mxu0 %v9278
    %9632 = vmatpush.bf16.msra.mxu0 %v9277
    %9633 = vmatpush.bf16.msra.mxu0 %v9276
    %9634 = vmatpush.bf16.msra.mxu0 %v9275
    %9635 = vmatpush.bf16.msra.mxu0 %v9274
    %9636 = vmatmul.bf16.gmra.mxu0 %v8584
    %v9637 = vpop.f32.mrf.mxu0
    %v9638 = vadd.f32 %v9619, %v9637
    %v9639 = vpop.f32.mrf.mxu0
    %v9640 = vadd.f32 %v9621, %v9639
    %9641 = vmatmul.bf16.gmra.mxu0 %v8602
    %v9642 = vpop.f32.mrf.mxu0
    %v9643 = vadd.f32 %v9624, %v9642
    %v9644 = vpop.f32.mrf.mxu0
    %v9645 = vadd.f32 %v9626, %v9644
    %9646 = vdwg.mxu0
    %9647 = vmatpush.bf16.msra.mxu0 %v9289
    %9648 = vmatpush.bf16.msra.mxu0 %v9288
    %9649 = vmatpush.bf16.msra.mxu0 %v9287
    %9650 = vmatpush.bf16.msra.mxu0 %v9286
    %9651 = vmatpush.bf16.msra.mxu0 %v9285
    %9652 = vmatpush.bf16.msra.mxu0 %v9284
    %9653 = vmatpush.bf16.msra.mxu0 %v9283
    %9654 = vmatpush.bf16.msra.mxu0 %v9282
    %9655 = vmatmul.bf16.gmra.mxu0 %v8585
    %v9656 = vpop.f32.mrf.mxu0
    %v9657 = vadd.f32 %v9638, %v9656
    %v9658 = vpop.f32.mrf.mxu0
    %v9659 = vadd.f32 %v9640, %v9658
    %9660 = vmatmul.bf16.gmra.mxu0 %v8603
    %v9661 = vpop.f32.mrf.mxu0
    %v9662 = vadd.f32 %v9643, %v9661
    %v9663 = vpop.f32.mrf.mxu0
    %v9664 = vadd.f32 %v9645, %v9663
    %9665 = vdwg.mxu0
    %9666 = vmatpush.bf16.msra.mxu0 %v9297
    %9667 = vmatpush.bf16.msra.mxu0 %v9296
    %9668 = vmatpush.bf16.msra.mxu0 %v9295
    %9669 = vmatpush.bf16.msra.mxu0 %v9294
    %9670 = vmatpush.bf16.msra.mxu0 %v9293
    %9671 = vmatpush.bf16.msra.mxu0 %v9292
    %9672 = vmatpush.bf16.msra.mxu0 %v9291
    %9673 = vmatpush.bf16.msra.mxu0 %v9290
    %9674 = vmatmul.bf16.gmra.mxu0 %v8586
    %v9675 = vpop.f32.mrf.mxu0
    %v9676 = vadd.f32 %v9657, %v9675
    %v9677 = vpop.f32.mrf.mxu0
    %v9678 = vadd.f32 %v9659, %v9677
    %9679 = vmatmul.bf16.gmra.mxu0 %v8604
    %v9680 = vpop.f32.mrf.mxu0
    %v9681 = vadd.f32 %v9662, %v9680
    %v9682 = vpop.f32.mrf.mxu0
    %v9683 = vadd.f32 %v9664, %v9682
    %9684 = vdwg.mxu0
    %9685 = vmatpush.bf16.msra.mxu0 %v9305
    %9686 = vmatpush.bf16.msra.mxu0 %v9304
    %9687 = vmatpush.bf16.msra.mxu0 %v9303
    %9688 = vmatpush.bf16.msra.mxu0 %v9302
    %9689 = vmatpush.bf16.msra.mxu0 %v9301
    %9690 = vmatpush.bf16.msra.mxu0 %v9300
    %9691 = vmatpush.bf16.msra.mxu0 %v9299
    %9692 = vmatpush.bf16.msra.mxu0 %v9298
    %9693 = vmatmul.bf16.gmra.mxu0 %v8587
    %v9694 = vpop.f32.mrf.mxu0
    %v9695 = vadd.f32 %v9676, %v9694
    %v9696 = vpop.f32.mrf.mxu0
    %v9697 = vadd.f32 %v9678, %v9696
    %9698 = vmatmul.bf16.gmra.mxu0 %v8605
    %v9699 = vpop.f32.mrf.mxu0
    %v9700 = vadd.f32 %v9681, %v9699
    %v9701 = vpop.f32.mrf.mxu0
    %v9702 = vadd.f32 %v9683, %v9701
    %9703 = vdwg.mxu0
    %9704 = vmatpush.bf16.msra.mxu0 %v9313
    %9705 = vmatpush.bf16.msra.mxu0 %v9312
    %9706 = vmatpush.bf16.msra.mxu0 %v9311
    %9707 = vmatpush.bf16.msra.mxu0 %v9310
    %9708 = vmatpush.bf16.msra.mxu0 %v9309
    %9709 = vmatpush.bf16.msra.mxu0 %v9308
    %9710 = vmatpush.bf16.msra.mxu0 %v9307
    %9711 = vmatpush.bf16.msra.mxu0 %v9306
    %9712 = vmatmul.bf16.gmra.mxu0 %v8588
    %v9713 = vpop.f32.mrf.mxu0
    %v9714 = vadd.f32 %v9695, %v9713
    %v9715 = vpop.f32.mrf.mxu0
    %v9716 = vadd.f32 %v9697, %v9715
    %9717 = vmatmul.bf16.gmra.mxu0 %v8606
    %v9718 = vpop.f32.mrf.mxu0
    %v9719 = vadd.f32 %v9700, %v9718
    %v9720 = vpop.f32.mrf.mxu0
    %v9721 = vadd.f32 %v9702, %v9720
    %9722 = vdwg.mxu0
    %9723 = vmatpush.bf16.msra.mxu0 %v9321
    %9724 = vmatpush.bf16.msra.mxu0 %v9320
    %9725 = vmatpush.bf16.msra.mxu0 %v9319
    %9726 = vmatpush.bf16.msra.mxu0 %v9318
    %9727 = vmatpush.bf16.msra.mxu0 %v9317
    %9728 = vmatpush.bf16.msra.mxu0 %v9316
    %9729 = vmatpush.bf16.msra.mxu0 %v9315
    %9730 = vmatpush.bf16.msra.mxu0 %v9314
    %9731 = vmatmul.bf16.gmra.mxu0 %v8589
    %v9732 = vpop.f32.mrf.mxu0
    %v9733 = vadd.f32 %v9714, %v9732
    %v9734 = vpop.f32.mrf.mxu0
    %v9735 = vadd.f32 %v9716, %v9734
    %9736 = vmatmul.bf16.gmra.mxu0 %v8607
    %v9737 = vpop.f32.mrf.mxu0
    %v9738 = vadd.f32 %v9719, %v9737
    %v9739 = vpop.f32.mrf.mxu0
    %v9740 = vadd.f32 %v9721, %v9739
    %9741 = vdwg.mxu0
    %9742 = vmatpush.bf16.msra.mxu0 %v9329
    %9743 = vmatpush.bf16.msra.mxu0 %v9328
    %9744 = vmatpush.bf16.msra.mxu0 %v9327
    %9745 = vmatpush.bf16.msra.mxu0 %v9326
    %9746 = vmatpush.bf16.msra.mxu0 %v9325
    %9747 = vmatpush.bf16.msra.mxu0 %v9324
    %9748 = vmatpush.bf16.msra.mxu0 %v9323
    %9749 = vmatpush.bf16.msra.mxu0 %v9322
    %9750 = vmatmul.bf16.gmra.mxu0 %v8590
    %v9751 = vpop.f32.mrf.mxu0
    %v9752 = vadd.f32 %v9733, %v9751
    %v9753 = vpop.f32.mrf.mxu0
    %v9754 = vadd.f32 %v9735, %v9753
    %9755 = vmatmul.bf16.gmra.mxu0 %v8608
    %v9756 = vpop.f32.mrf.mxu0
    %v9757 = vadd.f32 %v9738, %v9756
    %v9758 = vpop.f32.mrf.mxu0
    %v9759 = vadd.f32 %v9740, %v9758
    %9760 = vdwg.mxu0
    %9761 = vmatpush.bf16.msra.mxu0 %v9337
    %9762 = vmatpush.bf16.msra.mxu0 %v9336
    %9763 = vmatpush.bf16.msra.mxu0 %v9335
    %9764 = vmatpush.bf16.msra.mxu0 %v9334
    %9765 = vmatpush.bf16.msra.mxu0 %v9333
    %9766 = vmatpush.bf16.msra.mxu0 %v9332
    %9767 = vmatpush.bf16.msra.mxu0 %v9331
    %9768 = vmatpush.bf16.msra.mxu0 %v9330
    %9769 = vmatmul.bf16.gmra.mxu0 %v8591
    %v9770 = vpop.f32.mrf.mxu0
    %v9771 = vadd.f32 %v9752, %v9770
    %v9772 = vpop.f32.mrf.mxu0
    %v9773 = vadd.f32 %v9754, %v9772
    %9774 = vmatmul.bf16.gmra.mxu0 %v8609
    %v9775 = vpop.f32.mrf.mxu0
    %v9776 = vadd.f32 %v9757, %v9775
    %v9777 = vpop.f32.mrf.mxu0
    %v9778 = vadd.f32 %v9759, %v9777
    %9779 = vdwg.mxu0
    %9780 = vmatpush.bf16.msra.mxu0 %v9345
    %9781 = vmatpush.bf16.msra.mxu0 %v9344
    %9782 = vmatpush.bf16.msra.mxu0 %v9343
    %9783 = vmatpush.bf16.msra.mxu0 %v9342
    %9784 = vmatpush.bf16.msra.mxu0 %v9341
    %9785 = vmatpush.bf16.msra.mxu0 %v9340
    %9786 = vmatpush.bf16.msra.mxu0 %v9339
    %9787 = vmatpush.bf16.msra.mxu0 %v9338
    %9788 = vmatmul.bf16.gmra.mxu0 %v8592
    %v9789 = vpop.f32.mrf.mxu0
    %v9790 = vadd.f32 %v9771, %v9789
    %v9791 = vpop.f32.mrf.mxu0
    %v9792 = vadd.f32 %v9773, %v9791
    %9793 = vmatmul.bf16.gmra.mxu0 %v8610
    %v9794 = vpop.f32.mrf.mxu0
    %v9795 = vadd.f32 %v9776, %v9794
    %v9796 = vpop.f32.mrf.mxu0
    %v9797 = vadd.f32 %v9778, %v9796
    %9798 = vdwg.mxu0
    %9799 = vmatpush.bf16.msra.mxu0 %v9353
    %9800 = vmatpush.bf16.msra.mxu0 %v9352
    %9801 = vmatpush.bf16.msra.mxu0 %v9351
    %9802 = vmatpush.bf16.msra.mxu0 %v9350
    %9803 = vmatpush.bf16.msra.mxu0 %v9349
    %9804 = vmatpush.bf16.msra.mxu0 %v9348
    %9805 = vmatpush.bf16.msra.mxu0 %v9347
    %9806 = vmatpush.bf16.msra.mxu0 %v9346
    %9807 = vmatmul.bf16.gmra.mxu0 %v8593
    %v9808 = vpop.f32.mrf.mxu0
    %v9809 = vadd.f32 %v9790, %v9808
    %v9810 = vpop.f32.mrf.mxu0
    %v9811 = vadd.f32 %v9792, %v9810
    %9812 = vmatmul.bf16.gmra.mxu0 %v8611
    %v9813 = vpop.f32.mrf.mxu0
    %v9814 = vadd.f32 %v9795, %v9813
    %v9815 = vpop.f32.mrf.mxu0
    %v9816 = vadd.f32 %v9797, %v9815
    %9817 = vdwg.mxu0
    %9818 = vmatpush.bf16.msra.mxu0 %v9361
    %9819 = vmatpush.bf16.msra.mxu0 %v9360
    %9820 = vmatpush.bf16.msra.mxu0 %v9359
    %9821 = vmatpush.bf16.msra.mxu0 %v9358
    %9822 = vmatpush.bf16.msra.mxu0 %v9357
    %9823 = vmatpush.bf16.msra.mxu0 %v9356
    %9824 = vmatpush.bf16.msra.mxu0 %v9355
    %9825 = vmatpush.bf16.msra.mxu0 %v9354
    %9826 = vmatmul.bf16.gmra.mxu0 %v8594
    %v9827 = vpop.f32.mrf.mxu0
    %v9828 = vadd.f32 %v9809, %v9827
    %v9829 = vpop.f32.mrf.mxu0
    %v9830 = vadd.f32 %v9811, %v9829
    %9831 = vmatmul.bf16.gmra.mxu0 %v8612
    %v9832 = vpop.f32.mrf.mxu0
    %v9833 = vadd.f32 %v9814, %v9832
    %v9834 = vpop.f32.mrf.mxu0
    %v9835 = vadd.f32 %v9816, %v9834
    %9836 = vdwg.mxu0
    %9837 = vmatpush.bf16.msra.mxu0 %v9369
    %9838 = vmatpush.bf16.msra.mxu0 %v9368
    %9839 = vmatpush.bf16.msra.mxu0 %v9367
    %9840 = vmatpush.bf16.msra.mxu0 %v9366
    %9841 = vmatpush.bf16.msra.mxu0 %v9365
    %9842 = vmatpush.bf16.msra.mxu0 %v9364
    %9843 = vmatpush.bf16.msra.mxu0 %v9363
    %9844 = vmatpush.bf16.msra.mxu0 %v9362
    %9845 = vmatmul.bf16.gmra.mxu0 %v8595
    %v9846 = vpop.f32.mrf.mxu0
    %v9847 = vadd.f32 %v9828, %v9846
    %v9848 = vpop.f32.mrf.mxu0
    %v9849 = vadd.f32 %v9830, %v9848
    %9850 = vmatmul.bf16.gmra.mxu0 %v8613
    %v9851 = vpop.f32.mrf.mxu0
    %v9852 = vadd.f32 %v9833, %v9851
    %v9853 = vpop.f32.mrf.mxu0
    %v9854 = vadd.f32 %v9835, %v9853
    %9855 = vdwg.mxu0
    %v9860 = vrot.slane %v9847, 7
    %v9861 = vrot.slane %v9849, 7
    %v9862 = vrot.slane %v9852, 7
    %v9863 = vrot.slane %v9854, 7
    %v9868 = vsel %vm7818, %v9847, %v9860
    %v9869 = vsel %vm7818, %v9849, %v9861
    %v9870 = vsel %vm7818, %v9852, %v9862
    %v9871 = vsel %vm7818, %v9854, %v9863
    %v9872 = vrot.slane %v9847, 1
    %v9873 = vrot.slane %v9849, 1
    %v9874 = vrot.slane %v9852, 1
    %v9875 = vrot.slane %v9854, 1
    %vm9880 = vcmask 1042432
    %v9881 = vsel %vm9880, %v9872, %v9847
    %v9882 = vsel %vm9880, %v9873, %v9849
    %v9883 = vsel %vm9880, %v9874, %v9852
    %v9884 = vsel %vm9880, %v9875, %v9854
    %v9885 = vmul.f32 %v9847, 0.75
    %v9886 = vmul.f32 %v9849, 0.75
    %v9887 = vmul.f32 %v9852, 0.75
    %v9888 = vmul.f32 %v9854, 0.75
    %v9889 = vmul.f32 %v9868, 0.25
    %v9890 = vmul.f32 %v9869, 0.25
    %v9891 = vmul.f32 %v9870, 0.25
    %v9892 = vmul.f32 %v9871, 0.25
    %v9893 = vadd.f32 %v9885, %v9889
    %v9894 = vadd.f32 %v9886, %v9890
    %v9895 = vadd.f32 %v9887, %v9891
    %v9896 = vadd.f32 %v9888, %v9892
    %v9897 = vmul.f32 %v9881, 0.25
    %v9898 = vmul.f32 %v9882, 0.25
    %v9899 = vmul.f32 %v9883, 0.25
    %v9900 = vmul.f32 %v9884, 0.25
    %v9901 = vadd.f32 %v9885, %v9897
    %v9902 = vadd.f32 %v9886, %v9898
    %v9903 = vadd.f32 %v9887, %v9899
    %v9904 = vadd.f32 %v9888, %v9900
    %v9909 = vrot.slane %v9893, 1
    %v9910 = vrot.slane %v9893, 2
    %v9911 = vrot.slane %v9893, 3
    %v9912 = vrot.slane %v9894, 1
    %v9913 = vrot.slane %v9894, 2
    %v9914 = vrot.slane %v9894, 3
    %v9915 = vrot.slane %v9895, 1
    %v9916 = vrot.slane %v9895, 2
    %v9917 = vrot.slane %v9895, 3
    %v9918 = vrot.slane %v9896, 1
    %v9919 = vrot.slane %v9896, 2
    %v9920 = vrot.slane %v9896, 3
    %v9937 = vrot.slane %v9901, 1
    %v9938 = vrot.slane %v9901, 2
    %v9939 = vrot.slane %v9901, 3
    %v9940 = vrot.slane %v9902, 1
    %v9941 = vrot.slane %v9902, 2
    %v9942 = vrot.slane %v9902, 3
    %v9943 = vrot.slane %v9903, 1
    %v9944 = vrot.slane %v9903, 2
    %v9945 = vrot.slane %v9903, 3
    %v9946 = vrot.slane %v9904, 1
    %v9947 = vrot.slane %v9904, 2
    %v9948 = vrot.slane %v9904, 3
    %v9949 = vperm.slane %v9901, 0
    %v9950 = vperm.slane %v9937, 0
    %v9951 = vperm.slane %v9938, 0
    %v9952 = vperm.slane %v9939, 0
    %v9953 = vperm.slane %v9902, 0
    %v9954 = vperm.slane %v9940, 0
    %v9955 = vperm.slane %v9941, 0
    %v9956 = vperm.slane %v9942, 0
    %v9957 = vperm.slane %v9903, 0
    %v9958 = vperm.slane %v9943, 0
    %v9959 = vperm.slane %v9944, 0
    %v9960 = vperm.slane %v9945, 0
    %v9961 = vperm.slane %v9904, 0
    %v9962 = vperm.slane %v9946, 0
    %v9963 = vperm.slane %v9947, 0
    %v9964 = vperm.slane %v9948, 0
    %v9981 = vsel %vm7818, %v9893, %v9949
    %v9982 = vsel %vm7818, %v9909, %v9950
    %v9983 = vsel %vm7818, %v9910, %v9951
    %v9984 = vsel %vm7818, %v9911, %v9952
    %v9985 = vsel %vm7818, %v9894, %v9953
    %v9986 = vsel %vm7818, %v9912, %v9954
    %v9987 = vsel %vm7818, %v9913, %v9955
    %v9988 = vsel %vm7818, %v9914, %v9956
    %v9989 = vsel %vm7818, %v9895, %v9957
    %v9990 = vsel %vm7818, %v9915, %v9958
    %v9991 = vsel %vm7818, %v9916, %v9959
    %v9992 = vsel %vm7818, %v9917, %v9960
    %v9993 = vsel %vm7818, %v9896, %v9961
    %v9994 = vsel %vm7818, %v9918, %v9962
    %v9995 = vsel %vm7818, %v9919, %v9963
    %v9996 = vsel %vm7818, %v9920, %v9964
    %10013 = vst [vmem:[#allocation1] ss:$4 sm:$0xff] %v9981
    %s10014 = scalar_lea.vmem [#allocation1], 1
    %10015 = vst [vmem:[%s10014] ss:$4 sm:$0xff] %v9982
    %s10016 = scalar_lea.vmem [#allocation1], 2
    %10017 = vst [vmem:[%s10016] ss:$4 sm:$0xff] %v9983
    %s10018 = scalar_lea.vmem [#allocation1], 3
    %10019 = vst [vmem:[%s10018] ss:$4 sm:$0xff] %v9984
    %v10020 = vld.sshfl [vmem:[#allocation1] sm:$0xff pattern:$0x73625140]
    %s10021 = scalar_lea.vmem [#allocation1], 32
    %10022 = vst [vmem:[%s10021] ss:$4 sm:$0xff] %v9985
    %s10023 = scalar_lea.vmem [#allocation1], 33
    %10024 = vst [vmem:[%s10023] ss:$4 sm:$0xff] %v9986
    %s10025 = scalar_lea.vmem [#allocation1], 34
    %10026 = vst [vmem:[%s10025] ss:$4 sm:$0xff] %v9987
    %s10027 = scalar_lea.vmem [#allocation1], 35
    %10028 = vst [vmem:[%s10027] ss:$4 sm:$0xff] %v9988
    %v10029 = vld.sshfl [vmem:[#allocation1 + $0x20] sm:$0xff pattern:$0x73625140]
    %10030 = vst [vmem:[#allocation1] ss:$4 sm:$0xff] %v9989
    %10031 = vst [vmem:[%s10014] ss:$4 sm:$0xff] %v9990
    %10032 = vst [vmem:[%s10016] ss:$4 sm:$0xff] %v9991
    %10033 = vst [vmem:[%s10018] ss:$4 sm:$0xff] %v9992
    %v10034 = vld.sshfl [vmem:[#allocation1] sm:$0xff pattern:$0x73625140]
    %10035 = vst [vmem:[%s10021] ss:$4 sm:$0xff] %v9993
    %10036 = vst [vmem:[%s10023] ss:$4 sm:$0xff] %v9994
    %10037 = vst [vmem:[%s10025] ss:$4 sm:$0xff] %v9995
    %10038 = vst [vmem:[%s10027] ss:$4 sm:$0xff] %v9996
    %v10039 = vld.sshfl [vmem:[#allocation1 + $0x20] sm:$0xff pattern:$0x73625140]
    %v10040 = vrot.slane %v10020, 7
    %v10041 = vrot.slane %v10029, 7
    %v10042 = vrot.slane %v10034, 7
    %v10043 = vrot.slane %v10039, 7
    %v10048 = vsel %vm7818, %v9981, %v10040
    %v10049 = vsel %vm7818, %v9985, %v10041
    %v10050 = vsel %vm7818, %v9989, %v10042
    %v10051 = vsel %vm7818, %v9993, %v10043
    %10052 = vst [vmem:[#allocation1] ss:$4 sm:$0xff] %v9981
    %s10053 = scalar_lea.vmem [#allocation1], 1
    %10054 = vst [vmem:[%s10053] ss:$4 sm:$0xff] %v9982
    %s10055 = scalar_lea.vmem [#allocation1], 2
    %10056 = vst [vmem:[%s10055] ss:$4 sm:$0xff] %v9983
    %s10057 = scalar_lea.vmem [#allocation1], 3
    %10058 = vst [vmem:[%s10057] ss:$4 sm:$0xff] %v9984
    %v10059 = vld.sshfl [vmem:[#allocation1] sm:$0xff pattern:$0x73625140]
    %s10060 = scalar_lea.vmem [#allocation1], 32
    %10061 = vst [vmem:[%s10060] ss:$4 sm:$0xff] %v9985
    %s10062 = scalar_lea.vmem [#allocation1], 33
    %10063 = vst [vmem:[%s10062] ss:$4 sm:$0xff] %v9986
    %s10064 = scalar_lea.vmem [#allocation1], 34
    %10065 = vst [vmem:[%s10064] ss:$4 sm:$0xff] %v9987
    %s10066 = scalar_lea.vmem [#allocation1], 35
    %10067 = vst [vmem:[%s10066] ss:$4 sm:$0xff] %v9988
    %v10068 = vld.sshfl [vmem:[#allocation1 + $0x20] sm:$0xff pattern:$0x73625140]
    %10069 = vst [vmem:[#allocation1] ss:$4 sm:$0xff] %v9989
    %10070 = vst [vmem:[%s10053] ss:$4 sm:$0xff] %v9990
    %10071 = vst [vmem:[%s10055] ss:$4 sm:$0xff] %v9991
    %10072 = vst [vmem:[%s10057] ss:$4 sm:$0xff] %v9992
    %v10073 = vld.sshfl [vmem:[#allocation1] sm:$0xff pattern:$0x73625140]
    %10074 = vst [vmem:[%s10060] ss:$4 sm:$0xff] %v9993
    %10075 = vst [vmem:[%s10062] ss:$4 sm:$0xff] %v9994
    %10076 = vst [vmem:[%s10064] ss:$4 sm:$0xff] %v9995
    %10077 = vst [vmem:[%s10066] ss:$4 sm:$0xff] %v9996
    %v10078 = vld.sshfl [vmem:[#allocation1 + $0x20] sm:$0xff pattern:$0x73625140]
    %v10079 = vrot.slane %v10059, 1
    %v10080 = vrot.slane %v10068, 1
    %v10081 = vrot.slane %v10073, 1
    %v10082 = vrot.slane %v10078, 1
    %v10087 = vperm.slane %v9984, 1
    %v10088 = vperm.slane %v9988, 1
    %v10089 = vperm.slane %v9992, 1
    %v10090 = vperm.slane %v9996, 1
    %vm10095 = vcmask 1046528
    %v10096 = vsel %vm10095, %v10079, %v10087
    %v10097 = vsel %vm10095, %v10080, %v10088
    %v10098 = vsel %vm10095, %v10081, %v10089
    %v10099 = vsel %vm10095, %v10082, %v10090
    %v10100 = vmul.f32 %v9981, 0.75
    %v10101 = vmul.f32 %v9982, 0.75
    %v10102 = vmul.f32 %v9983, 0.75
    %v10103 = vmul.f32 %v9984, 0.75
    %v10104 = vmul.f32 %v9985, 0.75
    %v10105 = vmul.f32 %v9986, 0.75
    %v10106 = vmul.f32 %v9987, 0.75
    %v10107 = vmul.f32 %v9988, 0.75
    %v10108 = vmul.f32 %v9989, 0.75
    %v10109 = vmul.f32 %v9990, 0.75
    %v10110 = vmul.f32 %v9991, 0.75
    %v10111 = vmul.f32 %v9992, 0.75
    %v10112 = vmul.f32 %v9993, 0.75
    %v10113 = vmul.f32 %v9994, 0.75
    %v10114 = vmul.f32 %v9995, 0.75
    %v10115 = vmul.f32 %v9996, 0.75
    %v10116 = vmul.f32 %v10048, 0.25
    %v10117 = vmul.f32 %v10049, 0.25
    %v10118 = vmul.f32 %v10050, 0.25
    %v10119 = vmul.f32 %v10051, 0.25
    %v10124 = vrot.slane %v10116, 2
    %v10125 = vrot.slane %v10116, 4
    %v10126 = vrot.slane %v10116, 6
    %v10127 = vrot.slane %v10117, 2
    %v10128 = vrot.slane %v10117, 4
    %v10129 = vrot.slane %v10117, 6
    %v10130 = vrot.slane %v10118, 2
    %v10131 = vrot.slane %v10118, 4
    %v10132 = vrot.slane %v10118, 6
    %v10133 = vrot.slane %v10119, 2
    %v10134 = vrot.slane %v10119, 4
    %v10135 = vrot.slane %v10119, 6
    %v10148 = vadd.f32 %v10100, %v10116
    %v10149 = vadd.f32 %v10101, %v10124
    %v10150 = vadd.f32 %v10102, %v10125
    %v10151 = vadd.f32 %v10103, %v10126
    %v10152 = vadd.f32 %v10104, %v10117
    %v10153 = vadd.f32 %v10105, %v10127
    %v10154 = vadd.f32 %v10106, %v10128
    %v10155 = vadd.f32 %v10107, %v10129
    %v10156 = vadd.f32 %v10108, %v10118
    %v10157 = vadd.f32 %v10109, %v10130
    %v10158 = vadd.f32 %v10110, %v10131
    %v10159 = vadd.f32 %v10111, %v10132
    %v10160 = vadd.f32 %v10112, %v10119
    %v10161 = vadd.f32 %v10113, %v10133
    %v10162 = vadd.f32 %v10114, %v10134
    %v10163 = vadd.f32 %v10115, %v10135
    %v10164 = vmul.f32 %v10096, 0.25
    %v10165 = vmul.f32 %v10097, 0.25
    %v10166 = vmul.f32 %v10098, 0.25
    %v10167 = vmul.f32 %v10099, 0.25
    %v10172 = vrot.slane %v10164, 2
    %v10173 = vrot.slane %v10164, 4
    %v10174 = vrot.slane %v10164, 6
    %v10175 = vrot.slane %v10165, 2
    %v10176 = vrot.slane %v10165, 4
    %v10177 = vrot.slane %v10165, 6
    %v10178 = vrot.slane %v10166, 2
    %v10179 = vrot.slane %v10166, 4
    %v10180 = vrot.slane %v10166, 6
    %v10181 = vrot.slane %v10167, 2
    %v10182 = vrot.slane %v10167, 4
    %v10183 = vrot.slane %v10167, 6
    %v10196 = vadd.f32 %v10100, %v10164
    %v10197 = vadd.f32 %v10101, %v10172
    %v10198 = vadd.f32 %v10102, %v10173
    %v10199 = vadd.f32 %v10103, %v10174
    %v10200 = vadd.f32 %v10104, %v10165
    %v10201 = vadd.f32 %v10105, %v10175
    %v10202 = vadd.f32 %v10106, %v10176
    %v10203 = vadd.f32 %v10107, %v10177
    %v10204 = vadd.f32 %v10108, %v10166
    %v10205 = vadd.f32 %v10109, %v10178
    %v10206 = vadd.f32 %v10110, %v10179
    %v10207 = vadd.f32 %v10111, %v10180
    %v10208 = vadd.f32 %v10112, %v10167
    %v10209 = vadd.f32 %v10113, %v10181
    %v10210 = vadd.f32 %v10114, %v10182
    %v10211 = vadd.f32 %v10115, %v10183
    %v10228 = vrot.slane %v10148, 1
    %v10229 = vrot.slane %v10148, 2
    %v10230 = vrot.slane %v10148, 3
    %v10231 = vrot.slane %v10149, 1
    %v10232 = vrot.slane %v10149, 2
    %v10233 = vrot.slane %v10149, 3
    %v10234 = vrot.slane %v10150, 1
    %v10235 = vrot.slane %v10150, 2
    %v10236 = vrot.slane %v10150, 3
    %v10237 = vrot.slane %v10151, 1
    %v10238 = vrot.slane %v10151, 2
    %v10239 = vrot.slane %v10151, 3
    %v10240 = vrot.slane %v10152, 1
    %v10241 = vrot.slane %v10152, 2
    %v10242 = vrot.slane %v10152, 3
    %v10243 = vrot.slane %v10153, 1
    %v10244 = vrot.slane %v10153, 2
    %v10245 = vrot.slane %v10153, 3
    %v10246 = vrot.slane %v10154, 1
    %v10247 = vrot.slane %v10154, 2
    %v10248 = vrot.slane %v10154, 3
    %v10249 = vrot.slane %v10155, 1
    %v10250 = vrot.slane %v10155, 2
    %v10251 = vrot.slane %v10155, 3
    %v10252 = vrot.slane %v10156, 1
    %v10253 = vrot.slane %v10156, 2
    %v10254 = vrot.slane %v10156, 3
    %v10255 = vrot.slane %v10157, 1
    %v10256 = vrot.slane %v10157, 2
    %v10257 = vrot.slane %v10157, 3
    %v10258 = vrot.slane %v10158, 1
    %v10259 = vrot.slane %v10158, 2
    %v10260 = vrot.slane %v10158, 3
    %v10261 = vrot.slane %v10159, 1
    %v10262 = vrot.slane %v10159, 2
    %v10263 = vrot.slane %v10159, 3
    %v10264 = vrot.slane %v10160, 1
    %v10265 = vrot.slane %v10160, 2
    %v10266 = vrot.slane %v10160, 3
    %v10267 = vrot.slane %v10161, 1
    %v10268 = vrot.slane %v10161, 2
    %v10269 = vrot.slane %v10161, 3
    %v10270 = vrot.slane %v10162, 1
    %v10271 = vrot.slane %v10162, 2
    %v10272 = vrot.slane %v10162, 3
    %v10273 = vrot.slane %v10163, 1
    %v10274 = vrot.slane %v10163, 2
    %v10275 = vrot.slane %v10163, 3
    %v10276 = vsel %vm7818, %v10148, %v10228
    %v10277 = vsel %vm4968, %v10229, %v10230
    %v10278 = vsel %vm7696, %v10276, %v10277
    %v10279 = vsel %vm4966, %v10148, %v10228
    %v10280 = vsel %vm4970, %v10229, %v10230
    %vm10281 = vcmask 1042433
    %v10282 = vsel %vm10281, %v10279, %v10280
    %v10283 = vrot.slane %v10282, 1
    %v10284 = vsel %vm7818, %v10149, %v10231
    %v10285 = vsel %vm4968, %v10232, %v10233
    %v10286 = vsel %vm7696, %v10284, %v10285
    %v10287 = vsel %vm4966, %v10149, %v10231
    %v10288 = vsel %vm4970, %v10232, %v10233
    %v10289 = vsel %vm10281, %v10287, %v10288
    %v10290 = vrot.slane %v10289, 1
    %v10291 = vsel %vm7818, %v10150, %v10234
    %v10292 = vsel %vm4968, %v10235, %v10236
    %v10293 = vsel %vm7696, %v10291, %v10292
    %v10294 = vsel %vm4966, %v10150, %v10234
    %v10295 = vsel %vm4970, %v10235, %v10236
    %v10296 = vsel %vm10281, %v10294, %v10295
    %v10297 = vrot.slane %v10296, 1
    %v10298 = vsel %vm7818, %v10151, %v10237
    %v10299 = vsel %vm4968, %v10238, %v10239
    %v10300 = vsel %vm7696, %v10298, %v10299
    %v10301 = vsel %vm4966, %v10151, %v10237
    %v10302 = vsel %vm4970, %v10238, %v10239
    %v10303 = vsel %vm10281, %v10301, %v10302
    %v10304 = vrot.slane %v10303, 1
    %v10305 = vsel %vm7818, %v10152, %v10240
    %v10306 = vsel %vm4968, %v10241, %v10242
    %v10307 = vsel %vm7696, %v10305, %v10306
    %v10308 = vsel %vm4966, %v10152, %v10240
    %v10309 = vsel %vm4970, %v10241, %v10242
    %v10310 = vsel %vm10281, %v10308, %v10309
    %v10311 = vrot.slane %v10310, 1
    %v10312 = vsel %vm7818, %v10153, %v10243
    %v10313 = vsel %vm4968, %v10244, %v10245
    %v10314 = vsel %vm7696, %v10312, %v10313
    %v10315 = vsel %vm4966, %v10153, %v10243
    %v10316 = vsel %vm4970, %v10244, %v10245
    %v10317 = vsel %vm10281, %v10315, %v10316
    %v10318 = vrot.slane %v10317, 1
    %v10319 = vsel %vm7818, %v10154, %v10246
    %v10320 = vsel %vm4968, %v10247, %v10248
    %v10321 = vsel %vm7696, %v10319, %v10320
    %v10322 = vsel %vm4966, %v10154, %v10246
    %v10323 = vsel %vm4970, %v10247, %v10248
    %v10324 = vsel %vm10281, %v10322, %v10323
    %v10325 = vrot.slane %v10324, 1
    %v10326 = vsel %vm7818, %v10155, %v10249
    %v10327 = vsel %vm4968, %v10250, %v10251
    %v10328 = vsel %vm7696, %v10326, %v10327
    %v10329 = vsel %vm4966, %v10155, %v10249
    %v10330 = vsel %vm4970, %v10250, %v10251
    %v10331 = vsel %vm10281, %v10329, %v10330
    %v10332 = vrot.slane %v10331, 1
    %v10333 = vsel %vm7818, %v10156, %v10252
    %v10334 = vsel %vm4968, %v10253, %v10254
    %v10335 = vsel %vm7696, %v10333, %v10334
    %v10336 = vsel %vm4966, %v10156, %v10252
    %v10337 = vsel %vm4970, %v10253, %v10254
    %v10338 = vsel %vm10281, %v10336, %v10337
    %v10339 = vrot.slane %v10338, 1
    %v10340 = vsel %vm7818, %v10157, %v10255
    %v10341 = vsel %vm4968, %v10256, %v10257
    %v10342 = vsel %vm7696, %v10340, %v10341
    %v10343 = vsel %vm4966, %v10157, %v10255
    %v10344 = vsel %vm4970, %v10256, %v10257
    %v10345 = vsel %vm10281, %v10343, %v10344
    %v10346 = vrot.slane %v10345, 1
    %v10347 = vsel %vm7818, %v10158, %v10258
    %v10348 = vsel %vm4968, %v10259, %v10260
    %v10349 = vsel %vm7696, %v10347, %v10348
    %v10350 = vsel %vm4966, %v10158, %v10258
    %v10351 = vsel %vm4970, %v10259, %v10260
    %v10352 = vsel %vm10281, %v10350, %v10351
    %v10353 = vrot.slane %v10352, 1
    %v10354 = vsel %vm7818, %v10159, %v10261
    %v10355 = vsel %vm4968, %v10262, %v10263
    %v10356 = vsel %vm7696, %v10354, %v10355
    %v10357 = vsel %vm4966, %v10159, %v10261
    %v10358 = vsel %vm4970, %v10262, %v10263
    %v10359 = vsel %vm10281, %v10357, %v10358
    %v10360 = vrot.slane %v10359, 1
    %v10361 = vsel %vm7818, %v10160, %v10264
    %v10362 = vsel %vm4968, %v10265, %v10266
    %v10363 = vsel %vm7696, %v10361, %v10362
    %v10364 = vsel %vm4966, %v10160, %v10264
    %v10365 = vsel %vm4970, %v10265, %v10266
    %v10366 = vsel %vm10281, %v10364, %v10365
    %v10367 = vrot.slane %v10366, 1
    %v10368 = vsel %vm7818, %v10161, %v10267
    %v10369 = vsel %vm4968, %v10268, %v10269
    %v10370 = vsel %vm7696, %v10368, %v10369
    %v10371 = vsel %vm4966, %v10161, %v10267
    %v10372 = vsel %vm4970, %v10268, %v10269
    %v10373 = vsel %vm10281, %v10371, %v10372
    %v10374 = vrot.slane %v10373, 1
    %v10375 = vsel %vm7818, %v10162, %v10270
    %v10376 = vsel %vm4968, %v10271, %v10272
    %v10377 = vsel %vm7696, %v10375, %v10376
    %v10378 = vsel %vm4966, %v10162, %v10270
    %v10379 = vsel %vm4970, %v10271, %v10272
    %v10380 = vsel %vm10281, %v10378, %v10379
    %v10381 = vrot.slane %v10380, 1
    %v10382 = vsel %vm7818, %v10163, %v10273
    %v10383 = vsel %vm4968, %v10274, %v10275
    %v10384 = vsel %vm7696, %v10382, %v10383
    %v10385 = vsel %vm4966, %v10163, %v10273
    %v10386 = vsel %vm4970, %v10274, %v10275
    %v10387 = vsel %vm10281, %v10385, %v10386
    %v10388 = vrot.slane %v10387, 1
    %v10437 = vrot.slane %v10196, 1
    %v10438 = vrot.slane %v10196, 2
    %v10439 = vrot.slane %v10196, 3
    %v10440 = vrot.slane %v10197, 1
    %v10441 = vrot.slane %v10197, 2
    %v10442 = vrot.slane %v10197, 3
    %v10443 = vrot.slane %v10198, 1
    %v10444 = vrot.slane %v10198, 2
    %v10445 = vrot.slane %v10198, 3
    %v10446 = vrot.slane %v10199, 1
    %v10447 = vrot.slane %v10199, 2
    %v10448 = vrot.slane %v10199, 3
    %v10449 = vrot.slane %v10200, 1
    %v10450 = vrot.slane %v10200, 2
    %v10451 = vrot.slane %v10200, 3
    %v10452 = vrot.slane %v10201, 1
    %v10453 = vrot.slane %v10201, 2
    %v10454 = vrot.slane %v10201, 3
    %v10455 = vrot.slane %v10202, 1
    %v10456 = vrot.slane %v10202, 2
    %v10457 = vrot.slane %v10202, 3
    %v10458 = vrot.slane %v10203, 1
    %v10459 = vrot.slane %v10203, 2
    %v10460 = vrot.slane %v10203, 3
    %v10461 = vrot.slane %v10204, 1
    %v10462 = vrot.slane %v10204, 2
    %v10463 = vrot.slane %v10204, 3
    %v10464 = vrot.slane %v10205, 1
    %v10465 = vrot.slane %v10205, 2
    %v10466 = vrot.slane %v10205, 3
    %v10467 = vrot.slane %v10206, 1
    %v10468 = vrot.slane %v10206, 2
    %v10469 = vrot.slane %v10206, 3
    %v10470 = vrot.slane %v10207, 1
    %v10471 = vrot.slane %v10207, 2
    %v10472 = vrot.slane %v10207, 3
    %v10473 = vrot.slane %v10208, 1
    %v10474 = vrot.slane %v10208, 2
    %v10475 = vrot.slane %v10208, 3
    %v10476 = vrot.slane %v10209, 1
    %v10477 = vrot.slane %v10209, 2
    %v10478 = vrot.slane %v10209, 3
    %v10479 = vrot.slane %v10210, 1
    %v10480 = vrot.slane %v10210, 2
    %v10481 = vrot.slane %v10210, 3
    %v10482 = vrot.slane %v10211, 1
    %v10483 = vrot.slane %v10211, 2
    %v10484 = vrot.slane %v10211, 3
    %v10485 = vsel %vm7818, %v10196, %v10437
    %v10486 = vsel %vm4968, %v10438, %v10439
    %v10487 = vsel %vm7696, %v10485, %v10486
    %v10488 = vsel %vm4966, %v10196, %v10437
    %v10489 = vsel %vm4970, %v10438, %v10439
    %v10490 = vsel %vm10281, %v10488, %v10489
    %v10491 = vrot.slane %v10490, 1
    %v10492 = vsel %vm7818, %v10197, %v10440
    %v10493 = vsel %vm4968, %v10441, %v10442
    %v10494 = vsel %vm7696, %v10492, %v10493
    %v10495 = vsel %vm4966, %v10197, %v10440
    %v10496 = vsel %vm4970, %v10441, %v10442
    %v10497 = vsel %vm10281, %v10495, %v10496
    %v10498 = vrot.slane %v10497, 1
    %v10499 = vsel %vm7818, %v10198, %v10443
    %v10500 = vsel %vm4968, %v10444, %v10445
    %v10501 = vsel %vm7696, %v10499, %v10500
    %v10502 = vsel %vm4966, %v10198, %v10443
    %v10503 = vsel %vm4970, %v10444, %v10445
    %v10504 = vsel %vm10281, %v10502, %v10503
    %v10505 = vrot.slane %v10504, 1
    %v10506 = vsel %vm7818, %v10199, %v10446
    %v10507 = vsel %vm4968, %v10447, %v10448
    %v10508 = vsel %vm7696, %v10506, %v10507
    %v10509 = vsel %vm4966, %v10199, %v10446
    %v10510 = vsel %vm4970, %v10447, %v10448
    %v10511 = vsel %vm10281, %v10509, %v10510
    %v10512 = vrot.slane %v10511, 1
    %v10513 = vsel %vm7818, %v10200, %v10449
    %v10514 = vsel %vm4968, %v10450, %v10451
    %v10515 = vsel %vm7696, %v10513, %v10514
    %v10516 = vsel %vm4966, %v10200, %v10449
    %v10517 = vsel %vm4970, %v10450, %v10451
    %v10518 = vsel %vm10281, %v10516, %v10517
    %v10519 = vrot.slane %v10518, 1
    %v10520 = vsel %vm7818, %v10201, %v10452
    %v10521 = vsel %vm4968, %v10453, %v10454
    %v10522 = vsel %vm7696, %v10520, %v10521
    %v10523 = vsel %vm4966, %v10201, %v10452
    %v10524 = vsel %vm4970, %v10453, %v10454
    %v10525 = vsel %vm10281, %v10523, %v10524
    %v10526 = vrot.slane %v10525, 1
    %v10527 = vsel %vm7818, %v10202, %v10455
    %v10528 = vsel %vm4968, %v10456, %v10457
    %v10529 = vsel %vm7696, %v10527, %v10528
    %v10530 = vsel %vm4966, %v10202, %v10455
    %v10531 = vsel %vm4970, %v10456, %v10457
    %v10532 = vsel %vm10281, %v10530, %v10531
    %v10533 = vrot.slane %v10532, 1
    %v10534 = vsel %vm7818, %v10203, %v10458
    %v10535 = vsel %vm4968, %v10459, %v10460
    %v10536 = vsel %vm7696, %v10534, %v10535
    %v10537 = vsel %vm4966, %v10203, %v10458
    %v10538 = vsel %vm4970, %v10459, %v10460
    %v10539 = vsel %vm10281, %v10537, %v10538
    %v10540 = vrot.slane %v10539, 1
    %v10541 = vsel %vm7818, %v10204, %v10461
    %v10542 = vsel %vm4968, %v10462, %v10463
    %v10543 = vsel %vm7696, %v10541, %v10542
    %v10544 = vsel %vm4966, %v10204, %v10461
    %v10545 = vsel %vm4970, %v10462, %v10463
    %v10546 = vsel %vm10281, %v10544, %v10545
    %v10547 = vrot.slane %v10546, 1
    %v10548 = vsel %vm7818, %v10205, %v10464
    %v10549 = vsel %vm4968, %v10465, %v10466
    %v10550 = vsel %vm7696, %v10548, %v10549
    %v10551 = vsel %vm4966, %v10205, %v10464
    %v10552 = vsel %vm4970, %v10465, %v10466
    %v10553 = vsel %vm10281, %v10551, %v10552
    %v10554 = vrot.slane %v10553, 1
    %v10555 = vsel %vm7818, %v10206, %v10467
    %v10556 = vsel %vm4968, %v10468, %v10469
    %v10557 = vsel %vm7696, %v10555, %v10556
    %v10558 = vsel %vm4966, %v10206, %v10467
    %v10559 = vsel %vm4970, %v10468, %v10469
    %v10560 = vsel %vm10281, %v10558, %v10559
    %v10561 = vrot.slane %v10560, 1
    %v10562 = vsel %vm7818, %v10207, %v10470
    %v10563 = vsel %vm4968, %v10471, %v10472
    %v10564 = vsel %vm7696, %v10562, %v10563
    %v10565 = vsel %vm4966, %v10207, %v10470
    %v10566 = vsel %vm4970, %v10471, %v10472
    %v10567 = vsel %vm10281, %v10565, %v10566
    %v10568 = vrot.slane %v10567, 1
    %v10569 = vsel %vm7818, %v10208, %v10473
    %v10570 = vsel %vm4968, %v10474, %v10475
    %v10571 = vsel %vm7696, %v10569, %v10570
    %v10572 = vsel %vm4966, %v10208, %v10473
    %v10573 = vsel %vm4970, %v10474, %v10475
    %v10574 = vsel %vm10281, %v10572, %v10573
    %v10575 = vrot.slane %v10574, 1
    %v10576 = vsel %vm7818, %v10209, %v10476
    %v10577 = vsel %vm4968, %v10477, %v10478
    %v10578 = vsel %vm7696, %v10576, %v10577
    %v10579 = vsel %vm4966, %v10209, %v10476
    %v10580 = vsel %vm4970, %v10477, %v10478
    %v10581 = vsel %vm10281, %v10579, %v10580
    %v10582 = vrot.slane %v10581, 1
    %v10583 = vsel %vm7818, %v10210, %v10479
    %v10584 = vsel %vm4968, %v10480, %v10481
    %v10585 = vsel %vm7696, %v10583, %v10584
    %v10586 = vsel %vm4966, %v10210, %v10479
    %v10587 = vsel %vm4970, %v10480, %v10481
    %v10588 = vsel %vm10281, %v10586, %v10587
    %v10589 = vrot.slane %v10588, 1
    %v10590 = vsel %vm7818, %v10211, %v10482
    %v10591 = vsel %vm4968, %v10483, %v10484
    %v10592 = vsel %vm7696, %v10590, %v10591
    %v10593 = vsel %vm4966, %v10211, %v10482
    %v10594 = vsel %vm4970, %v10483, %v10484
    %v10595 = vsel %vm10281, %v10593, %v10594
    %v10596 = vrot.slane %v10595, 1
    %v10597 = vperm.slane %v10487, 0
    %v10598 = vperm.slane %v10491, 0
    %v10599 = vperm.slane %v10494, 0
    %v10600 = vperm.slane %v10498, 0
    %v10601 = vperm.slane %v10501, 0
    %v10602 = vperm.slane %v10505, 0
    %v10603 = vperm.slane %v10508, 0
    %v10604 = vperm.slane %v10512, 0
    %v10605 = vperm.slane %v10515, 0
    %v10606 = vperm.slane %v10519, 0
    %v10607 = vperm.slane %v10522, 0
    %v10608 = vperm.slane %v10526, 0
    %v10609 = vperm.slane %v10529, 0
    %v10610 = vperm.slane %v10533, 0
    %v10611 = vperm.slane %v10536, 0
    %v10612 = vperm.slane %v10540, 0
    %v10613 = vperm.slane %v10543, 0
    %v10614 = vperm.slane %v10547, 0
    %v10615 = vperm.slane %v10550, 0
    %v10616 = vperm.slane %v10554, 0
    %v10617 = vperm.slane %v10557, 0
    %v10618 = vperm.slane %v10561, 0
    %v10619 = vperm.slane %v10564, 0
    %v10620 = vperm.slane %v10568, 0
    %v10621 = vperm.slane %v10571, 0
    %v10622 = vperm.slane %v10575, 0
    %v10623 = vperm.slane %v10578, 0
    %v10624 = vperm.slane %v10582, 0
    %v10625 = vperm.slane %v10585, 0
    %v10626 = vperm.slane %v10589, 0
    %v10627 = vperm.slane %v10592, 0
    %v10628 = vperm.slane %v10596, 0
    %v10661 = vsel %vm7818, %v10278, %v10597
    %v10662 = vsel %vm7818, %v10283, %v10598
    %v10663 = vsel %vm7818, %v10286, %v10599
    %v10664 = vsel %vm7818, %v10290, %v10600
    %v10665 = vsel %vm7818, %v10293, %v10601
    %v10666 = vsel %vm7818, %v10297, %v10602
    %v10667 = vsel %vm7818, %v10300, %v10603
    %v10668 = vsel %vm7818, %v10304, %v10604
    %v10669 = vsel %vm7818, %v10307, %v10605
    %v10670 = vsel %vm7818, %v10311, %v10606
    %v10671 = vsel %vm7818, %v10314, %v10607
    %v10672 = vsel %vm7818, %v10318, %v10608
    %v10673 = vsel %vm7818, %v10321, %v10609
    %v10674 = vsel %vm7818, %v10325, %v10610
    %v10675 = vsel %vm7818, %v10328, %v10611
    %v10676 = vsel %vm7818, %v10332, %v10612
    %v10677 = vsel %vm7818, %v10335, %v10613
    %v10678 = vsel %vm7818, %v10339, %v10614
    %v10679 = vsel %vm7818, %v10342, %v10615
    %v10680 = vsel %vm7818, %v10346, %v10616
    %v10681 = vsel %vm7818, %v10349, %v10617
    %v10682 = vsel %vm7818, %v10353, %v10618
    %v10683 = vsel %vm7818, %v10356, %v10619
    %v10684 = vsel %vm7818, %v10360, %v10620
    %v10685 = vsel %vm7818, %v10363, %v10621
    %v10686 = vsel %vm7818, %v10367, %v10622
    %v10687 = vsel %vm7818, %v10370, %v10623
    %v10688 = vsel %vm7818, %v10374, %v10624
    %v10689 = vsel %vm7818, %v10377, %v10625
    %v10690 = vsel %vm7818, %v10381, %v10626
    %v10691 = vsel %vm7818, %v10384, %v10627
    %v10692 = vsel %vm7818, %v10388, %v10628
    %10725 = vst [vmem:[#allocation1] ss:$4 sm:$0xff] %v10661
    %s10726 = scalar_lea.vmem [#allocation1], 1
    %10727 = vst [vmem:[%s10726] ss:$4 sm:$0xff] %v10662
    %s10728 = scalar_lea.vmem [#allocation1], 2
    %10729 = vst [vmem:[%s10728] ss:$4 sm:$0xff] %v10663
    %s10730 = scalar_lea.vmem [#allocation1], 3
    %10731 = vst [vmem:[%s10730] ss:$4 sm:$0xff] %v10664
    %s10732 = scalar_lea.vmem [#allocation1], 32
    %10733 = vst [vmem:[%s10732] ss:$4 sm:$0xff] %v10665
    %s10734 = scalar_lea.vmem [#allocation1], 33
    %10735 = vst [vmem:[%s10734] ss:$4 sm:$0xff] %v10666
    %s10736 = scalar_lea.vmem [#allocation1], 34
    %10737 = vst [vmem:[%s10736] ss:$4 sm:$0xff] %v10667
    %s10738 = scalar_lea.vmem [#allocation1], 35
    %10739 = vst [vmem:[%s10738] ss:$4 sm:$0xff] %v10668
    %v10740 = vld.sshfl [vmem:[#allocation1] sm:$0xff pattern:$0x73625140]
    %v10741 = vld.sshfl [vmem:[#allocation1 + $0x20] sm:$0xff pattern:$0x73625140]
    %10742 = vst [vmem:[#allocation1] ss:$4 sm:$0xff] %v10669
    %10743 = vst [vmem:[%s10726] ss:$4 sm:$0xff] %v10670
    %10744 = vst [vmem:[%s10728] ss:$4 sm:$0xff] %v10671
    %10745 = vst [vmem:[%s10730] ss:$4 sm:$0xff] %v10672
    %10746 = vst [vmem:[%s10732] ss:$4 sm:$0xff] %v10673
    %10747 = vst [vmem:[%s10734] ss:$4 sm:$0xff] %v10674
    %10748 = vst [vmem:[%s10736] ss:$4 sm:$0xff] %v10675
    %10749 = vst [vmem:[%s10738] ss:$4 sm:$0xff] %v10676
    %v10750 = vld.sshfl [vmem:[#allocation1] sm:$0xff pattern:$0x73625140]
    %v10751 = vld.sshfl [vmem:[#allocation1 + $0x20] sm:$0xff pattern:$0x73625140]
    %10752 = vst [vmem:[#allocation1] ss:$4 sm:$0xff] %v10677
    %10753 = vst [vmem:[%s10726] ss:$4 sm:$0xff] %v10678
    %10754 = vst [vmem:[%s10728] ss:$4 sm:$0xff] %v10679
    %10755 = vst [vmem:[%s10730] ss:$4 sm:$0xff] %v10680
    %10756 = vst [vmem:[%s10732] ss:$4 sm:$0xff] %v10681
    %10757 = vst [vmem:[%s10734] ss:$4 sm:$0xff] %v10682
    %10758 = vst [vmem:[%s10736] ss:$4 sm:$0xff] %v10683
    %10759 = vst [vmem:[%s10738] ss:$4 sm:$0xff] %v10684
    %v10760 = vld.sshfl [vmem:[#allocation1] sm:$0xff pattern:$0x73625140]
    %v10761 = vld.sshfl [vmem:[#allocation1 + $0x20] sm:$0xff pattern:$0x73625140]
    %10762 = vst [vmem:[#allocation1] ss:$4 sm:$0xff] %v10685
    %10763 = vst [vmem:[%s10726] ss:$4 sm:$0xff] %v10686
    %10764 = vst [vmem:[%s10728] ss:$4 sm:$0xff] %v10687
    %10765 = vst [vmem:[%s10730] ss:$4 sm:$0xff] %v10688
    %10766 = vst [vmem:[%s10732] ss:$4 sm:$0xff] %v10689
    %10767 = vst [vmem:[%s10734] ss:$4 sm:$0xff] %v10690
    %10768 = vst [vmem:[%s10736] ss:$4 sm:$0xff] %v10691
    %10769 = vst [vmem:[%s10738] ss:$4 sm:$0xff] %v10692
    %v10770 = vld.sshfl [vmem:[#allocation1] sm:$0xff pattern:$0x73625140]
    %v10771 = vld.sshfl [vmem:[#allocation1 + $0x20] sm:$0xff pattern:$0x73625140]
    %v10780 = vpack.c.bf16 %v10740, %v10740
    %v10781 = vpack.c.bf16 %v10741, %v10741
    %v10782 = vpack.c.bf16 %v10750, %v10750
    %v10783 = vpack.c.bf16 %v10751, %v10751
    %v10784 = vpack.c.bf16 %v10760, %v10760
    %v10785 = vpack.c.bf16 %v10761, %v10761
    %v10786 = vpack.c.bf16 %v10770, %v10770
    %v10787 = vpack.c.bf16 %v10771, %v10771
    %v10796 = vunpack.c.l.b16 %v10780
    %v10797 = vunpack.c.l.b16 %v10781
    %v10798 = vunpack.c.l.b16 %v10782
    %v10799 = vunpack.c.l.b16 %v10783
    %v10800 = vunpack.c.l.b16 %v10784
    %v10801 = vunpack.c.l.b16 %v10785
    %v10802 = vunpack.c.l.b16 %v10786
    %v10803 = vunpack.c.l.b16 %v10787
    %v10804 = vpack.c.b16 %v10797, %v10796
    %v10805 = vpack.c.b16 %v10799, %v10798
    %v10806 = vpack.c.b16 %v10801, %v10800
    %v10807 = vpack.c.b16 %v10803, %v10802
    %v10809 = vshrl.u32 %v10804, 16
    %v10811 = vrot.slane %v10809, 7
    %v10812 = vshll.u32 %v10804, 16
    %v10814 = vor.u32 %v10811, %v10812
    %v10816 = vshrl.u32 %v10805, 16
    %v10818 = vrot.slane %v10816, 7
    %v10819 = vshll.u32 %v10805, 16
    %v10821 = vor.u32 %v10818, %v10819
    %v10823 = vshrl.u32 %v10806, 16
    %v10825 = vrot.slane %v10823, 7
    %v10826 = vshll.u32 %v10806, 16
    %v10828 = vor.u32 %v10825, %v10826
    %v10830 = vshrl.u32 %v10807, 16
    %v10832 = vrot.slane %v10830, 7
    %v10833 = vshll.u32 %v10807, 16
    %v10835 = vor.u32 %v10832, %v10833
    %v10844 = vsel %vm667, 0, %v10814
    %v10845 = vsel %vm667, 0, %v10821
    %v10846 = vsel %vm667, 0, %v10828
    %v10847 = vsel %vm667, 0, %v10835
    %v10848 = vsel %vm667, %v10811, 0
    %v10849 = vsel %vm667, %v10818, 0
    %v10850 = vsel %vm667, %v10825, 0
    %v10851 = vsel %vm667, %v10832, 0
    %v10853 = vshrl.u32 %v10844, 16
    %v10855 = vshll.u32 %v10844, 16
    %v10857 = vrot.slane %v10855, 1
    %v10858 = vor.u32 %v10853, %v10857
    %v10860 = vshll.u32 %v10848, 16
    %v10862 = vrot.slane %v10860, 1
    %v10863 = vsel %vm734, %v10858, %v10862
    %v10865 = vshrl.u32 %v10846, 16
    %v10867 = vshll.u32 %v10846, 16
    %v10869 = vrot.slane %v10867, 1
    %v10870 = vor.u32 %v10865, %v10869
    %v10872 = vshll.u32 %v10850, 16
    %v10874 = vrot.slane %v10872, 1
    %v10875 = vsel %vm734, %v10870, %v10874
    %v10883 = vrot.slane %v10844, 1
    %v10884 = vrot.slane %v10848, 1
    %v10885 = vsel %vm1231, %v10883, %v10884
    %v10886 = vrot.slane %v10846, 1
    %v10887 = vrot.slane %v10850, 1
    %v10888 = vsel %vm1231, %v10886, %v10887
    %v10893 = vshrl.u32 %v10845, 16
    %v10895 = vshll.u32 %v10845, 16
    %v10897 = vrot.slane %v10895, 1
    %v10898 = vor.u32 %v10893, %v10897
    %v10900 = vshll.u32 %v10849, 16
    %v10902 = vrot.slane %v10900, 1
    %v10903 = vsel %vm734, %v10898, %v10902
    %v10905 = vshrl.u32 %v10847, 16
    %v10907 = vshll.u32 %v10847, 16
    %v10909 = vrot.slane %v10907, 1
    %v10910 = vor.u32 %v10905, %v10909
    %v10912 = vshll.u32 %v10851, 16
    %v10914 = vrot.slane %v10912, 1
    %v10915 = vsel %vm734, %v10910, %v10914
    %v10922 = vrot.slane %v10845, 1
    %v10923 = vrot.slane %v10849, 1
    %v10924 = vsel %vm1231, %v10922, %v10923
    %v10925 = vrot.slane %v10847, 1
    %v10926 = vrot.slane %v10851, 1
    %v10927 = vsel %vm1231, %v10925, %v10926
    %v10930 = vld [vmem:[%s11] sm:$0xf]
    %v10931 = vld [vmem:[%s11 + $0x4] sm:$0xf]
    %v10932 = vld [vmem:[%s11 + $0x8] sm:$0xf]
    %v10933 = vld [vmem:[%s11 + $0xc] sm:$0xf]
    %v10934 = vld [vmem:[%s11 + $0x10] sm:$0xf]
    %v10935 = vld [vmem:[%s11 + $0x14] sm:$0xf]
    %v10936 = vld [vmem:[%s11 + $0x18] sm:$0xf]
    %v10937 = vld [vmem:[%s11 + $0x1c] sm:$0xf]
    %v10938 = vld [vmem:[%s11 + $0x20] sm:$0xf]
    %v10939 = vld [vmem:[%s11 + $0x24] sm:$0xf]
    %v10940 = vld [vmem:[%s11 + $0x28] sm:$0xf]
    %v10941 = vld [vmem:[%s11 + $0x2c] sm:$0xf]
    %v10942 = vld [vmem:[%s11 + $0x30] sm:$0xf]
    %v10943 = vld [vmem:[%s11 + $0x34] sm:$0xf]
    %v10944 = vld [vmem:[%s11 + $0x38] sm:$0xf]
    %v10945 = vld [vmem:[%s11 + $0x3c] sm:$0xf]
    %v10946 = vld [vmem:[%s11 + $0x40] sm:$0xf]
    %v10947 = vld [vmem:[%s11 + $0x44] sm:$0xf]
    %v10948 = vld [vmem:[%s11 + $0x48] sm:$0xf]
    %v10949 = vld [vmem:[%s11 + $0x4c] sm:$0xf]
    %v10950 = vld [vmem:[%s11 + $0x50] sm:$0xf]
    %v10951 = vld [vmem:[%s11 + $0x54] sm:$0xf]
    %v10952 = vld [vmem:[%s11 + $0x58] sm:$0xf]
    %v10953 = vld [vmem:[%s11 + $0x5c] sm:$0xf]
    %v10954 = vld [vmem:[%s11 + $0x60] sm:$0xf]
    %v10955 = vld [vmem:[%s11 + $0x64] sm:$0xf]
    %v10956 = vld [vmem:[%s11 + $0x68] sm:$0xf]
    %v10957 = vld [vmem:[%s11 + $0x6c] sm:$0xf]
    %v10958 = vld [vmem:[%s11 + $0x70] sm:$0xf]
    %v10959 = vld [vmem:[%s11 + $0x74] sm:$0xf]
    %v10960 = vld [vmem:[%s11 + $0x78] sm:$0xf]
    %v10961 = vld [vmem:[%s11 + $0x7c] sm:$0xf]
    %v10962 = vld [vmem:[%s11 + $0x80] sm:$0xf]
    %v10963 = vld [vmem:[%s11 + $0x84] sm:$0xf]
    %v10964 = vld [vmem:[%s11 + $0x88] sm:$0xf]
    %v10965 = vld [vmem:[%s11 + $0x8c] sm:$0xf]
    %v10966 = vld [vmem:[%s11 + $0x90] sm:$0xf]
    %v10967 = vld [vmem:[%s11 + $0x94] sm:$0xf]
    %v10968 = vld [vmem:[%s11 + $0x98] sm:$0xf]
    %v10969 = vld [vmem:[%s11 + $0x9c] sm:$0xf]
    %v10970 = vld [vmem:[%s11 + $0xa0] sm:$0xf]
    %v10971 = vld [vmem:[%s11 + $0xa4] sm:$0xf]
    %v10972 = vld [vmem:[%s11 + $0xa8] sm:$0xf]
    %v10973 = vld [vmem:[%s11 + $0xac] sm:$0xf]
    %v10974 = vld [vmem:[%s11 + $0xb0] sm:$0xf]
    %v10975 = vld [vmem:[%s11 + $0xb4] sm:$0xf]
    %v10976 = vld [vmem:[%s11 + $0xb8] sm:$0xf]
    %v10977 = vld [vmem:[%s11 + $0xbc] sm:$0xf]
    %v10978 = vld [vmem:[%s11 + $0xc0] sm:$0xf]
    %v10979 = vld [vmem:[%s11 + $0xc4] sm:$0xf]
    %v10980 = vld [vmem:[%s11 + $0xc8] sm:$0xf]
    %v10981 = vld [vmem:[%s11 + $0xcc] sm:$0xf]
    %v10982 = vld [vmem:[%s11 + $0xd0] sm:$0xf]
    %v10983 = vld [vmem:[%s11 + $0xd4] sm:$0xf]
    %v10984 = vld [vmem:[%s11 + $0xd8] sm:$0xf]
    %v10985 = vld [vmem:[%s11 + $0xdc] sm:$0xf]
    %v10986 = vld [vmem:[%s11 + $0xe0] sm:$0xf]
    %v10987 = vld [vmem:[%s11 + $0xe4] sm:$0xf]
    %v10988 = vld [vmem:[%s11 + $0xe8] sm:$0xf]
    %v10989 = vld [vmem:[%s11 + $0xec] sm:$0xf]
    %v10990 = vld [vmem:[%s11 + $0xf0] sm:$0xf]
    %v10991 = vld [vmem:[%s11 + $0xf4] sm:$0xf]
    %v10992 = vld [vmem:[%s11 + $0xf8] sm:$0xf]
    %v10993 = vld [vmem:[%s11 + $0xfc] sm:$0xf]
    %v10994 = vld [vmem:[%s11 + $0x100] sm:$0xf]
    %v10995 = vld [vmem:[%s11 + $0x104] sm:$0xf]
    %v10996 = vld [vmem:[%s11 + $0x108] sm:$0xf]
    %v10997 = vld [vmem:[%s11 + $0x10c] sm:$0xf]
    %v10998 = vld [vmem:[%s11 + $0x110] sm:$0xf]
    %v10999 = vld [vmem:[%s11 + $0x114] sm:$0xf]
    %v11000 = vld [vmem:[%s11 + $0x118] sm:$0xf]
    %v11001 = vld [vmem:[%s11 + $0x11c] sm:$0xf]
    %v11002 = vld [vmem:[%s11 + $0x120] sm:$0xf]
    %v11003 = vld [vmem:[%s11 + $0x124] sm:$0xf]
    %v11004 = vld [vmem:[%s11 + $0x128] sm:$0xf]
    %v11005 = vld [vmem:[%s11 + $0x12c] sm:$0xf]
    %v11006 = vld [vmem:[%s11 + $0x130] sm:$0xf]
    %v11007 = vld [vmem:[%s11 + $0x134] sm:$0xf]
    %v11008 = vld [vmem:[%s11 + $0x138] sm:$0xf]
    %v11009 = vld [vmem:[%s11 + $0x13c] sm:$0xf]
    %v11010 = vld [vmem:[%s11 + $0x140] sm:$0xf]
    %v11011 = vld [vmem:[%s11 + $0x144] sm:$0xf]
    %v11012 = vld [vmem:[%s11 + $0x148] sm:$0xf]
    %v11013 = vld [vmem:[%s11 + $0x14c] sm:$0xf]
    %v11014 = vld [vmem:[%s11 + $0x150] sm:$0xf]
    %v11015 = vld [vmem:[%s11 + $0x154] sm:$0xf]
    %v11016 = vld [vmem:[%s11 + $0x158] sm:$0xf]
    %v11017 = vld [vmem:[%s11 + $0x15c] sm:$0xf]
    %v11018 = vld [vmem:[%s11 + $0x160] sm:$0xf]
    %v11019 = vld [vmem:[%s11 + $0x164] sm:$0xf]
    %v11020 = vld [vmem:[%s11 + $0x168] sm:$0xf]
    %v11021 = vld [vmem:[%s11 + $0x16c] sm:$0xf]
    %v11022 = vld [vmem:[%s11 + $0x170] sm:$0xf]
    %v11023 = vld [vmem:[%s11 + $0x174] sm:$0xf]
    %v11024 = vld [vmem:[%s11 + $0x178] sm:$0xf]
    %v11025 = vld [vmem:[%s11 + $0x17c] sm:$0xf]
    %v11026 = vld [vmem:[%s11 + $0x180] sm:$0xf]
    %v11027 = vld [vmem:[%s11 + $0x184] sm:$0xf]
    %v11028 = vld [vmem:[%s11 + $0x188] sm:$0xf]
    %v11029 = vld [vmem:[%s11 + $0x18c] sm:$0xf]
    %v11030 = vld [vmem:[%s11 + $0x190] sm:$0xf]
    %v11031 = vld [vmem:[%s11 + $0x194] sm:$0xf]
    %v11032 = vld [vmem:[%s11 + $0x198] sm:$0xf]
    %v11033 = vld [vmem:[%s11 + $0x19c] sm:$0xf]
    %v11034 = vld [vmem:[%s11 + $0x1a0] sm:$0xf]
    %v11035 = vld [vmem:[%s11 + $0x1a4] sm:$0xf]
    %v11036 = vld [vmem:[%s11 + $0x1a8] sm:$0xf]
    %v11037 = vld [vmem:[%s11 + $0x1ac] sm:$0xf]
    %v11038 = vld [vmem:[%s11 + $0x1b0] sm:$0xf]
    %v11039 = vld [vmem:[%s11 + $0x1b4] sm:$0xf]
    %v11040 = vld [vmem:[%s11 + $0x1b8] sm:$0xf]
    %v11041 = vld [vmem:[%s11 + $0x1bc] sm:$0xf]
    %v11042 = vld [vmem:[%s11 + $0x1c0] sm:$0xf]
    %v11043 = vld [vmem:[%s11 + $0x1c4] sm:$0xf]
    %v11044 = vld [vmem:[%s11 + $0x1c8] sm:$0xf]
    %v11045 = vld [vmem:[%s11 + $0x1cc] sm:$0xf]
    %v11046 = vld [vmem:[%s11 + $0x1d0] sm:$0xf]
    %v11047 = vld [vmem:[%s11 + $0x1d4] sm:$0xf]
    %v11048 = vld [vmem:[%s11 + $0x1d8] sm:$0xf]
    %v11049 = vld [vmem:[%s11 + $0x1dc] sm:$0xf]
    %v11050 = vld [vmem:[%s11 + $0x1e0] sm:$0xf]
    %v11051 = vld [vmem:[%s11 + $0x1e4] sm:$0xf]
    %v11052 = vld [vmem:[%s11 + $0x1e8] sm:$0xf]
    %v11053 = vld [vmem:[%s11 + $0x1ec] sm:$0xf]
    %v11054 = vld [vmem:[%s11 + $0x1f0] sm:$0xf]
    %v11055 = vld [vmem:[%s11 + $0x1f4] sm:$0xf]
    %v11056 = vld [vmem:[%s11 + $0x1f8] sm:$0xf]
    %v11057 = vld [vmem:[%s11 + $0x1fc] sm:$0xf]
    %v11058 = vld [vmem:[%s11 + $0x200] sm:$0xf]
    %v11059 = vld [vmem:[%s11 + $0x204] sm:$0xf]
    %v11060 = vld [vmem:[%s11 + $0x208] sm:$0xf]
    %v11061 = vld [vmem:[%s11 + $0x20c] sm:$0xf]
    %v11062 = vld [vmem:[%s11 + $0x210] sm:$0xf]
    %v11063 = vld [vmem:[%s11 + $0x214] sm:$0xf]
    %v11064 = vld [vmem:[%s11 + $0x218] sm:$0xf]
    %v11065 = vld [vmem:[%s11 + $0x21c] sm:$0xf]
    %v11066 = vld [vmem:[%s11 + $0x220] sm:$0xf]
    %v11067 = vld [vmem:[%s11 + $0x224] sm:$0xf]
    %v11068 = vld [vmem:[%s11 + $0x228] sm:$0xf]
    %v11069 = vld [vmem:[%s11 + $0x22c] sm:$0xf]
    %v11070 = vld [vmem:[%s11 + $0x230] sm:$0xf]
    %v11071 = vld [vmem:[%s11 + $0x234] sm:$0xf]
    %v11072 = vld [vmem:[%s11 + $0x238] sm:$0xf]
    %v11073 = vld [vmem:[%s11 + $0x23c] sm:$0xf]
    %v11074 = vld [vmem:[%s12] sm:$0x1]
    %v11076 = vperm.slane %v11074, 0
    %v11222 = vunpack.c.l.b16 %v10930
    %v11223 = vunpack.c.l.b16 %v10931
    %v11224 = vunpack.c.l.b16 %v10932
    %v11225 = vunpack.c.l.b16 %v10933
    %v11226 = vunpack.c.l.b16 %v10934
    %v11227 = vunpack.c.l.b16 %v10935
    %v11228 = vunpack.c.l.b16 %v10936
    %v11229 = vunpack.c.l.b16 %v10937
    %v11230 = vunpack.c.l.b16 %v10938
    %v11231 = vunpack.c.l.b16 %v10939
    %v11232 = vunpack.c.l.b16 %v10940
    %v11233 = vunpack.c.l.b16 %v10941
    %v11234 = vunpack.c.l.b16 %v10942
    %v11235 = vunpack.c.l.b16 %v10943
    %v11236 = vunpack.c.l.b16 %v10944
    %v11237 = vunpack.c.l.b16 %v10945
    %v11238 = vunpack.c.l.b16 %v10946
    %v11239 = vunpack.c.l.b16 %v10947
    %v11240 = vunpack.c.l.b16 %v10948
    %v11241 = vunpack.c.l.b16 %v10949
    %v11242 = vunpack.c.l.b16 %v10950
    %v11243 = vunpack.c.l.b16 %v10951
    %v11244 = vunpack.c.l.b16 %v10952
    %v11245 = vunpack.c.l.b16 %v10953
    %v11246 = vunpack.c.l.b16 %v10954
    %v11247 = vunpack.c.l.b16 %v10955
    %v11248 = vunpack.c.l.b16 %v10956
    %v11249 = vunpack.c.l.b16 %v10957
    %v11250 = vunpack.c.l.b16 %v10958
    %v11251 = vunpack.c.l.b16 %v10959
    %v11252 = vunpack.c.l.b16 %v10960
    %v11253 = vunpack.c.l.b16 %v10961
    %v11254 = vunpack.c.l.b16 %v10962
    %v11255 = vunpack.c.l.b16 %v10963
    %v11256 = vunpack.c.l.b16 %v10964
    %v11257 = vunpack.c.l.b16 %v10965
    %v11258 = vunpack.c.l.b16 %v10966
    %v11259 = vunpack.c.l.b16 %v10967
    %v11260 = vunpack.c.l.b16 %v10968
    %v11261 = vunpack.c.l.b16 %v10969
    %v11262 = vunpack.c.l.b16 %v10970
    %v11263 = vunpack.c.l.b16 %v10971
    %v11264 = vunpack.c.l.b16 %v10972
    %v11265 = vunpack.c.l.b16 %v10973
    %v11266 = vunpack.c.l.b16 %v10974
    %v11267 = vunpack.c.l.b16 %v10975
    %v11268 = vunpack.c.l.b16 %v10976
    %v11269 = vunpack.c.l.b16 %v10977
    %v11270 = vunpack.c.l.b16 %v10978
    %v11271 = vunpack.c.l.b16 %v10979
    %v11272 = vunpack.c.l.b16 %v10980
    %v11273 = vunpack.c.l.b16 %v10981
    %v11274 = vunpack.c.l.b16 %v10982
    %v11275 = vunpack.c.l.b16 %v10983
    %v11276 = vunpack.c.l.b16 %v10984
    %v11277 = vunpack.c.l.b16 %v10985
    %v11278 = vunpack.c.l.b16 %v10986
    %v11279 = vunpack.c.l.b16 %v10987
    %v11280 = vunpack.c.l.b16 %v10988
    %v11281 = vunpack.c.l.b16 %v10989
    %v11282 = vunpack.c.l.b16 %v10990
    %v11283 = vunpack.c.l.b16 %v10991
    %v11284 = vunpack.c.l.b16 %v10992
    %v11285 = vunpack.c.l.b16 %v10993
    %v11286 = vunpack.c.l.b16 %v10994
    %v11287 = vunpack.c.l.b16 %v10995
    %v11288 = vunpack.c.l.b16 %v10996
    %v11289 = vunpack.c.l.b16 %v10997
    %v11290 = vunpack.c.l.b16 %v10998
    %v11291 = vunpack.c.l.b16 %v10999
    %v11292 = vunpack.c.l.b16 %v11000
    %v11293 = vunpack.c.l.b16 %v11001
    %v11294 = vunpack.c.l.b16 %v11002
    %v11295 = vunpack.c.l.b16 %v11003
    %v11296 = vunpack.c.l.b16 %v11004
    %v11297 = vunpack.c.l.b16 %v11005
    %v11298 = vunpack.c.l.b16 %v11006
    %v11299 = vunpack.c.l.b16 %v11007
    %v11300 = vunpack.c.l.b16 %v11008
    %v11301 = vunpack.c.l.b16 %v11009
    %v11302 = vunpack.c.l.b16 %v11010
    %v11303 = vunpack.c.l.b16 %v11011
    %v11304 = vunpack.c.l.b16 %v11012
    %v11305 = vunpack.c.l.b16 %v11013
    %v11306 = vunpack.c.l.b16 %v11014
    %v11307 = vunpack.c.l.b16 %v11015
    %v11308 = vunpack.c.l.b16 %v11016
    %v11309 = vunpack.c.l.b16 %v11017
    %v11310 = vunpack.c.l.b16 %v11018
    %v11311 = vunpack.c.l.b16 %v11019
    %v11312 = vunpack.c.l.b16 %v11020
    %v11313 = vunpack.c.l.b16 %v11021
    %v11314 = vunpack.c.l.b16 %v11022
    %v11315 = vunpack.c.l.b16 %v11023
    %v11316 = vunpack.c.l.b16 %v11024
    %v11317 = vunpack.c.l.b16 %v11025
    %v11318 = vunpack.c.l.b16 %v11026
    %v11319 = vunpack.c.l.b16 %v11027
    %v11320 = vunpack.c.l.b16 %v11028
    %v11321 = vunpack.c.l.b16 %v11029
    %v11322 = vunpack.c.l.b16 %v11030
    %v11323 = vunpack.c.l.b16 %v11031
    %v11324 = vunpack.c.l.b16 %v11032
    %v11325 = vunpack.c.l.b16 %v11033
    %v11326 = vunpack.c.l.b16 %v11034
    %v11327 = vunpack.c.l.b16 %v11035
    %v11328 = vunpack.c.l.b16 %v11036
    %v11329 = vunpack.c.l.b16 %v11037
    %v11330 = vunpack.c.l.b16 %v11038
    %v11331 = vunpack.c.l.b16 %v11039
    %v11332 = vunpack.c.l.b16 %v11040
    %v11333 = vunpack.c.l.b16 %v11041
    %v11334 = vunpack.c.l.b16 %v11042
    %v11335 = vunpack.c.l.b16 %v11043
    %v11336 = vunpack.c.l.b16 %v11044
    %v11337 = vunpack.c.l.b16 %v11045
    %v11338 = vunpack.c.l.b16 %v11046
    %v11339 = vunpack.c.l.b16 %v11047
    %v11340 = vunpack.c.l.b16 %v11048
    %v11341 = vunpack.c.l.b16 %v11049
    %v11342 = vunpack.c.l.b16 %v11050
    %v11343 = vunpack.c.l.b16 %v11051
    %v11344 = vunpack.c.l.b16 %v11052
    %v11345 = vunpack.c.l.b16 %v11053
    %v11346 = vunpack.c.l.b16 %v11054
    %v11347 = vunpack.c.l.b16 %v11055
    %v11348 = vunpack.c.l.b16 %v11056
    %v11349 = vunpack.c.l.b16 %v11057
    %v11350 = vunpack.c.l.b16 %v11058
    %v11351 = vunpack.c.l.b16 %v11059
    %v11352 = vunpack.c.l.b16 %v11060
    %v11353 = vunpack.c.l.b16 %v11061
    %v11354 = vunpack.c.l.b16 %v11062
    %v11355 = vunpack.c.l.b16 %v11063
    %v11356 = vunpack.c.l.b16 %v11064
    %v11357 = vunpack.c.l.b16 %v11065
    %v11358 = vunpack.c.l.b16 %v11066
    %v11359 = vunpack.c.l.b16 %v11067
    %v11360 = vunpack.c.l.b16 %v11068
    %v11361 = vunpack.c.l.b16 %v11069
    %v11362 = vunpack.c.l.b16 %v11070
    %v11363 = vunpack.c.l.b16 %v11071
    %v11364 = vunpack.c.l.b16 %v11072
    %v11365 = vunpack.c.l.b16 %v11073
    %v11366 = vpack.c.b16 %v11223, %v11222
    %v11367 = vpack.c.b16 %v11225, %v11224
    %v11368 = vpack.c.b16 %v11227, %v11226
    %v11369 = vpack.c.b16 %v11229, %v11228
    %v11370 = vpack.c.b16 %v11231, %v11230
    %v11371 = vpack.c.b16 %v11233, %v11232
    %v11372 = vpack.c.b16 %v11235, %v11234
    %v11373 = vpack.c.b16 %v11237, %v11236
    %v11374 = vpack.c.b16 %v11239, %v11238
    %v11375 = vpack.c.b16 %v11241, %v11240
    %v11376 = vpack.c.b16 %v11243, %v11242
    %v11377 = vpack.c.b16 %v11245, %v11244
    %v11378 = vpack.c.b16 %v11247, %v11246
    %v11379 = vpack.c.b16 %v11249, %v11248
    %v11380 = vpack.c.b16 %v11251, %v11250
    %v11381 = vpack.c.b16 %v11253, %v11252
    %v11382 = vpack.c.b16 %v11255, %v11254
    %v11383 = vpack.c.b16 %v11257, %v11256
    %v11384 = vpack.c.b16 %v11259, %v11258
    %v11385 = vpack.c.b16 %v11261, %v11260
    %v11386 = vpack.c.b16 %v11263, %v11262
    %v11387 = vpack.c.b16 %v11265, %v11264
    %v11388 = vpack.c.b16 %v11267, %v11266
    %v11389 = vpack.c.b16 %v11269, %v11268
    %v11390 = vpack.c.b16 %v11271, %v11270
    %v11391 = vpack.c.b16 %v11273, %v11272
    %v11392 = vpack.c.b16 %v11275, %v11274
    %v11393 = vpack.c.b16 %v11277, %v11276
    %v11394 = vpack.c.b16 %v11279, %v11278
    %v11395 = vpack.c.b16 %v11281, %v11280
    %v11396 = vpack.c.b16 %v11283, %v11282
    %v11397 = vpack.c.b16 %v11285, %v11284
    %v11398 = vpack.c.b16 %v11287, %v11286
    %v11399 = vpack.c.b16 %v11289, %v11288
    %v11400 = vpack.c.b16 %v11291, %v11290
    %v11401 = vpack.c.b16 %v11293, %v11292
    %v11402 = vpack.c.b16 %v11295, %v11294
    %v11403 = vpack.c.b16 %v11297, %v11296
    %v11404 = vpack.c.b16 %v11299, %v11298
    %v11405 = vpack.c.b16 %v11301, %v11300
    %v11406 = vpack.c.b16 %v11303, %v11302
    %v11407 = vpack.c.b16 %v11305, %v11304
    %v11408 = vpack.c.b16 %v11307, %v11306
    %v11409 = vpack.c.b16 %v11309, %v11308
    %v11410 = vpack.c.b16 %v11311, %v11310
    %v11411 = vpack.c.b16 %v11313, %v11312
    %v11412 = vpack.c.b16 %v11315, %v11314
    %v11413 = vpack.c.b16 %v11317, %v11316
    %v11414 = vpack.c.b16 %v11319, %v11318
    %v11415 = vpack.c.b16 %v11321, %v11320
    %v11416 = vpack.c.b16 %v11323, %v11322
    %v11417 = vpack.c.b16 %v11325, %v11324
    %v11418 = vpack.c.b16 %v11327, %v11326
    %v11419 = vpack.c.b16 %v11329, %v11328
    %v11420 = vpack.c.b16 %v11331, %v11330
    %v11421 = vpack.c.b16 %v11333, %v11332
    %v11422 = vpack.c.b16 %v11335, %v11334
    %v11423 = vpack.c.b16 %v11337, %v11336
    %v11424 = vpack.c.b16 %v11339, %v11338
    %v11425 = vpack.c.b16 %v11341, %v11340
    %v11426 = vpack.c.b16 %v11343, %v11342
    %v11427 = vpack.c.b16 %v11345, %v11344
    %v11428 = vpack.c.b16 %v11347, %v11346
    %v11429 = vpack.c.b16 %v11349, %v11348
    %v11430 = vpack.c.b16 %v11351, %v11350
    %v11431 = vpack.c.b16 %v11353, %v11352
    %v11432 = vpack.c.b16 %v11355, %v11354
    %v11433 = vpack.c.b16 %v11357, %v11356
    %v11434 = vpack.c.b16 %v11359, %v11358
    %v11435 = vpack.c.b16 %v11361, %v11360
    %v11436 = vpack.c.b16 %v11363, %v11362
    %v11437 = vpack.c.b16 %v11365, %v11364
    %11510 = vmatpush.bf16.msra.mxu0 %v11373
    %11511 = vmatpush.bf16.msra.mxu0 %v11372
    %11512 = vmatpush.bf16.msra.mxu0 %v11371
    %11513 = vmatpush.bf16.msra.mxu0 %v11370
    %11514 = vmatpush.bf16.msra.mxu0 %v11369
    %11515 = vmatpush.bf16.msra.mxu0 %v11368
    %11516 = vmatpush.bf16.msra.mxu0 %v11367
    %11517 = vmatpush.bf16.msra.mxu0 %v11366
    %11518 = vmatmul.bf16.gmra.mxu0 %v668
    %v11519 = vpop.f32.mrf.mxu0
    %v11520 = vadd.f32 %v11076, %v11519
    %v11521 = vpop.f32.mrf.mxu0
    %v11522 = vadd.f32 %v11076, %v11521
    %11523 = vmatmul.bf16.gmra.mxu0 %v10844
    %v11524 = vpop.f32.mrf.mxu0
    %v11525 = vadd.f32 %v11076, %v11524
    %v11526 = vpop.f32.mrf.mxu0
    %v11527 = vadd.f32 %v11076, %v11526
    %11528 = vmatmul.bf16.gmra.mxu0 %v668
    %v11529 = vpop.f32.mrf.mxu0
    %v11530 = vadd.f32 %v11076, %v11529
    %v11531 = vpop.f32.mrf.mxu0
    %v11532 = vadd.f32 %v11076, %v11531
    %11533 = vmatmul.bf16.gmra.mxu0 %v10846
    %v11534 = vpop.f32.mrf.mxu0
    %v11535 = vadd.f32 %v11076, %v11534
    %v11536 = vpop.f32.mrf.mxu0
    %v11537 = vadd.f32 %v11076, %v11536
    %11538 = vdwg.mxu0
    %11539 = vmatpush.bf16.msra.mxu0 %v11381
    %11540 = vmatpush.bf16.msra.mxu0 %v11380
    %11541 = vmatpush.bf16.msra.mxu0 %v11379
    %11542 = vmatpush.bf16.msra.mxu0 %v11378
    %11543 = vmatpush.bf16.msra.mxu0 %v11377
    %11544 = vmatpush.bf16.msra.mxu0 %v11376
    %11545 = vmatpush.bf16.msra.mxu0 %v11375
    %11546 = vmatpush.bf16.msra.mxu0 %v11374
    %11547 = vmatmul.bf16.gmra.mxu0 %v746
    %v11548 = vpop.f32.mrf.mxu0
    %v11549 = vadd.f32 %v11520, %v11548
    %v11550 = vpop.f32.mrf.mxu0
    %v11551 = vadd.f32 %v11522, %v11550
    %11552 = vmatmul.bf16.gmra.mxu0 %v10863
    %v11553 = vpop.f32.mrf.mxu0
    %v11554 = vadd.f32 %v11525, %v11553
    %v11555 = vpop.f32.mrf.mxu0
    %v11556 = vadd.f32 %v11527, %v11555
    %11557 = vmatmul.bf16.gmra.mxu0 %v746
    %v11558 = vpop.f32.mrf.mxu0
    %v11559 = vadd.f32 %v11530, %v11558
    %v11560 = vpop.f32.mrf.mxu0
    %v11561 = vadd.f32 %v11532, %v11560
    %11562 = vmatmul.bf16.gmra.mxu0 %v10875
    %v11563 = vpop.f32.mrf.mxu0
    %v11564 = vadd.f32 %v11535, %v11563
    %v11565 = vpop.f32.mrf.mxu0
    %v11566 = vadd.f32 %v11537, %v11565
    %11567 = vdwg.mxu0
    %11568 = vmatpush.bf16.msra.mxu0 %v11389
    %11569 = vmatpush.bf16.msra.mxu0 %v11388
    %11570 = vmatpush.bf16.msra.mxu0 %v11387
    %11571 = vmatpush.bf16.msra.mxu0 %v11386
    %11572 = vmatpush.bf16.msra.mxu0 %v11385
    %11573 = vmatpush.bf16.msra.mxu0 %v11384
    %11574 = vmatpush.bf16.msra.mxu0 %v11383
    %11575 = vmatpush.bf16.msra.mxu0 %v11382
    %11576 = vmatmul.bf16.gmra.mxu0 %v1234
    %v11577 = vpop.f32.mrf.mxu0
    %v11578 = vadd.f32 %v11549, %v11577
    %v11579 = vpop.f32.mrf.mxu0
    %v11580 = vadd.f32 %v11551, %v11579
    %11581 = vmatmul.bf16.gmra.mxu0 %v10885
    %v11582 = vpop.f32.mrf.mxu0
    %v11583 = vadd.f32 %v11554, %v11582
    %v11584 = vpop.f32.mrf.mxu0
    %v11585 = vadd.f32 %v11556, %v11584
    %11586 = vmatmul.bf16.gmra.mxu0 %v1234
    %v11587 = vpop.f32.mrf.mxu0
    %v11588 = vadd.f32 %v11559, %v11587
    %v11589 = vpop.f32.mrf.mxu0
    %v11590 = vadd.f32 %v11561, %v11589
    %11591 = vmatmul.bf16.gmra.mxu0 %v10888
    %v11592 = vpop.f32.mrf.mxu0
    %v11593 = vadd.f32 %v11564, %v11592
    %v11594 = vpop.f32.mrf.mxu0
    %v11595 = vadd.f32 %v11566, %v11594
    %11596 = vdwg.mxu0
    %11597 = vmatpush.bf16.msra.mxu0 %v11397
    %11598 = vmatpush.bf16.msra.mxu0 %v11396
    %11599 = vmatpush.bf16.msra.mxu0 %v11395
    %11600 = vmatpush.bf16.msra.mxu0 %v11394
    %11601 = vmatpush.bf16.msra.mxu0 %v11393
    %11602 = vmatpush.bf16.msra.mxu0 %v11392
    %11603 = vmatpush.bf16.msra.mxu0 %v11391
    %11604 = vmatpush.bf16.msra.mxu0 %v11390
    %11605 = vmatmul.bf16.gmra.mxu0 %v10844
    %v11606 = vpop.f32.mrf.mxu0
    %v11607 = vadd.f32 %v11578, %v11606
    %v11608 = vpop.f32.mrf.mxu0
    %v11609 = vadd.f32 %v11580, %v11608
    %11610 = vmatmul.bf16.gmra.mxu0 %v10845
    %v11611 = vpop.f32.mrf.mxu0
    %v11612 = vadd.f32 %v11583, %v11611
    %v11613 = vpop.f32.mrf.mxu0
    %v11614 = vadd.f32 %v11585, %v11613
    %11615 = vmatmul.bf16.gmra.mxu0 %v10846
    %v11616 = vpop.f32.mrf.mxu0
    %v11617 = vadd.f32 %v11588, %v11616
    %v11618 = vpop.f32.mrf.mxu0
    %v11619 = vadd.f32 %v11590, %v11618
    %11620 = vmatmul.bf16.gmra.mxu0 %v10847
    %v11621 = vpop.f32.mrf.mxu0
    %v11622 = vadd.f32 %v11593, %v11621
    %v11623 = vpop.f32.mrf.mxu0
    %v11624 = vadd.f32 %v11595, %v11623
    %11625 = vdwg.mxu0
    %11626 = vmatpush.bf16.msra.mxu0 %v11405
    %11627 = vmatpush.bf16.msra.mxu0 %v11404
    %11628 = vmatpush.bf16.msra.mxu0 %v11403
    %11629 = vmatpush.bf16.msra.mxu0 %v11402
    %11630 = vmatpush.bf16.msra.mxu0 %v11401
    %11631 = vmatpush.bf16.msra.mxu0 %v11400
    %11632 = vmatpush.bf16.msra.mxu0 %v11399
    %11633 = vmatpush.bf16.msra.mxu0 %v11398
    %11634 = vmatmul.bf16.gmra.mxu0 %v10863
    %v11635 = vpop.f32.mrf.mxu0
    %v11636 = vadd.f32 %v11607, %v11635
    %v11637 = vpop.f32.mrf.mxu0
    %v11638 = vadd.f32 %v11609, %v11637
    %11639 = vmatmul.bf16.gmra.mxu0 %v10903
    %v11640 = vpop.f32.mrf.mxu0
    %v11641 = vadd.f32 %v11612, %v11640
    %v11642 = vpop.f32.mrf.mxu0
    %v11643 = vadd.f32 %v11614, %v11642
    %11644 = vmatmul.bf16.gmra.mxu0 %v10875
    %v11645 = vpop.f32.mrf.mxu0
    %v11646 = vadd.f32 %v11617, %v11645
    %v11647 = vpop.f32.mrf.mxu0
    %v11648 = vadd.f32 %v11619, %v11647
    %11649 = vmatmul.bf16.gmra.mxu0 %v10915
    %v11650 = vpop.f32.mrf.mxu0
    %v11651 = vadd.f32 %v11622, %v11650
    %v11652 = vpop.f32.mrf.mxu0
    %v11653 = vadd.f32 %v11624, %v11652
    %11654 = vdwg.mxu0
    %11655 = vmatpush.bf16.msra.mxu0 %v11413
    %11656 = vmatpush.bf16.msra.mxu0 %v11412
    %11657 = vmatpush.bf16.msra.mxu0 %v11411
    %11658 = vmatpush.bf16.msra.mxu0 %v11410
    %11659 = vmatpush.bf16.msra.mxu0 %v11409
    %11660 = vmatpush.bf16.msra.mxu0 %v11408
    %11661 = vmatpush.bf16.msra.mxu0 %v11407
    %11662 = vmatpush.bf16.msra.mxu0 %v11406
    %11663 = vmatmul.bf16.gmra.mxu0 %v10885
    %v11664 = vpop.f32.mrf.mxu0
    %v11665 = vadd.f32 %v11636, %v11664
    %v11666 = vpop.f32.mrf.mxu0
    %v11667 = vadd.f32 %v11638, %v11666
    %11668 = vmatmul.bf16.gmra.mxu0 %v10924
    %v11669 = vpop.f32.mrf.mxu0
    %v11670 = vadd.f32 %v11641, %v11669
    %v11671 = vpop.f32.mrf.mxu0
    %v11672 = vadd.f32 %v11643, %v11671
    %11673 = vmatmul.bf16.gmra.mxu0 %v10888
    %v11674 = vpop.f32.mrf.mxu0
    %v11675 = vadd.f32 %v11646, %v11674
    %v11676 = vpop.f32.mrf.mxu0
    %v11677 = vadd.f32 %v11648, %v11676
    %11678 = vmatmul.bf16.gmra.mxu0 %v10927
    %v11679 = vpop.f32.mrf.mxu0
    %v11680 = vadd.f32 %v11651, %v11679
    %v11681 = vpop.f32.mrf.mxu0
    %v11682 = vadd.f32 %v11653, %v11681
    %11683 = vdwg.mxu0
    %11684 = vmatpush.bf16.msra.mxu0 %v11421
    %11685 = vmatpush.bf16.msra.mxu0 %v11420
    %11686 = vmatpush.bf16.msra.mxu0 %v11419
    %11687 = vmatpush.bf16.msra.mxu0 %v11418
    %11688 = vmatpush.bf16.msra.mxu0 %v11417
    %11689 = vmatpush.bf16.msra.mxu0 %v11416
    %11690 = vmatpush.bf16.msra.mxu0 %v11415
    %11691 = vmatpush.bf16.msra.mxu0 %v11414
    %11692 = vmatmul.bf16.gmra.mxu0 %v10845
    %v11693 = vpop.f32.mrf.mxu0
    %v11694 = vadd.f32 %v11665, %v11693
    %v11695 = vpop.f32.mrf.mxu0
    %v11696 = vadd.f32 %v11667, %v11695
    %11697 = vmatmul.bf16.gmra.mxu0 %v668
    %v11698 = vpop.f32.mrf.mxu0
    %v11699 = vadd.f32 %v11670, %v11698
    %v11700 = vpop.f32.mrf.mxu0
    %v11701 = vadd.f32 %v11672, %v11700
    %11702 = vmatmul.bf16.gmra.mxu0 %v10847
    %v11703 = vpop.f32.mrf.mxu0
    %v11704 = vadd.f32 %v11675, %v11703
    %v11705 = vpop.f32.mrf.mxu0
    %v11706 = vadd.f32 %v11677, %v11705
    %11707 = vmatmul.bf16.gmra.mxu0 %v668
    %v11708 = vpop.f32.mrf.mxu0
    %v11709 = vadd.f32 %v11680, %v11708
    %v11710 = vpop.f32.mrf.mxu0
    %v11711 = vadd.f32 %v11682, %v11710
    %11712 = vdwg.mxu0
    %11713 = vmatpush.bf16.msra.mxu0 %v11429
    %11714 = vmatpush.bf16.msra.mxu0 %v11428
    %11715 = vmatpush.bf16.msra.mxu0 %v11427
    %11716 = vmatpush.bf16.msra.mxu0 %v11426
    %11717 = vmatpush.bf16.msra.mxu0 %v11425
    %11718 = vmatpush.bf16.msra.mxu0 %v11424
    %11719 = vmatpush.bf16.msra.mxu0 %v11423
    %11720 = vmatpush.bf16.msra.mxu0 %v11422
    %11721 = vmatmul.bf16.gmra.mxu0 %v10903
    %v11722 = vpop.f32.mrf.mxu0
    %v11723 = vadd.f32 %v11694, %v11722
    %v11724 = vpop.f32.mrf.mxu0
    %v11725 = vadd.f32 %v11696, %v11724
    %11726 = vmatmul.bf16.gmra.mxu0 %v746
    %v11727 = vpop.f32.mrf.mxu0
    %v11728 = vadd.f32 %v11699, %v11727
    %v11729 = vpop.f32.mrf.mxu0
    %v11730 = vadd.f32 %v11701, %v11729
    %11731 = vmatmul.bf16.gmra.mxu0 %v10915
    %v11732 = vpop.f32.mrf.mxu0
    %v11733 = vadd.f32 %v11704, %v11732
    %v11734 = vpop.f32.mrf.mxu0
    %v11735 = vadd.f32 %v11706, %v11734
    %11736 = vmatmul.bf16.gmra.mxu0 %v746
    %v11737 = vpop.f32.mrf.mxu0
    %v11738 = vadd.f32 %v11709, %v11737
    %v11739 = vpop.f32.mrf.mxu0
    %v11740 = vadd.f32 %v11711, %v11739
    %11741 = vdwg.mxu0
    %11742 = vmatpush.bf16.msra.mxu0 %v11437
    %11743 = vmatpush.bf16.msra.mxu0 %v11436
    %11744 = vmatpush.bf16.msra.mxu0 %v11435
    %11745 = vmatpush.bf16.msra.mxu0 %v11434
    %11746 = vmatpush.bf16.msra.mxu0 %v11433
    %11747 = vmatpush.bf16.msra.mxu0 %v11432
    %11748 = vmatpush.bf16.msra.mxu0 %v11431
    %11749 = vmatpush.bf16.msra.mxu0 %v11430
    %11750 = vmatmul.bf16.gmra.mxu0 %v10924
    %v11751 = vpop.f32.mrf.mxu0
    %v11752 = vadd.f32 %v11723, %v11751
    %v11753 = vpop.f32.mrf.mxu0
    %v11754 = vadd.f32 %v11725, %v11753
    %11755 = vmatmul.bf16.gmra.mxu0 %v1234
    %v11756 = vpop.f32.mrf.mxu0
    %v11757 = vadd.f32 %v11728, %v11756
    %v11758 = vpop.f32.mrf.mxu0
    %v11759 = vadd.f32 %v11730, %v11758
    %11760 = vmatmul.bf16.gmra.mxu0 %v10927
    %v11761 = vpop.f32.mrf.mxu0
    %v11762 = vadd.f32 %v11733, %v11761
    %v11763 = vpop.f32.mrf.mxu0
    %v11764 = vadd.f32 %v11735, %v11763
    %11765 = vmatmul.bf16.gmra.mxu0 %v1234
    %v11766 = vpop.f32.mrf.mxu0
    %v11767 = vadd.f32 %v11738, %v11766
    %v11768 = vpop.f32.mrf.mxu0
    %v11769 = vadd.f32 %v11740, %v11768
    %11770 = vdwg.mxu0
    %11771 = vst.msk [vmem:[%s14] sm:$0xff] %vm1799, %v11752
    %11772 = vst.msk [vmem:[%s14 + $0x8] sm:$0xff] %vm1799, %v11754
    %11773 = vst.msk [vmem:[%s14 + $0x10] sm:$0xff] %vm1799, %v11757
    %11774 = vst.msk [vmem:[%s14 + $0x18] sm:$0xff] %vm1799, %v11759
    %11775 = vst.msk [vmem:[%s14 + $0x20] sm:$0xff] %vm1799, %v11762
    %11776 = vst.msk [vmem:[%s14 + $0x28] sm:$0xff] %vm1799, %v11764
    %11777 = vst.msk [vmem:[%s14 + $0x30] sm:$0xff] %vm1799, %v11767
    %11778 = vst.msk [vmem:[%s14 + $0x38] sm:$0xff] %vm1799, %v11769
    // Predicated region
    $region62: #{autoencoder_forward.1} parent=1 // pred_check
      _
    $region63: #{autoencoder_forward.1} parent=1 // pred_check_branch
      %11780 = sbr.rel (0) target = $region65
    $region64: #{autoencoder_forward.1} parent=1 // pred_region
      %11782 = vsyncadd [#allocation7], 0
      %s11783 = sshll.u32 [#allocation10], 4
      %s11784 = int_to_ptr.vmem [resolvable:$true] %s11783
      %s11785 = sshll.u32 %s13, 4
      %s11786 = int_to_ptr.hbm [resolvable:$true] %s11785
      %11791 = dma.vmem_to_hbm [thread:$0]  %s11784, 256, %s11786, [#allocation7], 64, 64, 4
    $region65: #{autoencoder_forward.1} parent=1 // pred_fallthru
      _
    // Predicated region
    $region66: #{autoencoder_forward.1} parent=1 // pred_check
      _
    $region67: #{autoencoder_forward.1} parent=1 // pred_check_branch
      %11793 = sbr.rel (0) target = $region69
    $region68: #{autoencoder_forward.1} parent=1 // pred_region
      _
    $region69: #{autoencoder_forward.1} parent=1 // pred_fallthru
      _
    // Predicated region
    $region70: #{autoencoder_forward.1} parent=1 // pred_check
      _
    $region71: #{autoencoder_forward.1} parent=1 // pred_check_branch
      %11795 = sbr.rel (0) target = $region73
    $region72: #{autoencoder_forward.1} parent=1 // pred_region
      %11797 = dma.done [#allocation7], 256
    $region73: #{autoencoder_forward.1} parent=1 // pred_fallthru
      _
    // Predicated region
    $region74: #{autoencoder_forward.1} parent=1 // pred_check
      _
    $region75: #{autoencoder_forward.1} parent=1 // pred_check_branch
      %11799 = sbr.rel (0) target = $region77
    $region76: #{autoencoder_forward.1} parent=1 // pred_region
      _
    $region77: #{autoencoder_forward.1} parent=1 // pred_fallthru
      _
    %11800 = vsyncpa [#allocation6], 1
    %11801 = vsyncpa [#allocation9], 1
    %11802 = vsyncpa [#allocation7], 1

</llo_original>
